<compile_context>
chip_gen: v5e
topology: v5e:2x2
jax: 0.10.0
libtpu: 0.0.40
codegen_flags: <defaults>
</compile_context>

<pallas_src>
import functools
import math

import jax
import jax.numpy as jnp
from jax.experimental import pallas as pl
from jax.experimental.pallas import tpu as pltpu

_LANE = 128
_MAX_T_TILE = 512      # cap for the q / kv tile sizes
_MAX_HEAD_BLOCK = 8    # heads fused per grid step


def _round_up(x, m):
    return ((x + m - 1) // m) * m


def _largest_divisor_leq(n, cap):
    cap = max(1, min(n, cap))
    for d in range(cap, 0, -1):
        if n % d == 0:
            return d
    return 1


def _attn_kernel(q_ref, k_ref, v_ref, o_ref, qs_ref, m_ref, l_ref, acc_ref,
                 *, scale2, t_real, mxu_dtype):
    """One (head-block, q-tile, kv-tile) step.

    q_ref: (hb, ch, tq)   k_ref/v_ref: (hb, ch, tkv)   o_ref: (hb, ch, tq)
    qs_ref: (hb, ch, tq) mxu_dtype    scaled/cast q (resident across kv)
    m_ref/l_ref: (hb, 1, tq) f32      running max / denominator
    acc_ref: (hb, ch, tq) f32         running numerator
    """
    kv = pl.program_id(2)

    @pl.when(kv == 0)
    def _init():
        # Hoisted out of the kv loop: scale + downcast of q happens once per
        # (head-block, q-tile) instead of on every kv step.
        qs_ref[...] = (q_ref[...] * scale2).astype(mxu_dtype)
        m_ref[...] = jnp.full_like(m_ref, -1e30)   # finite: no inf arithmetic
        l_ref[...] = jnp.zeros_like(l_ref)
        acc_ref[...] = jnp.zeros_like(acc_ref)

    # s[h, key, query] = sum_c k[h, c, key] * q_scaled[h, c, query]
    # Batched over the head-block, contraction over channels, no transposes.
    s = jax.lax.dot_general(
        k_ref[...].astype(mxu_dtype), qs_ref[...],
        dimension_numbers=(((1,), (1,)), ((0,), (0,))),
        preferred_element_type=jnp.float32)              # (hb, tkv, tq) f32

    if t_real is not None:
        # T was padded to a multiple of 128; only the last kv tile can contain
        # padded keys.  The bias is a narrow (1, tkv, 1) column (identically
        # zero on interior tiles), so the only full-tile cost is one add.
        tkv = k_ref.shape[2]
        key_idx = kv * tkv + jax.lax.broadcasted_iota(jnp.int32, (1, tkv, 1), 1)
        bias = jnp.where(key_idx < t_real, 0.0, -1e30).astype(jnp.float32)
        s = s + bias

    # Online softmax; reductions run along the sublane / key axis.
    m_prev = m_ref[...]                                          # (hb, 1, tq)
    m_new = jnp.maximum(m_prev, jnp.max(s, axis=1, keepdims=True))
    alpha = jnp.exp(m_prev - m_new)                              # (hb, 1, tq)
    p = jnp.exp(s - m_new)                                       # (hb, tkv, tq) f32
    l_ref[...] = alpha * l_ref[...] + jnp.sum(p, axis=1, keepdims=True)
    # acc[h, c, q] += sum_key v[h, c, key] * p[h, key, q]   (MXU, f32 accum)
    acc_ref[...] = alpha * acc_ref[...] + jax.lax.dot_general(
        v_ref[...].astype(mxu_dtype), p.astype(mxu_dtype),
        dimension_numbers=(((2,), (1,)), ((0,), (0,))),
        preferred_element_type=jnp.float32)
    m_ref[...] = m_new

    @pl.when(kv == pl.num_programs(2) - 1)
    def _finalize():
        inv = pl.reciprocal(l_ref[...], approx=True)             # EUP slot
        inv = inv * (2.0 - l_ref[...] * inv)                     # 1 Newton step
        o_ref[...] = (acc_ref[...] * inv).astype(o_ref.dtype)


def qkv_attention_diffae(qkv, num_heads, *, mxu_dtype=None,
                         max_t_tile=_MAX_T_TILE,
                         max_head_block=_MAX_HEAD_BLOCK):
    """Pallas equivalent of QKVAttentionDiffAE(num_heads)(qkv)."""
    B, width, T = qkv.shape
    assert width % (3 * num_heads) == 0
    ch = width // (3 * num_heads)
    # Original applies scale = ch**-0.25 to both q and k; fold scale^2 onto q.
    scale2 = 1.0 / math.sqrt(ch)

    if mxu_dtype is None:
        # MXU is bf16-native on v5e/v6e/v7x: feed it bf16 operands when the
        # input is f32.  Softmax statistics / accumulation stay f32.
        mxu_dtype = jnp.bfloat16 if qkv.dtype == jnp.float32 else qkv.dtype

    n_bh = B * num_heads
    # (B, 3*H*ch, T) -> (B*H, 3, ch, T): planes 0/1/2 are q/k/v per head.
    qkv_r = qkv.reshape(n_bh, 3, ch, T)

    # ---- T tiling: avoid wrapper pad / slice whenever T is lane-aligned ----
    if T % _LANE == 0:
        t_pad, t_real = T, None
    else:
        t_pad, t_real = _round_up(T, _LANE), T
    tile = _largest_divisor_leq(t_pad // _LANE, max_t_tile // _LANE) * _LANE
    tq = tkv = tile

    if t_pad != T:
        qkv_r = jnp.pad(qkv_r, ((0, 0), (0, 0), (0, 0), (0, t_pad - T)))

    # ---- head blocking (amortize per-step pipeline overhead) ----
    hb = _largest_divisor_leq(n_bh, max_head_block)

    # ---- VMEM budget (v7x has only 64 MiB physical VMEM per TensorCore) ----
    itemsize = jnp.dtype(qkv.dtype).itemsize
    mxu_itemsize = jnp.dtype(mxu_dtype).itemsize

    def vmem_estimate(hb_, tq_, tkv_):
        blocks = 2 * hb_ * ch * (2 * tq_ + 2 * tkv_) * itemsize   # dbl-buffered in/out
        scratch = hb_ * ch * tq_ * (mxu_itemsize + 4) + 2 * hb_ * 8 * tq_ * 4
        temps = 3 * hb_ * tkv_ * tq_ * 4                          # s / p / p-cast
        return blocks + scratch + temps

    budget = 40 * 1024 * 1024
    while vmem_estimate(hb, tq, tkv) > budget:
        if hb > 1:
            hb = _largest_divisor_leq(n_bh, hb // 2)
        elif tkv > _LANE:
            tkv = _largest_divisor_leq(t_pad // _LANE, tkv // _LANE - 1) * _LANE
        elif tq > _LANE:
            tq = _largest_divisor_leq(t_pad // _LANE, tq // _LANE - 1) * _LANE
        else:
            break

    n_q = t_pad // tq
    n_kv = t_pad // tkv

    # Keep >= 2 parallel work items when possible (v7x has 2 TensorCores).
    if hb > 1 and (n_bh // hb) * n_q < 2:
        hb = _largest_divisor_leq(n_bh, hb // 2)

    grid = (n_bh // hb, n_q, n_kv)
    vmem_limit = int(min(48 << 20, max(32 << 20,
                                       vmem_estimate(hb, tq, tkv) + (2 << 20))))

    kernel = functools.partial(_attn_kernel, scale2=scale2, t_real=t_real,
                               mxu_dtype=mxu_dtype)

    out = pl.pallas_call(
        kernel,
        out_shape=jax.ShapeDtypeStruct((n_bh, ch, t_pad), qkv.dtype),
        grid_spec=pltpu.PrefetchScalarGridSpec(
            num_scalar_prefetch=0,
            grid=grid,
            in_specs=[
                # q tiles: plane 0, q-tile block i, head-block h
                pl.BlockSpec((hb, pl.Squeezed(), ch, tq),
                             lambda h, i, j: (h, 0, 0, i)),
                # k tiles: plane 1, kv-tile block j
                pl.BlockSpec((hb, pl.Squeezed(), ch, tkv),
                             lambda h, i, j: (h, 1, 0, j)),
                # v tiles: plane 2, kv-tile block j
                pl.BlockSpec((hb, pl.Squeezed(), ch, tkv),
                             lambda h, i, j: (h, 2, 0, j)),
            ],
            out_specs=pl.BlockSpec((hb, ch, tq), lambda h, i, j: (h, 0, i)),
            scratch_shapes=[
                pltpu.VMEM((hb, ch, tq), mxu_dtype),    # scaled q (hoisted)
                pltpu.VMEM((hb, 1, tq), jnp.float32),   # running max  m
                pltpu.VMEM((hb, 1, tq), jnp.float32),   # running sum  l
                pltpu.VMEM((hb, ch, tq), jnp.float32),  # output accumulator
            ],
        ),
        compiler_params=pltpu.CompilerParams(
            dimension_semantics=("parallel", "parallel", "arbitrary"),
            vmem_limit_bytes=vmem_limit,
        ),
    )(qkv_r, qkv_r, qkv_r)

    if t_pad != T:
        out = out[:, :, :T]
    return out.reshape(B, num_heads * ch, T)


def _reference(qkv, num_heads):
    """Pure-JAX transcription of the PyTorch forward (for verification)."""
    B, width, T = qkv.shape
    ch = width // (3 * num_heads)
    scale = 1.0 / math.sqrt(math.sqrt(ch))
    r = qkv.reshape(B * num_heads, 3 * ch, T)
    q, k, v = r[:, :ch], r[:, ch:2 * ch], r[:, 2 * ch:]
    w = jnp.einsum('bct,bcs->bts', q * scale, k * scale)
    w = jax.nn.softmax(w, axis=-1)
    a = jnp.einsum('bts,bcs->bct', w, v)
    return a.reshape(B, -1, T)


if __name__ == "__main__":
    key = jax.random.PRNGKey(0)

    cases = [
        # (batch, heads, ch, length)
        (2, 2, 64, 512),    # single 512 tile, head-block of 2
        (2, 3, 32, 384),    # T multiple of 128 (384 tile, no pad / no slice)
        (1, 2, 8, 80),      # tiny ragged T: pad 80 -> 128 + key-mask bias
        (1, 2, 64, 1024),   # multiple q / kv tiles: online softmax across tiles
        (1, 2, 16, 600),    # ragged T with multiple kv tiles (mask on last)
    ]
    for idx, (B, H, ch, T) in enumerate(cases):
        sub = jax.random.fold_in(key, idx)
        qkv = jax.random.normal(sub, (B, 3 * H * ch, T), dtype=jnp.float32)
        ref = _reference(qkv, H)

        # Default path: bf16 MXU operands, f32 softmax / accumulation.
        out = jax.block_until_ready(qkv_attention_diffae(qkv, H))
        assert out.shape == (B, H * ch, T)
        err = float(jnp.max(jnp.abs(out - ref)))
        assert err < 3e-2, f"bf16 path mismatch for {(B, H, ch, T)}: {err}"

        # Full-f32 MXU path: exact check of the flash-softmax algorithm.
        if idx in (1, 4):
            out32 = jax.block_until_ready(
                qkv_attention_diffae(qkv, H, mxu_dtype=jnp.float32))
            err32 = float(jnp.max(jnp.abs(out32 - ref)))
            assert err32 < 2e-4, f"f32 path mismatch for {(B, H, ch, T)}: {err32}"

    print("KERNEL_OK")
</pallas_src>

<mosaic_0001>
module attributes {stable_mosaic.version = 11 : i64} {
  func.func @_attn_kernel(%arg0: i32, %arg1: i32, %arg2: i32, %arg3: memref<2x1x64x512xf32, #tpu.memory_space<vmem>>, %arg4: memref<2x1x64x512xf32, #tpu.memory_space<vmem>>, %arg5: memref<2x1x64x512xf32, #tpu.memory_space<vmem>>, %arg6: memref<2x64x512xf32, #tpu.memory_space<vmem>>, %arg7: memref<2x64x512xbf16, #tpu.memory_space<vmem>>, %arg8: memref<2x1x512xf32, #tpu.memory_space<vmem>>, %arg9: memref<2x1x512xf32, #tpu.memory_space<vmem>>, %arg10: memref<2x64x512xf32, #tpu.memory_space<vmem>>) attributes {dimension_semantics = [#tpu.dimension_semantics<parallel>, #tpu.dimension_semantics<parallel>, #tpu.dimension_semantics<arbitrary>], iteration_bounds = array<i64: 2, 1, 1>, scalar_prefetch = 0 : i64, scratch_operands = 4 : i64, tpu.core_type = #tpu.core_type<tc>, window_params = [{transform_indices = @transform_0, window_bounds = array<i64: 2, 1, 64, 512>}, {transform_indices = @transform_1, window_bounds = array<i64: 2, 1, 64, 512>}, {transform_indices = @transform_2, window_bounds = array<i64: 2, 1, 64, 512>}, {transform_indices = @transform_3, window_bounds = array<i64: 2, 64, 512>}]} {
    %c0_i32 = arith.constant 0 : i32
    %0 = arith.cmpi eq, %arg2, %c0_i32 : i32
    %1 = arith.extui %0 : i1 to i32
    %c0_i32_0 = arith.constant 0 : i32
    %2 = arith.cmpi ne, %1, %c0_i32_0 : i32
    scf.if %2 {
      %c0_34 = arith.constant 0 : index
      %c0_35 = arith.constant 0 : index
      %c0_36 = arith.constant 0 : index
      %c0_37 = arith.constant 0 : index
      %37 = vector.load %arg3[%c0_34, %c0_35, %c0_36, %c0_37] : memref<2x1x64x512xf32, #tpu.memory_space<vmem>>, vector<2x1x64x512xf32>
      %38 = vector.shape_cast %37 : vector<2x1x64x512xf32> to vector<2x64x512xf32>
      %cst_38 = arith.constant 1.250000e-01 : f32
      %39 = vector.broadcast %cst_38 : f32 to vector<2x64x512xf32>
      %40 = arith.mulf %38, %39 : vector<2x64x512xf32>
      %41 = arith.truncf %40 : vector<2x64x512xf32> to vector<2x64x512xbf16>
      %c0_39 = arith.constant 0 : index
      %c0_40 = arith.constant 0 : index
      %c0_41 = arith.constant 0 : index
      %42 = vector.load %arg7[%c0_39, %c0_40, %c0_41] : memref<2x64x512xbf16, #tpu.memory_space<vmem>>, vector<2x64x512xbf16>
      tpu.vector_store %arg7[%c0_39, %c0_40, %c0_41], %41 {strides = array<i32>} : memref<2x64x512xbf16, #tpu.memory_space<vmem>>, vector<2x64x512xbf16>,
      %cst_42 = arith.constant -1.000000e+30 : f32
      %43 = vector.broadcast %cst_42 : f32 to vector<2x1x512xf32>
      %c0_43 = arith.constant 0 : index
      %c0_44 = arith.constant 0 : index
      %c0_45 = arith.constant 0 : index
      %44 = vector.load %arg8[%c0_43, %c0_44, %c0_45] : memref<2x1x512xf32, #tpu.memory_space<vmem>>, vector<2x1x512xf32>
      tpu.vector_store %arg8[%c0_43, %c0_44, %c0_45], %43 {strides = array<i32>} : memref<2x1x512xf32, #tpu.memory_space<vmem>>, vector<2x1x512xf32>,
      %cst_46 = arith.constant 0.000000e+00 : f32
      %45 = vector.broadcast %cst_46 : f32 to vector<2x1x512xf32>
      %c0_47 = arith.constant 0 : index
      %c0_48 = arith.constant 0 : index
      %c0_49 = arith.constant 0 : index
      %46 = vector.load %arg9[%c0_47, %c0_48, %c0_49] : memref<2x1x512xf32, #tpu.memory_space<vmem>>, vector<2x1x512xf32>
      tpu.vector_store %arg9[%c0_47, %c0_48, %c0_49], %45 {strides = array<i32>} : memref<2x1x512xf32, #tpu.memory_space<vmem>>, vector<2x1x512xf32>,
      %cst_50 = arith.constant 0.000000e+00 : f32
      %47 = vector.broadcast %cst_50 : f32 to vector<2x64x512xf32>
      %c0_51 = arith.constant 0 : index
      %c0_52 = arith.constant 0 : index
      %c0_53 = arith.constant 0 : index
      %48 = vector.load %arg10[%c0_51, %c0_52, %c0_53] : memref<2x64x512xf32, #tpu.memory_space<vmem>>, vector<2x64x512xf32>
      tpu.vector_store %arg10[%c0_51, %c0_52, %c0_53], %47 {strides = array<i32>} : memref<2x64x512xf32, #tpu.memory_space<vmem>>, vector<2x64x512xf32>,
    } else {
    }
    %c0 = arith.constant 0 : index
    %c0_1 = arith.constant 0 : index
    %c0_2 = arith.constant 0 : index
    %c0_3 = arith.constant 0 : index
    %3 = vector.load %arg4[%c0, %c0_1, %c0_2, %c0_3] : memref<2x1x64x512xf32, #tpu.memory_space<vmem>>, vector<2x1x64x512xf32>
    %4 = vector.shape_cast %3 : vector<2x1x64x512xf32> to vector<2x64x512xf32>
    %5 = arith.truncf %4 : vector<2x64x512xf32> to vector<2x64x512xbf16>
    %c0_4 = arith.constant 0 : index
    %c0_5 = arith.constant 0 : index
    %c0_6 = arith.constant 0 : index
    %6 = vector.load %arg7[%c0_4, %c0_5, %c0_6] : memref<2x64x512xbf16, #tpu.memory_space<vmem>>, vector<2x64x512xbf16>
    %cst = arith.constant dense<0.000000e+00> : vector<2x512x512xf32>
    %7 = tpu.matmul %5, %6, %cst {dimension_numbers = #tpu.dot_dimension_numbers<[1], [1], [2], [2], [0, 0, 0, 2, 1, 2], [0], [0]>} : vector<2x64x512xbf16>, vector<2x64x512xbf16>, vector<2x512x512xf32> -> vector<2x512x512xf32>
    %c0_7 = arith.constant 0 : index
    %c0_8 = arith.constant 0 : index
    %c0_9 = arith.constant 0 : index
    %8 = vector.load %arg8[%c0_7, %c0_8, %c0_9] : memref<2x1x512xf32, #tpu.memory_space<vmem>>, vector<2x1x512xf32>
    %cst_10 = arith.constant dense<0xFF800000> : vector<2x512xf32>
    %9 = vector.multi_reduction <maximumf>, %7, %cst_10 [1] : vector<2x512x512xf32> to vector<2x512xf32>
    %10 = vector.shape_cast %9 : vector<2x512xf32> to vector<2x1x512xf32>
    %11 = arith.maximumf %8, %10 : vector<2x1x512xf32>
    %12 = arith.subf %8, %11 : vector<2x1x512xf32>
    %13 = math.exp %12 : vector<2x1x512xf32>
    %14 = vector.broadcast %11 : vector<2x1x512xf32> to vector<2x512x512xf32>
    %15 = arith.subf %7, %14 : vector<2x512x512xf32>
    %16 = math.exp %15 : vector<2x512x512xf32>
    %c0_11 = arith.constant 0 : index
    %c0_12 = arith.constant 0 : index
    %c0_13 = arith.constant 0 : index
    %17 = vector.load %arg9[%c0_11, %c0_12, %c0_13] : memref<2x1x512xf32, #tpu.memory_space<vmem>>, vector<2x1x512xf32>
    %18 = arith.mulf %13, %17 : vector<2x1x512xf32>
    %cst_14 = arith.constant dense<0.000000e+00> : vector<2x512xf32>
    %19 = vector.multi_reduction <add>, %16, %cst_14 [1] : vector<2x512x512xf32> to vector<2x512xf32>
    %20 = vector.shape_cast %19 : vector<2x512xf32> to vector<2x1x512xf32>
    %21 = arith.addf %18, %20 : vector<2x1x512xf32>
    %c0_15 = arith.constant 0 : index
    %c0_16 = arith.constant 0 : index
    %c0_17 = arith.constant 0 : index
    %22 = vector.load %arg9[%c0_15, %c0_16, %c0_17] : memref<2x1x512xf32, #tpu.memory_space<vmem>>, vector<2x1x512xf32>
    tpu.vector_store %arg9[%c0_15, %c0_16, %c0_17], %21 {strides = array<i32>} : memref<2x1x512xf32, #tpu.memory_space<vmem>>, vector<2x1x512xf32>,
    %c0_18 = arith.constant 0 : index
    %c0_19 = arith.constant 0 : index
    %c0_20 = arith.constant 0 : index
    %23 = vector.load %arg10[%c0_18, %c0_19, %c0_20] : memref<2x64x512xf32, #tpu.memory_space<vmem>>, vector<2x64x512xf32>
    %24 = vector.broadcast %13 : vector<2x1x512xf32> to vector<2x64x512xf32>
    %25 = arith.mulf %24, %23 : vector<2x64x512xf32>
    %c0_21 = arith.constant 0 : index
    %c0_22 = arith.constant 0 : index
    %c0_23 = arith.constant 0 : index
    %c0_24 = arith.constant 0 : index
    %26 = vector.load %arg5[%c0_21, %c0_22, %c0_23, %c0_24] : memref<2x1x64x512xf32, #tpu.memory_space<vmem>>, vector<2x1x64x512xf32>
    %27 = vector.shape_cast %26 : vector<2x1x64x512xf32> to vector<2x64x512xf32>
    %28 = arith.truncf %27 : vector<2x64x512xf32> to vector<2x64x512xbf16>
    %29 = arith.truncf %16 : vector<2x512x512xf32> to vector<2x512x512xbf16>
    %cst_25 = arith.constant dense<0.000000e+00> : vector<2x64x512xf32>
    %30 = tpu.matmul %28, %29, %cst_25 {dimension_numbers = #tpu.dot_dimension_numbers<[2], [1], [1], [2], [0, 0, 0, 1, 1, 2], [0], [0]>} : vector<2x64x512xbf16>, vector<2x512x512xbf16>, vector<2x64x512xf32> -> vector<2x64x512xf32>
    %31 = arith.addf %25, %30 : vector<2x64x512xf32>
    %c0_26 = arith.constant 0 : index
    %c0_27 = arith.constant 0 : index
    %c0_28 = arith.constant 0 : index
    %32 = vector.load %arg10[%c0_26, %c0_27, %c0_28] : memref<2x64x512xf32, #tpu.memory_space<vmem>>, vector<2x64x512xf32>
    tpu.vector_store %arg10[%c0_26, %c0_27, %c0_28], %31 {strides = array<i32>} : memref<2x64x512xf32, #tpu.memory_space<vmem>>, vector<2x64x512xf32>,
    %c0_29 = arith.constant 0 : index
    %c0_30 = arith.constant 0 : index
    %c0_31 = arith.constant 0 : index
    %33 = vector.load %arg8[%c0_29, %c0_30, %c0_31] : memref<2x1x512xf32, #tpu.memory_space<vmem>>, vector<2x1x512xf32>
    tpu.vector_store %arg8[%c0_29, %c0_30, %c0_31], %11 {strides = array<i32>} : memref<2x1x512xf32, #tpu.memory_space<vmem>>, vector<2x1x512xf32>,
    %c0_i32_32 = arith.constant 0 : i32
    %34 = arith.cmpi eq, %arg2, %c0_i32_32 : i32
    %35 = arith.extui %34 : i1 to i32
    %c0_i32_33 = arith.constant 0 : i32
    %36 = arith.cmpi ne, %35, %c0_i32_33 : i32
    scf.if %36 {
      %c0_34 = arith.constant 0 : index
      %c0_35 = arith.constant 0 : index
      %c0_36 = arith.constant 0 : index
      %37 = vector.load %arg9[%c0_34, %c0_35, %c0_36] : memref<2x1x512xf32, #tpu.memory_space<vmem>>, vector<2x1x512xf32>
      %38 = tpu.reciprocal %37 {approx = true} : vector<2x1x512xf32> -> vector<2x1x512xf32>
      %c0_37 = arith.constant 0 : index
      %c0_38 = arith.constant 0 : index
      %c0_39 = arith.constant 0 : index
      %39 = vector.load %arg9[%c0_37, %c0_38, %c0_39] : memref<2x1x512xf32, #tpu.memory_space<vmem>>, vector<2x1x512xf32>
      %40 = arith.mulf %39, %38 : vector<2x1x512xf32>
      %cst_40 = arith.constant 2.000000e+00 : f32
      %41 = vector.broadcast %cst_40 : f32 to vector<2x1x512xf32>
      %42 = arith.subf %41, %40 : vector<2x1x512xf32>
      %43 = arith.mulf %38, %42 : vector<2x1x512xf32>
      %c0_41 = arith.constant 0 : index
      %c0_42 = arith.constant 0 : index
      %c0_43 = arith.constant 0 : index
      %44 = vector.load %arg10[%c0_41, %c0_42, %c0_43] : memref<2x64x512xf32, #tpu.memory_space<vmem>>, vector<2x64x512xf32>
      %45 = vector.broadcast %43 : vector<2x1x512xf32> to vector<2x64x512xf32>
      %46 = arith.mulf %44, %45 : vector<2x64x512xf32>
      %c0_44 = arith.constant 0 : index
      %c0_45 = arith.constant 0 : index
      %c0_46 = arith.constant 0 : index
      %47 = vector.load %arg6[%c0_44, %c0_45, %c0_46] : memref<2x64x512xf32, #tpu.memory_space<vmem>>, vector<2x64x512xf32>
      tpu.vector_store %arg6[%c0_44, %c0_45, %c0_46], %46 {strides = array<i32>} : memref<2x64x512xf32, #tpu.memory_space<vmem>>, vector<2x64x512xf32>,
    } else {
    }
    return
  }
  func.func @transform_0(%arg0: i32, %arg1: i32, %arg2: i32) -> (i32, i32, i32, i32) {
    %c0_i32 = arith.constant 0 : i32
    %c0_i32_0 = arith.constant 0 : i32
    %c0_i32_1 = arith.constant 0 : i32
    return %arg0, %c0_i32, %c0_i32_0, %arg1 : i32, i32, i32, i32
  }
  func.func @transform_1(%arg0: i32, %arg1: i32, %arg2: i32) -> (i32, i32, i32, i32) {
    %c1_i32 = arith.constant 1 : i32
    %c0_i32 = arith.constant 0 : i32
    %c0_i32_0 = arith.constant 0 : i32
    return %arg0, %c1_i32, %c0_i32, %arg2 : i32, i32, i32, i32
  }
  func.func @transform_2(%arg0: i32, %arg1: i32, %arg2: i32) -> (i32, i32, i32, i32) {
    %c2_i32 = arith.constant 2 : i32
    %c0_i32 = arith.constant 0 : i32
    %c0_i32_0 = arith.constant 0 : i32
    return %arg0, %c2_i32, %c0_i32, %arg2 : i32, i32, i32, i32
  }
  func.func @transform_3(%arg0: i32, %arg1: i32, %arg2: i32) -> (i32, i32, i32) {
    %c0_i32 = arith.constant 0 : i32
    %c0_i32_0 = arith.constant 0 : i32
    return %arg0, %c0_i32, %arg1 : i32, i32, i32
  }
}

</mosaic_0001>

<llo_original>
// kernel: tpu_custom_call.1
$region0: #{tpu_custom_call.1}
  #allocation0 [shape = 'u32[]', space=smem, size = 0x4, offset = 0x4, fixed_abs, tag = 'smem constant byte address 0x4 - core index']
  #allocation1 [shape = 'u32[72,128]{1,0:T(1,128)}', space=vmem, size = 0x9000, scoped, tag = 'internal scratch']
  #allocation2 [shape = 'bf16[2,64,512]{2,1,0:T(8,128)(2,1)}', space=vmem, size = 0x20000, scoped, tag = 'scratch operand']
  #allocation3 [shape = 'f32[2,1,512]{2,1,0:T(1,128)}', space=vmem, size = 0x1000, scoped, tag = 'scratch operand']
  #allocation4 [shape = 'f32[2,1,512]{2,1,0:T(1,128)}', space=vmem, size = 0x1000, scoped, tag = 'scratch operand']
  #allocation5 [shape = 'f32[2,64,512]{2,1,0:T(8,128)}', space=vmem, size = 0x40000, scoped, tag = 'scratch operand']
  #allocation13 [shape = 's32[]', space=sflag, size = 0x4, offset = 0, fixed_abs, tag = 'sflag constant byte address 0x0 - dummy sync flag']
  #allocation15 [shape = 's32[]', space=sflag, size = 0x4, offset = 0, fixed_abs, tag = 'sflag constant byte address 0x0 - dummy sync flag']
  #allocation17 [shape = 's32[]', space=sflag, size = 0x4, offset = 0, fixed_abs, tag = 'sflag constant byte address 0x0 - dummy sync flag']
  %s0 = inlined_call_operand.hbm [shape: f32[4,3,64,512], index: 0, kind: input, shape index: {}]
  %s1 = inlined_call_operand.hbm [shape: f32[4,3,64,512], index: 1, kind: input, shape index: {}]
  %s2 = inlined_call_operand.hbm [shape: f32[4,3,64,512], index: 2, kind: input, shape index: {}]
  %s3 = inlined_call_operand.hbm [shape: f32[4,64,512], index: 3, kind: output, shape index: {}]
  %s4 = sld [smem:[#allocation0]]
  $region65: #{tpu_custom_call.1} parent=0
    _
  %s6 = ssub.s32 1, %s4
  %s7 = scalar_select 0, %s6, %s4
  $region1: #{tpu_custom_call.1} parent=0
    #allocation6 [shape = 'u8[524288]{0}', space=vmem, size = 0x80000, scoped, tag = 'input window, operand 0']
    #allocation7 [shape = 's32[2]{0}', space=sflag, size = 0x8, scoped, tag = 'scoped memory for tpu_custom_call.1']
    #allocation8 [shape = 's32[2]{0}', space=sflag, size = 0x8, scoped, tag = 'scoped memory for tpu_custom_call.1']
    #allocation9 [shape = 'u8[524288]{0}', space=vmem, size = 0x80000, scoped, tag = 'input window, operand 1']
    #allocation10 [shape = 's32[2]{0}', space=sflag, size = 0x8, scoped, tag = 'scoped memory for tpu_custom_call.1']
    #allocation11 [shape = 'u8[524288]{0}', space=vmem, size = 0x80000, scoped, tag = 'input window, operand 2']
    #allocation12 [shape = 'u8[524288]{0}', space=vmem, size = 0x80000, scoped, tag = 'output window, operand 0']
    %8 = vsyncpa [#allocation7], 0
    %s9 = scalar_lea.sflag [#allocation7], 1
    %10 = vsyncpa %s9, 0
    %11 = vsyncpa [#allocation10], 0
    %s12 = scalar_lea.sflag [#allocation10], 1
    %13 = vsyncpa %s12, 0
    %14 = vsyncpa [#allocation8], 0
    %s15 = scalar_lea.sflag [#allocation8], 1
    %16 = vsyncpa %s15, 0
    loop: start=0, step=1, limit=4
    $region2: #{tpu_custom_call.1} parent=1 // loop_pre_header
      _
    $region3: #{tpu_custom_call.1} parent=1 // loop_header
      %s18 = sphi 0, %s22
      %p19 = scmp.ge.s32.totalorder %s18, 4
      %s25 = sphi 0, %s44
      %s26 = sphi 0, %s40
      %s27 = sphi 0, %s36
      %s28 = sphi 0, %s25
      %s29 = sphi 0, %s26
      %s30 = sphi 0, %s27
      %s31 = sphi 0, %s28
      %s32 = sphi 0, %s29
      %s33 = sphi 0, %s30
      %s49 = sphi 0, %s51
      %s52 = sphi 0, %s49
      %s53 = sphi 0, %s52
      %s69 = sphi 0, %s53
      %s77 = sphi 0, %s79
      %s80 = sphi 0, %s77
      %s81 = sphi 0, %s80
      %s97 = sphi 0, %s81
      %s105 = sphi 0, %s107
      %s108 = sphi 0, %s105
      %s109 = sphi 0, %s108
      %s125 = sphi 0, %s109
      %s133 = sphi 0, %s135
      %s136 = sphi 0, %s133
      %s137 = sphi 0, %s136
      %s153 = sphi 0, %s137
    $region4: #{tpu_custom_call.1} parent=1 // loop_header_branch
      %21 = sbr.rel (%p19) target = $region8
    $region5: #{tpu_custom_call.1} parent=1 // loop_body
      %s23 = ssub.s32 %s18, 1
      %s24 = ssub.s32 %s18, 2
      %s34 = sadd.s32 1, %s27
      %p35 = scmp.ge.s32.totalorder %s34, 1
      %s36 = scalar_select %p35, 0, %s34
      %s37 = sadd.s32 1, %s26
      %s38 = scalar_select %p35, %s37, %s26
      %p39 = scmp.ge.s32.totalorder %s38, 1
      %s40 = scalar_select %p39, 0, %s38
      %s41 = sadd.s32 1, %s25
      %s42 = scalar_select %p39, %s41, %s25
      %p43 = scmp.ge.s32.totalorder %s42, 2
      %s44 = scalar_select %p43, 0, %s42
      %s45 = ssub.s32 %s25, %s44
      %s46 = ssub.s32 %s26, %s40
      %s47 = sor.u32 %s45, %s46
      %p48 = scmp.eq.s32.totalorder %s47, 0
      %s50 = sadd.s32 %s49, 1
      %s51 = scalar_select %p48, %s49, %s50
      %p54 = pneg %p48
      %p55 = scmp.eq.s32.totalorder %s18, 1
      %p56 = por %p54, %p55
      %p57 = scmp.ne.s32.totalorder %s49, %s52
      %p58 = scmp.eq.s32.totalorder %s18, 0
      %p59 = por %p57, %p58
      %p60 = scmp.ne.s32.totalorder %s49, %s52
      %p61 = scmp.eq.s32.totalorder %s23, 1
      %p62 = por %p60, %p61
      %p63 = scmp.ne.s32.totalorder %s52, %s53
      %p64 = scmp.eq.s32.totalorder %s23, 0
      %p65 = por %p63, %p64
      %p66 = scmp.ne.s32.totalorder %s52, %s53
      %p67 = scmp.eq.s32.totalorder %s24, 1
      %p68 = por %p66, %p67
      %p70 = scmp.ne.s32.totalorder %s53, %s69
      %p71 = scmp.eq.s32.totalorder %s24, 0
      %p72 = por %p70, %p71
      %s73 = ssub.s32 %s25, %s44
      %s74 = ssub.s32 %s27, %s36
      %s75 = sor.u32 %s73, %s74
      %p76 = scmp.eq.s32.totalorder %s75, 0
      %s78 = sadd.s32 %s77, 1
      %s79 = scalar_select %p76, %s77, %s78
      %p82 = pneg %p76
      %p83 = scmp.eq.s32.totalorder %s18, 1
      %p84 = por %p82, %p83
      %p85 = scmp.ne.s32.totalorder %s77, %s80
      %p86 = scmp.eq.s32.totalorder %s18, 0
      %p87 = por %p85, %p86
      %p88 = scmp.ne.s32.totalorder %s77, %s80
      %p89 = scmp.eq.s32.totalorder %s23, 1
      %p90 = por %p88, %p89
      %p91 = scmp.ne.s32.totalorder %s80, %s81
      %p92 = scmp.eq.s32.totalorder %s23, 0
      %p93 = por %p91, %p92
      %p94 = scmp.ne.s32.totalorder %s80, %s81
      %p95 = scmp.eq.s32.totalorder %s24, 1
      %p96 = por %p94, %p95
      %p98 = scmp.ne.s32.totalorder %s81, %s97
      %p99 = scmp.eq.s32.totalorder %s24, 0
      %p100 = por %p98, %p99
      %s101 = ssub.s32 %s25, %s44
      %s102 = ssub.s32 %s27, %s36
      %s103 = sor.u32 %s101, %s102
      %p104 = scmp.eq.s32.totalorder %s103, 0
      %s106 = sadd.s32 %s105, 1
      %s107 = scalar_select %p104, %s105, %s106
      %p110 = pneg %p104
      %p111 = scmp.eq.s32.totalorder %s18, 1
      %p112 = por %p110, %p111
      %p113 = scmp.ne.s32.totalorder %s105, %s108
      %p114 = scmp.eq.s32.totalorder %s18, 0
      %p115 = por %p113, %p114
      %p116 = scmp.ne.s32.totalorder %s105, %s108
      %p117 = scmp.eq.s32.totalorder %s23, 1
      %p118 = por %p116, %p117
      %p119 = scmp.ne.s32.totalorder %s108, %s109
      %p120 = scmp.eq.s32.totalorder %s23, 0
      %p121 = por %p119, %p120
      %p122 = scmp.ne.s32.totalorder %s108, %s109
      %p123 = scmp.eq.s32.totalorder %s24, 1
      %p124 = por %p122, %p123
      %p126 = scmp.ne.s32.totalorder %s109, %s125
      %p127 = scmp.eq.s32.totalorder %s24, 0
      %p128 = por %p126, %p127
      %s129 = ssub.s32 %s25, %s44
      %s130 = ssub.s32 %s26, %s40
      %s131 = sor.u32 %s129, %s130
      %p132 = scmp.eq.s32.totalorder %s131, 0
      %s134 = sadd.s32 %s133, 1
      %s135 = scalar_select %p132, %s133, %s134
      %p138 = pneg %p132
      %p139 = scmp.eq.s32.totalorder %s18, 1
      %p140 = por %p138, %p139
      %p141 = scmp.ne.s32.totalorder %s133, %s136
      %p142 = scmp.eq.s32.totalorder %s18, 0
      %p143 = por %p141, %p142
      %p144 = scmp.ne.s32.totalorder %s133, %s136
      %p145 = scmp.eq.s32.totalorder %s23, 1
      %p146 = por %p144, %p145
      %p147 = scmp.ne.s32.totalorder %s136, %s137
      %p148 = scmp.eq.s32.totalorder %s23, 0
      %p149 = por %p147, %p148
      %p150 = scmp.ne.s32.totalorder %s136, %s137
      %p151 = scmp.eq.s32.totalorder %s24, 1
      %p152 = por %p150, %p151
      %p154 = scmp.ne.s32.totalorder %s137, %s153
      %p155 = scmp.eq.s32.totalorder %s24, 0
      %p156 = por %p154, %p155
      %p157 = scmp.le.s32.totalorder 1, %s18
      %p158 = scmp.lt.s32.totalorder %s18, 3
      %p159 = pnand %p157, %p158
      %p160 = pneg %p159
      // Predicated region
      $region9: #{tpu_custom_call.1} parent=5 // pred_check
        _
      $region10: #{tpu_custom_call.1} parent=5 // pred_check_branch
        %162 = sbr.rel (%p159) target = $region12
      $region11: #{tpu_custom_call.1} parent=5 // pred_region
        %s163 = ssub.s32 %s18, 1
      $region12: #{tpu_custom_call.1} parent=5 // pred_fallthru
        _
      %p164 = scmp.lt.s32.totalorder %s18, 2
      // Predicated region
      $region13: #{tpu_custom_call.1} parent=5 // pred_check
        %p165 = pneg %p164
      $region14: #{tpu_custom_call.1} parent=5 // pred_check_branch
        %167 = sbr.rel (%p165) target = $region16
      $region15: #{tpu_custom_call.1} parent=5 // pred_region
        // Predicated region
        $region17: #{tpu_custom_call.1} parent=15 // pred_check
          %p168 = pneg %p59
        $region18: #{tpu_custom_call.1} parent=15 // pred_check_branch
          %170 = sbr.rel (%p168) target = $region20
        $region19: #{tpu_custom_call.1} parent=15 // pred_region
          #allocation14 [shape = 'u32[6]{0}', space=smem, size = 0x18, scoped, tag = 'DMA stride descriptor']
          %s171 = sand.u32 %s49, 1
          %s172 = scalar_lea.sflag [#allocation7], %s171
          %s173 = sand.u32 %s49, 1
          %s174 = smul.addr %s173, 512
          %s175 = scalar_lea.vmem [#allocation6], %s174
          %s176 = smul.u32 2, %s25
          %s177 = smul.u32 4, %s26
          %179 = vsyncadd %s172, 0
          %s180 = smul.addr %s176, 96
          %s181 = sadd.s32 %s177, %s180
          %s182 = smul.addr %s181, 8
          %s183 = scalar_lea.hbm %s0, %s182
          %s185 = sshll.u32 1, 14
          %s186 = sxor.u32 4294967295, %s185
          %s188 = sld [smem:[#allocation0]]
          %s189 = sadd.s32 2, %s188
          %s191 = sshll.u32 7, 26
          %s192 = sxor.u32 4294967295, %s191
          %s193 = sand.u32 0, %s192
          %s194 = sshll.u32 %s189, 26
          %s195 = sor.u32 %s193, %s194
          %s196 = sshll.u32 %s183, 4
          %s197 = int_to_ptr.hbm [resolvable:$true] %s196
          %s198 = sshll.u32 %s175, 4
          %s199 = int_to_ptr.vmem [resolvable:$true] %s198
          %205 = sst [smem:[#allocation14]] 12288
          %s206 = scalar_lea.smem [#allocation14], 1
          %207 = sst [smem:[%s206]] 4096
          %s208 = scalar_lea.smem [#allocation14], 2
          %209 = sst [smem:[%s208]] 8
          %s210 = scalar_lea.smem [#allocation14], 3
          %211 = sst [smem:[%s210]] 512
          %s212 = scalar_lea.smem [#allocation14], 4
          %213 = sst [smem:[%s212]] 512
          %s214 = scalar_lea.smem [#allocation14], 5
          %215 = sst [smem:[%s214]] 32
          %217 = dma.general %s197, 8192, %s199, %s172, [#allocation13], [#allocation14], %s195, 0
        $region20: #{tpu_custom_call.1} parent=15 // pred_fallthru
          _
        // Predicated region
        $region21: #{tpu_custom_call.1} parent=15 // pred_check
          %p218 = pneg %p87
        $region22: #{tpu_custom_call.1} parent=15 // pred_check_branch
          %220 = sbr.rel (%p218) target = $region24
        $region23: #{tpu_custom_call.1} parent=15 // pred_region
          #allocation16 [shape = 'u32[6]{0}', space=smem, size = 0x18, scoped, tag = 'DMA stride descriptor']
          %s221 = sand.u32 %s18, 1
          %s222 = scalar_lea.sflag [#allocation10], %s221
          %s223 = sand.u32 %s77, 1
          %s224 = smul.addr %s223, 512
          %s225 = scalar_lea.vmem [#allocation9], %s224
          %s226 = smul.u32 2, %s25
          %s227 = smul.u32 4, %s27
          %229 = vsyncadd %s222, 0
          %s230 = sadd.s32 %s227, 32
          %s231 = smul.addr %s226, 96
          %s232 = sadd.s32 %s230, %s231
          %s233 = smul.addr %s232, 8
          %s234 = scalar_lea.hbm %s1, %s233
          %s236 = sshll.u32 1, 14
          %s237 = sxor.u32 4294967295, %s236
          %s239 = sld [smem:[#allocation0]]
          %s240 = sadd.s32 2, %s239
          %s242 = sshll.u32 7, 26
          %s243 = sxor.u32 4294967295, %s242
          %s244 = sand.u32 0, %s243
          %s245 = sshll.u32 %s240, 26
          %s246 = sor.u32 %s244, %s245
          %s247 = sshll.u32 %s234, 4
          %s248 = int_to_ptr.hbm [resolvable:$true] %s247
          %s249 = sshll.u32 %s225, 4
          %s250 = int_to_ptr.vmem [resolvable:$true] %s249
          %256 = sst [smem:[#allocation16]] 12288
          %s257 = scalar_lea.smem [#allocation16], 1
          %258 = sst [smem:[%s257]] 4096
          %s259 = scalar_lea.smem [#allocation16], 2
          %260 = sst [smem:[%s259]] 8
          %s261 = scalar_lea.smem [#allocation16], 3
          %262 = sst [smem:[%s261]] 512
          %s263 = scalar_lea.smem [#allocation16], 4
          %264 = sst [smem:[%s263]] 512
          %s265 = scalar_lea.smem [#allocation16], 5
          %266 = sst [smem:[%s265]] 32
          %268 = dma.general %s248, 8192, %s250, %s222, [#allocation15], [#allocation16], %s246, 0
        $region24: #{tpu_custom_call.1} parent=15 // pred_fallthru
          _
        // Predicated region
        $region25: #{tpu_custom_call.1} parent=15 // pred_check
          %p269 = pneg %p115
        $region26: #{tpu_custom_call.1} parent=15 // pred_check_branch
          %271 = sbr.rel (%p269) target = $region28
        $region27: #{tpu_custom_call.1} parent=15 // pred_region
          #allocation18 [shape = 'u32[6]{0}', space=smem, size = 0x18, scoped, tag = 'DMA stride descriptor']
          %s272 = sand.u32 %s18, 1
          %s273 = scalar_lea.sflag [#allocation10], %s272
          %s274 = sand.u32 %s105, 1
          %s275 = smul.addr %s274, 512
          %s276 = scalar_lea.vmem [#allocation11], %s275
          %s277 = smul.u32 2, %s25
          %s278 = smul.u32 4, %s27
          %280 = vsyncadd %s273, 0
          %s281 = sadd.s32 %s278, 64
          %s282 = smul.addr %s277, 96
          %s283 = sadd.s32 %s281, %s282
          %s284 = smul.addr %s283, 8
          %s285 = scalar_lea.hbm %s2, %s284
          %s287 = sshll.u32 1, 14
          %s288 = sxor.u32 4294967295, %s287
          %s290 = sld [smem:[#allocation0]]
          %s291 = sadd.s32 2, %s290
          %s293 = sshll.u32 7, 26
          %s294 = sxor.u32 4294967295, %s293
          %s295 = sand.u32 0, %s294
          %s296 = sshll.u32 %s291, 26
          %s297 = sor.u32 %s295, %s296
          %s298 = sshll.u32 %s285, 4
          %s299 = int_to_ptr.hbm [resolvable:$true] %s298
          %s300 = sshll.u32 %s276, 4
          %s301 = int_to_ptr.vmem [resolvable:$true] %s300
          %307 = sst [smem:[#allocation18]] 12288
          %s308 = scalar_lea.smem [#allocation18], 1
          %309 = sst [smem:[%s308]] 4096
          %s310 = scalar_lea.smem [#allocation18], 2
          %311 = sst [smem:[%s310]] 8
          %s312 = scalar_lea.smem [#allocation18], 3
          %313 = sst [smem:[%s312]] 512
          %s314 = scalar_lea.smem [#allocation18], 4
          %315 = sst [smem:[%s314]] 512
          %s316 = scalar_lea.smem [#allocation18], 5
          %317 = sst [smem:[%s316]] 32
          %319 = dma.general %s299, 8192, %s301, %s273, [#allocation17], [#allocation18], %s297, 0
        $region28: #{tpu_custom_call.1} parent=15 // pred_fallthru
          _
      $region16: #{tpu_custom_call.1} parent=5 // pred_fallthru
        _
      %p320 = scmp.le.s32.totalorder 1, %s18
      %p321 = scmp.lt.s32.totalorder %s18, 3
      %p322 = pnand %p320, %p321
      %p323 = pneg %p322
      // Predicated region
      $region29: #{tpu_custom_call.1} parent=5 // pred_check
        _
      $region30: #{tpu_custom_call.1} parent=5 // pred_check_branch
        %325 = sbr.rel (%p322) target = $region32
      $region31: #{tpu_custom_call.1} parent=5 // pred_region
        %s326 = ssub.s32 %s18, 1
        %s327 = sand.u32 %s52, 1
        %s328 = scalar_lea.sflag [#allocation7], %s327
        %s329 = sand.u32 %s52, 1
        %s330 = smul.addr %s329, 512
        %s331 = scalar_lea.vmem [#allocation6], %s330
        // Predicated region
        $region33: #{tpu_custom_call.1} parent=31 // pred_check
          %p332 = pneg %p65
        $region34: #{tpu_custom_call.1} parent=31 // pred_check_branch
          %334 = sbr.rel (%p332) target = $region36
        $region35: #{tpu_custom_call.1} parent=31 // pred_region
          %336 = dma.done %s328, 8192
        $region36: #{tpu_custom_call.1} parent=31 // pred_fallthru
          _
        %s337 = sand.u32 %s23, 1
        %s338 = scalar_lea.sflag [#allocation10], %s337
        %s339 = sand.u32 %s80, 1
        %s340 = smul.addr %s339, 512
        %s341 = scalar_lea.vmem [#allocation9], %s340
        // Predicated region
        $region37: #{tpu_custom_call.1} parent=31 // pred_check
          %p342 = pneg %p93
        $region38: #{tpu_custom_call.1} parent=31 // pred_check_branch
          %344 = sbr.rel (%p342) target = $region40
        $region39: #{tpu_custom_call.1} parent=31 // pred_region
          %346 = dma.done %s338, 8192
        $region40: #{tpu_custom_call.1} parent=31 // pred_fallthru
          _
        %s347 = sand.u32 %s23, 1
        %s348 = scalar_lea.sflag [#allocation10], %s347
        %s349 = sand.u32 %s108, 1
        %s350 = smul.addr %s349, 512
        %s351 = scalar_lea.vmem [#allocation11], %s350
        // Predicated region
        $region41: #{tpu_custom_call.1} parent=31 // pred_check
          %p352 = pneg %p121
        $region42: #{tpu_custom_call.1} parent=31 // pred_check_branch
          %354 = sbr.rel (%p352) target = $region44
        $region43: #{tpu_custom_call.1} parent=31 // pred_region
          %356 = dma.done %s348, 8192
        $region44: #{tpu_custom_call.1} parent=31 // pred_fallthru
          _
        %s357 = sand.u32 %s52, 1
        %s358 = scalar_lea.sflag [#allocation7], %s357
        %s359 = sand.u32 %s52, 1
        %s360 = smul.addr %s359, 512
        %s361 = scalar_lea.vmem [#allocation6], %s360
        %p362 = pneg %p65
        %p363 = pneg %p62
        %s364 = sand.u32 %s23, 1
        %s365 = scalar_lea.sflag [#allocation10], %s364
        %s366 = sand.u32 %s80, 1
        %s367 = smul.addr %s366, 512
        %s368 = scalar_lea.vmem [#allocation9], %s367
        %p369 = pneg %p93
        %p370 = pneg %p90
        %s371 = sand.u32 %s23, 1
        %s372 = scalar_lea.sflag [#allocation10], %s371
        %s373 = sand.u32 %s108, 1
        %s374 = smul.addr %s373, 512
        %s375 = scalar_lea.vmem [#allocation11], %s374
        %p376 = pneg %p121
        %p377 = pneg %p118
        %p378 = pneg %p149
        %p379 = pneg %p146
        %s380 = sand.u32 %s136, 1
        %s381 = scalar_lea.sflag [#allocation8], %s380
        %s382 = sand.u32 %s136, 1
        %s383 = smul.addr %s382, 512
        %s384 = scalar_lea.vmem [#allocation12], %s383
        %s385 = smul.u32 2, %s28
        %s386 = smul.u32 4, %s29
        %s387 = smul.u32 2, %s28
        %s388 = smul.u32 4, %s30
        %s389 = smul.u32 2, %s28
        %s390 = smul.u32 4, %s30
        %s391 = smul.u32 2, %s28
        %s392 = smul.u32 4, %s29
        %p394 = scmp.eq.s32.totalorder %s30, 0
        // Predicated region
        $region45: #{tpu_custom_call.1} parent=31 // pred_check
          %p395 = pneg %p394
        $region46: #{tpu_custom_call.1} parent=31 // pred_check_branch
          %397 = sbr.rel (%p395) target = $region48
        $region47: #{tpu_custom_call.1} parent=31 // pred_region
          %v398 = vld [vmem:[%s331] sm:$0xff]
          %v399 = vld [vmem:[%s331 + $0x8] sm:$0xff]
          %v400 = vld [vmem:[%s331 + $0x10] sm:$0xff]
          %v401 = vld [vmem:[%s331 + $0x18] sm:$0xff]
          %v402 = vld [vmem:[%s331 + $0x20] sm:$0xff]
          %v403 = vld [vmem:[%s331 + $0x28] sm:$0xff]
          %v404 = vld [vmem:[%s331 + $0x30] sm:$0xff]
          %v405 = vld [vmem:[%s331 + $0x38] sm:$0xff]
          %v406 = vld [vmem:[%s331 + $0x40] sm:$0xff]
          %v407 = vld [vmem:[%s331 + $0x48] sm:$0xff]
          %v408 = vld [vmem:[%s331 + $0x50] sm:$0xff]
          %v409 = vld [vmem:[%s331 + $0x58] sm:$0xff]
          %v410 = vld [vmem:[%s331 + $0x60] sm:$0xff]
          %v411 = vld [vmem:[%s331 + $0x68] sm:$0xff]
          %v412 = vld [vmem:[%s331 + $0x70] sm:$0xff]
          %v413 = vld [vmem:[%s331 + $0x78] sm:$0xff]
          %v414 = vld [vmem:[%s331 + $0x80] sm:$0xff]
          %v415 = vld [vmem:[%s331 + $0x88] sm:$0xff]
          %v416 = vld [vmem:[%s331 + $0x90] sm:$0xff]
          %v417 = vld [vmem:[%s331 + $0x98] sm:$0xff]
          %v418 = vld [vmem:[%s331 + $0xa0] sm:$0xff]
          %v419 = vld [vmem:[%s331 + $0xa8] sm:$0xff]
          %v420 = vld [vmem:[%s331 + $0xb0] sm:$0xff]
          %v421 = vld [vmem:[%s331 + $0xb8] sm:$0xff]
          %v422 = vld [vmem:[%s331 + $0xc0] sm:$0xff]
          %v423 = vld [vmem:[%s331 + $0xc8] sm:$0xff]
          %v424 = vld [vmem:[%s331 + $0xd0] sm:$0xff]
          %v425 = vld [vmem:[%s331 + $0xd8] sm:$0xff]
          %v426 = vld [vmem:[%s331 + $0xe0] sm:$0xff]
          %v427 = vld [vmem:[%s331 + $0xe8] sm:$0xff]
          %v428 = vld [vmem:[%s331 + $0xf0] sm:$0xff]
          %v429 = vld [vmem:[%s331 + $0xf8] sm:$0xff]
          %v430 = vld [vmem:[%s331 + $0x100] sm:$0xff]
          %v431 = vld [vmem:[%s331 + $0x108] sm:$0xff]
          %v432 = vld [vmem:[%s331 + $0x110] sm:$0xff]
          %v433 = vld [vmem:[%s331 + $0x118] sm:$0xff]
          %v434 = vld [vmem:[%s331 + $0x120] sm:$0xff]
          %v435 = vld [vmem:[%s331 + $0x128] sm:$0xff]
          %v436 = vld [vmem:[%s331 + $0x130] sm:$0xff]
          %v437 = vld [vmem:[%s331 + $0x138] sm:$0xff]
          %v438 = vld [vmem:[%s331 + $0x140] sm:$0xff]
          %v439 = vld [vmem:[%s331 + $0x148] sm:$0xff]
          %v440 = vld [vmem:[%s331 + $0x150] sm:$0xff]
          %v441 = vld [vmem:[%s331 + $0x158] sm:$0xff]
          %v442 = vld [vmem:[%s331 + $0x160] sm:$0xff]
          %v443 = vld [vmem:[%s331 + $0x168] sm:$0xff]
          %v444 = vld [vmem:[%s331 + $0x170] sm:$0xff]
          %v445 = vld [vmem:[%s331 + $0x178] sm:$0xff]
          %v446 = vld [vmem:[%s331 + $0x180] sm:$0xff]
          %v447 = vld [vmem:[%s331 + $0x188] sm:$0xff]
          %v448 = vld [vmem:[%s331 + $0x190] sm:$0xff]
          %v449 = vld [vmem:[%s331 + $0x198] sm:$0xff]
          %v450 = vld [vmem:[%s331 + $0x1a0] sm:$0xff]
          %v451 = vld [vmem:[%s331 + $0x1a8] sm:$0xff]
          %v452 = vld [vmem:[%s331 + $0x1b0] sm:$0xff]
          %v453 = vld [vmem:[%s331 + $0x1b8] sm:$0xff]
          %v454 = vld [vmem:[%s331 + $0x1c0] sm:$0xff]
          %v455 = vld [vmem:[%s331 + $0x1c8] sm:$0xff]
          %v456 = vld [vmem:[%s331 + $0x1d0] sm:$0xff]
          %v457 = vld [vmem:[%s331 + $0x1d8] sm:$0xff]
          %v458 = vld [vmem:[%s331 + $0x1e0] sm:$0xff]
          %v459 = vld [vmem:[%s331 + $0x1e8] sm:$0xff]
          %v460 = vld [vmem:[%s331 + $0x1f0] sm:$0xff]
          %v461 = vld [vmem:[%s331 + $0x1f8] sm:$0xff]
          %v462 = vmul.f32 %v398, 0.125
          %v463 = vmul.f32 %v399, 0.125
          %v464 = vmul.f32 %v400, 0.125
          %v465 = vmul.f32 %v401, 0.125
          %v466 = vmul.f32 %v402, 0.125
          %v467 = vmul.f32 %v403, 0.125
          %v468 = vmul.f32 %v404, 0.125
          %v469 = vmul.f32 %v405, 0.125
          %v470 = vmul.f32 %v406, 0.125
          %v471 = vmul.f32 %v407, 0.125
          %v472 = vmul.f32 %v408, 0.125
          %v473 = vmul.f32 %v409, 0.125
          %v474 = vmul.f32 %v410, 0.125
          %v475 = vmul.f32 %v411, 0.125
          %v476 = vmul.f32 %v412, 0.125
          %v477 = vmul.f32 %v413, 0.125
          %v478 = vmul.f32 %v414, 0.125
          %v479 = vmul.f32 %v415, 0.125
          %v480 = vmul.f32 %v416, 0.125
          %v481 = vmul.f32 %v417, 0.125
          %v482 = vmul.f32 %v418, 0.125
          %v483 = vmul.f32 %v419, 0.125
          %v484 = vmul.f32 %v420, 0.125
          %v485 = vmul.f32 %v421, 0.125
          %v486 = vmul.f32 %v422, 0.125
          %v487 = vmul.f32 %v423, 0.125
          %v488 = vmul.f32 %v424, 0.125
          %v489 = vmul.f32 %v425, 0.125
          %v490 = vmul.f32 %v426, 0.125
          %v491 = vmul.f32 %v427, 0.125
          %v492 = vmul.f32 %v428, 0.125
          %v493 = vmul.f32 %v429, 0.125
          %v494 = vmul.f32 %v430, 0.125
          %v495 = vmul.f32 %v431, 0.125
          %v496 = vmul.f32 %v432, 0.125
          %v497 = vmul.f32 %v433, 0.125
          %v498 = vmul.f32 %v434, 0.125
          %v499 = vmul.f32 %v435, 0.125
          %v500 = vmul.f32 %v436, 0.125
          %v501 = vmul.f32 %v437, 0.125
          %v502 = vmul.f32 %v438, 0.125
          %v503 = vmul.f32 %v439, 0.125
          %v504 = vmul.f32 %v440, 0.125
          %v505 = vmul.f32 %v441, 0.125
          %v506 = vmul.f32 %v442, 0.125
          %v507 = vmul.f32 %v443, 0.125
          %v508 = vmul.f32 %v444, 0.125
          %v509 = vmul.f32 %v445, 0.125
          %v510 = vmul.f32 %v446, 0.125
          %v511 = vmul.f32 %v447, 0.125
          %v512 = vmul.f32 %v448, 0.125
          %v513 = vmul.f32 %v449, 0.125
          %v514 = vmul.f32 %v450, 0.125
          %v515 = vmul.f32 %v451, 0.125
          %v516 = vmul.f32 %v452, 0.125
          %v517 = vmul.f32 %v453, 0.125
          %v518 = vmul.f32 %v454, 0.125
          %v519 = vmul.f32 %v455, 0.125
          %v520 = vmul.f32 %v456, 0.125
          %v521 = vmul.f32 %v457, 0.125
          %v522 = vmul.f32 %v458, 0.125
          %v523 = vmul.f32 %v459, 0.125
          %v524 = vmul.f32 %v460, 0.125
          %v525 = vmul.f32 %v461, 0.125
          %v526 = vpack.c.bf16 %v463, %v462
          %v527 = vpack.c.bf16 %v465, %v464
          %v528 = vpack.c.bf16 %v467, %v466
          %v529 = vpack.c.bf16 %v469, %v468
          %v530 = vpack.c.bf16 %v471, %v470
          %v531 = vpack.c.bf16 %v473, %v472
          %v532 = vpack.c.bf16 %v475, %v474
          %v533 = vpack.c.bf16 %v477, %v476
          %v534 = vpack.c.bf16 %v479, %v478
          %v535 = vpack.c.bf16 %v481, %v480
          %v536 = vpack.c.bf16 %v483, %v482
          %v537 = vpack.c.bf16 %v485, %v484
          %v538 = vpack.c.bf16 %v487, %v486
          %v539 = vpack.c.bf16 %v489, %v488
          %v540 = vpack.c.bf16 %v491, %v490
          %v541 = vpack.c.bf16 %v493, %v492
          %v542 = vpack.c.bf16 %v495, %v494
          %v543 = vpack.c.bf16 %v497, %v496
          %v544 = vpack.c.bf16 %v499, %v498
          %v545 = vpack.c.bf16 %v501, %v500
          %v546 = vpack.c.bf16 %v503, %v502
          %v547 = vpack.c.bf16 %v505, %v504
          %v548 = vpack.c.bf16 %v507, %v506
          %v549 = vpack.c.bf16 %v509, %v508
          %v550 = vpack.c.bf16 %v511, %v510
          %v551 = vpack.c.bf16 %v513, %v512
          %v552 = vpack.c.bf16 %v515, %v514
          %v553 = vpack.c.bf16 %v517, %v516
          %v554 = vpack.c.bf16 %v519, %v518
          %v555 = vpack.c.bf16 %v521, %v520
          %v556 = vpack.c.bf16 %v523, %v522
          %v557 = vpack.c.bf16 %v525, %v524
          %558 = vst [vmem:[#allocation2] sm:$0xff] %v526
          %559 = vst [vmem:[#allocation2 + $0x8] sm:$0xff] %v527
          %560 = vst [vmem:[#allocation2 + $0x10] sm:$0xff] %v528
          %561 = vst [vmem:[#allocation2 + $0x18] sm:$0xff] %v529
          %562 = vst [vmem:[#allocation2 + $0x20] sm:$0xff] %v530
          %563 = vst [vmem:[#allocation2 + $0x28] sm:$0xff] %v531
          %564 = vst [vmem:[#allocation2 + $0x30] sm:$0xff] %v532
          %565 = vst [vmem:[#allocation2 + $0x38] sm:$0xff] %v533
          %566 = vst [vmem:[#allocation2 + $0x40] sm:$0xff] %v534
          %567 = vst [vmem:[#allocation2 + $0x48] sm:$0xff] %v535
          %568 = vst [vmem:[#allocation2 + $0x50] sm:$0xff] %v536
          %569 = vst [vmem:[#allocation2 + $0x58] sm:$0xff] %v537
          %570 = vst [vmem:[#allocation2 + $0x60] sm:$0xff] %v538
          %571 = vst [vmem:[#allocation2 + $0x68] sm:$0xff] %v539
          %572 = vst [vmem:[#allocation2 + $0x70] sm:$0xff] %v540
          %573 = vst [vmem:[#allocation2 + $0x78] sm:$0xff] %v541
          %574 = vst [vmem:[#allocation2 + $0x80] sm:$0xff] %v542
          %575 = vst [vmem:[#allocation2 + $0x88] sm:$0xff] %v543
          %576 = vst [vmem:[#allocation2 + $0x90] sm:$0xff] %v544
          %577 = vst [vmem:[#allocation2 + $0x98] sm:$0xff] %v545
          %578 = vst [vmem:[#allocation2 + $0xa0] sm:$0xff] %v546
          %579 = vst [vmem:[#allocation2 + $0xa8] sm:$0xff] %v547
          %580 = vst [vmem:[#allocation2 + $0xb0] sm:$0xff] %v548
          %581 = vst [vmem:[#allocation2 + $0xb8] sm:$0xff] %v549
          %582 = vst [vmem:[#allocation2 + $0xc0] sm:$0xff] %v550
          %583 = vst [vmem:[#allocation2 + $0xc8] sm:$0xff] %v551
          %584 = vst [vmem:[#allocation2 + $0xd0] sm:$0xff] %v552
          %585 = vst [vmem:[#allocation2 + $0xd8] sm:$0xff] %v553
          %586 = vst [vmem:[#allocation2 + $0xe0] sm:$0xff] %v554
          %587 = vst [vmem:[#allocation2 + $0xe8] sm:$0xff] %v555
          %588 = vst [vmem:[#allocation2 + $0xf0] sm:$0xff] %v556
          %589 = vst [vmem:[#allocation2 + $0xf8] sm:$0xff] %v557
          %v590 = vlaneseq
          %vm591 = vcmp.ge.s32.totalorder %v590, 0
          %vm592 = vcmp.lt.s32.totalorder %v590, 512
          %vm593 = vmand %vm591, %vm592
          %594 = vst.msk [vmem:[#allocation3] sm:$0xf] %vm593, -1e+30
          %595 = vst.msk [vmem:[#allocation3 + $0x4] sm:$0xf] %vm593, -1e+30
          %596 = vst.msk [vmem:[#allocation4] sm:$0xf] %vm593, 0.0
          %597 = vst.msk [vmem:[#allocation4 + $0x4] sm:$0xf] %vm593, 0.0
          %598 = vst [vmem:[#allocation5] sm:$0xff] 0.0
          %599 = vst [vmem:[#allocation5 + $0x8] sm:$0xff] 0.0
          %600 = vst [vmem:[#allocation5 + $0x10] sm:$0xff] 0.0
          %601 = vst [vmem:[#allocation5 + $0x18] sm:$0xff] 0.0
          %602 = vst [vmem:[#allocation5 + $0x20] sm:$0xff] 0.0
          %603 = vst [vmem:[#allocation5 + $0x28] sm:$0xff] 0.0
          %604 = vst [vmem:[#allocation5 + $0x30] sm:$0xff] 0.0
          %605 = vst [vmem:[#allocation5 + $0x38] sm:$0xff] 0.0
          %606 = vst [vmem:[#allocation5 + $0x40] sm:$0xff] 0.0
          %607 = vst [vmem:[#allocation5 + $0x48] sm:$0xff] 0.0
          %608 = vst [vmem:[#allocation5 + $0x50] sm:$0xff] 0.0
          %609 = vst [vmem:[#allocation5 + $0x58] sm:$0xff] 0.0
          %610 = vst [vmem:[#allocation5 + $0x60] sm:$0xff] 0.0
          %611 = vst [vmem:[#allocation5 + $0x68] sm:$0xff] 0.0
          %612 = vst [vmem:[#allocation5 + $0x70] sm:$0xff] 0.0
          %613 = vst [vmem:[#allocation5 + $0x78] sm:$0xff] 0.0
          %614 = vst [vmem:[#allocation5 + $0x80] sm:$0xff] 0.0
          %615 = vst [vmem:[#allocation5 + $0x88] sm:$0xff] 0.0
          %616 = vst [vmem:[#allocation5 + $0x90] sm:$0xff] 0.0
          %617 = vst [vmem:[#allocation5 + $0x98] sm:$0xff] 0.0
          %618 = vst [vmem:[#allocation5 + $0xa0] sm:$0xff] 0.0
          %619 = vst [vmem:[#allocation5 + $0xa8] sm:$0xff] 0.0
          %620 = vst [vmem:[#allocation5 + $0xb0] sm:$0xff] 0.0
          %621 = vst [vmem:[#allocation5 + $0xb8] sm:$0xff] 0.0
          %622 = vst [vmem:[#allocation5 + $0xc0] sm:$0xff] 0.0
          %623 = vst [vmem:[#allocation5 + $0xc8] sm:$0xff] 0.0
          %624 = vst [vmem:[#allocation5 + $0xd0] sm:$0xff] 0.0
          %625 = vst [vmem:[#allocation5 + $0xd8] sm:$0xff] 0.0
          %626 = vst [vmem:[#allocation5 + $0xe0] sm:$0xff] 0.0
          %627 = vst [vmem:[#allocation5 + $0xe8] sm:$0xff] 0.0
          %628 = vst [vmem:[#allocation5 + $0xf0] sm:$0xff] 0.0
          %629 = vst [vmem:[#allocation5 + $0xf8] sm:$0xff] 0.0
          %630 = vst [vmem:[#allocation5 + $0x100] sm:$0xff] 0.0
          %631 = vst [vmem:[#allocation5 + $0x108] sm:$0xff] 0.0
          %632 = vst [vmem:[#allocation5 + $0x110] sm:$0xff] 0.0
          %633 = vst [vmem:[#allocation5 + $0x118] sm:$0xff] 0.0
          %634 = vst [vmem:[#allocation5 + $0x120] sm:$0xff] 0.0
          %635 = vst [vmem:[#allocation5 + $0x128] sm:$0xff] 0.0
          %636 = vst [vmem:[#allocation5 + $0x130] sm:$0xff] 0.0
          %637 = vst [vmem:[#allocation5 + $0x138] sm:$0xff] 0.0
          %638 = vst [vmem:[#allocation5 + $0x140] sm:$0xff] 0.0
          %639 = vst [vmem:[#allocation5 + $0x148] sm:$0xff] 0.0
          %640 = vst [vmem:[#allocation5 + $0x150] sm:$0xff] 0.0
          %641 = vst [vmem:[#allocation5 + $0x158] sm:$0xff] 0.0
          %642 = vst [vmem:[#allocation5 + $0x160] sm:$0xff] 0.0
          %643 = vst [vmem:[#allocation5 + $0x168] sm:$0xff] 0.0
          %644 = vst [vmem:[#allocation5 + $0x170] sm:$0xff] 0.0
          %645 = vst [vmem:[#allocation5 + $0x178] sm:$0xff] 0.0
          %646 = vst [vmem:[#allocation5 + $0x180] sm:$0xff] 0.0
          %647 = vst [vmem:[#allocation5 + $0x188] sm:$0xff] 0.0
          %648 = vst [vmem:[#allocation5 + $0x190] sm:$0xff] 0.0
          %649 = vst [vmem:[#allocation5 + $0x198] sm:$0xff] 0.0
          %650 = vst [vmem:[#allocation5 + $0x1a0] sm:$0xff] 0.0
          %651 = vst [vmem:[#allocation5 + $0x1a8] sm:$0xff] 0.0
          %652 = vst [vmem:[#allocation5 + $0x1b0] sm:$0xff] 0.0
          %653 = vst [vmem:[#allocation5 + $0x1b8] sm:$0xff] 0.0
          %654 = vst [vmem:[#allocation5 + $0x1c0] sm:$0xff] 0.0
          %655 = vst [vmem:[#allocation5 + $0x1c8] sm:$0xff] 0.0
          %656 = vst [vmem:[#allocation5 + $0x1d0] sm:$0xff] 0.0
          %657 = vst [vmem:[#allocation5 + $0x1d8] sm:$0xff] 0.0
          %658 = vst [vmem:[#allocation5 + $0x1e0] sm:$0xff] 0.0
          %659 = vst [vmem:[#allocation5 + $0x1e8] sm:$0xff] 0.0
          %660 = vst [vmem:[#allocation5 + $0x1f0] sm:$0xff] 0.0
          %661 = vst [vmem:[#allocation5 + $0x1f8] sm:$0xff] 0.0
        $region48: #{tpu_custom_call.1} parent=31 // pred_fallthru
          _
        %v662 = vld [vmem:[%s341] sm:$0xff]
        %v663 = vld [vmem:[%s341 + $0x8] sm:$0xff]
        %v664 = vld [vmem:[%s341 + $0x10] sm:$0xff]
        %v665 = vld [vmem:[%s341 + $0x18] sm:$0xff]
        %v666 = vld [vmem:[%s341 + $0x20] sm:$0xff]
        %v667 = vld [vmem:[%s341 + $0x28] sm:$0xff]
        %v668 = vld [vmem:[%s341 + $0x30] sm:$0xff]
        %v669 = vld [vmem:[%s341 + $0x38] sm:$0xff]
        %v670 = vld [vmem:[%s341 + $0x40] sm:$0xff]
        %v671 = vld [vmem:[%s341 + $0x48] sm:$0xff]
        %v672 = vld [vmem:[%s341 + $0x50] sm:$0xff]
        %v673 = vld [vmem:[%s341 + $0x58] sm:$0xff]
        %v674 = vld [vmem:[%s341 + $0x60] sm:$0xff]
        %v675 = vld [vmem:[%s341 + $0x68] sm:$0xff]
        %v676 = vld [vmem:[%s341 + $0x70] sm:$0xff]
        %v677 = vld [vmem:[%s341 + $0x78] sm:$0xff]
        %v678 = vld [vmem:[%s341 + $0x80] sm:$0xff]
        %v679 = vld [vmem:[%s341 + $0x88] sm:$0xff]
        %v680 = vld [vmem:[%s341 + $0x90] sm:$0xff]
        %v681 = vld [vmem:[%s341 + $0x98] sm:$0xff]
        %v682 = vld [vmem:[%s341 + $0xa0] sm:$0xff]
        %v683 = vld [vmem:[%s341 + $0xa8] sm:$0xff]
        %v684 = vld [vmem:[%s341 + $0xb0] sm:$0xff]
        %v685 = vld [vmem:[%s341 + $0xb8] sm:$0xff]
        %v686 = vld [vmem:[%s341 + $0xc0] sm:$0xff]
        %v687 = vld [vmem:[%s341 + $0xc8] sm:$0xff]
        %v688 = vld [vmem:[%s341 + $0xd0] sm:$0xff]
        %v689 = vld [vmem:[%s341 + $0xd8] sm:$0xff]
        %v690 = vld [vmem:[%s341 + $0xe0] sm:$0xff]
        %v691 = vld [vmem:[%s341 + $0xe8] sm:$0xff]
        %v692 = vld [vmem:[%s341 + $0xf0] sm:$0xff]
        %v693 = vld [vmem:[%s341 + $0xf8] sm:$0xff]
        %v694 = vld [vmem:[%s341 + $0x100] sm:$0xff]
        %v695 = vld [vmem:[%s341 + $0x108] sm:$0xff]
        %v696 = vld [vmem:[%s341 + $0x110] sm:$0xff]
        %v697 = vld [vmem:[%s341 + $0x118] sm:$0xff]
        %v698 = vld [vmem:[%s341 + $0x120] sm:$0xff]
        %v699 = vld [vmem:[%s341 + $0x128] sm:$0xff]
        %v700 = vld [vmem:[%s341 + $0x130] sm:$0xff]
        %v701 = vld [vmem:[%s341 + $0x138] sm:$0xff]
        %v702 = vld [vmem:[%s341 + $0x140] sm:$0xff]
        %v703 = vld [vmem:[%s341 + $0x148] sm:$0xff]
        %v704 = vld [vmem:[%s341 + $0x150] sm:$0xff]
        %v705 = vld [vmem:[%s341 + $0x158] sm:$0xff]
        %v706 = vld [vmem:[%s341 + $0x160] sm:$0xff]
        %v707 = vld [vmem:[%s341 + $0x168] sm:$0xff]
        %v708 = vld [vmem:[%s341 + $0x170] sm:$0xff]
        %v709 = vld [vmem:[%s341 + $0x178] sm:$0xff]
        %v710 = vld [vmem:[%s341 + $0x180] sm:$0xff]
        %v711 = vld [vmem:[%s341 + $0x188] sm:$0xff]
        %v712 = vld [vmem:[%s341 + $0x190] sm:$0xff]
        %v713 = vld [vmem:[%s341 + $0x198] sm:$0xff]
        %v714 = vld [vmem:[%s341 + $0x1a0] sm:$0xff]
        %v715 = vld [vmem:[%s341 + $0x1a8] sm:$0xff]
        %v716 = vld [vmem:[%s341 + $0x1b0] sm:$0xff]
        %v717 = vld [vmem:[%s341 + $0x1b8] sm:$0xff]
        %v718 = vld [vmem:[%s341 + $0x1c0] sm:$0xff]
        %v719 = vld [vmem:[%s341 + $0x1c8] sm:$0xff]
        %v720 = vld [vmem:[%s341 + $0x1d0] sm:$0xff]
        %v721 = vld [vmem:[%s341 + $0x1d8] sm:$0xff]
        %v722 = vld [vmem:[%s341 + $0x1e0] sm:$0xff]
        %v723 = vld [vmem:[%s341 + $0x1e8] sm:$0xff]
        %v724 = vld [vmem:[%s341 + $0x1f0] sm:$0xff]
        %v725 = vld [vmem:[%s341 + $0x1f8] sm:$0xff]
        %v726 = vpack.c.bf16 %v663, %v662
        %v727 = vpack.c.bf16 %v665, %v664
        %v728 = vpack.c.bf16 %v667, %v666
        %v729 = vpack.c.bf16 %v669, %v668
        %v730 = vpack.c.bf16 %v671, %v670
        %v731 = vpack.c.bf16 %v673, %v672
        %v732 = vpack.c.bf16 %v675, %v674
        %v733 = vpack.c.bf16 %v677, %v676
        %v734 = vpack.c.bf16 %v679, %v678
        %v735 = vpack.c.bf16 %v681, %v680
        %v736 = vpack.c.bf16 %v683, %v682
        %v737 = vpack.c.bf16 %v685, %v684
        %v738 = vpack.c.bf16 %v687, %v686
        %v739 = vpack.c.bf16 %v689, %v688
        %v740 = vpack.c.bf16 %v691, %v690
        %v741 = vpack.c.bf16 %v693, %v692
        %v742 = vpack.c.bf16 %v695, %v694
        %v743 = vpack.c.bf16 %v697, %v696
        %v744 = vpack.c.bf16 %v699, %v698
        %v745 = vpack.c.bf16 %v701, %v700
        %v746 = vpack.c.bf16 %v703, %v702
        %v747 = vpack.c.bf16 %v705, %v704
        %v748 = vpack.c.bf16 %v707, %v706
        %v749 = vpack.c.bf16 %v709, %v708
        %v750 = vpack.c.bf16 %v711, %v710
        %v751 = vpack.c.bf16 %v713, %v712
        %v752 = vpack.c.bf16 %v715, %v714
        %v753 = vpack.c.bf16 %v717, %v716
        %v754 = vpack.c.bf16 %v719, %v718
        %v755 = vpack.c.bf16 %v721, %v720
        %v756 = vpack.c.bf16 %v723, %v722
        %v757 = vpack.c.bf16 %v725, %v724
        %v758 = vld [vmem:[#allocation2] sm:$0xff]
        %v759 = vld [vmem:[#allocation2 + $0x8] sm:$0xff]
        %v760 = vld [vmem:[#allocation2 + $0x10] sm:$0xff]
        %v761 = vld [vmem:[#allocation2 + $0x18] sm:$0xff]
        %v762 = vld [vmem:[#allocation2 + $0x20] sm:$0xff]
        %v763 = vld [vmem:[#allocation2 + $0x28] sm:$0xff]
        %v764 = vld [vmem:[#allocation2 + $0x30] sm:$0xff]
        %v765 = vld [vmem:[#allocation2 + $0x38] sm:$0xff]
        %v766 = vld [vmem:[#allocation2 + $0x40] sm:$0xff]
        %v767 = vld [vmem:[#allocation2 + $0x48] sm:$0xff]
        %v768 = vld [vmem:[#allocation2 + $0x50] sm:$0xff]
        %v769 = vld [vmem:[#allocation2 + $0x58] sm:$0xff]
        %v770 = vld [vmem:[#allocation2 + $0x60] sm:$0xff]
        %v771 = vld [vmem:[#allocation2 + $0x68] sm:$0xff]
        %v772 = vld [vmem:[#allocation2 + $0x70] sm:$0xff]
        %v773 = vld [vmem:[#allocation2 + $0x78] sm:$0xff]
        %v774 = vld [vmem:[#allocation2 + $0x80] sm:$0xff]
        %v775 = vld [vmem:[#allocation2 + $0x88] sm:$0xff]
        %v776 = vld [vmem:[#allocation2 + $0x90] sm:$0xff]
        %v777 = vld [vmem:[#allocation2 + $0x98] sm:$0xff]
        %v778 = vld [vmem:[#allocation2 + $0xa0] sm:$0xff]
        %v779 = vld [vmem:[#allocation2 + $0xa8] sm:$0xff]
        %v780 = vld [vmem:[#allocation2 + $0xb0] sm:$0xff]
        %v781 = vld [vmem:[#allocation2 + $0xb8] sm:$0xff]
        %v782 = vld [vmem:[#allocation2 + $0xc0] sm:$0xff]
        %v783 = vld [vmem:[#allocation2 + $0xc8] sm:$0xff]
        %v784 = vld [vmem:[#allocation2 + $0xd0] sm:$0xff]
        %v785 = vld [vmem:[#allocation2 + $0xd8] sm:$0xff]
        %v786 = vld [vmem:[#allocation2 + $0xe0] sm:$0xff]
        %v787 = vld [vmem:[#allocation2 + $0xe8] sm:$0xff]
        %v788 = vld [vmem:[#allocation2 + $0xf0] sm:$0xff]
        %v789 = vld [vmem:[#allocation2 + $0xf8] sm:$0xff]
        %v806 = vunpack.c.l.b16 %v726
        %v807 = vunpack.c.h.b16 %v726
        %v808 = vunpack.c.l.b16 %v727
        %v809 = vunpack.c.h.b16 %v727
        %v810 = vunpack.c.l.b16 %v728
        %v811 = vunpack.c.h.b16 %v728
        %v812 = vunpack.c.l.b16 %v729
        %v813 = vunpack.c.h.b16 %v729
        %v814 = vunpack.c.l.b16 %v730
        %v815 = vunpack.c.h.b16 %v730
        %v816 = vunpack.c.l.b16 %v731
        %v817 = vunpack.c.h.b16 %v731
        %v818 = vunpack.c.l.b16 %v732
        %v819 = vunpack.c.h.b16 %v732
        %v820 = vunpack.c.l.b16 %v733
        %v821 = vunpack.c.h.b16 %v733
        %v822 = vunpack.c.l.b16 %v734
        %v823 = vunpack.c.h.b16 %v734
        %v824 = vunpack.c.l.b16 %v735
        %v825 = vunpack.c.h.b16 %v735
        %v826 = vunpack.c.l.b16 %v736
        %v827 = vunpack.c.h.b16 %v736
        %v828 = vunpack.c.l.b16 %v737
        %v829 = vunpack.c.h.b16 %v737
        %v830 = vunpack.c.l.b16 %v738
        %v831 = vunpack.c.h.b16 %v738
        %v832 = vunpack.c.l.b16 %v739
        %v833 = vunpack.c.h.b16 %v739
        %v834 = vunpack.c.l.b16 %v740
        %v835 = vunpack.c.h.b16 %v740
        %v836 = vunpack.c.l.b16 %v741
        %v837 = vunpack.c.h.b16 %v741
        %v838 = vpack.c.b16 %v810, %v806
        %v839 = vpack.c.b16 %v811, %v807
        %v840 = vpack.c.b16 %v812, %v808
        %v841 = vpack.c.b16 %v813, %v809
        %v842 = vpack.c.b16 %v818, %v814
        %v843 = vpack.c.b16 %v819, %v815
        %v844 = vpack.c.b16 %v820, %v816
        %v845 = vpack.c.b16 %v821, %v817
        %v846 = vpack.c.b16 %v826, %v822
        %v847 = vpack.c.b16 %v827, %v823
        %v848 = vpack.c.b16 %v828, %v824
        %v849 = vpack.c.b16 %v829, %v825
        %v850 = vpack.c.b16 %v834, %v830
        %v851 = vpack.c.b16 %v835, %v831
        %v852 = vpack.c.b16 %v836, %v832
        %v853 = vpack.c.b16 %v837, %v833
        %870 = vxpose.binary.xlu0.c.b16.start [1/16] %v839, %v838, 128
        %871 = vxpose.binary.xlu0.c.b16.cont [2/16] %v843, %v842, 128
        %872 = vxpose.binary.xlu0.c.b16.cont [3/16] %v847, %v846, 128
        %873 = vxpose.binary.xlu0.c.b16.cont [4/16] %v851, %v850, 128
        %874 = vxpose.binary.xlu0.c.b16.cont [5/16] 0, 0, 128
        %875 = vxpose.binary.xlu0.c.b16.cont [6/16] 0, 0, 128
        %876 = vxpose.binary.xlu0.c.b16.cont [7/16] 0, 0, 128
        %877 = vxpose.binary.xlu0.c.b16.end [8/16] 0, 0, 128
        %v878 = vpop.trf.xlu0
        %v879 = vpop.trf.xlu0
        %v880 = vpop.trf.xlu0
        %v881 = vpop.trf.xlu0
        %v882 = vpop.trf.xlu0
        %v883 = vpop.trf.xlu0
        %v884 = vpop.trf.xlu0
        %v885 = vpop.trf.xlu0
        %v886 = vpop.trf.xlu0
        %v887 = vpop.trf.xlu0
        %v888 = vpop.trf.xlu0
        %v889 = vpop.trf.xlu0
        %v890 = vpop.trf.xlu0
        %v891 = vpop.trf.xlu0
        %v892 = vpop.trf.xlu0
        %v893 = vpop.trf.xlu0
        %894 = vxpose.binary.xlu0.c.b16.start [1/16] %v841, %v840, 128
        %895 = vxpose.binary.xlu0.c.b16.cont [2/16] %v845, %v844, 128
        %896 = vxpose.binary.xlu0.c.b16.cont [3/16] %v849, %v848, 128
        %897 = vxpose.binary.xlu0.c.b16.cont [4/16] %v853, %v852, 128
        %898 = vxpose.binary.xlu0.c.b16.cont [5/16] 0, 0, 128
        %899 = vxpose.binary.xlu0.c.b16.cont [6/16] 0, 0, 128
        %900 = vxpose.binary.xlu0.c.b16.cont [7/16] 0, 0, 128
        %901 = vxpose.binary.xlu0.c.b16.end [8/16] 0, 0, 128
        %v902 = vpop.trf.xlu0
        %v903 = vpop.trf.xlu0
        %v904 = vpop.trf.xlu0
        %v905 = vpop.trf.xlu0
        %v906 = vpop.trf.xlu0
        %v907 = vpop.trf.xlu0
        %v908 = vpop.trf.xlu0
        %v909 = vpop.trf.xlu0
        %v910 = vpop.trf.xlu0
        %v911 = vpop.trf.xlu0
        %v912 = vpop.trf.xlu0
        %v913 = vpop.trf.xlu0
        %v914 = vpop.trf.xlu0
        %v915 = vpop.trf.xlu0
        %v916 = vpop.trf.xlu0
        %v917 = vpop.trf.xlu0
        %v934 = vunpack.c.l.b16 %v758
        %v935 = vunpack.c.h.b16 %v758
        %v936 = vunpack.c.l.b16 %v759
        %v937 = vunpack.c.h.b16 %v759
        %v938 = vunpack.c.l.b16 %v760
        %v939 = vunpack.c.h.b16 %v760
        %v940 = vunpack.c.l.b16 %v761
        %v941 = vunpack.c.h.b16 %v761
        %v942 = vunpack.c.l.b16 %v762
        %v943 = vunpack.c.h.b16 %v762
        %v944 = vunpack.c.l.b16 %v763
        %v945 = vunpack.c.h.b16 %v763
        %v946 = vunpack.c.l.b16 %v764
        %v947 = vunpack.c.h.b16 %v764
        %v948 = vunpack.c.l.b16 %v765
        %v949 = vunpack.c.h.b16 %v765
        %v950 = vunpack.c.l.b16 %v766
        %v951 = vunpack.c.h.b16 %v766
        %v952 = vunpack.c.l.b16 %v767
        %v953 = vunpack.c.h.b16 %v767
        %v954 = vunpack.c.l.b16 %v768
        %v955 = vunpack.c.h.b16 %v768
        %v956 = vunpack.c.l.b16 %v769
        %v957 = vunpack.c.h.b16 %v769
        %v958 = vunpack.c.l.b16 %v770
        %v959 = vunpack.c.h.b16 %v770
        %v960 = vunpack.c.l.b16 %v771
        %v961 = vunpack.c.h.b16 %v771
        %v962 = vunpack.c.l.b16 %v772
        %v963 = vunpack.c.h.b16 %v772
        %v964 = vunpack.c.l.b16 %v773
        %v965 = vunpack.c.h.b16 %v773
        %v966 = vpack.c.b16 %v938, %v934
        %v967 = vpack.c.b16 %v939, %v935
        %v968 = vpack.c.b16 %v940, %v936
        %v969 = vpack.c.b16 %v941, %v937
        %v970 = vpack.c.b16 %v946, %v942
        %v971 = vpack.c.b16 %v947, %v943
        %v972 = vpack.c.b16 %v948, %v944
        %v973 = vpack.c.b16 %v949, %v945
        %v974 = vpack.c.b16 %v954, %v950
        %v975 = vpack.c.b16 %v955, %v951
        %v976 = vpack.c.b16 %v956, %v952
        %v977 = vpack.c.b16 %v957, %v953
        %v978 = vpack.c.b16 %v962, %v958
        %v979 = vpack.c.b16 %v963, %v959
        %v980 = vpack.c.b16 %v964, %v960
        %v981 = vpack.c.b16 %v965, %v961
        %vm998 = vcmask 523264
        %v1000 = vsel %vm998, %v878, 0
        %v1003 = vsel %vm998, %v880, 0
        %v1006 = vsel %vm998, %v882, 0
        %v1009 = vsel %vm998, %v884, 0
        %v1012 = vsel %vm998, %v886, 0
        %v1015 = vsel %vm998, %v888, 0
        %v1018 = vsel %vm998, %v890, 0
        %v1021 = vsel %vm998, %v892, 0
        %v1024 = vsel %vm998, %v879, 0
        %v1027 = vsel %vm998, %v881, 0
        %v1030 = vsel %vm998, %v883, 0
        %v1033 = vsel %vm998, %v885, 0
        %v1036 = vsel %vm998, %v887, 0
        %v1039 = vsel %vm998, %v889, 0
        %v1042 = vsel %vm998, %v891, 0
        %v1045 = vsel %vm998, %v893, 0
        %v1048 = vsel %vm998, %v902, 0
        %v1051 = vsel %vm998, %v904, 0
        %v1054 = vsel %vm998, %v906, 0
        %v1057 = vsel %vm998, %v908, 0
        %v1060 = vsel %vm998, %v910, 0
        %v1063 = vsel %vm998, %v912, 0
        %v1066 = vsel %vm998, %v914, 0
        %v1069 = vsel %vm998, %v916, 0
        %v1072 = vsel %vm998, %v903, 0
        %v1075 = vsel %vm998, %v905, 0
        %v1078 = vsel %vm998, %v907, 0
        %v1081 = vsel %vm998, %v909, 0
        %v1084 = vsel %vm998, %v911, 0
        %v1087 = vsel %vm998, %v913, 0
        %v1090 = vsel %vm998, %v915, 0
        %v1093 = vsel %vm998, %v917, 0
        %1095 = vmatpush.bf16.msra.mxu0 0
        %1096 = vmatpush.bf16.msra.mxu0 0
        %1097 = vmatpush.bf16.msra.mxu0 0
        %1098 = vmatpush.bf16.msra.mxu0 0
        %1099 = vmatpush.bf16.msra.mxu0 %v978
        %1100 = vmatpush.bf16.msra.mxu0 %v974
        %1101 = vmatpush.bf16.msra.mxu0 %v970
        %1102 = vmatpush.bf16.msra.mxu0 %v966
        %1103 = vmatmul.bf16.gmra.mxu0 %v1000
        %v1104 = vpop.f32.mrf.mxu0
        %v1105 = vadd.f32 0.0, %v1104
        %v1106 = vpop.f32.mrf.mxu0
        %v1107 = vadd.f32 0.0, %v1106
        %1108 = vmatmul.bf16.gmra.mxu0 %v1003
        %v1109 = vpop.f32.mrf.mxu0
        %v1110 = vadd.f32 0.0, %v1109
        %v1111 = vpop.f32.mrf.mxu0
        %v1112 = vadd.f32 0.0, %v1111
        %1113 = vmatmul.bf16.gmra.mxu0 %v1006
        %v1114 = vpop.f32.mrf.mxu0
        %v1115 = vadd.f32 0.0, %v1114
        %v1116 = vpop.f32.mrf.mxu0
        %v1117 = vadd.f32 0.0, %v1116
        %1118 = vmatmul.bf16.gmra.mxu0 %v1009
        %v1119 = vpop.f32.mrf.mxu0
        %v1120 = vadd.f32 0.0, %v1119
        %v1121 = vpop.f32.mrf.mxu0
        %v1122 = vadd.f32 0.0, %v1121
        %1123 = vmatmul.bf16.gmra.mxu0 %v1012
        %v1124 = vpop.f32.mrf.mxu0
        %v1125 = vadd.f32 0.0, %v1124
        %v1126 = vpop.f32.mrf.mxu0
        %v1127 = vadd.f32 0.0, %v1126
        %1128 = vmatmul.bf16.gmra.mxu0 %v1015
        %v1129 = vpop.f32.mrf.mxu0
        %v1130 = vadd.f32 0.0, %v1129
        %v1131 = vpop.f32.mrf.mxu0
        %v1132 = vadd.f32 0.0, %v1131
        %1133 = vmatmul.bf16.gmra.mxu0 %v1018
        %v1134 = vpop.f32.mrf.mxu0
        %v1135 = vadd.f32 0.0, %v1134
        %v1136 = vpop.f32.mrf.mxu0
        %v1137 = vadd.f32 0.0, %v1136
        %1138 = vmatmul.bf16.gmra.mxu0 %v1021
        %v1139 = vpop.f32.mrf.mxu0
        %v1140 = vadd.f32 0.0, %v1139
        %v1141 = vpop.f32.mrf.mxu0
        %v1142 = vadd.f32 0.0, %v1141
        %1143 = vmatmul.bf16.gmra.mxu0 %v1024
        %v1144 = vpop.f32.mrf.mxu0
        %v1145 = vadd.f32 0.0, %v1144
        %v1146 = vpop.f32.mrf.mxu0
        %v1147 = vadd.f32 0.0, %v1146
        %1148 = vmatmul.bf16.gmra.mxu0 %v1027
        %v1149 = vpop.f32.mrf.mxu0
        %v1150 = vadd.f32 0.0, %v1149
        %v1151 = vpop.f32.mrf.mxu0
        %v1152 = vadd.f32 0.0, %v1151
        %1153 = vmatmul.bf16.gmra.mxu0 %v1030
        %v1154 = vpop.f32.mrf.mxu0
        %v1155 = vadd.f32 0.0, %v1154
        %v1156 = vpop.f32.mrf.mxu0
        %v1157 = vadd.f32 0.0, %v1156
        %1158 = vmatmul.bf16.gmra.mxu0 %v1033
        %v1159 = vpop.f32.mrf.mxu0
        %v1160 = vadd.f32 0.0, %v1159
        %v1161 = vpop.f32.mrf.mxu0
        %v1162 = vadd.f32 0.0, %v1161
        %1163 = vmatmul.bf16.gmra.mxu0 %v1036
        %v1164 = vpop.f32.mrf.mxu0
        %v1165 = vadd.f32 0.0, %v1164
        %v1166 = vpop.f32.mrf.mxu0
        %v1167 = vadd.f32 0.0, %v1166
        %1168 = vmatmul.bf16.gmra.mxu0 %v1039
        %v1169 = vpop.f32.mrf.mxu0
        %v1170 = vadd.f32 0.0, %v1169
        %v1171 = vpop.f32.mrf.mxu0
        %v1172 = vadd.f32 0.0, %v1171
        %1173 = vmatmul.bf16.gmra.mxu0 %v1042
        %v1174 = vpop.f32.mrf.mxu0
        %v1175 = vadd.f32 0.0, %v1174
        %v1176 = vpop.f32.mrf.mxu0
        %v1177 = vadd.f32 0.0, %v1176
        %1178 = vmatmul.bf16.gmra.mxu0 %v1045
        %v1179 = vpop.f32.mrf.mxu0
        %v1180 = vadd.f32 0.0, %v1179
        %v1181 = vpop.f32.mrf.mxu0
        %v1182 = vadd.f32 0.0, %v1181
        %1183 = vmatmul.bf16.gmra.mxu0 %v1048
        %v1184 = vpop.f32.mrf.mxu0
        %v1185 = vadd.f32 0.0, %v1184
        %v1186 = vpop.f32.mrf.mxu0
        %v1187 = vadd.f32 0.0, %v1186
        %1188 = vmatmul.bf16.gmra.mxu0 %v1051
        %v1189 = vpop.f32.mrf.mxu0
        %v1190 = vadd.f32 0.0, %v1189
        %v1191 = vpop.f32.mrf.mxu0
        %v1192 = vadd.f32 0.0, %v1191
        %1193 = vmatmul.bf16.gmra.mxu0 %v1054
        %v1194 = vpop.f32.mrf.mxu0
        %v1195 = vadd.f32 0.0, %v1194
        %v1196 = vpop.f32.mrf.mxu0
        %v1197 = vadd.f32 0.0, %v1196
        %1198 = vmatmul.bf16.gmra.mxu0 %v1057
        %v1199 = vpop.f32.mrf.mxu0
        %v1200 = vadd.f32 0.0, %v1199
        %v1201 = vpop.f32.mrf.mxu0
        %v1202 = vadd.f32 0.0, %v1201
        %1203 = vmatmul.bf16.gmra.mxu0 %v1060
        %v1204 = vpop.f32.mrf.mxu0
        %v1205 = vadd.f32 0.0, %v1204
        %v1206 = vpop.f32.mrf.mxu0
        %v1207 = vadd.f32 0.0, %v1206
        %1208 = vmatmul.bf16.gmra.mxu0 %v1063
        %v1209 = vpop.f32.mrf.mxu0
        %v1210 = vadd.f32 0.0, %v1209
        %v1211 = vpop.f32.mrf.mxu0
        %v1212 = vadd.f32 0.0, %v1211
        %1213 = vmatmul.bf16.gmra.mxu0 %v1066
        %v1214 = vpop.f32.mrf.mxu0
        %v1215 = vadd.f32 0.0, %v1214
        %v1216 = vpop.f32.mrf.mxu0
        %v1217 = vadd.f32 0.0, %v1216
        %1218 = vmatmul.bf16.gmra.mxu0 %v1069
        %v1219 = vpop.f32.mrf.mxu0
        %v1220 = vadd.f32 0.0, %v1219
        %v1221 = vpop.f32.mrf.mxu0
        %v1222 = vadd.f32 0.0, %v1221
        %1223 = vmatmul.bf16.gmra.mxu0 %v1072
        %v1224 = vpop.f32.mrf.mxu0
        %v1225 = vadd.f32 0.0, %v1224
        %v1226 = vpop.f32.mrf.mxu0
        %v1227 = vadd.f32 0.0, %v1226
        %1228 = vmatmul.bf16.gmra.mxu0 %v1075
        %v1229 = vpop.f32.mrf.mxu0
        %v1230 = vadd.f32 0.0, %v1229
        %v1231 = vpop.f32.mrf.mxu0
        %v1232 = vadd.f32 0.0, %v1231
        %1233 = vmatmul.bf16.gmra.mxu0 %v1078
        %v1234 = vpop.f32.mrf.mxu0
        %v1235 = vadd.f32 0.0, %v1234
        %v1236 = vpop.f32.mrf.mxu0
        %v1237 = vadd.f32 0.0, %v1236
        %1238 = vmatmul.bf16.gmra.mxu0 %v1081
        %v1239 = vpop.f32.mrf.mxu0
        %v1240 = vadd.f32 0.0, %v1239
        %v1241 = vpop.f32.mrf.mxu0
        %v1242 = vadd.f32 0.0, %v1241
        %1243 = vmatmul.bf16.gmra.mxu0 %v1084
        %v1244 = vpop.f32.mrf.mxu0
        %v1245 = vadd.f32 0.0, %v1244
        %v1246 = vpop.f32.mrf.mxu0
        %v1247 = vadd.f32 0.0, %v1246
        %1248 = vmatmul.bf16.gmra.mxu0 %v1087
        %v1249 = vpop.f32.mrf.mxu0
        %v1250 = vadd.f32 0.0, %v1249
        %v1251 = vpop.f32.mrf.mxu0
        %v1252 = vadd.f32 0.0, %v1251
        %1253 = vmatmul.bf16.gmra.mxu0 %v1090
        %v1254 = vpop.f32.mrf.mxu0
        %v1255 = vadd.f32 0.0, %v1254
        %v1256 = vpop.f32.mrf.mxu0
        %v1257 = vadd.f32 0.0, %v1256
        %1258 = vmatmul.bf16.gmra.mxu0 %v1093
        %v1259 = vpop.f32.mrf.mxu0
        %v1260 = vadd.f32 0.0, %v1259
        %v1261 = vpop.f32.mrf.mxu0
        %v1262 = vadd.f32 0.0, %v1261
        %1263 = vdwg.mxu0
        %1264 = vmatpush.bf16.msra.mxu0 0
        %1265 = vmatpush.bf16.msra.mxu0 0
        %1266 = vmatpush.bf16.msra.mxu0 0
        %1267 = vmatpush.bf16.msra.mxu0 0
        %1268 = vmatpush.bf16.msra.mxu0 %v979
        %1269 = vmatpush.bf16.msra.mxu0 %v975
        %1270 = vmatpush.bf16.msra.mxu0 %v971
        %1271 = vmatpush.bf16.msra.mxu0 %v967
        %1272 = vmatmul.bf16.gmra.mxu0 %v1000
        %v1273 = vpop.f32.mrf.mxu0
        %v1274 = vadd.f32 0.0, %v1273
        %v1275 = vpop.f32.mrf.mxu0
        %v1276 = vadd.f32 0.0, %v1275
        %1277 = vmatmul.bf16.gmra.mxu0 %v1003
        %v1278 = vpop.f32.mrf.mxu0
        %v1279 = vadd.f32 0.0, %v1278
        %v1280 = vpop.f32.mrf.mxu0
        %v1281 = vadd.f32 0.0, %v1280
        %1282 = vmatmul.bf16.gmra.mxu0 %v1006
        %v1283 = vpop.f32.mrf.mxu0
        %v1284 = vadd.f32 0.0, %v1283
        %v1285 = vpop.f32.mrf.mxu0
        %v1286 = vadd.f32 0.0, %v1285
        %1287 = vmatmul.bf16.gmra.mxu0 %v1009
        %v1288 = vpop.f32.mrf.mxu0
        %v1289 = vadd.f32 0.0, %v1288
        %v1290 = vpop.f32.mrf.mxu0
        %v1291 = vadd.f32 0.0, %v1290
        %1292 = vmatmul.bf16.gmra.mxu0 %v1012
        %v1293 = vpop.f32.mrf.mxu0
        %v1294 = vadd.f32 0.0, %v1293
        %v1295 = vpop.f32.mrf.mxu0
        %v1296 = vadd.f32 0.0, %v1295
        %1297 = vmatmul.bf16.gmra.mxu0 %v1015
        %v1298 = vpop.f32.mrf.mxu0
        %v1299 = vadd.f32 0.0, %v1298
        %v1300 = vpop.f32.mrf.mxu0
        %v1301 = vadd.f32 0.0, %v1300
        %1302 = vmatmul.bf16.gmra.mxu0 %v1018
        %v1303 = vpop.f32.mrf.mxu0
        %v1304 = vadd.f32 0.0, %v1303
        %v1305 = vpop.f32.mrf.mxu0
        %v1306 = vadd.f32 0.0, %v1305
        %1307 = vmatmul.bf16.gmra.mxu0 %v1021
        %v1308 = vpop.f32.mrf.mxu0
        %v1309 = vadd.f32 0.0, %v1308
        %v1310 = vpop.f32.mrf.mxu0
        %v1311 = vadd.f32 0.0, %v1310
        %1312 = vmatmul.bf16.gmra.mxu0 %v1024
        %v1313 = vpop.f32.mrf.mxu0
        %v1314 = vadd.f32 0.0, %v1313
        %v1315 = vpop.f32.mrf.mxu0
        %v1316 = vadd.f32 0.0, %v1315
        %1317 = vmatmul.bf16.gmra.mxu0 %v1027
        %v1318 = vpop.f32.mrf.mxu0
        %v1319 = vadd.f32 0.0, %v1318
        %v1320 = vpop.f32.mrf.mxu0
        %v1321 = vadd.f32 0.0, %v1320
        %1322 = vmatmul.bf16.gmra.mxu0 %v1030
        %v1323 = vpop.f32.mrf.mxu0
        %v1324 = vadd.f32 0.0, %v1323
        %v1325 = vpop.f32.mrf.mxu0
        %v1326 = vadd.f32 0.0, %v1325
        %1327 = vmatmul.bf16.gmra.mxu0 %v1033
        %v1328 = vpop.f32.mrf.mxu0
        %v1329 = vadd.f32 0.0, %v1328
        %v1330 = vpop.f32.mrf.mxu0
        %v1331 = vadd.f32 0.0, %v1330
        %1332 = vmatmul.bf16.gmra.mxu0 %v1036
        %v1333 = vpop.f32.mrf.mxu0
        %v1334 = vadd.f32 0.0, %v1333
        %v1335 = vpop.f32.mrf.mxu0
        %v1336 = vadd.f32 0.0, %v1335
        %1337 = vmatmul.bf16.gmra.mxu0 %v1039
        %v1338 = vpop.f32.mrf.mxu0
        %v1339 = vadd.f32 0.0, %v1338
        %v1340 = vpop.f32.mrf.mxu0
        %v1341 = vadd.f32 0.0, %v1340
        %1342 = vmatmul.bf16.gmra.mxu0 %v1042
        %v1343 = vpop.f32.mrf.mxu0
        %v1344 = vadd.f32 0.0, %v1343
        %v1345 = vpop.f32.mrf.mxu0
        %v1346 = vadd.f32 0.0, %v1345
        %1347 = vmatmul.bf16.gmra.mxu0 %v1045
        %v1348 = vpop.f32.mrf.mxu0
        %v1349 = vadd.f32 0.0, %v1348
        %v1350 = vpop.f32.mrf.mxu0
        %v1351 = vadd.f32 0.0, %v1350
        %1352 = vmatmul.bf16.gmra.mxu0 %v1048
        %v1353 = vpop.f32.mrf.mxu0
        %v1354 = vadd.f32 0.0, %v1353
        %v1355 = vpop.f32.mrf.mxu0
        %v1356 = vadd.f32 0.0, %v1355
        %1357 = vmatmul.bf16.gmra.mxu0 %v1051
        %v1358 = vpop.f32.mrf.mxu0
        %v1359 = vadd.f32 0.0, %v1358
        %v1360 = vpop.f32.mrf.mxu0
        %v1361 = vadd.f32 0.0, %v1360
        %1362 = vmatmul.bf16.gmra.mxu0 %v1054
        %v1363 = vpop.f32.mrf.mxu0
        %v1364 = vadd.f32 0.0, %v1363
        %v1365 = vpop.f32.mrf.mxu0
        %v1366 = vadd.f32 0.0, %v1365
        %1367 = vmatmul.bf16.gmra.mxu0 %v1057
        %v1368 = vpop.f32.mrf.mxu0
        %v1369 = vadd.f32 0.0, %v1368
        %v1370 = vpop.f32.mrf.mxu0
        %v1371 = vadd.f32 0.0, %v1370
        %1372 = vmatmul.bf16.gmra.mxu0 %v1060
        %v1373 = vpop.f32.mrf.mxu0
        %v1374 = vadd.f32 0.0, %v1373
        %v1375 = vpop.f32.mrf.mxu0
        %v1376 = vadd.f32 0.0, %v1375
        %1377 = vmatmul.bf16.gmra.mxu0 %v1063
        %v1378 = vpop.f32.mrf.mxu0
        %v1379 = vadd.f32 0.0, %v1378
        %v1380 = vpop.f32.mrf.mxu0
        %v1381 = vadd.f32 0.0, %v1380
        %1382 = vmatmul.bf16.gmra.mxu0 %v1066
        %v1383 = vpop.f32.mrf.mxu0
        %v1384 = vadd.f32 0.0, %v1383
        %v1385 = vpop.f32.mrf.mxu0
        %v1386 = vadd.f32 0.0, %v1385
        %1387 = vmatmul.bf16.gmra.mxu0 %v1069
        %v1388 = vpop.f32.mrf.mxu0
        %v1389 = vadd.f32 0.0, %v1388
        %v1390 = vpop.f32.mrf.mxu0
        %v1391 = vadd.f32 0.0, %v1390
        %1392 = vmatmul.bf16.gmra.mxu0 %v1072
        %v1393 = vpop.f32.mrf.mxu0
        %v1394 = vadd.f32 0.0, %v1393
        %v1395 = vpop.f32.mrf.mxu0
        %v1396 = vadd.f32 0.0, %v1395
        %1397 = vmatmul.bf16.gmra.mxu0 %v1075
        %v1398 = vpop.f32.mrf.mxu0
        %v1399 = vadd.f32 0.0, %v1398
        %v1400 = vpop.f32.mrf.mxu0
        %v1401 = vadd.f32 0.0, %v1400
        %1402 = vmatmul.bf16.gmra.mxu0 %v1078
        %v1403 = vpop.f32.mrf.mxu0
        %v1404 = vadd.f32 0.0, %v1403
        %v1405 = vpop.f32.mrf.mxu0
        %v1406 = vadd.f32 0.0, %v1405
        %1407 = vmatmul.bf16.gmra.mxu0 %v1081
        %v1408 = vpop.f32.mrf.mxu0
        %v1409 = vadd.f32 0.0, %v1408
        %v1410 = vpop.f32.mrf.mxu0
        %v1411 = vadd.f32 0.0, %v1410
        %1412 = vmatmul.bf16.gmra.mxu0 %v1084
        %v1413 = vpop.f32.mrf.mxu0
        %v1414 = vadd.f32 0.0, %v1413
        %v1415 = vpop.f32.mrf.mxu0
        %v1416 = vadd.f32 0.0, %v1415
        %1417 = vmatmul.bf16.gmra.mxu0 %v1087
        %v1418 = vpop.f32.mrf.mxu0
        %v1419 = vadd.f32 0.0, %v1418
        %v1420 = vpop.f32.mrf.mxu0
        %v1421 = vadd.f32 0.0, %v1420
        %1422 = vmatmul.bf16.gmra.mxu0 %v1090
        %v1423 = vpop.f32.mrf.mxu0
        %v1424 = vadd.f32 0.0, %v1423
        %v1425 = vpop.f32.mrf.mxu0
        %v1426 = vadd.f32 0.0, %v1425
        %1427 = vmatmul.bf16.gmra.mxu0 %v1093
        %v1428 = vpop.f32.mrf.mxu0
        %v1429 = vadd.f32 0.0, %v1428
        %v1430 = vpop.f32.mrf.mxu0
        %v1431 = vadd.f32 0.0, %v1430
        %1432 = vdwg.mxu0
        %1433 = vmatpush.bf16.msra.mxu0 0
        %1434 = vmatpush.bf16.msra.mxu0 0
        %1435 = vmatpush.bf16.msra.mxu0 0
        %1436 = vmatpush.bf16.msra.mxu0 0
        %1437 = vmatpush.bf16.msra.mxu0 %v980
        %1438 = vmatpush.bf16.msra.mxu0 %v976
        %1439 = vmatpush.bf16.msra.mxu0 %v972
        %1440 = vmatpush.bf16.msra.mxu0 %v968
        %1441 = vmatmul.bf16.gmra.mxu0 %v1000
        %v1442 = vpop.f32.mrf.mxu0
        %v1443 = vadd.f32 0.0, %v1442
        %v1444 = vpop.f32.mrf.mxu0
        %v1445 = vadd.f32 0.0, %v1444
        %1446 = vmatmul.bf16.gmra.mxu0 %v1003
        %v1447 = vpop.f32.mrf.mxu0
        %v1448 = vadd.f32 0.0, %v1447
        %v1449 = vpop.f32.mrf.mxu0
        %v1450 = vadd.f32 0.0, %v1449
        %1451 = vmatmul.bf16.gmra.mxu0 %v1006
        %v1452 = vpop.f32.mrf.mxu0
        %v1453 = vadd.f32 0.0, %v1452
        %v1454 = vpop.f32.mrf.mxu0
        %v1455 = vadd.f32 0.0, %v1454
        %1456 = vmatmul.bf16.gmra.mxu0 %v1009
        %v1457 = vpop.f32.mrf.mxu0
        %v1458 = vadd.f32 0.0, %v1457
        %v1459 = vpop.f32.mrf.mxu0
        %v1460 = vadd.f32 0.0, %v1459
        %1461 = vmatmul.bf16.gmra.mxu0 %v1012
        %v1462 = vpop.f32.mrf.mxu0
        %v1463 = vadd.f32 0.0, %v1462
        %v1464 = vpop.f32.mrf.mxu0
        %v1465 = vadd.f32 0.0, %v1464
        %1466 = vmatmul.bf16.gmra.mxu0 %v1015
        %v1467 = vpop.f32.mrf.mxu0
        %v1468 = vadd.f32 0.0, %v1467
        %v1469 = vpop.f32.mrf.mxu0
        %v1470 = vadd.f32 0.0, %v1469
        %1471 = vmatmul.bf16.gmra.mxu0 %v1018
        %v1472 = vpop.f32.mrf.mxu0
        %v1473 = vadd.f32 0.0, %v1472
        %v1474 = vpop.f32.mrf.mxu0
        %v1475 = vadd.f32 0.0, %v1474
        %1476 = vmatmul.bf16.gmra.mxu0 %v1021
        %v1477 = vpop.f32.mrf.mxu0
        %v1478 = vadd.f32 0.0, %v1477
        %v1479 = vpop.f32.mrf.mxu0
        %v1480 = vadd.f32 0.0, %v1479
        %1481 = vmatmul.bf16.gmra.mxu0 %v1024
        %v1482 = vpop.f32.mrf.mxu0
        %v1483 = vadd.f32 0.0, %v1482
        %v1484 = vpop.f32.mrf.mxu0
        %v1485 = vadd.f32 0.0, %v1484
        %1486 = vmatmul.bf16.gmra.mxu0 %v1027
        %v1487 = vpop.f32.mrf.mxu0
        %v1488 = vadd.f32 0.0, %v1487
        %v1489 = vpop.f32.mrf.mxu0
        %v1490 = vadd.f32 0.0, %v1489
        %1491 = vmatmul.bf16.gmra.mxu0 %v1030
        %v1492 = vpop.f32.mrf.mxu0
        %v1493 = vadd.f32 0.0, %v1492
        %v1494 = vpop.f32.mrf.mxu0
        %v1495 = vadd.f32 0.0, %v1494
        %1496 = vmatmul.bf16.gmra.mxu0 %v1033
        %v1497 = vpop.f32.mrf.mxu0
        %v1498 = vadd.f32 0.0, %v1497
        %v1499 = vpop.f32.mrf.mxu0
        %v1500 = vadd.f32 0.0, %v1499
        %1501 = vmatmul.bf16.gmra.mxu0 %v1036
        %v1502 = vpop.f32.mrf.mxu0
        %v1503 = vadd.f32 0.0, %v1502
        %v1504 = vpop.f32.mrf.mxu0
        %v1505 = vadd.f32 0.0, %v1504
        %1506 = vmatmul.bf16.gmra.mxu0 %v1039
        %v1507 = vpop.f32.mrf.mxu0
        %v1508 = vadd.f32 0.0, %v1507
        %v1509 = vpop.f32.mrf.mxu0
        %v1510 = vadd.f32 0.0, %v1509
        %1511 = vmatmul.bf16.gmra.mxu0 %v1042
        %v1512 = vpop.f32.mrf.mxu0
        %v1513 = vadd.f32 0.0, %v1512
        %v1514 = vpop.f32.mrf.mxu0
        %v1515 = vadd.f32 0.0, %v1514
        %1516 = vmatmul.bf16.gmra.mxu0 %v1045
        %v1517 = vpop.f32.mrf.mxu0
        %v1518 = vadd.f32 0.0, %v1517
        %v1519 = vpop.f32.mrf.mxu0
        %v1520 = vadd.f32 0.0, %v1519
        %1521 = vmatmul.bf16.gmra.mxu0 %v1048
        %v1522 = vpop.f32.mrf.mxu0
        %v1523 = vadd.f32 0.0, %v1522
        %v1524 = vpop.f32.mrf.mxu0
        %v1525 = vadd.f32 0.0, %v1524
        %1526 = vmatmul.bf16.gmra.mxu0 %v1051
        %v1527 = vpop.f32.mrf.mxu0
        %v1528 = vadd.f32 0.0, %v1527
        %v1529 = vpop.f32.mrf.mxu0
        %v1530 = vadd.f32 0.0, %v1529
        %1531 = vmatmul.bf16.gmra.mxu0 %v1054
        %v1532 = vpop.f32.mrf.mxu0
        %v1533 = vadd.f32 0.0, %v1532
        %v1534 = vpop.f32.mrf.mxu0
        %v1535 = vadd.f32 0.0, %v1534
        %1536 = vmatmul.bf16.gmra.mxu0 %v1057
        %v1537 = vpop.f32.mrf.mxu0
        %v1538 = vadd.f32 0.0, %v1537
        %v1539 = vpop.f32.mrf.mxu0
        %v1540 = vadd.f32 0.0, %v1539
        %1541 = vmatmul.bf16.gmra.mxu0 %v1060
        %v1542 = vpop.f32.mrf.mxu0
        %v1543 = vadd.f32 0.0, %v1542
        %v1544 = vpop.f32.mrf.mxu0
        %v1545 = vadd.f32 0.0, %v1544
        %1546 = vmatmul.bf16.gmra.mxu0 %v1063
        %v1547 = vpop.f32.mrf.mxu0
        %v1548 = vadd.f32 0.0, %v1547
        %v1549 = vpop.f32.mrf.mxu0
        %v1550 = vadd.f32 0.0, %v1549
        %1551 = vmatmul.bf16.gmra.mxu0 %v1066
        %v1552 = vpop.f32.mrf.mxu0
        %v1553 = vadd.f32 0.0, %v1552
        %v1554 = vpop.f32.mrf.mxu0
        %v1555 = vadd.f32 0.0, %v1554
        %1556 = vmatmul.bf16.gmra.mxu0 %v1069
        %v1557 = vpop.f32.mrf.mxu0
        %v1558 = vadd.f32 0.0, %v1557
        %v1559 = vpop.f32.mrf.mxu0
        %v1560 = vadd.f32 0.0, %v1559
        %1561 = vmatmul.bf16.gmra.mxu0 %v1072
        %v1562 = vpop.f32.mrf.mxu0
        %v1563 = vadd.f32 0.0, %v1562
        %v1564 = vpop.f32.mrf.mxu0
        %v1565 = vadd.f32 0.0, %v1564
        %1566 = vmatmul.bf16.gmra.mxu0 %v1075
        %v1567 = vpop.f32.mrf.mxu0
        %v1568 = vadd.f32 0.0, %v1567
        %v1569 = vpop.f32.mrf.mxu0
        %v1570 = vadd.f32 0.0, %v1569
        %1571 = vmatmul.bf16.gmra.mxu0 %v1078
        %v1572 = vpop.f32.mrf.mxu0
        %v1573 = vadd.f32 0.0, %v1572
        %v1574 = vpop.f32.mrf.mxu0
        %v1575 = vadd.f32 0.0, %v1574
        %1576 = vmatmul.bf16.gmra.mxu0 %v1081
        %v1577 = vpop.f32.mrf.mxu0
        %v1578 = vadd.f32 0.0, %v1577
        %v1579 = vpop.f32.mrf.mxu0
        %v1580 = vadd.f32 0.0, %v1579
        %1581 = vmatmul.bf16.gmra.mxu0 %v1084
        %v1582 = vpop.f32.mrf.mxu0
        %v1583 = vadd.f32 0.0, %v1582
        %v1584 = vpop.f32.mrf.mxu0
        %v1585 = vadd.f32 0.0, %v1584
        %1586 = vmatmul.bf16.gmra.mxu0 %v1087
        %v1587 = vpop.f32.mrf.mxu0
        %v1588 = vadd.f32 0.0, %v1587
        %v1589 = vpop.f32.mrf.mxu0
        %v1590 = vadd.f32 0.0, %v1589
        %1591 = vmatmul.bf16.gmra.mxu0 %v1090
        %v1592 = vpop.f32.mrf.mxu0
        %v1593 = vadd.f32 0.0, %v1592
        %v1594 = vpop.f32.mrf.mxu0
        %v1595 = vadd.f32 0.0, %v1594
        %1596 = vmatmul.bf16.gmra.mxu0 %v1093
        %v1597 = vpop.f32.mrf.mxu0
        %v1598 = vadd.f32 0.0, %v1597
        %v1599 = vpop.f32.mrf.mxu0
        %v1600 = vadd.f32 0.0, %v1599
        %1601 = vdwg.mxu0
        %1602 = vmatpush.bf16.msra.mxu0 0
        %1603 = vmatpush.bf16.msra.mxu0 0
        %1604 = vmatpush.bf16.msra.mxu0 0
        %1605 = vmatpush.bf16.msra.mxu0 0
        %1606 = vmatpush.bf16.msra.mxu0 %v981
        %1607 = vmatpush.bf16.msra.mxu0 %v977
        %1608 = vmatpush.bf16.msra.mxu0 %v973
        %1609 = vmatpush.bf16.msra.mxu0 %v969
        %1610 = vmatmul.bf16.gmra.mxu0 %v1000
        %v1611 = vpop.f32.mrf.mxu0
        %v1612 = vadd.f32 0.0, %v1611
        %v1613 = vpop.f32.mrf.mxu0
        %v1614 = vadd.f32 0.0, %v1613
        %1615 = vmatmul.bf16.gmra.mxu0 %v1003
        %v1616 = vpop.f32.mrf.mxu0
        %v1617 = vadd.f32 0.0, %v1616
        %v1618 = vpop.f32.mrf.mxu0
        %v1619 = vadd.f32 0.0, %v1618
        %1620 = vmatmul.bf16.gmra.mxu0 %v1006
        %v1621 = vpop.f32.mrf.mxu0
        %v1622 = vadd.f32 0.0, %v1621
        %v1623 = vpop.f32.mrf.mxu0
        %v1624 = vadd.f32 0.0, %v1623
        %1625 = vmatmul.bf16.gmra.mxu0 %v1009
        %v1626 = vpop.f32.mrf.mxu0
        %v1627 = vadd.f32 0.0, %v1626
        %v1628 = vpop.f32.mrf.mxu0
        %v1629 = vadd.f32 0.0, %v1628
        %1630 = vmatmul.bf16.gmra.mxu0 %v1012
        %v1631 = vpop.f32.mrf.mxu0
        %v1632 = vadd.f32 0.0, %v1631
        %v1633 = vpop.f32.mrf.mxu0
        %v1634 = vadd.f32 0.0, %v1633
        %1635 = vmatmul.bf16.gmra.mxu0 %v1015
        %v1636 = vpop.f32.mrf.mxu0
        %v1637 = vadd.f32 0.0, %v1636
        %v1638 = vpop.f32.mrf.mxu0
        %v1639 = vadd.f32 0.0, %v1638
        %1640 = vmatmul.bf16.gmra.mxu0 %v1018
        %v1641 = vpop.f32.mrf.mxu0
        %v1642 = vadd.f32 0.0, %v1641
        %v1643 = vpop.f32.mrf.mxu0
        %v1644 = vadd.f32 0.0, %v1643
        %1645 = vmatmul.bf16.gmra.mxu0 %v1021
        %v1646 = vpop.f32.mrf.mxu0
        %v1647 = vadd.f32 0.0, %v1646
        %v1648 = vpop.f32.mrf.mxu0
        %v1649 = vadd.f32 0.0, %v1648
        %1650 = vmatmul.bf16.gmra.mxu0 %v1024
        %v1651 = vpop.f32.mrf.mxu0
        %v1652 = vadd.f32 0.0, %v1651
        %v1653 = vpop.f32.mrf.mxu0
        %v1654 = vadd.f32 0.0, %v1653
        %1655 = vmatmul.bf16.gmra.mxu0 %v1027
        %v1656 = vpop.f32.mrf.mxu0
        %v1657 = vadd.f32 0.0, %v1656
        %v1658 = vpop.f32.mrf.mxu0
        %v1659 = vadd.f32 0.0, %v1658
        %1660 = vmatmul.bf16.gmra.mxu0 %v1030
        %v1661 = vpop.f32.mrf.mxu0
        %v1662 = vadd.f32 0.0, %v1661
        %v1663 = vpop.f32.mrf.mxu0
        %v1664 = vadd.f32 0.0, %v1663
        %1665 = vmatmul.bf16.gmra.mxu0 %v1033
        %v1666 = vpop.f32.mrf.mxu0
        %v1667 = vadd.f32 0.0, %v1666
        %v1668 = vpop.f32.mrf.mxu0
        %v1669 = vadd.f32 0.0, %v1668
        %1670 = vmatmul.bf16.gmra.mxu0 %v1036
        %v1671 = vpop.f32.mrf.mxu0
        %v1672 = vadd.f32 0.0, %v1671
        %v1673 = vpop.f32.mrf.mxu0
        %v1674 = vadd.f32 0.0, %v1673
        %1675 = vmatmul.bf16.gmra.mxu0 %v1039
        %v1676 = vpop.f32.mrf.mxu0
        %v1677 = vadd.f32 0.0, %v1676
        %v1678 = vpop.f32.mrf.mxu0
        %v1679 = vadd.f32 0.0, %v1678
        %1680 = vmatmul.bf16.gmra.mxu0 %v1042
        %v1681 = vpop.f32.mrf.mxu0
        %v1682 = vadd.f32 0.0, %v1681
        %v1683 = vpop.f32.mrf.mxu0
        %v1684 = vadd.f32 0.0, %v1683
        %1685 = vmatmul.bf16.gmra.mxu0 %v1045
        %v1686 = vpop.f32.mrf.mxu0
        %v1687 = vadd.f32 0.0, %v1686
        %v1688 = vpop.f32.mrf.mxu0
        %v1689 = vadd.f32 0.0, %v1688
        %1690 = vmatmul.bf16.gmra.mxu0 %v1048
        %v1691 = vpop.f32.mrf.mxu0
        %v1692 = vadd.f32 0.0, %v1691
        %v1693 = vpop.f32.mrf.mxu0
        %v1694 = vadd.f32 0.0, %v1693
        %1695 = vmatmul.bf16.gmra.mxu0 %v1051
        %v1696 = vpop.f32.mrf.mxu0
        %v1697 = vadd.f32 0.0, %v1696
        %v1698 = vpop.f32.mrf.mxu0
        %v1699 = vadd.f32 0.0, %v1698
        %1700 = vmatmul.bf16.gmra.mxu0 %v1054
        %v1701 = vpop.f32.mrf.mxu0
        %v1702 = vadd.f32 0.0, %v1701
        %v1703 = vpop.f32.mrf.mxu0
        %v1704 = vadd.f32 0.0, %v1703
        %1705 = vmatmul.bf16.gmra.mxu0 %v1057
        %v1706 = vpop.f32.mrf.mxu0
        %v1707 = vadd.f32 0.0, %v1706
        %v1708 = vpop.f32.mrf.mxu0
        %v1709 = vadd.f32 0.0, %v1708
        %1710 = vmatmul.bf16.gmra.mxu0 %v1060
        %v1711 = vpop.f32.mrf.mxu0
        %v1712 = vadd.f32 0.0, %v1711
        %v1713 = vpop.f32.mrf.mxu0
        %v1714 = vadd.f32 0.0, %v1713
        %1715 = vmatmul.bf16.gmra.mxu0 %v1063
        %v1716 = vpop.f32.mrf.mxu0
        %v1717 = vadd.f32 0.0, %v1716
        %v1718 = vpop.f32.mrf.mxu0
        %v1719 = vadd.f32 0.0, %v1718
        %1720 = vmatmul.bf16.gmra.mxu0 %v1066
        %v1721 = vpop.f32.mrf.mxu0
        %v1722 = vadd.f32 0.0, %v1721
        %v1723 = vpop.f32.mrf.mxu0
        %v1724 = vadd.f32 0.0, %v1723
        %1725 = vmatmul.bf16.gmra.mxu0 %v1069
        %v1726 = vpop.f32.mrf.mxu0
        %v1727 = vadd.f32 0.0, %v1726
        %v1728 = vpop.f32.mrf.mxu0
        %v1729 = vadd.f32 0.0, %v1728
        %1730 = vmatmul.bf16.gmra.mxu0 %v1072
        %v1731 = vpop.f32.mrf.mxu0
        %v1732 = vadd.f32 0.0, %v1731
        %v1733 = vpop.f32.mrf.mxu0
        %v1734 = vadd.f32 0.0, %v1733
        %1735 = vmatmul.bf16.gmra.mxu0 %v1075
        %v1736 = vpop.f32.mrf.mxu0
        %v1737 = vadd.f32 0.0, %v1736
        %v1738 = vpop.f32.mrf.mxu0
        %v1739 = vadd.f32 0.0, %v1738
        %1740 = vmatmul.bf16.gmra.mxu0 %v1078
        %v1741 = vpop.f32.mrf.mxu0
        %v1742 = vadd.f32 0.0, %v1741
        %v1743 = vpop.f32.mrf.mxu0
        %v1744 = vadd.f32 0.0, %v1743
        %1745 = vmatmul.bf16.gmra.mxu0 %v1081
        %v1746 = vpop.f32.mrf.mxu0
        %v1747 = vadd.f32 0.0, %v1746
        %v1748 = vpop.f32.mrf.mxu0
        %v1749 = vadd.f32 0.0, %v1748
        %1750 = vmatmul.bf16.gmra.mxu0 %v1084
        %v1751 = vpop.f32.mrf.mxu0
        %v1752 = vadd.f32 0.0, %v1751
        %v1753 = vpop.f32.mrf.mxu0
        %v1754 = vadd.f32 0.0, %v1753
        %1755 = vmatmul.bf16.gmra.mxu0 %v1087
        %v1756 = vpop.f32.mrf.mxu0
        %v1757 = vadd.f32 0.0, %v1756
        %v1758 = vpop.f32.mrf.mxu0
        %v1759 = vadd.f32 0.0, %v1758
        %1760 = vmatmul.bf16.gmra.mxu0 %v1090
        %v1761 = vpop.f32.mrf.mxu0
        %v1762 = vadd.f32 0.0, %v1761
        %v1763 = vpop.f32.mrf.mxu0
        %v1764 = vadd.f32 0.0, %v1763
        %1765 = vmatmul.bf16.gmra.mxu0 %v1093
        %v1766 = vpop.f32.mrf.mxu0
        %v1767 = vadd.f32 0.0, %v1766
        %v1768 = vpop.f32.mrf.mxu0
        %v1769 = vadd.f32 0.0, %v1768
        %1770 = vdwg.mxu0
        %v1787 = vunpack.c.l.b16 %v742
        %v1788 = vunpack.c.h.b16 %v742
        %v1789 = vunpack.c.l.b16 %v743
        %v1790 = vunpack.c.h.b16 %v743
        %v1791 = vunpack.c.l.b16 %v744
        %v1792 = vunpack.c.h.b16 %v744
        %v1793 = vunpack.c.l.b16 %v745
        %v1794 = vunpack.c.h.b16 %v745
        %v1795 = vunpack.c.l.b16 %v746
        %v1796 = vunpack.c.h.b16 %v746
        %v1797 = vunpack.c.l.b16 %v747
        %v1798 = vunpack.c.h.b16 %v747
        %v1799 = vunpack.c.l.b16 %v748
        %v1800 = vunpack.c.h.b16 %v748
        %v1801 = vunpack.c.l.b16 %v749
        %v1802 = vunpack.c.h.b16 %v749
        %v1803 = vunpack.c.l.b16 %v750
        %v1804 = vunpack.c.h.b16 %v750
        %v1805 = vunpack.c.l.b16 %v751
        %v1806 = vunpack.c.h.b16 %v751
        %v1807 = vunpack.c.l.b16 %v752
        %v1808 = vunpack.c.h.b16 %v752
        %v1809 = vunpack.c.l.b16 %v753
        %v1810 = vunpack.c.h.b16 %v753
        %v1811 = vunpack.c.l.b16 %v754
        %v1812 = vunpack.c.h.b16 %v754
        %v1813 = vunpack.c.l.b16 %v755
        %v1814 = vunpack.c.h.b16 %v755
        %v1815 = vunpack.c.l.b16 %v756
        %v1816 = vunpack.c.h.b16 %v756
        %v1817 = vunpack.c.l.b16 %v757
        %v1818 = vunpack.c.h.b16 %v757
        %v1819 = vpack.c.b16 %v1791, %v1787
        %v1820 = vpack.c.b16 %v1792, %v1788
        %v1821 = vpack.c.b16 %v1793, %v1789
        %v1822 = vpack.c.b16 %v1794, %v1790
        %v1823 = vpack.c.b16 %v1799, %v1795
        %v1824 = vpack.c.b16 %v1800, %v1796
        %v1825 = vpack.c.b16 %v1801, %v1797
        %v1826 = vpack.c.b16 %v1802, %v1798
        %v1827 = vpack.c.b16 %v1807, %v1803
        %v1828 = vpack.c.b16 %v1808, %v1804
        %v1829 = vpack.c.b16 %v1809, %v1805
        %v1830 = vpack.c.b16 %v1810, %v1806
        %v1831 = vpack.c.b16 %v1815, %v1811
        %v1832 = vpack.c.b16 %v1816, %v1812
        %v1833 = vpack.c.b16 %v1817, %v1813
        %v1834 = vpack.c.b16 %v1818, %v1814
        %1851 = vxpose.binary.xlu0.c.b16.start [1/16] %v1820, %v1819, 128
        %1852 = vxpose.binary.xlu0.c.b16.cont [2/16] %v1824, %v1823, 128
        %1853 = vxpose.binary.xlu0.c.b16.cont [3/16] %v1828, %v1827, 128
        %1854 = vxpose.binary.xlu0.c.b16.cont [4/16] %v1832, %v1831, 128
        %1855 = vxpose.binary.xlu0.c.b16.cont [5/16] 0, 0, 128
        %1856 = vxpose.binary.xlu0.c.b16.cont [6/16] 0, 0, 128
        %1857 = vxpose.binary.xlu0.c.b16.cont [7/16] 0, 0, 128
        %1858 = vxpose.binary.xlu0.c.b16.end [8/16] 0, 0, 128
        %v1859 = vpop.trf.xlu0
        %v1860 = vpop.trf.xlu0
        %v1861 = vpop.trf.xlu0
        %v1862 = vpop.trf.xlu0
        %v1863 = vpop.trf.xlu0
        %v1864 = vpop.trf.xlu0
        %v1865 = vpop.trf.xlu0
        %v1866 = vpop.trf.xlu0
        %v1867 = vpop.trf.xlu0
        %v1868 = vpop.trf.xlu0
        %v1869 = vpop.trf.xlu0
        %v1870 = vpop.trf.xlu0
        %v1871 = vpop.trf.xlu0
        %v1872 = vpop.trf.xlu0
        %v1873 = vpop.trf.xlu0
        %v1874 = vpop.trf.xlu0
        %1875 = vxpose.binary.xlu0.c.b16.start [1/16] %v1822, %v1821, 128
        %1876 = vxpose.binary.xlu0.c.b16.cont [2/16] %v1826, %v1825, 128
        %1877 = vxpose.binary.xlu0.c.b16.cont [3/16] %v1830, %v1829, 128
        %1878 = vxpose.binary.xlu0.c.b16.cont [4/16] %v1834, %v1833, 128
        %1879 = vxpose.binary.xlu0.c.b16.cont [5/16] 0, 0, 128
        %1880 = vxpose.binary.xlu0.c.b16.cont [6/16] 0, 0, 128
        %1881 = vxpose.binary.xlu0.c.b16.cont [7/16] 0, 0, 128
        %1882 = vxpose.binary.xlu0.c.b16.end [8/16] 0, 0, 128
        %v1883 = vpop.trf.xlu0
        %v1884 = vpop.trf.xlu0
        %v1885 = vpop.trf.xlu0
        %v1886 = vpop.trf.xlu0
        %v1887 = vpop.trf.xlu0
        %v1888 = vpop.trf.xlu0
        %v1889 = vpop.trf.xlu0
        %v1890 = vpop.trf.xlu0
        %v1891 = vpop.trf.xlu0
        %v1892 = vpop.trf.xlu0
        %v1893 = vpop.trf.xlu0
        %v1894 = vpop.trf.xlu0
        %v1895 = vpop.trf.xlu0
        %v1896 = vpop.trf.xlu0
        %v1897 = vpop.trf.xlu0
        %v1898 = vpop.trf.xlu0
        %v1915 = vunpack.c.l.b16 %v774
        %v1916 = vunpack.c.h.b16 %v774
        %v1917 = vunpack.c.l.b16 %v775
        %v1918 = vunpack.c.h.b16 %v775
        %v1919 = vunpack.c.l.b16 %v776
        %v1920 = vunpack.c.h.b16 %v776
        %v1921 = vunpack.c.l.b16 %v777
        %v1922 = vunpack.c.h.b16 %v777
        %v1923 = vunpack.c.l.b16 %v778
        %v1924 = vunpack.c.h.b16 %v778
        %v1925 = vunpack.c.l.b16 %v779
        %v1926 = vunpack.c.h.b16 %v779
        %v1927 = vunpack.c.l.b16 %v780
        %v1928 = vunpack.c.h.b16 %v780
        %v1929 = vunpack.c.l.b16 %v781
        %v1930 = vunpack.c.h.b16 %v781
        %v1931 = vunpack.c.l.b16 %v782
        %v1932 = vunpack.c.h.b16 %v782
        %v1933 = vunpack.c.l.b16 %v783
        %v1934 = vunpack.c.h.b16 %v783
        %v1935 = vunpack.c.l.b16 %v784
        %v1936 = vunpack.c.h.b16 %v784
        %v1937 = vunpack.c.l.b16 %v785
        %v1938 = vunpack.c.h.b16 %v785
        %v1939 = vunpack.c.l.b16 %v786
        %v1940 = vunpack.c.h.b16 %v786
        %v1941 = vunpack.c.l.b16 %v787
        %v1942 = vunpack.c.h.b16 %v787
        %v1943 = vunpack.c.l.b16 %v788
        %v1944 = vunpack.c.h.b16 %v788
        %v1945 = vunpack.c.l.b16 %v789
        %v1946 = vunpack.c.h.b16 %v789
        %v1947 = vpack.c.b16 %v1919, %v1915
        %v1948 = vpack.c.b16 %v1920, %v1916
        %v1949 = vpack.c.b16 %v1921, %v1917
        %v1950 = vpack.c.b16 %v1922, %v1918
        %v1951 = vpack.c.b16 %v1927, %v1923
        %v1952 = vpack.c.b16 %v1928, %v1924
        %v1953 = vpack.c.b16 %v1929, %v1925
        %v1954 = vpack.c.b16 %v1930, %v1926
        %v1955 = vpack.c.b16 %v1935, %v1931
        %v1956 = vpack.c.b16 %v1936, %v1932
        %v1957 = vpack.c.b16 %v1937, %v1933
        %v1958 = vpack.c.b16 %v1938, %v1934
        %v1959 = vpack.c.b16 %v1943, %v1939
        %v1960 = vpack.c.b16 %v1944, %v1940
        %v1961 = vpack.c.b16 %v1945, %v1941
        %v1962 = vpack.c.b16 %v1946, %v1942
        %v1980 = vsel %vm998, %v1859, 0
        %v1983 = vsel %vm998, %v1861, 0
        %v1986 = vsel %vm998, %v1863, 0
        %v1989 = vsel %vm998, %v1865, 0
        %v1992 = vsel %vm998, %v1867, 0
        %v1995 = vsel %vm998, %v1869, 0
        %v1998 = vsel %vm998, %v1871, 0
        %v2001 = vsel %vm998, %v1873, 0
        %v2004 = vsel %vm998, %v1860, 0
        %v2007 = vsel %vm998, %v1862, 0
        %v2010 = vsel %vm998, %v1864, 0
        %v2013 = vsel %vm998, %v1866, 0
        %v2016 = vsel %vm998, %v1868, 0
        %v2019 = vsel %vm998, %v1870, 0
        %v2022 = vsel %vm998, %v1872, 0
        %v2025 = vsel %vm998, %v1874, 0
        %v2028 = vsel %vm998, %v1883, 0
        %v2031 = vsel %vm998, %v1885, 0
        %v2034 = vsel %vm998, %v1887, 0
        %v2037 = vsel %vm998, %v1889, 0
        %v2040 = vsel %vm998, %v1891, 0
        %v2043 = vsel %vm998, %v1893, 0
        %v2046 = vsel %vm998, %v1895, 0
        %v2049 = vsel %vm998, %v1897, 0
        %v2052 = vsel %vm998, %v1884, 0
        %v2055 = vsel %vm998, %v1886, 0
        %v2058 = vsel %vm998, %v1888, 0
        %v2061 = vsel %vm998, %v1890, 0
        %v2064 = vsel %vm998, %v1892, 0
        %v2067 = vsel %vm998, %v1894, 0
        %v2070 = vsel %vm998, %v1896, 0
        %v2073 = vsel %vm998, %v1898, 0
        %2075 = vmatpush.bf16.msra.mxu0 0
        %2076 = vmatpush.bf16.msra.mxu0 0
        %2077 = vmatpush.bf16.msra.mxu0 0
        %2078 = vmatpush.bf16.msra.mxu0 0
        %2079 = vmatpush.bf16.msra.mxu0 %v1959
        %2080 = vmatpush.bf16.msra.mxu0 %v1955
        %2081 = vmatpush.bf16.msra.mxu0 %v1951
        %2082 = vmatpush.bf16.msra.mxu0 %v1947
        %2083 = vmatmul.bf16.gmra.mxu0 %v1980
        %v2084 = vpop.f32.mrf.mxu0
        %v2085 = vadd.f32 0.0, %v2084
        %v2086 = vpop.f32.mrf.mxu0
        %v2087 = vadd.f32 0.0, %v2086
        %2088 = vmatmul.bf16.gmra.mxu0 %v1983
        %v2089 = vpop.f32.mrf.mxu0
        %v2090 = vadd.f32 0.0, %v2089
        %v2091 = vpop.f32.mrf.mxu0
        %v2092 = vadd.f32 0.0, %v2091
        %2093 = vmatmul.bf16.gmra.mxu0 %v1986
        %v2094 = vpop.f32.mrf.mxu0
        %v2095 = vadd.f32 0.0, %v2094
        %v2096 = vpop.f32.mrf.mxu0
        %v2097 = vadd.f32 0.0, %v2096
        %2098 = vmatmul.bf16.gmra.mxu0 %v1989
        %v2099 = vpop.f32.mrf.mxu0
        %v2100 = vadd.f32 0.0, %v2099
        %v2101 = vpop.f32.mrf.mxu0
        %v2102 = vadd.f32 0.0, %v2101
        %2103 = vmatmul.bf16.gmra.mxu0 %v1992
        %v2104 = vpop.f32.mrf.mxu0
        %v2105 = vadd.f32 0.0, %v2104
        %v2106 = vpop.f32.mrf.mxu0
        %v2107 = vadd.f32 0.0, %v2106
        %2108 = vmatmul.bf16.gmra.mxu0 %v1995
        %v2109 = vpop.f32.mrf.mxu0
        %v2110 = vadd.f32 0.0, %v2109
        %v2111 = vpop.f32.mrf.mxu0
        %v2112 = vadd.f32 0.0, %v2111
        %2113 = vmatmul.bf16.gmra.mxu0 %v1998
        %v2114 = vpop.f32.mrf.mxu0
        %v2115 = vadd.f32 0.0, %v2114
        %v2116 = vpop.f32.mrf.mxu0
        %v2117 = vadd.f32 0.0, %v2116
        %2118 = vmatmul.bf16.gmra.mxu0 %v2001
        %v2119 = vpop.f32.mrf.mxu0
        %v2120 = vadd.f32 0.0, %v2119
        %v2121 = vpop.f32.mrf.mxu0
        %v2122 = vadd.f32 0.0, %v2121
        %2123 = vmatmul.bf16.gmra.mxu0 %v2004
        %v2124 = vpop.f32.mrf.mxu0
        %v2125 = vadd.f32 0.0, %v2124
        %v2126 = vpop.f32.mrf.mxu0
        %v2127 = vadd.f32 0.0, %v2126
        %2128 = vmatmul.bf16.gmra.mxu0 %v2007
        %v2129 = vpop.f32.mrf.mxu0
        %v2130 = vadd.f32 0.0, %v2129
        %v2131 = vpop.f32.mrf.mxu0
        %v2132 = vadd.f32 0.0, %v2131
        %2133 = vmatmul.bf16.gmra.mxu0 %v2010
        %v2134 = vpop.f32.mrf.mxu0
        %v2135 = vadd.f32 0.0, %v2134
        %v2136 = vpop.f32.mrf.mxu0
        %v2137 = vadd.f32 0.0, %v2136
        %2138 = vmatmul.bf16.gmra.mxu0 %v2013
        %v2139 = vpop.f32.mrf.mxu0
        %v2140 = vadd.f32 0.0, %v2139
        %v2141 = vpop.f32.mrf.mxu0
        %v2142 = vadd.f32 0.0, %v2141
        %2143 = vmatmul.bf16.gmra.mxu0 %v2016
        %v2144 = vpop.f32.mrf.mxu0
        %v2145 = vadd.f32 0.0, %v2144
        %v2146 = vpop.f32.mrf.mxu0
        %v2147 = vadd.f32 0.0, %v2146
        %2148 = vmatmul.bf16.gmra.mxu0 %v2019
        %v2149 = vpop.f32.mrf.mxu0
        %v2150 = vadd.f32 0.0, %v2149
        %v2151 = vpop.f32.mrf.mxu0
        %v2152 = vadd.f32 0.0, %v2151
        %2153 = vmatmul.bf16.gmra.mxu0 %v2022
        %v2154 = vpop.f32.mrf.mxu0
        %v2155 = vadd.f32 0.0, %v2154
        %v2156 = vpop.f32.mrf.mxu0
        %v2157 = vadd.f32 0.0, %v2156
        %2158 = vmatmul.bf16.gmra.mxu0 %v2025
        %v2159 = vpop.f32.mrf.mxu0
        %v2160 = vadd.f32 0.0, %v2159
        %v2161 = vpop.f32.mrf.mxu0
        %v2162 = vadd.f32 0.0, %v2161
        %2163 = vmatmul.bf16.gmra.mxu0 %v2028
        %v2164 = vpop.f32.mrf.mxu0
        %v2165 = vadd.f32 0.0, %v2164
        %v2166 = vpop.f32.mrf.mxu0
        %v2167 = vadd.f32 0.0, %v2166
        %2168 = vmatmul.bf16.gmra.mxu0 %v2031
        %v2169 = vpop.f32.mrf.mxu0
        %v2170 = vadd.f32 0.0, %v2169
        %v2171 = vpop.f32.mrf.mxu0
        %v2172 = vadd.f32 0.0, %v2171
        %2173 = vmatmul.bf16.gmra.mxu0 %v2034
        %v2174 = vpop.f32.mrf.mxu0
        %v2175 = vadd.f32 0.0, %v2174
        %v2176 = vpop.f32.mrf.mxu0
        %v2177 = vadd.f32 0.0, %v2176
        %2178 = vmatmul.bf16.gmra.mxu0 %v2037
        %v2179 = vpop.f32.mrf.mxu0
        %v2180 = vadd.f32 0.0, %v2179
        %v2181 = vpop.f32.mrf.mxu0
        %v2182 = vadd.f32 0.0, %v2181
        %2183 = vmatmul.bf16.gmra.mxu0 %v2040
        %v2184 = vpop.f32.mrf.mxu0
        %v2185 = vadd.f32 0.0, %v2184
        %v2186 = vpop.f32.mrf.mxu0
        %v2187 = vadd.f32 0.0, %v2186
        %2188 = vmatmul.bf16.gmra.mxu0 %v2043
        %v2189 = vpop.f32.mrf.mxu0
        %v2190 = vadd.f32 0.0, %v2189
        %v2191 = vpop.f32.mrf.mxu0
        %v2192 = vadd.f32 0.0, %v2191
        %2193 = vmatmul.bf16.gmra.mxu0 %v2046
        %v2194 = vpop.f32.mrf.mxu0
        %v2195 = vadd.f32 0.0, %v2194
        %v2196 = vpop.f32.mrf.mxu0
        %v2197 = vadd.f32 0.0, %v2196
        %2198 = vmatmul.bf16.gmra.mxu0 %v2049
        %v2199 = vpop.f32.mrf.mxu0
        %v2200 = vadd.f32 0.0, %v2199
        %v2201 = vpop.f32.mrf.mxu0
        %v2202 = vadd.f32 0.0, %v2201
        %2203 = vmatmul.bf16.gmra.mxu0 %v2052
        %v2204 = vpop.f32.mrf.mxu0
        %v2205 = vadd.f32 0.0, %v2204
        %v2206 = vpop.f32.mrf.mxu0
        %v2207 = vadd.f32 0.0, %v2206
        %2208 = vmatmul.bf16.gmra.mxu0 %v2055
        %v2209 = vpop.f32.mrf.mxu0
        %v2210 = vadd.f32 0.0, %v2209
        %v2211 = vpop.f32.mrf.mxu0
        %v2212 = vadd.f32 0.0, %v2211
        %2213 = vmatmul.bf16.gmra.mxu0 %v2058
        %v2214 = vpop.f32.mrf.mxu0
        %v2215 = vadd.f32 0.0, %v2214
        %v2216 = vpop.f32.mrf.mxu0
        %v2217 = vadd.f32 0.0, %v2216
        %2218 = vmatmul.bf16.gmra.mxu0 %v2061
        %v2219 = vpop.f32.mrf.mxu0
        %v2220 = vadd.f32 0.0, %v2219
        %v2221 = vpop.f32.mrf.mxu0
        %v2222 = vadd.f32 0.0, %v2221
        %2223 = vmatmul.bf16.gmra.mxu0 %v2064
        %v2224 = vpop.f32.mrf.mxu0
        %v2225 = vadd.f32 0.0, %v2224
        %v2226 = vpop.f32.mrf.mxu0
        %v2227 = vadd.f32 0.0, %v2226
        %2228 = vmatmul.bf16.gmra.mxu0 %v2067
        %v2229 = vpop.f32.mrf.mxu0
        %v2230 = vadd.f32 0.0, %v2229
        %v2231 = vpop.f32.mrf.mxu0
        %v2232 = vadd.f32 0.0, %v2231
        %2233 = vmatmul.bf16.gmra.mxu0 %v2070
        %v2234 = vpop.f32.mrf.mxu0
        %v2235 = vadd.f32 0.0, %v2234
        %v2236 = vpop.f32.mrf.mxu0
        %v2237 = vadd.f32 0.0, %v2236
        %2238 = vmatmul.bf16.gmra.mxu0 %v2073
        %v2239 = vpop.f32.mrf.mxu0
        %v2240 = vadd.f32 0.0, %v2239
        %v2241 = vpop.f32.mrf.mxu0
        %v2242 = vadd.f32 0.0, %v2241
        %2243 = vdwg.mxu0
        %2244 = vmatpush.bf16.msra.mxu0 0
        %2245 = vmatpush.bf16.msra.mxu0 0
        %2246 = vmatpush.bf16.msra.mxu0 0
        %2247 = vmatpush.bf16.msra.mxu0 0
        %2248 = vmatpush.bf16.msra.mxu0 %v1960
        %2249 = vmatpush.bf16.msra.mxu0 %v1956
        %2250 = vmatpush.bf16.msra.mxu0 %v1952
        %2251 = vmatpush.bf16.msra.mxu0 %v1948
        %2252 = vmatmul.bf16.gmra.mxu0 %v1980
        %v2253 = vpop.f32.mrf.mxu0
        %v2254 = vadd.f32 0.0, %v2253
        %v2255 = vpop.f32.mrf.mxu0
        %v2256 = vadd.f32 0.0, %v2255
        %2257 = vmatmul.bf16.gmra.mxu0 %v1983
        %v2258 = vpop.f32.mrf.mxu0
        %v2259 = vadd.f32 0.0, %v2258
        %v2260 = vpop.f32.mrf.mxu0
        %v2261 = vadd.f32 0.0, %v2260
        %2262 = vmatmul.bf16.gmra.mxu0 %v1986
        %v2263 = vpop.f32.mrf.mxu0
        %v2264 = vadd.f32 0.0, %v2263
        %v2265 = vpop.f32.mrf.mxu0
        %v2266 = vadd.f32 0.0, %v2265
        %2267 = vmatmul.bf16.gmra.mxu0 %v1989
        %v2268 = vpop.f32.mrf.mxu0
        %v2269 = vadd.f32 0.0, %v2268
        %v2270 = vpop.f32.mrf.mxu0
        %v2271 = vadd.f32 0.0, %v2270
        %2272 = vmatmul.bf16.gmra.mxu0 %v1992
        %v2273 = vpop.f32.mrf.mxu0
        %v2274 = vadd.f32 0.0, %v2273
        %v2275 = vpop.f32.mrf.mxu0
        %v2276 = vadd.f32 0.0, %v2275
        %2277 = vmatmul.bf16.gmra.mxu0 %v1995
        %v2278 = vpop.f32.mrf.mxu0
        %v2279 = vadd.f32 0.0, %v2278
        %v2280 = vpop.f32.mrf.mxu0
        %v2281 = vadd.f32 0.0, %v2280
        %2282 = vmatmul.bf16.gmra.mxu0 %v1998
        %v2283 = vpop.f32.mrf.mxu0
        %v2284 = vadd.f32 0.0, %v2283
        %v2285 = vpop.f32.mrf.mxu0
        %v2286 = vadd.f32 0.0, %v2285
        %2287 = vmatmul.bf16.gmra.mxu0 %v2001
        %v2288 = vpop.f32.mrf.mxu0
        %v2289 = vadd.f32 0.0, %v2288
        %v2290 = vpop.f32.mrf.mxu0
        %v2291 = vadd.f32 0.0, %v2290
        %2292 = vmatmul.bf16.gmra.mxu0 %v2004
        %v2293 = vpop.f32.mrf.mxu0
        %v2294 = vadd.f32 0.0, %v2293
        %v2295 = vpop.f32.mrf.mxu0
        %v2296 = vadd.f32 0.0, %v2295
        %2297 = vmatmul.bf16.gmra.mxu0 %v2007
        %v2298 = vpop.f32.mrf.mxu0
        %v2299 = vadd.f32 0.0, %v2298
        %v2300 = vpop.f32.mrf.mxu0
        %v2301 = vadd.f32 0.0, %v2300
        %2302 = vmatmul.bf16.gmra.mxu0 %v2010
        %v2303 = vpop.f32.mrf.mxu0
        %v2304 = vadd.f32 0.0, %v2303
        %v2305 = vpop.f32.mrf.mxu0
        %v2306 = vadd.f32 0.0, %v2305
        %2307 = vmatmul.bf16.gmra.mxu0 %v2013
        %v2308 = vpop.f32.mrf.mxu0
        %v2309 = vadd.f32 0.0, %v2308
        %v2310 = vpop.f32.mrf.mxu0
        %v2311 = vadd.f32 0.0, %v2310
        %2312 = vmatmul.bf16.gmra.mxu0 %v2016
        %v2313 = vpop.f32.mrf.mxu0
        %v2314 = vadd.f32 0.0, %v2313
        %v2315 = vpop.f32.mrf.mxu0
        %v2316 = vadd.f32 0.0, %v2315
        %2317 = vmatmul.bf16.gmra.mxu0 %v2019
        %v2318 = vpop.f32.mrf.mxu0
        %v2319 = vadd.f32 0.0, %v2318
        %v2320 = vpop.f32.mrf.mxu0
        %v2321 = vadd.f32 0.0, %v2320
        %2322 = vmatmul.bf16.gmra.mxu0 %v2022
        %v2323 = vpop.f32.mrf.mxu0
        %v2324 = vadd.f32 0.0, %v2323
        %v2325 = vpop.f32.mrf.mxu0
        %v2326 = vadd.f32 0.0, %v2325
        %2327 = vmatmul.bf16.gmra.mxu0 %v2025
        %v2328 = vpop.f32.mrf.mxu0
        %v2329 = vadd.f32 0.0, %v2328
        %v2330 = vpop.f32.mrf.mxu0
        %v2331 = vadd.f32 0.0, %v2330
        %2332 = vmatmul.bf16.gmra.mxu0 %v2028
        %v2333 = vpop.f32.mrf.mxu0
        %v2334 = vadd.f32 0.0, %v2333
        %v2335 = vpop.f32.mrf.mxu0
        %v2336 = vadd.f32 0.0, %v2335
        %2337 = vmatmul.bf16.gmra.mxu0 %v2031
        %v2338 = vpop.f32.mrf.mxu0
        %v2339 = vadd.f32 0.0, %v2338
        %v2340 = vpop.f32.mrf.mxu0
        %v2341 = vadd.f32 0.0, %v2340
        %2342 = vmatmul.bf16.gmra.mxu0 %v2034
        %v2343 = vpop.f32.mrf.mxu0
        %v2344 = vadd.f32 0.0, %v2343
        %v2345 = vpop.f32.mrf.mxu0
        %v2346 = vadd.f32 0.0, %v2345
        %2347 = vmatmul.bf16.gmra.mxu0 %v2037
        %v2348 = vpop.f32.mrf.mxu0
        %v2349 = vadd.f32 0.0, %v2348
        %v2350 = vpop.f32.mrf.mxu0
        %v2351 = vadd.f32 0.0, %v2350
        %2352 = vmatmul.bf16.gmra.mxu0 %v2040
        %v2353 = vpop.f32.mrf.mxu0
        %v2354 = vadd.f32 0.0, %v2353
        %v2355 = vpop.f32.mrf.mxu0
        %v2356 = vadd.f32 0.0, %v2355
        %2357 = vmatmul.bf16.gmra.mxu0 %v2043
        %v2358 = vpop.f32.mrf.mxu0
        %v2359 = vadd.f32 0.0, %v2358
        %v2360 = vpop.f32.mrf.mxu0
        %v2361 = vadd.f32 0.0, %v2360
        %2362 = vmatmul.bf16.gmra.mxu0 %v2046
        %v2363 = vpop.f32.mrf.mxu0
        %v2364 = vadd.f32 0.0, %v2363
        %v2365 = vpop.f32.mrf.mxu0
        %v2366 = vadd.f32 0.0, %v2365
        %2367 = vmatmul.bf16.gmra.mxu0 %v2049
        %v2368 = vpop.f32.mrf.mxu0
        %v2369 = vadd.f32 0.0, %v2368
        %v2370 = vpop.f32.mrf.mxu0
        %v2371 = vadd.f32 0.0, %v2370
        %2372 = vmatmul.bf16.gmra.mxu0 %v2052
        %v2373 = vpop.f32.mrf.mxu0
        %v2374 = vadd.f32 0.0, %v2373
        %v2375 = vpop.f32.mrf.mxu0
        %v2376 = vadd.f32 0.0, %v2375
        %2377 = vmatmul.bf16.gmra.mxu0 %v2055
        %v2378 = vpop.f32.mrf.mxu0
        %v2379 = vadd.f32 0.0, %v2378
        %v2380 = vpop.f32.mrf.mxu0
        %v2381 = vadd.f32 0.0, %v2380
        %2382 = vmatmul.bf16.gmra.mxu0 %v2058
        %v2383 = vpop.f32.mrf.mxu0
        %v2384 = vadd.f32 0.0, %v2383
        %v2385 = vpop.f32.mrf.mxu0
        %v2386 = vadd.f32 0.0, %v2385
        %2387 = vmatmul.bf16.gmra.mxu0 %v2061
        %v2388 = vpop.f32.mrf.mxu0
        %v2389 = vadd.f32 0.0, %v2388
        %v2390 = vpop.f32.mrf.mxu0
        %v2391 = vadd.f32 0.0, %v2390
        %2392 = vmatmul.bf16.gmra.mxu0 %v2064
        %v2393 = vpop.f32.mrf.mxu0
        %v2394 = vadd.f32 0.0, %v2393
        %v2395 = vpop.f32.mrf.mxu0
        %v2396 = vadd.f32 0.0, %v2395
        %2397 = vmatmul.bf16.gmra.mxu0 %v2067
        %v2398 = vpop.f32.mrf.mxu0
        %v2399 = vadd.f32 0.0, %v2398
        %v2400 = vpop.f32.mrf.mxu0
        %v2401 = vadd.f32 0.0, %v2400
        %2402 = vmatmul.bf16.gmra.mxu0 %v2070
        %v2403 = vpop.f32.mrf.mxu0
        %v2404 = vadd.f32 0.0, %v2403
        %v2405 = vpop.f32.mrf.mxu0
        %v2406 = vadd.f32 0.0, %v2405
        %2407 = vmatmul.bf16.gmra.mxu0 %v2073
        %v2408 = vpop.f32.mrf.mxu0
        %v2409 = vadd.f32 0.0, %v2408
        %v2410 = vpop.f32.mrf.mxu0
        %v2411 = vadd.f32 0.0, %v2410
        %2412 = vdwg.mxu0
        %2413 = vmatpush.bf16.msra.mxu0 0
        %2414 = vmatpush.bf16.msra.mxu0 0
        %2415 = vmatpush.bf16.msra.mxu0 0
        %2416 = vmatpush.bf16.msra.mxu0 0
        %2417 = vmatpush.bf16.msra.mxu0 %v1961
        %2418 = vmatpush.bf16.msra.mxu0 %v1957
        %2419 = vmatpush.bf16.msra.mxu0 %v1953
        %2420 = vmatpush.bf16.msra.mxu0 %v1949
        %2421 = vmatmul.bf16.gmra.mxu0 %v1980
        %v2422 = vpop.f32.mrf.mxu0
        %v2423 = vadd.f32 0.0, %v2422
        %v2424 = vpop.f32.mrf.mxu0
        %v2425 = vadd.f32 0.0, %v2424
        %2426 = vmatmul.bf16.gmra.mxu0 %v1983
        %v2427 = vpop.f32.mrf.mxu0
        %v2428 = vadd.f32 0.0, %v2427
        %v2429 = vpop.f32.mrf.mxu0
        %v2430 = vadd.f32 0.0, %v2429
        %2431 = vmatmul.bf16.gmra.mxu0 %v1986
        %v2432 = vpop.f32.mrf.mxu0
        %v2433 = vadd.f32 0.0, %v2432
        %v2434 = vpop.f32.mrf.mxu0
        %v2435 = vadd.f32 0.0, %v2434
        %2436 = vmatmul.bf16.gmra.mxu0 %v1989
        %v2437 = vpop.f32.mrf.mxu0
        %v2438 = vadd.f32 0.0, %v2437
        %v2439 = vpop.f32.mrf.mxu0
        %v2440 = vadd.f32 0.0, %v2439
        %2441 = vmatmul.bf16.gmra.mxu0 %v1992
        %v2442 = vpop.f32.mrf.mxu0
        %v2443 = vadd.f32 0.0, %v2442
        %v2444 = vpop.f32.mrf.mxu0
        %v2445 = vadd.f32 0.0, %v2444
        %2446 = vmatmul.bf16.gmra.mxu0 %v1995
        %v2447 = vpop.f32.mrf.mxu0
        %v2448 = vadd.f32 0.0, %v2447
        %v2449 = vpop.f32.mrf.mxu0
        %v2450 = vadd.f32 0.0, %v2449
        %2451 = vmatmul.bf16.gmra.mxu0 %v1998
        %v2452 = vpop.f32.mrf.mxu0
        %v2453 = vadd.f32 0.0, %v2452
        %v2454 = vpop.f32.mrf.mxu0
        %v2455 = vadd.f32 0.0, %v2454
        %2456 = vmatmul.bf16.gmra.mxu0 %v2001
        %v2457 = vpop.f32.mrf.mxu0
        %v2458 = vadd.f32 0.0, %v2457
        %v2459 = vpop.f32.mrf.mxu0
        %v2460 = vadd.f32 0.0, %v2459
        %2461 = vmatmul.bf16.gmra.mxu0 %v2004
        %v2462 = vpop.f32.mrf.mxu0
        %v2463 = vadd.f32 0.0, %v2462
        %v2464 = vpop.f32.mrf.mxu0
        %v2465 = vadd.f32 0.0, %v2464
        %2466 = vmatmul.bf16.gmra.mxu0 %v2007
        %v2467 = vpop.f32.mrf.mxu0
        %v2468 = vadd.f32 0.0, %v2467
        %v2469 = vpop.f32.mrf.mxu0
        %v2470 = vadd.f32 0.0, %v2469
        %2471 = vmatmul.bf16.gmra.mxu0 %v2010
        %v2472 = vpop.f32.mrf.mxu0
        %v2473 = vadd.f32 0.0, %v2472
        %v2474 = vpop.f32.mrf.mxu0
        %v2475 = vadd.f32 0.0, %v2474
        %2476 = vmatmul.bf16.gmra.mxu0 %v2013
        %v2477 = vpop.f32.mrf.mxu0
        %v2478 = vadd.f32 0.0, %v2477
        %v2479 = vpop.f32.mrf.mxu0
        %v2480 = vadd.f32 0.0, %v2479
        %2481 = vmatmul.bf16.gmra.mxu0 %v2016
        %v2482 = vpop.f32.mrf.mxu0
        %v2483 = vadd.f32 0.0, %v2482
        %v2484 = vpop.f32.mrf.mxu0
        %v2485 = vadd.f32 0.0, %v2484
        %2486 = vmatmul.bf16.gmra.mxu0 %v2019
        %v2487 = vpop.f32.mrf.mxu0
        %v2488 = vadd.f32 0.0, %v2487
        %v2489 = vpop.f32.mrf.mxu0
        %v2490 = vadd.f32 0.0, %v2489
        %2491 = vmatmul.bf16.gmra.mxu0 %v2022
        %v2492 = vpop.f32.mrf.mxu0
        %v2493 = vadd.f32 0.0, %v2492
        %v2494 = vpop.f32.mrf.mxu0
        %v2495 = vadd.f32 0.0, %v2494
        %2496 = vmatmul.bf16.gmra.mxu0 %v2025
        %v2497 = vpop.f32.mrf.mxu0
        %v2498 = vadd.f32 0.0, %v2497
        %v2499 = vpop.f32.mrf.mxu0
        %v2500 = vadd.f32 0.0, %v2499
        %2501 = vmatmul.bf16.gmra.mxu0 %v2028
        %v2502 = vpop.f32.mrf.mxu0
        %v2503 = vadd.f32 0.0, %v2502
        %v2504 = vpop.f32.mrf.mxu0
        %v2505 = vadd.f32 0.0, %v2504
        %2506 = vmatmul.bf16.gmra.mxu0 %v2031
        %v2507 = vpop.f32.mrf.mxu0
        %v2508 = vadd.f32 0.0, %v2507
        %v2509 = vpop.f32.mrf.mxu0
        %v2510 = vadd.f32 0.0, %v2509
        %2511 = vmatmul.bf16.gmra.mxu0 %v2034
        %v2512 = vpop.f32.mrf.mxu0
        %v2513 = vadd.f32 0.0, %v2512
        %v2514 = vpop.f32.mrf.mxu0
        %v2515 = vadd.f32 0.0, %v2514
        %2516 = vmatmul.bf16.gmra.mxu0 %v2037
        %v2517 = vpop.f32.mrf.mxu0
        %v2518 = vadd.f32 0.0, %v2517
        %v2519 = vpop.f32.mrf.mxu0
        %v2520 = vadd.f32 0.0, %v2519
        %2521 = vmatmul.bf16.gmra.mxu0 %v2040
        %v2522 = vpop.f32.mrf.mxu0
        %v2523 = vadd.f32 0.0, %v2522
        %v2524 = vpop.f32.mrf.mxu0
        %v2525 = vadd.f32 0.0, %v2524
        %2526 = vmatmul.bf16.gmra.mxu0 %v2043
        %v2527 = vpop.f32.mrf.mxu0
        %v2528 = vadd.f32 0.0, %v2527
        %v2529 = vpop.f32.mrf.mxu0
        %v2530 = vadd.f32 0.0, %v2529
        %2531 = vmatmul.bf16.gmra.mxu0 %v2046
        %v2532 = vpop.f32.mrf.mxu0
        %v2533 = vadd.f32 0.0, %v2532
        %v2534 = vpop.f32.mrf.mxu0
        %v2535 = vadd.f32 0.0, %v2534
        %2536 = vmatmul.bf16.gmra.mxu0 %v2049
        %v2537 = vpop.f32.mrf.mxu0
        %v2538 = vadd.f32 0.0, %v2537
        %v2539 = vpop.f32.mrf.mxu0
        %v2540 = vadd.f32 0.0, %v2539
        %2541 = vmatmul.bf16.gmra.mxu0 %v2052
        %v2542 = vpop.f32.mrf.mxu0
        %v2543 = vadd.f32 0.0, %v2542
        %v2544 = vpop.f32.mrf.mxu0
        %v2545 = vadd.f32 0.0, %v2544
        %2546 = vmatmul.bf16.gmra.mxu0 %v2055
        %v2547 = vpop.f32.mrf.mxu0
        %v2548 = vadd.f32 0.0, %v2547
        %v2549 = vpop.f32.mrf.mxu0
        %v2550 = vadd.f32 0.0, %v2549
        %2551 = vmatmul.bf16.gmra.mxu0 %v2058
        %v2552 = vpop.f32.mrf.mxu0
        %v2553 = vadd.f32 0.0, %v2552
        %v2554 = vpop.f32.mrf.mxu0
        %v2555 = vadd.f32 0.0, %v2554
        %2556 = vmatmul.bf16.gmra.mxu0 %v2061
        %v2557 = vpop.f32.mrf.mxu0
        %v2558 = vadd.f32 0.0, %v2557
        %v2559 = vpop.f32.mrf.mxu0
        %v2560 = vadd.f32 0.0, %v2559
        %2561 = vmatmul.bf16.gmra.mxu0 %v2064
        %v2562 = vpop.f32.mrf.mxu0
        %v2563 = vadd.f32 0.0, %v2562
        %v2564 = vpop.f32.mrf.mxu0
        %v2565 = vadd.f32 0.0, %v2564
        %2566 = vmatmul.bf16.gmra.mxu0 %v2067
        %v2567 = vpop.f32.mrf.mxu0
        %v2568 = vadd.f32 0.0, %v2567
        %v2569 = vpop.f32.mrf.mxu0
        %v2570 = vadd.f32 0.0, %v2569
        %2571 = vmatmul.bf16.gmra.mxu0 %v2070
        %v2572 = vpop.f32.mrf.mxu0
        %v2573 = vadd.f32 0.0, %v2572
        %v2574 = vpop.f32.mrf.mxu0
        %v2575 = vadd.f32 0.0, %v2574
        %2576 = vmatmul.bf16.gmra.mxu0 %v2073
        %v2577 = vpop.f32.mrf.mxu0
        %v2578 = vadd.f32 0.0, %v2577
        %v2579 = vpop.f32.mrf.mxu0
        %v2580 = vadd.f32 0.0, %v2579
        %2581 = vdwg.mxu0
        %2582 = vmatpush.bf16.msra.mxu0 0
        %2583 = vmatpush.bf16.msra.mxu0 0
        %2584 = vmatpush.bf16.msra.mxu0 0
        %2585 = vmatpush.bf16.msra.mxu0 0
        %2586 = vmatpush.bf16.msra.mxu0 %v1962
        %2587 = vmatpush.bf16.msra.mxu0 %v1958
        %2588 = vmatpush.bf16.msra.mxu0 %v1954
        %2589 = vmatpush.bf16.msra.mxu0 %v1950
        %2590 = vmatmul.bf16.gmra.mxu0 %v1980
        %v2591 = vpop.f32.mrf.mxu0
        %v2592 = vadd.f32 0.0, %v2591
        %v2593 = vpop.f32.mrf.mxu0
        %v2594 = vadd.f32 0.0, %v2593
        %2595 = vmatmul.bf16.gmra.mxu0 %v1983
        %v2596 = vpop.f32.mrf.mxu0
        %v2597 = vadd.f32 0.0, %v2596
        %v2598 = vpop.f32.mrf.mxu0
        %v2599 = vadd.f32 0.0, %v2598
        %2600 = vmatmul.bf16.gmra.mxu0 %v1986
        %v2601 = vpop.f32.mrf.mxu0
        %v2602 = vadd.f32 0.0, %v2601
        %v2603 = vpop.f32.mrf.mxu0
        %v2604 = vadd.f32 0.0, %v2603
        %2605 = vmatmul.bf16.gmra.mxu0 %v1989
        %v2606 = vpop.f32.mrf.mxu0
        %v2607 = vadd.f32 0.0, %v2606
        %v2608 = vpop.f32.mrf.mxu0
        %v2609 = vadd.f32 0.0, %v2608
        %2610 = vmatmul.bf16.gmra.mxu0 %v1992
        %v2611 = vpop.f32.mrf.mxu0
        %v2612 = vadd.f32 0.0, %v2611
        %v2613 = vpop.f32.mrf.mxu0
        %v2614 = vadd.f32 0.0, %v2613
        %2615 = vmatmul.bf16.gmra.mxu0 %v1995
        %v2616 = vpop.f32.mrf.mxu0
        %v2617 = vadd.f32 0.0, %v2616
        %v2618 = vpop.f32.mrf.mxu0
        %v2619 = vadd.f32 0.0, %v2618
        %2620 = vmatmul.bf16.gmra.mxu0 %v1998
        %v2621 = vpop.f32.mrf.mxu0
        %v2622 = vadd.f32 0.0, %v2621
        %v2623 = vpop.f32.mrf.mxu0
        %v2624 = vadd.f32 0.0, %v2623
        %2625 = vmatmul.bf16.gmra.mxu0 %v2001
        %v2626 = vpop.f32.mrf.mxu0
        %v2627 = vadd.f32 0.0, %v2626
        %v2628 = vpop.f32.mrf.mxu0
        %v2629 = vadd.f32 0.0, %v2628
        %2630 = vmatmul.bf16.gmra.mxu0 %v2004
        %v2631 = vpop.f32.mrf.mxu0
        %v2632 = vadd.f32 0.0, %v2631
        %v2633 = vpop.f32.mrf.mxu0
        %v2634 = vadd.f32 0.0, %v2633
        %2635 = vmatmul.bf16.gmra.mxu0 %v2007
        %v2636 = vpop.f32.mrf.mxu0
        %v2637 = vadd.f32 0.0, %v2636
        %v2638 = vpop.f32.mrf.mxu0
        %v2639 = vadd.f32 0.0, %v2638
        %2640 = vmatmul.bf16.gmra.mxu0 %v2010
        %v2641 = vpop.f32.mrf.mxu0
        %v2642 = vadd.f32 0.0, %v2641
        %v2643 = vpop.f32.mrf.mxu0
        %v2644 = vadd.f32 0.0, %v2643
        %2645 = vmatmul.bf16.gmra.mxu0 %v2013
        %v2646 = vpop.f32.mrf.mxu0
        %v2647 = vadd.f32 0.0, %v2646
        %v2648 = vpop.f32.mrf.mxu0
        %v2649 = vadd.f32 0.0, %v2648
        %2650 = vmatmul.bf16.gmra.mxu0 %v2016
        %v2651 = vpop.f32.mrf.mxu0
        %v2652 = vadd.f32 0.0, %v2651
        %v2653 = vpop.f32.mrf.mxu0
        %v2654 = vadd.f32 0.0, %v2653
        %2655 = vmatmul.bf16.gmra.mxu0 %v2019
        %v2656 = vpop.f32.mrf.mxu0
        %v2657 = vadd.f32 0.0, %v2656
        %v2658 = vpop.f32.mrf.mxu0
        %v2659 = vadd.f32 0.0, %v2658
        %2660 = vmatmul.bf16.gmra.mxu0 %v2022
        %v2661 = vpop.f32.mrf.mxu0
        %v2662 = vadd.f32 0.0, %v2661
        %v2663 = vpop.f32.mrf.mxu0
        %v2664 = vadd.f32 0.0, %v2663
        %2665 = vmatmul.bf16.gmra.mxu0 %v2025
        %v2666 = vpop.f32.mrf.mxu0
        %v2667 = vadd.f32 0.0, %v2666
        %v2668 = vpop.f32.mrf.mxu0
        %v2669 = vadd.f32 0.0, %v2668
        %2670 = vmatmul.bf16.gmra.mxu0 %v2028
        %v2671 = vpop.f32.mrf.mxu0
        %v2672 = vadd.f32 0.0, %v2671
        %v2673 = vpop.f32.mrf.mxu0
        %v2674 = vadd.f32 0.0, %v2673
        %2675 = vmatmul.bf16.gmra.mxu0 %v2031
        %v2676 = vpop.f32.mrf.mxu0
        %v2677 = vadd.f32 0.0, %v2676
        %v2678 = vpop.f32.mrf.mxu0
        %v2679 = vadd.f32 0.0, %v2678
        %2680 = vmatmul.bf16.gmra.mxu0 %v2034
        %v2681 = vpop.f32.mrf.mxu0
        %v2682 = vadd.f32 0.0, %v2681
        %v2683 = vpop.f32.mrf.mxu0
        %v2684 = vadd.f32 0.0, %v2683
        %2685 = vmatmul.bf16.gmra.mxu0 %v2037
        %v2686 = vpop.f32.mrf.mxu0
        %v2687 = vadd.f32 0.0, %v2686
        %v2688 = vpop.f32.mrf.mxu0
        %v2689 = vadd.f32 0.0, %v2688
        %2690 = vmatmul.bf16.gmra.mxu0 %v2040
        %v2691 = vpop.f32.mrf.mxu0
        %v2692 = vadd.f32 0.0, %v2691
        %v2693 = vpop.f32.mrf.mxu0
        %v2694 = vadd.f32 0.0, %v2693
        %2695 = vmatmul.bf16.gmra.mxu0 %v2043
        %v2696 = vpop.f32.mrf.mxu0
        %v2697 = vadd.f32 0.0, %v2696
        %v2698 = vpop.f32.mrf.mxu0
        %v2699 = vadd.f32 0.0, %v2698
        %2700 = vmatmul.bf16.gmra.mxu0 %v2046
        %v2701 = vpop.f32.mrf.mxu0
        %v2702 = vadd.f32 0.0, %v2701
        %v2703 = vpop.f32.mrf.mxu0
        %v2704 = vadd.f32 0.0, %v2703
        %2705 = vmatmul.bf16.gmra.mxu0 %v2049
        %v2706 = vpop.f32.mrf.mxu0
        %v2707 = vadd.f32 0.0, %v2706
        %v2708 = vpop.f32.mrf.mxu0
        %v2709 = vadd.f32 0.0, %v2708
        %2710 = vmatmul.bf16.gmra.mxu0 %v2052
        %v2711 = vpop.f32.mrf.mxu0
        %v2712 = vadd.f32 0.0, %v2711
        %v2713 = vpop.f32.mrf.mxu0
        %v2714 = vadd.f32 0.0, %v2713
        %2715 = vmatmul.bf16.gmra.mxu0 %v2055
        %v2716 = vpop.f32.mrf.mxu0
        %v2717 = vadd.f32 0.0, %v2716
        %v2718 = vpop.f32.mrf.mxu0
        %v2719 = vadd.f32 0.0, %v2718
        %2720 = vmatmul.bf16.gmra.mxu0 %v2058
        %v2721 = vpop.f32.mrf.mxu0
        %v2722 = vadd.f32 0.0, %v2721
        %v2723 = vpop.f32.mrf.mxu0
        %v2724 = vadd.f32 0.0, %v2723
        %2725 = vmatmul.bf16.gmra.mxu0 %v2061
        %v2726 = vpop.f32.mrf.mxu0
        %v2727 = vadd.f32 0.0, %v2726
        %v2728 = vpop.f32.mrf.mxu0
        %v2729 = vadd.f32 0.0, %v2728
        %2730 = vmatmul.bf16.gmra.mxu0 %v2064
        %v2731 = vpop.f32.mrf.mxu0
        %v2732 = vadd.f32 0.0, %v2731
        %v2733 = vpop.f32.mrf.mxu0
        %v2734 = vadd.f32 0.0, %v2733
        %2735 = vmatmul.bf16.gmra.mxu0 %v2067
        %v2736 = vpop.f32.mrf.mxu0
        %v2737 = vadd.f32 0.0, %v2736
        %v2738 = vpop.f32.mrf.mxu0
        %v2739 = vadd.f32 0.0, %v2738
        %2740 = vmatmul.bf16.gmra.mxu0 %v2070
        %v2741 = vpop.f32.mrf.mxu0
        %v2742 = vadd.f32 0.0, %v2741
        %v2743 = vpop.f32.mrf.mxu0
        %v2744 = vadd.f32 0.0, %v2743
        %2745 = vmatmul.bf16.gmra.mxu0 %v2073
        %v2746 = vpop.f32.mrf.mxu0
        %v2747 = vadd.f32 0.0, %v2746
        %v2748 = vpop.f32.mrf.mxu0
        %v2749 = vadd.f32 0.0, %v2748
        %2750 = vdwg.mxu0
        %v2751 = vld [vmem:[#allocation3] sm:$0xf]
        %v2752 = vld [vmem:[#allocation3 + $0x4] sm:$0xf]
        %v2753 = vmax.f32 %v1105, %v1107
        %v2754 = vmax.f32 %v2753, %v1110
        %v2755 = vmax.f32 %v2754, %v1112
        %v2756 = vmax.f32 %v2755, %v1115
        %v2757 = vmax.f32 %v2756, %v1117
        %v2758 = vmax.f32 %v2757, %v1120
        %v2759 = vmax.f32 %v2758, %v1122
        %v2760 = vmax.f32 %v2759, %v1125
        %v2761 = vmax.f32 %v2760, %v1127
        %v2762 = vmax.f32 %v2761, %v1130
        %v2763 = vmax.f32 %v2762, %v1132
        %v2764 = vmax.f32 %v2763, %v1135
        %v2765 = vmax.f32 %v2764, %v1137
        %v2766 = vmax.f32 %v2765, %v1140
        %v2767 = vmax.f32 %v2766, %v1142
        %v2768 = vmax.f32 %v2767, %v1145
        %v2769 = vmax.f32 %v2768, %v1147
        %v2770 = vmax.f32 %v2769, %v1150
        %v2771 = vmax.f32 %v2770, %v1152
        %v2772 = vmax.f32 %v2771, %v1155
        %v2773 = vmax.f32 %v2772, %v1157
        %v2774 = vmax.f32 %v2773, %v1160
        %v2775 = vmax.f32 %v2774, %v1162
        %v2776 = vmax.f32 %v2775, %v1165
        %v2777 = vmax.f32 %v2776, %v1167
        %v2778 = vmax.f32 %v2777, %v1170
        %v2779 = vmax.f32 %v2778, %v1172
        %v2780 = vmax.f32 %v2779, %v1175
        %v2781 = vmax.f32 %v2780, %v1177
        %v2782 = vmax.f32 %v2781, %v1180
        %v2783 = vmax.f32 %v2782, %v1182
        %v2784 = vmax.f32 %v2783, %v1185
        %v2785 = vmax.f32 %v2784, %v1187
        %v2786 = vmax.f32 %v2785, %v1190
        %v2787 = vmax.f32 %v2786, %v1192
        %v2788 = vmax.f32 %v2787, %v1195
        %v2789 = vmax.f32 %v2788, %v1197
        %v2790 = vmax.f32 %v2789, %v1200
        %v2791 = vmax.f32 %v2790, %v1202
        %v2792 = vmax.f32 %v2791, %v1205
        %v2793 = vmax.f32 %v2792, %v1207
        %v2794 = vmax.f32 %v2793, %v1210
        %v2795 = vmax.f32 %v2794, %v1212
        %v2796 = vmax.f32 %v2795, %v1215
        %v2797 = vmax.f32 %v2796, %v1217
        %v2798 = vmax.f32 %v2797, %v1220
        %v2799 = vmax.f32 %v2798, %v1222
        %v2800 = vmax.f32 %v2799, %v1225
        %v2801 = vmax.f32 %v2800, %v1227
        %v2802 = vmax.f32 %v2801, %v1230
        %v2803 = vmax.f32 %v2802, %v1232
        %v2804 = vmax.f32 %v2803, %v1235
        %v2805 = vmax.f32 %v2804, %v1237
        %v2806 = vmax.f32 %v2805, %v1240
        %v2807 = vmax.f32 %v2806, %v1242
        %v2808 = vmax.f32 %v2807, %v1245
        %v2809 = vmax.f32 %v2808, %v1247
        %v2810 = vmax.f32 %v2809, %v1250
        %v2811 = vmax.f32 %v2810, %v1252
        %v2812 = vmax.f32 %v2811, %v1255
        %v2813 = vmax.f32 %v2812, %v1257
        %v2814 = vmax.f32 %v2813, %v1260
        %v2815 = vmax.f32 %v2814, %v1262
        %v2816 = vrot.slane %v2815, 4
        %v2817 = vmax.f32 %v2815, %v2816
        %v2818 = vrot.slane %v2817, 2
        %v2819 = vmax.f32 %v2817, %v2818
        %v2820 = vrot.slane %v2819, 1
        %v2821 = vmax.f32 %v2819, %v2820
        %v2822 = vmax.f32 %v1274, %v1276
        %v2823 = vmax.f32 %v2822, %v1279
        %v2824 = vmax.f32 %v2823, %v1281
        %v2825 = vmax.f32 %v2824, %v1284
        %v2826 = vmax.f32 %v2825, %v1286
        %v2827 = vmax.f32 %v2826, %v1289
        %v2828 = vmax.f32 %v2827, %v1291
        %v2829 = vmax.f32 %v2828, %v1294
        %v2830 = vmax.f32 %v2829, %v1296
        %v2831 = vmax.f32 %v2830, %v1299
        %v2832 = vmax.f32 %v2831, %v1301
        %v2833 = vmax.f32 %v2832, %v1304
        %v2834 = vmax.f32 %v2833, %v1306
        %v2835 = vmax.f32 %v2834, %v1309
        %v2836 = vmax.f32 %v2835, %v1311
        %v2837 = vmax.f32 %v2836, %v1314
        %v2838 = vmax.f32 %v2837, %v1316
        %v2839 = vmax.f32 %v2838, %v1319
        %v2840 = vmax.f32 %v2839, %v1321
        %v2841 = vmax.f32 %v2840, %v1324
        %v2842 = vmax.f32 %v2841, %v1326
        %v2843 = vmax.f32 %v2842, %v1329
        %v2844 = vmax.f32 %v2843, %v1331
        %v2845 = vmax.f32 %v2844, %v1334
        %v2846 = vmax.f32 %v2845, %v1336
        %v2847 = vmax.f32 %v2846, %v1339
        %v2848 = vmax.f32 %v2847, %v1341
        %v2849 = vmax.f32 %v2848, %v1344
        %v2850 = vmax.f32 %v2849, %v1346
        %v2851 = vmax.f32 %v2850, %v1349
        %v2852 = vmax.f32 %v2851, %v1351
        %v2853 = vmax.f32 %v2852, %v1354
        %v2854 = vmax.f32 %v2853, %v1356
        %v2855 = vmax.f32 %v2854, %v1359
        %v2856 = vmax.f32 %v2855, %v1361
        %v2857 = vmax.f32 %v2856, %v1364
        %v2858 = vmax.f32 %v2857, %v1366
        %v2859 = vmax.f32 %v2858, %v1369
        %v2860 = vmax.f32 %v2859, %v1371
        %v2861 = vmax.f32 %v2860, %v1374
        %v2862 = vmax.f32 %v2861, %v1376
        %v2863 = vmax.f32 %v2862, %v1379
        %v2864 = vmax.f32 %v2863, %v1381
        %v2865 = vmax.f32 %v2864, %v1384
        %v2866 = vmax.f32 %v2865, %v1386
        %v2867 = vmax.f32 %v2866, %v1389
        %v2868 = vmax.f32 %v2867, %v1391
        %v2869 = vmax.f32 %v2868, %v1394
        %v2870 = vmax.f32 %v2869, %v1396
        %v2871 = vmax.f32 %v2870, %v1399
        %v2872 = vmax.f32 %v2871, %v1401
        %v2873 = vmax.f32 %v2872, %v1404
        %v2874 = vmax.f32 %v2873, %v1406
        %v2875 = vmax.f32 %v2874, %v1409
        %v2876 = vmax.f32 %v2875, %v1411
        %v2877 = vmax.f32 %v2876, %v1414
        %v2878 = vmax.f32 %v2877, %v1416
        %v2879 = vmax.f32 %v2878, %v1419
        %v2880 = vmax.f32 %v2879, %v1421
        %v2881 = vmax.f32 %v2880, %v1424
        %v2882 = vmax.f32 %v2881, %v1426
        %v2883 = vmax.f32 %v2882, %v1429
        %v2884 = vmax.f32 %v2883, %v1431
        %v2885 = vrot.slane %v2884, 4
        %v2886 = vmax.f32 %v2884, %v2885
        %v2887 = vrot.slane %v2886, 2
        %v2888 = vmax.f32 %v2886, %v2887
        %v2889 = vrot.slane %v2888, 1
        %v2890 = vmax.f32 %v2888, %v2889
        %v2891 = vmax.f32 %v1443, %v1445
        %v2892 = vmax.f32 %v2891, %v1448
        %v2893 = vmax.f32 %v2892, %v1450
        %v2894 = vmax.f32 %v2893, %v1453
        %v2895 = vmax.f32 %v2894, %v1455
        %v2896 = vmax.f32 %v2895, %v1458
        %v2897 = vmax.f32 %v2896, %v1460
        %v2898 = vmax.f32 %v2897, %v1463
        %v2899 = vmax.f32 %v2898, %v1465
        %v2900 = vmax.f32 %v2899, %v1468
        %v2901 = vmax.f32 %v2900, %v1470
        %v2902 = vmax.f32 %v2901, %v1473
        %v2903 = vmax.f32 %v2902, %v1475
        %v2904 = vmax.f32 %v2903, %v1478
        %v2905 = vmax.f32 %v2904, %v1480
        %v2906 = vmax.f32 %v2905, %v1483
        %v2907 = vmax.f32 %v2906, %v1485
        %v2908 = vmax.f32 %v2907, %v1488
        %v2909 = vmax.f32 %v2908, %v1490
        %v2910 = vmax.f32 %v2909, %v1493
        %v2911 = vmax.f32 %v2910, %v1495
        %v2912 = vmax.f32 %v2911, %v1498
        %v2913 = vmax.f32 %v2912, %v1500
        %v2914 = vmax.f32 %v2913, %v1503
        %v2915 = vmax.f32 %v2914, %v1505
        %v2916 = vmax.f32 %v2915, %v1508
        %v2917 = vmax.f32 %v2916, %v1510
        %v2918 = vmax.f32 %v2917, %v1513
        %v2919 = vmax.f32 %v2918, %v1515
        %v2920 = vmax.f32 %v2919, %v1518
        %v2921 = vmax.f32 %v2920, %v1520
        %v2922 = vmax.f32 %v2921, %v1523
        %v2923 = vmax.f32 %v2922, %v1525
        %v2924 = vmax.f32 %v2923, %v1528
        %v2925 = vmax.f32 %v2924, %v1530
        %v2926 = vmax.f32 %v2925, %v1533
        %v2927 = vmax.f32 %v2926, %v1535
        %v2928 = vmax.f32 %v2927, %v1538
        %v2929 = vmax.f32 %v2928, %v1540
        %v2930 = vmax.f32 %v2929, %v1543
        %v2931 = vmax.f32 %v2930, %v1545
        %v2932 = vmax.f32 %v2931, %v1548
        %v2933 = vmax.f32 %v2932, %v1550
        %v2934 = vmax.f32 %v2933, %v1553
        %v2935 = vmax.f32 %v2934, %v1555
        %v2936 = vmax.f32 %v2935, %v1558
        %v2937 = vmax.f32 %v2936, %v1560
        %v2938 = vmax.f32 %v2937, %v1563
        %v2939 = vmax.f32 %v2938, %v1565
        %v2940 = vmax.f32 %v2939, %v1568
        %v2941 = vmax.f32 %v2940, %v1570
        %v2942 = vmax.f32 %v2941, %v1573
        %v2943 = vmax.f32 %v2942, %v1575
        %v2944 = vmax.f32 %v2943, %v1578
        %v2945 = vmax.f32 %v2944, %v1580
        %v2946 = vmax.f32 %v2945, %v1583
        %v2947 = vmax.f32 %v2946, %v1585
        %v2948 = vmax.f32 %v2947, %v1588
        %v2949 = vmax.f32 %v2948, %v1590
        %v2950 = vmax.f32 %v2949, %v1593
        %v2951 = vmax.f32 %v2950, %v1595
        %v2952 = vmax.f32 %v2951, %v1598
        %v2953 = vmax.f32 %v2952, %v1600
        %v2954 = vrot.slane %v2953, 4
        %v2955 = vmax.f32 %v2953, %v2954
        %v2956 = vrot.slane %v2955, 2
        %v2957 = vmax.f32 %v2955, %v2956
        %v2958 = vrot.slane %v2957, 1
        %v2959 = vmax.f32 %v2957, %v2958
        %v2960 = vmax.f32 %v1612, %v1614
        %v2961 = vmax.f32 %v2960, %v1617
        %v2962 = vmax.f32 %v2961, %v1619
        %v2963 = vmax.f32 %v2962, %v1622
        %v2964 = vmax.f32 %v2963, %v1624
        %v2965 = vmax.f32 %v2964, %v1627
        %v2966 = vmax.f32 %v2965, %v1629
        %v2967 = vmax.f32 %v2966, %v1632
        %v2968 = vmax.f32 %v2967, %v1634
        %v2969 = vmax.f32 %v2968, %v1637
        %v2970 = vmax.f32 %v2969, %v1639
        %v2971 = vmax.f32 %v2970, %v1642
        %v2972 = vmax.f32 %v2971, %v1644
        %v2973 = vmax.f32 %v2972, %v1647
        %v2974 = vmax.f32 %v2973, %v1649
        %v2975 = vmax.f32 %v2974, %v1652
        %v2976 = vmax.f32 %v2975, %v1654
        %v2977 = vmax.f32 %v2976, %v1657
        %v2978 = vmax.f32 %v2977, %v1659
        %v2979 = vmax.f32 %v2978, %v1662
        %v2980 = vmax.f32 %v2979, %v1664
        %v2981 = vmax.f32 %v2980, %v1667
        %v2982 = vmax.f32 %v2981, %v1669
        %v2983 = vmax.f32 %v2982, %v1672
        %v2984 = vmax.f32 %v2983, %v1674
        %v2985 = vmax.f32 %v2984, %v1677
        %v2986 = vmax.f32 %v2985, %v1679
        %v2987 = vmax.f32 %v2986, %v1682
        %v2988 = vmax.f32 %v2987, %v1684
        %v2989 = vmax.f32 %v2988, %v1687
        %v2990 = vmax.f32 %v2989, %v1689
        %v2991 = vmax.f32 %v2990, %v1692
        %v2992 = vmax.f32 %v2991, %v1694
        %v2993 = vmax.f32 %v2992, %v1697
        %v2994 = vmax.f32 %v2993, %v1699
        %v2995 = vmax.f32 %v2994, %v1702
        %v2996 = vmax.f32 %v2995, %v1704
        %v2997 = vmax.f32 %v2996, %v1707
        %v2998 = vmax.f32 %v2997, %v1709
        %v2999 = vmax.f32 %v2998, %v1712
        %v3000 = vmax.f32 %v2999, %v1714
        %v3001 = vmax.f32 %v3000, %v1717
        %v3002 = vmax.f32 %v3001, %v1719
        %v3003 = vmax.f32 %v3002, %v1722
        %v3004 = vmax.f32 %v3003, %v1724
        %v3005 = vmax.f32 %v3004, %v1727
        %v3006 = vmax.f32 %v3005, %v1729
        %v3007 = vmax.f32 %v3006, %v1732
        %v3008 = vmax.f32 %v3007, %v1734
        %v3009 = vmax.f32 %v3008, %v1737
        %v3010 = vmax.f32 %v3009, %v1739
        %v3011 = vmax.f32 %v3010, %v1742
        %v3012 = vmax.f32 %v3011, %v1744
        %v3013 = vmax.f32 %v3012, %v1747
        %v3014 = vmax.f32 %v3013, %v1749
        %v3015 = vmax.f32 %v3014, %v1752
        %v3016 = vmax.f32 %v3015, %v1754
        %v3017 = vmax.f32 %v3016, %v1757
        %v3018 = vmax.f32 %v3017, %v1759
        %v3019 = vmax.f32 %v3018, %v1762
        %v3020 = vmax.f32 %v3019, %v1764
        %v3021 = vmax.f32 %v3020, %v1767
        %v3022 = vmax.f32 %v3021, %v1769
        %v3023 = vrot.slane %v3022, 4
        %v3024 = vmax.f32 %v3022, %v3023
        %v3025 = vrot.slane %v3024, 2
        %v3026 = vmax.f32 %v3024, %v3025
        %v3027 = vrot.slane %v3026, 1
        %v3028 = vmax.f32 %v3026, %v3027
        %v3029 = vmax.f32 %v2085, %v2087
        %v3030 = vmax.f32 %v3029, %v2090
        %v3031 = vmax.f32 %v3030, %v2092
        %v3032 = vmax.f32 %v3031, %v2095
        %v3033 = vmax.f32 %v3032, %v2097
        %v3034 = vmax.f32 %v3033, %v2100
        %v3035 = vmax.f32 %v3034, %v2102
        %v3036 = vmax.f32 %v3035, %v2105
        %v3037 = vmax.f32 %v3036, %v2107
        %v3038 = vmax.f32 %v3037, %v2110
        %v3039 = vmax.f32 %v3038, %v2112
        %v3040 = vmax.f32 %v3039, %v2115
        %v3041 = vmax.f32 %v3040, %v2117
        %v3042 = vmax.f32 %v3041, %v2120
        %v3043 = vmax.f32 %v3042, %v2122
        %v3044 = vmax.f32 %v3043, %v2125
        %v3045 = vmax.f32 %v3044, %v2127
        %v3046 = vmax.f32 %v3045, %v2130
        %v3047 = vmax.f32 %v3046, %v2132
        %v3048 = vmax.f32 %v3047, %v2135
        %v3049 = vmax.f32 %v3048, %v2137
        %v3050 = vmax.f32 %v3049, %v2140
        %v3051 = vmax.f32 %v3050, %v2142
        %v3052 = vmax.f32 %v3051, %v2145
        %v3053 = vmax.f32 %v3052, %v2147
        %v3054 = vmax.f32 %v3053, %v2150
        %v3055 = vmax.f32 %v3054, %v2152
        %v3056 = vmax.f32 %v3055, %v2155
        %v3057 = vmax.f32 %v3056, %v2157
        %v3058 = vmax.f32 %v3057, %v2160
        %v3059 = vmax.f32 %v3058, %v2162
        %v3060 = vmax.f32 %v3059, %v2165
        %v3061 = vmax.f32 %v3060, %v2167
        %v3062 = vmax.f32 %v3061, %v2170
        %v3063 = vmax.f32 %v3062, %v2172
        %v3064 = vmax.f32 %v3063, %v2175
        %v3065 = vmax.f32 %v3064, %v2177
        %v3066 = vmax.f32 %v3065, %v2180
        %v3067 = vmax.f32 %v3066, %v2182
        %v3068 = vmax.f32 %v3067, %v2185
        %v3069 = vmax.f32 %v3068, %v2187
        %v3070 = vmax.f32 %v3069, %v2190
        %v3071 = vmax.f32 %v3070, %v2192
        %v3072 = vmax.f32 %v3071, %v2195
        %v3073 = vmax.f32 %v3072, %v2197
        %v3074 = vmax.f32 %v3073, %v2200
        %v3075 = vmax.f32 %v3074, %v2202
        %v3076 = vmax.f32 %v3075, %v2205
        %v3077 = vmax.f32 %v3076, %v2207
        %v3078 = vmax.f32 %v3077, %v2210
        %v3079 = vmax.f32 %v3078, %v2212
        %v3080 = vmax.f32 %v3079, %v2215
        %v3081 = vmax.f32 %v3080, %v2217
        %v3082 = vmax.f32 %v3081, %v2220
        %v3083 = vmax.f32 %v3082, %v2222
        %v3084 = vmax.f32 %v3083, %v2225
        %v3085 = vmax.f32 %v3084, %v2227
        %v3086 = vmax.f32 %v3085, %v2230
        %v3087 = vmax.f32 %v3086, %v2232
        %v3088 = vmax.f32 %v3087, %v2235
        %v3089 = vmax.f32 %v3088, %v2237
        %v3090 = vmax.f32 %v3089, %v2240
        %v3091 = vmax.f32 %v3090, %v2242
        %v3092 = vrot.slane %v3091, 4
        %v3093 = vmax.f32 %v3091, %v3092
        %v3094 = vrot.slane %v3093, 2
        %v3095 = vmax.f32 %v3093, %v3094
        %v3096 = vrot.slane %v3095, 1
        %v3097 = vmax.f32 %v3095, %v3096
        %v3098 = vmax.f32 %v2254, %v2256
        %v3099 = vmax.f32 %v3098, %v2259
        %v3100 = vmax.f32 %v3099, %v2261
        %v3101 = vmax.f32 %v3100, %v2264
        %v3102 = vmax.f32 %v3101, %v2266
        %v3103 = vmax.f32 %v3102, %v2269
        %v3104 = vmax.f32 %v3103, %v2271
        %v3105 = vmax.f32 %v3104, %v2274
        %v3106 = vmax.f32 %v3105, %v2276
        %v3107 = vmax.f32 %v3106, %v2279
        %v3108 = vmax.f32 %v3107, %v2281
        %v3109 = vmax.f32 %v3108, %v2284
        %v3110 = vmax.f32 %v3109, %v2286
        %v3111 = vmax.f32 %v3110, %v2289
        %v3112 = vmax.f32 %v3111, %v2291
        %v3113 = vmax.f32 %v3112, %v2294
        %v3114 = vmax.f32 %v3113, %v2296
        %v3115 = vmax.f32 %v3114, %v2299
        %v3116 = vmax.f32 %v3115, %v2301
        %v3117 = vmax.f32 %v3116, %v2304
        %v3118 = vmax.f32 %v3117, %v2306
        %v3119 = vmax.f32 %v3118, %v2309
        %v3120 = vmax.f32 %v3119, %v2311
        %v3121 = vmax.f32 %v3120, %v2314
        %v3122 = vmax.f32 %v3121, %v2316
        %v3123 = vmax.f32 %v3122, %v2319
        %v3124 = vmax.f32 %v3123, %v2321
        %v3125 = vmax.f32 %v3124, %v2324
        %v3126 = vmax.f32 %v3125, %v2326
        %v3127 = vmax.f32 %v3126, %v2329
        %v3128 = vmax.f32 %v3127, %v2331
        %v3129 = vmax.f32 %v3128, %v2334
        %v3130 = vmax.f32 %v3129, %v2336
        %v3131 = vmax.f32 %v3130, %v2339
        %v3132 = vmax.f32 %v3131, %v2341
        %v3133 = vmax.f32 %v3132, %v2344
        %v3134 = vmax.f32 %v3133, %v2346
        %v3135 = vmax.f32 %v3134, %v2349
        %v3136 = vmax.f32 %v3135, %v2351
        %v3137 = vmax.f32 %v3136, %v2354
        %v3138 = vmax.f32 %v3137, %v2356
        %v3139 = vmax.f32 %v3138, %v2359
        %v3140 = vmax.f32 %v3139, %v2361
        %v3141 = vmax.f32 %v3140, %v2364
        %v3142 = vmax.f32 %v3141, %v2366
        %v3143 = vmax.f32 %v3142, %v2369
        %v3144 = vmax.f32 %v3143, %v2371
        %v3145 = vmax.f32 %v3144, %v2374
        %v3146 = vmax.f32 %v3145, %v2376
        %v3147 = vmax.f32 %v3146, %v2379
        %v3148 = vmax.f32 %v3147, %v2381
        %v3149 = vmax.f32 %v3148, %v2384
        %v3150 = vmax.f32 %v3149, %v2386
        %v3151 = vmax.f32 %v3150, %v2389
        %v3152 = vmax.f32 %v3151, %v2391
        %v3153 = vmax.f32 %v3152, %v2394
        %v3154 = vmax.f32 %v3153, %v2396
        %v3155 = vmax.f32 %v3154, %v2399
        %v3156 = vmax.f32 %v3155, %v2401
        %v3157 = vmax.f32 %v3156, %v2404
        %v3158 = vmax.f32 %v3157, %v2406
        %v3159 = vmax.f32 %v3158, %v2409
        %v3160 = vmax.f32 %v3159, %v2411
        %v3161 = vrot.slane %v3160, 4
        %v3162 = vmax.f32 %v3160, %v3161
        %v3163 = vrot.slane %v3162, 2
        %v3164 = vmax.f32 %v3162, %v3163
        %v3165 = vrot.slane %v3164, 1
        %v3166 = vmax.f32 %v3164, %v3165
        %v3167 = vmax.f32 %v2423, %v2425
        %v3168 = vmax.f32 %v3167, %v2428
        %v3169 = vmax.f32 %v3168, %v2430
        %v3170 = vmax.f32 %v3169, %v2433
        %v3171 = vmax.f32 %v3170, %v2435
        %v3172 = vmax.f32 %v3171, %v2438
        %v3173 = vmax.f32 %v3172, %v2440
        %v3174 = vmax.f32 %v3173, %v2443
        %v3175 = vmax.f32 %v3174, %v2445
        %v3176 = vmax.f32 %v3175, %v2448
        %v3177 = vmax.f32 %v3176, %v2450
        %v3178 = vmax.f32 %v3177, %v2453
        %v3179 = vmax.f32 %v3178, %v2455
        %v3180 = vmax.f32 %v3179, %v2458
        %v3181 = vmax.f32 %v3180, %v2460
        %v3182 = vmax.f32 %v3181, %v2463
        %v3183 = vmax.f32 %v3182, %v2465
        %v3184 = vmax.f32 %v3183, %v2468
        %v3185 = vmax.f32 %v3184, %v2470
        %v3186 = vmax.f32 %v3185, %v2473
        %v3187 = vmax.f32 %v3186, %v2475
        %v3188 = vmax.f32 %v3187, %v2478
        %v3189 = vmax.f32 %v3188, %v2480
        %v3190 = vmax.f32 %v3189, %v2483
        %v3191 = vmax.f32 %v3190, %v2485
        %v3192 = vmax.f32 %v3191, %v2488
        %v3193 = vmax.f32 %v3192, %v2490
        %v3194 = vmax.f32 %v3193, %v2493
        %v3195 = vmax.f32 %v3194, %v2495
        %v3196 = vmax.f32 %v3195, %v2498
        %v3197 = vmax.f32 %v3196, %v2500
        %v3198 = vmax.f32 %v3197, %v2503
        %v3199 = vmax.f32 %v3198, %v2505
        %v3200 = vmax.f32 %v3199, %v2508
        %v3201 = vmax.f32 %v3200, %v2510
        %v3202 = vmax.f32 %v3201, %v2513
        %v3203 = vmax.f32 %v3202, %v2515
        %v3204 = vmax.f32 %v3203, %v2518
        %v3205 = vmax.f32 %v3204, %v2520
        %v3206 = vmax.f32 %v3205, %v2523
        %v3207 = vmax.f32 %v3206, %v2525
        %v3208 = vmax.f32 %v3207, %v2528
        %v3209 = vmax.f32 %v3208, %v2530
        %v3210 = vmax.f32 %v3209, %v2533
        %v3211 = vmax.f32 %v3210, %v2535
        %v3212 = vmax.f32 %v3211, %v2538
        %v3213 = vmax.f32 %v3212, %v2540
        %v3214 = vmax.f32 %v3213, %v2543
        %v3215 = vmax.f32 %v3214, %v2545
        %v3216 = vmax.f32 %v3215, %v2548
        %v3217 = vmax.f32 %v3216, %v2550
        %v3218 = vmax.f32 %v3217, %v2553
        %v3219 = vmax.f32 %v3218, %v2555
        %v3220 = vmax.f32 %v3219, %v2558
        %v3221 = vmax.f32 %v3220, %v2560
        %v3222 = vmax.f32 %v3221, %v2563
        %v3223 = vmax.f32 %v3222, %v2565
        %v3224 = vmax.f32 %v3223, %v2568
        %v3225 = vmax.f32 %v3224, %v2570
        %v3226 = vmax.f32 %v3225, %v2573
        %v3227 = vmax.f32 %v3226, %v2575
        %v3228 = vmax.f32 %v3227, %v2578
        %v3229 = vmax.f32 %v3228, %v2580
        %v3230 = vrot.slane %v3229, 4
        %v3231 = vmax.f32 %v3229, %v3230
        %v3232 = vrot.slane %v3231, 2
        %v3233 = vmax.f32 %v3231, %v3232
        %v3234 = vrot.slane %v3233, 1
        %v3235 = vmax.f32 %v3233, %v3234
        %v3236 = vmax.f32 %v2592, %v2594
        %v3237 = vmax.f32 %v3236, %v2597
        %v3238 = vmax.f32 %v3237, %v2599
        %v3239 = vmax.f32 %v3238, %v2602
        %v3240 = vmax.f32 %v3239, %v2604
        %v3241 = vmax.f32 %v3240, %v2607
        %v3242 = vmax.f32 %v3241, %v2609
        %v3243 = vmax.f32 %v3242, %v2612
        %v3244 = vmax.f32 %v3243, %v2614
        %v3245 = vmax.f32 %v3244, %v2617
        %v3246 = vmax.f32 %v3245, %v2619
        %v3247 = vmax.f32 %v3246, %v2622
        %v3248 = vmax.f32 %v3247, %v2624
        %v3249 = vmax.f32 %v3248, %v2627
        %v3250 = vmax.f32 %v3249, %v2629
        %v3251 = vmax.f32 %v3250, %v2632
        %v3252 = vmax.f32 %v3251, %v2634
        %v3253 = vmax.f32 %v3252, %v2637
        %v3254 = vmax.f32 %v3253, %v2639
        %v3255 = vmax.f32 %v3254, %v2642
        %v3256 = vmax.f32 %v3255, %v2644
        %v3257 = vmax.f32 %v3256, %v2647
        %v3258 = vmax.f32 %v3257, %v2649
        %v3259 = vmax.f32 %v3258, %v2652
        %v3260 = vmax.f32 %v3259, %v2654
        %v3261 = vmax.f32 %v3260, %v2657
        %v3262 = vmax.f32 %v3261, %v2659
        %v3263 = vmax.f32 %v3262, %v2662
        %v3264 = vmax.f32 %v3263, %v2664
        %v3265 = vmax.f32 %v3264, %v2667
        %v3266 = vmax.f32 %v3265, %v2669
        %v3267 = vmax.f32 %v3266, %v2672
        %v3268 = vmax.f32 %v3267, %v2674
        %v3269 = vmax.f32 %v3268, %v2677
        %v3270 = vmax.f32 %v3269, %v2679
        %v3271 = vmax.f32 %v3270, %v2682
        %v3272 = vmax.f32 %v3271, %v2684
        %v3273 = vmax.f32 %v3272, %v2687
        %v3274 = vmax.f32 %v3273, %v2689
        %v3275 = vmax.f32 %v3274, %v2692
        %v3276 = vmax.f32 %v3275, %v2694
        %v3277 = vmax.f32 %v3276, %v2697
        %v3278 = vmax.f32 %v3277, %v2699
        %v3279 = vmax.f32 %v3278, %v2702
        %v3280 = vmax.f32 %v3279, %v2704
        %v3281 = vmax.f32 %v3280, %v2707
        %v3282 = vmax.f32 %v3281, %v2709
        %v3283 = vmax.f32 %v3282, %v2712
        %v3284 = vmax.f32 %v3283, %v2714
        %v3285 = vmax.f32 %v3284, %v2717
        %v3286 = vmax.f32 %v3285, %v2719
        %v3287 = vmax.f32 %v3286, %v2722
        %v3288 = vmax.f32 %v3287, %v2724
        %v3289 = vmax.f32 %v3288, %v2727
        %v3290 = vmax.f32 %v3289, %v2729
        %v3291 = vmax.f32 %v3290, %v2732
        %v3292 = vmax.f32 %v3291, %v2734
        %v3293 = vmax.f32 %v3292, %v2737
        %v3294 = vmax.f32 %v3293, %v2739
        %v3295 = vmax.f32 %v3294, %v2742
        %v3296 = vmax.f32 %v3295, %v2744
        %v3297 = vmax.f32 %v3296, %v2747
        %v3298 = vmax.f32 %v3297, %v2749
        %v3299 = vrot.slane %v3298, 4
        %v3300 = vmax.f32 %v3298, %v3299
        %v3301 = vrot.slane %v3300, 2
        %v3302 = vmax.f32 %v3300, %v3301
        %v3303 = vrot.slane %v3302, 1
        %v3304 = vmax.f32 %v3302, %v3303
        %v3313 = vrot.slane %v2890, 7
        %v3314 = vrot.slane %v2959, 6
        %v3315 = vrot.slane %v3028, 5
        %v3316 = vrot.slane %v3166, 7
        %v3317 = vrot.slane %v3235, 6
        %v3318 = vrot.slane %v3304, 5
        %vm3319 = vcmask 1040384
        %v3320 = vsel %vm3319, %v2821, %v3313
        %vm3321 = vcmask 1042434
        %v3322 = vsel %vm3321, %v3314, %v3315
        %vm3323 = vcmask 1041408
        %v3324 = vsel %vm3323, %v3320, %v3322
        %v3325 = vsel %vm3319, %v3097, %v3316
        %v3326 = vsel %vm3321, %v3317, %v3318
        %v3327 = vsel %vm3323, %v3325, %v3326
        %v3330 = vmax.f32 %v2751, %v3324
        %v3331 = vmax.f32 %v2752, %v3327
        %v3332 = vsub.f32 %v2751, %v3330
        %v3333 = vsub.f32 %v2752, %v3331
        %v3334 = vmul.f32 %v3332, 1.442695
        %v3335 = vpow.pop %v3334
        %v3336 = vmul.f32 %v3333, 1.442695
        %v3337 = vpow.pop %v3336
        %v3340 = vperm.slane %v3330, 0
        %v3341 = vperm.slane %v3330, 1
        %v3342 = vperm.slane %v3330, 2
        %v3343 = vperm.slane %v3330, 3
        %v3344 = vperm.slane %v3331, 0
        %v3345 = vperm.slane %v3331, 1
        %v3346 = vperm.slane %v3331, 2
        %v3347 = vperm.slane %v3331, 3
        %v3356 = vsub.f32 %v1105, %v3340
        %v3357 = vsub.f32 %v1274, %v3341
        %v3358 = vsub.f32 %v1443, %v3342
        %v3359 = vsub.f32 %v1612, %v3343
        %v3360 = vsub.f32 %v1107, %v3340
        %v3361 = vsub.f32 %v1276, %v3341
        %v3362 = vsub.f32 %v1445, %v3342
        %v3363 = vsub.f32 %v1614, %v3343
        %v3364 = vsub.f32 %v1110, %v3340
        %v3365 = vsub.f32 %v1279, %v3341
        %v3366 = vsub.f32 %v1448, %v3342
        %v3367 = vsub.f32 %v1617, %v3343
        %v3368 = vsub.f32 %v1112, %v3340
        %v3369 = vsub.f32 %v1281, %v3341
        %v3370 = vsub.f32 %v1450, %v3342
        %v3371 = vsub.f32 %v1619, %v3343
        %v3372 = vsub.f32 %v1115, %v3340
        %v3373 = vsub.f32 %v1284, %v3341
        %v3374 = vsub.f32 %v1453, %v3342
        %v3375 = vsub.f32 %v1622, %v3343
        %v3376 = vsub.f32 %v1117, %v3340
        %v3377 = vsub.f32 %v1286, %v3341
        %v3378 = vsub.f32 %v1455, %v3342
        %v3379 = vsub.f32 %v1624, %v3343
        %v3380 = vsub.f32 %v1120, %v3340
        %v3381 = vsub.f32 %v1289, %v3341
        %v3382 = vsub.f32 %v1458, %v3342
        %v3383 = vsub.f32 %v1627, %v3343
        %v3384 = vsub.f32 %v1122, %v3340
        %v3385 = vsub.f32 %v1291, %v3341
        %v3386 = vsub.f32 %v1460, %v3342
        %v3387 = vsub.f32 %v1629, %v3343
        %v3388 = vsub.f32 %v1125, %v3340
        %v3389 = vsub.f32 %v1294, %v3341
        %v3390 = vsub.f32 %v1463, %v3342
        %v3391 = vsub.f32 %v1632, %v3343
        %v3392 = vsub.f32 %v1127, %v3340
        %v3393 = vsub.f32 %v1296, %v3341
        %v3394 = vsub.f32 %v1465, %v3342
        %v3395 = vsub.f32 %v1634, %v3343
        %v3396 = vsub.f32 %v1130, %v3340
        %v3397 = vsub.f32 %v1299, %v3341
        %v3398 = vsub.f32 %v1468, %v3342
        %v3399 = vsub.f32 %v1637, %v3343
        %v3400 = vsub.f32 %v1132, %v3340
        %v3401 = vsub.f32 %v1301, %v3341
        %v3402 = vsub.f32 %v1470, %v3342
        %v3403 = vsub.f32 %v1639, %v3343
        %v3404 = vsub.f32 %v1135, %v3340
        %v3405 = vsub.f32 %v1304, %v3341
        %v3406 = vsub.f32 %v1473, %v3342
        %v3407 = vsub.f32 %v1642, %v3343
        %v3408 = vsub.f32 %v1137, %v3340
        %v3409 = vsub.f32 %v1306, %v3341
        %v3410 = vsub.f32 %v1475, %v3342
        %v3411 = vsub.f32 %v1644, %v3343
        %v3412 = vsub.f32 %v1140, %v3340
        %v3413 = vsub.f32 %v1309, %v3341
        %v3414 = vsub.f32 %v1478, %v3342
        %v3415 = vsub.f32 %v1647, %v3343
        %v3416 = vsub.f32 %v1142, %v3340
        %v3417 = vsub.f32 %v1311, %v3341
        %v3418 = vsub.f32 %v1480, %v3342
        %v3419 = vsub.f32 %v1649, %v3343
        %v3420 = vsub.f32 %v1145, %v3340
        %v3421 = vsub.f32 %v1314, %v3341
        %v3422 = vsub.f32 %v1483, %v3342
        %v3423 = vsub.f32 %v1652, %v3343
        %v3424 = vsub.f32 %v1147, %v3340
        %v3425 = vsub.f32 %v1316, %v3341
        %v3426 = vsub.f32 %v1485, %v3342
        %v3427 = vsub.f32 %v1654, %v3343
        %v3428 = vsub.f32 %v1150, %v3340
        %v3429 = vsub.f32 %v1319, %v3341
        %v3430 = vsub.f32 %v1488, %v3342
        %v3431 = vsub.f32 %v1657, %v3343
        %v3432 = vsub.f32 %v1152, %v3340
        %v3433 = vsub.f32 %v1321, %v3341
        %v3434 = vsub.f32 %v1490, %v3342
        %v3435 = vsub.f32 %v1659, %v3343
        %v3436 = vsub.f32 %v1155, %v3340
        %v3437 = vsub.f32 %v1324, %v3341
        %v3438 = vsub.f32 %v1493, %v3342
        %v3439 = vsub.f32 %v1662, %v3343
        %v3440 = vsub.f32 %v1157, %v3340
        %v3441 = vsub.f32 %v1326, %v3341
        %v3442 = vsub.f32 %v1495, %v3342
        %v3443 = vsub.f32 %v1664, %v3343
        %v3444 = vsub.f32 %v1160, %v3340
        %v3445 = vsub.f32 %v1329, %v3341
        %v3446 = vsub.f32 %v1498, %v3342
        %v3447 = vsub.f32 %v1667, %v3343
        %v3448 = vsub.f32 %v1162, %v3340
        %v3449 = vsub.f32 %v1331, %v3341
        %v3450 = vsub.f32 %v1500, %v3342
        %v3451 = vsub.f32 %v1669, %v3343
        %v3452 = vsub.f32 %v1165, %v3340
        %v3453 = vsub.f32 %v1334, %v3341
        %v3454 = vsub.f32 %v1503, %v3342
        %v3455 = vsub.f32 %v1672, %v3343
        %v3456 = vsub.f32 %v1167, %v3340
        %v3457 = vsub.f32 %v1336, %v3341
        %v3458 = vsub.f32 %v1505, %v3342
        %v3459 = vsub.f32 %v1674, %v3343
        %v3460 = vsub.f32 %v1170, %v3340
        %v3461 = vsub.f32 %v1339, %v3341
        %v3462 = vsub.f32 %v1508, %v3342
        %v3463 = vsub.f32 %v1677, %v3343
        %v3464 = vsub.f32 %v1172, %v3340
        %v3465 = vsub.f32 %v1341, %v3341
        %v3466 = vsub.f32 %v1510, %v3342
        %v3467 = vsub.f32 %v1679, %v3343
        %v3468 = vsub.f32 %v1175, %v3340
        %v3469 = vsub.f32 %v1344, %v3341
        %v3470 = vsub.f32 %v1513, %v3342
        %v3471 = vsub.f32 %v1682, %v3343
        %v3472 = vsub.f32 %v1177, %v3340
        %v3473 = vsub.f32 %v1346, %v3341
        %v3474 = vsub.f32 %v1515, %v3342
        %v3475 = vsub.f32 %v1684, %v3343
        %v3476 = vsub.f32 %v1180, %v3340
        %v3477 = vsub.f32 %v1349, %v3341
        %v3478 = vsub.f32 %v1518, %v3342
        %v3479 = vsub.f32 %v1687, %v3343
        %v3480 = vsub.f32 %v1182, %v3340
        %v3481 = vsub.f32 %v1351, %v3341
        %v3482 = vsub.f32 %v1520, %v3342
        %v3483 = vsub.f32 %v1689, %v3343
        %v3484 = vsub.f32 %v1185, %v3340
        %v3485 = vsub.f32 %v1354, %v3341
        %v3486 = vsub.f32 %v1523, %v3342
        %v3487 = vsub.f32 %v1692, %v3343
        %v3488 = vsub.f32 %v1187, %v3340
        %v3489 = vsub.f32 %v1356, %v3341
        %v3490 = vsub.f32 %v1525, %v3342
        %v3491 = vsub.f32 %v1694, %v3343
        %v3492 = vsub.f32 %v1190, %v3340
        %v3493 = vsub.f32 %v1359, %v3341
        %v3494 = vsub.f32 %v1528, %v3342
        %v3495 = vsub.f32 %v1697, %v3343
        %v3496 = vsub.f32 %v1192, %v3340
        %v3497 = vsub.f32 %v1361, %v3341
        %v3498 = vsub.f32 %v1530, %v3342
        %v3499 = vsub.f32 %v1699, %v3343
        %v3500 = vsub.f32 %v1195, %v3340
        %v3501 = vsub.f32 %v1364, %v3341
        %v3502 = vsub.f32 %v1533, %v3342
        %v3503 = vsub.f32 %v1702, %v3343
        %v3504 = vsub.f32 %v1197, %v3340
        %v3505 = vsub.f32 %v1366, %v3341
        %v3506 = vsub.f32 %v1535, %v3342
        %v3507 = vsub.f32 %v1704, %v3343
        %v3508 = vsub.f32 %v1200, %v3340
        %v3509 = vsub.f32 %v1369, %v3341
        %v3510 = vsub.f32 %v1538, %v3342
        %v3511 = vsub.f32 %v1707, %v3343
        %v3512 = vsub.f32 %v1202, %v3340
        %v3513 = vsub.f32 %v1371, %v3341
        %v3514 = vsub.f32 %v1540, %v3342
        %v3515 = vsub.f32 %v1709, %v3343
        %v3516 = vsub.f32 %v1205, %v3340
        %v3517 = vsub.f32 %v1374, %v3341
        %v3518 = vsub.f32 %v1543, %v3342
        %v3519 = vsub.f32 %v1712, %v3343
        %v3520 = vsub.f32 %v1207, %v3340
        %v3521 = vsub.f32 %v1376, %v3341
        %v3522 = vsub.f32 %v1545, %v3342
        %v3523 = vsub.f32 %v1714, %v3343
        %v3524 = vsub.f32 %v1210, %v3340
        %v3525 = vsub.f32 %v1379, %v3341
        %v3526 = vsub.f32 %v1548, %v3342
        %v3527 = vsub.f32 %v1717, %v3343
        %v3528 = vsub.f32 %v1212, %v3340
        %v3529 = vsub.f32 %v1381, %v3341
        %v3530 = vsub.f32 %v1550, %v3342
        %v3531 = vsub.f32 %v1719, %v3343
        %v3532 = vsub.f32 %v1215, %v3340
        %v3533 = vsub.f32 %v1384, %v3341
        %v3534 = vsub.f32 %v1553, %v3342
        %v3535 = vsub.f32 %v1722, %v3343
        %v3536 = vsub.f32 %v1217, %v3340
        %v3537 = vsub.f32 %v1386, %v3341
        %v3538 = vsub.f32 %v1555, %v3342
        %v3539 = vsub.f32 %v1724, %v3343
        %v3540 = vsub.f32 %v1220, %v3340
        %v3541 = vsub.f32 %v1389, %v3341
        %v3542 = vsub.f32 %v1558, %v3342
        %v3543 = vsub.f32 %v1727, %v3343
        %v3544 = vsub.f32 %v1222, %v3340
        %v3545 = vsub.f32 %v1391, %v3341
        %v3546 = vsub.f32 %v1560, %v3342
        %v3547 = vsub.f32 %v1729, %v3343
        %v3548 = vsub.f32 %v1225, %v3340
        %v3549 = vsub.f32 %v1394, %v3341
        %v3550 = vsub.f32 %v1563, %v3342
        %v3551 = vsub.f32 %v1732, %v3343
        %v3552 = vsub.f32 %v1227, %v3340
        %v3553 = vsub.f32 %v1396, %v3341
        %v3554 = vsub.f32 %v1565, %v3342
        %v3555 = vsub.f32 %v1734, %v3343
        %v3556 = vsub.f32 %v1230, %v3340
        %v3557 = vsub.f32 %v1399, %v3341
        %v3558 = vsub.f32 %v1568, %v3342
        %v3559 = vsub.f32 %v1737, %v3343
        %v3560 = vsub.f32 %v1232, %v3340
        %v3561 = vsub.f32 %v1401, %v3341
        %v3562 = vsub.f32 %v1570, %v3342
        %v3563 = vsub.f32 %v1739, %v3343
        %v3564 = vsub.f32 %v1235, %v3340
        %v3565 = vsub.f32 %v1404, %v3341
        %v3566 = vsub.f32 %v1573, %v3342
        %v3567 = vsub.f32 %v1742, %v3343
        %v3568 = vsub.f32 %v1237, %v3340
        %v3569 = vsub.f32 %v1406, %v3341
        %v3570 = vsub.f32 %v1575, %v3342
        %v3571 = vsub.f32 %v1744, %v3343
        %v3572 = vsub.f32 %v1240, %v3340
        %v3573 = vsub.f32 %v1409, %v3341
        %v3574 = vsub.f32 %v1578, %v3342
        %v3575 = vsub.f32 %v1747, %v3343
        %v3576 = vsub.f32 %v1242, %v3340
        %v3577 = vsub.f32 %v1411, %v3341
        %v3578 = vsub.f32 %v1580, %v3342
        %v3579 = vsub.f32 %v1749, %v3343
        %v3580 = vsub.f32 %v1245, %v3340
        %v3581 = vsub.f32 %v1414, %v3341
        %v3582 = vsub.f32 %v1583, %v3342
        %v3583 = vsub.f32 %v1752, %v3343
        %v3584 = vsub.f32 %v1247, %v3340
        %v3585 = vsub.f32 %v1416, %v3341
        %v3586 = vsub.f32 %v1585, %v3342
        %v3587 = vsub.f32 %v1754, %v3343
        %v3588 = vsub.f32 %v1250, %v3340
        %v3589 = vsub.f32 %v1419, %v3341
        %v3590 = vsub.f32 %v1588, %v3342
        %v3591 = vsub.f32 %v1757, %v3343
        %v3592 = vsub.f32 %v1252, %v3340
        %v3593 = vsub.f32 %v1421, %v3341
        %v3594 = vsub.f32 %v1590, %v3342
        %v3595 = vsub.f32 %v1759, %v3343
        %v3596 = vsub.f32 %v1255, %v3340
        %v3597 = vsub.f32 %v1424, %v3341
        %v3598 = vsub.f32 %v1593, %v3342
        %v3599 = vsub.f32 %v1762, %v3343
        %v3600 = vsub.f32 %v1257, %v3340
        %v3601 = vsub.f32 %v1426, %v3341
        %v3602 = vsub.f32 %v1595, %v3342
        %v3603 = vsub.f32 %v1764, %v3343
        %v3604 = vsub.f32 %v1260, %v3340
        %v3605 = vsub.f32 %v1429, %v3341
        %v3606 = vsub.f32 %v1598, %v3342
        %v3607 = vsub.f32 %v1767, %v3343
        %v3608 = vsub.f32 %v1262, %v3340
        %v3609 = vsub.f32 %v1431, %v3341
        %v3610 = vsub.f32 %v1600, %v3342
        %v3611 = vsub.f32 %v1769, %v3343
        %v3612 = vsub.f32 %v2085, %v3344
        %v3613 = vsub.f32 %v2254, %v3345
        %v3614 = vsub.f32 %v2423, %v3346
        %v3615 = vsub.f32 %v2592, %v3347
        %v3616 = vsub.f32 %v2087, %v3344
        %v3617 = vsub.f32 %v2256, %v3345
        %v3618 = vsub.f32 %v2425, %v3346
        %v3619 = vsub.f32 %v2594, %v3347
        %v3620 = vsub.f32 %v2090, %v3344
        %v3621 = vsub.f32 %v2259, %v3345
        %v3622 = vsub.f32 %v2428, %v3346
        %v3623 = vsub.f32 %v2597, %v3347
        %v3624 = vsub.f32 %v2092, %v3344
        %v3625 = vsub.f32 %v2261, %v3345
        %v3626 = vsub.f32 %v2430, %v3346
        %v3627 = vsub.f32 %v2599, %v3347
        %v3628 = vsub.f32 %v2095, %v3344
        %v3629 = vsub.f32 %v2264, %v3345
        %v3630 = vsub.f32 %v2433, %v3346
        %v3631 = vsub.f32 %v2602, %v3347
        %v3632 = vsub.f32 %v2097, %v3344
        %v3633 = vsub.f32 %v2266, %v3345
        %v3634 = vsub.f32 %v2435, %v3346
        %v3635 = vsub.f32 %v2604, %v3347
        %v3636 = vsub.f32 %v2100, %v3344
        %v3637 = vsub.f32 %v2269, %v3345
        %v3638 = vsub.f32 %v2438, %v3346
        %v3639 = vsub.f32 %v2607, %v3347
        %v3640 = vsub.f32 %v2102, %v3344
        %v3641 = vsub.f32 %v2271, %v3345
        %v3642 = vsub.f32 %v2440, %v3346
        %v3643 = vsub.f32 %v2609, %v3347
        %v3644 = vsub.f32 %v2105, %v3344
        %v3645 = vsub.f32 %v2274, %v3345
        %v3646 = vsub.f32 %v2443, %v3346
        %v3647 = vsub.f32 %v2612, %v3347
        %v3648 = vsub.f32 %v2107, %v3344
        %v3649 = vsub.f32 %v2276, %v3345
        %v3650 = vsub.f32 %v2445, %v3346
        %v3651 = vsub.f32 %v2614, %v3347
        %v3652 = vsub.f32 %v2110, %v3344
        %v3653 = vsub.f32 %v2279, %v3345
        %v3654 = vsub.f32 %v2448, %v3346
        %v3655 = vsub.f32 %v2617, %v3347
        %v3656 = vsub.f32 %v2112, %v3344
        %v3657 = vsub.f32 %v2281, %v3345
        %v3658 = vsub.f32 %v2450, %v3346
        %v3659 = vsub.f32 %v2619, %v3347
        %v3660 = vsub.f32 %v2115, %v3344
        %v3661 = vsub.f32 %v2284, %v3345
        %v3662 = vsub.f32 %v2453, %v3346
        %v3663 = vsub.f32 %v2622, %v3347
        %v3664 = vsub.f32 %v2117, %v3344
        %v3665 = vsub.f32 %v2286, %v3345
        %v3666 = vsub.f32 %v2455, %v3346
        %v3667 = vsub.f32 %v2624, %v3347
        %v3668 = vsub.f32 %v2120, %v3344
        %v3669 = vsub.f32 %v2289, %v3345
        %v3670 = vsub.f32 %v2458, %v3346
        %v3671 = vsub.f32 %v2627, %v3347
        %v3672 = vsub.f32 %v2122, %v3344
        %v3673 = vsub.f32 %v2291, %v3345
        %v3674 = vsub.f32 %v2460, %v3346
        %v3675 = vsub.f32 %v2629, %v3347
        %v3676 = vsub.f32 %v2125, %v3344
        %v3677 = vsub.f32 %v2294, %v3345
        %v3678 = vsub.f32 %v2463, %v3346
        %v3679 = vsub.f32 %v2632, %v3347
        %v3680 = vsub.f32 %v2127, %v3344
        %v3681 = vsub.f32 %v2296, %v3345
        %v3682 = vsub.f32 %v2465, %v3346
        %v3683 = vsub.f32 %v2634, %v3347
        %v3684 = vsub.f32 %v2130, %v3344
        %v3685 = vsub.f32 %v2299, %v3345
        %v3686 = vsub.f32 %v2468, %v3346
        %v3687 = vsub.f32 %v2637, %v3347
        %v3688 = vsub.f32 %v2132, %v3344
        %v3689 = vsub.f32 %v2301, %v3345
        %v3690 = vsub.f32 %v2470, %v3346
        %v3691 = vsub.f32 %v2639, %v3347
        %v3692 = vsub.f32 %v2135, %v3344
        %v3693 = vsub.f32 %v2304, %v3345
        %v3694 = vsub.f32 %v2473, %v3346
        %v3695 = vsub.f32 %v2642, %v3347
        %v3696 = vsub.f32 %v2137, %v3344
        %v3697 = vsub.f32 %v2306, %v3345
        %v3698 = vsub.f32 %v2475, %v3346
        %v3699 = vsub.f32 %v2644, %v3347
        %v3700 = vsub.f32 %v2140, %v3344
        %v3701 = vsub.f32 %v2309, %v3345
        %v3702 = vsub.f32 %v2478, %v3346
        %v3703 = vsub.f32 %v2647, %v3347
        %v3704 = vsub.f32 %v2142, %v3344
        %v3705 = vsub.f32 %v2311, %v3345
        %v3706 = vsub.f32 %v2480, %v3346
        %v3707 = vsub.f32 %v2649, %v3347
        %v3708 = vsub.f32 %v2145, %v3344
        %v3709 = vsub.f32 %v2314, %v3345
        %v3710 = vsub.f32 %v2483, %v3346
        %v3711 = vsub.f32 %v2652, %v3347
        %v3712 = vsub.f32 %v2147, %v3344
        %v3713 = vsub.f32 %v2316, %v3345
        %v3714 = vsub.f32 %v2485, %v3346
        %v3715 = vsub.f32 %v2654, %v3347
        %v3716 = vsub.f32 %v2150, %v3344
        %v3717 = vsub.f32 %v2319, %v3345
        %v3718 = vsub.f32 %v2488, %v3346
        %v3719 = vsub.f32 %v2657, %v3347
        %v3720 = vsub.f32 %v2152, %v3344
        %v3721 = vsub.f32 %v2321, %v3345
        %v3722 = vsub.f32 %v2490, %v3346
        %v3723 = vsub.f32 %v2659, %v3347
        %v3724 = vsub.f32 %v2155, %v3344
        %v3725 = vsub.f32 %v2324, %v3345
        %v3726 = vsub.f32 %v2493, %v3346
        %v3727 = vsub.f32 %v2662, %v3347
        %v3728 = vsub.f32 %v2157, %v3344
        %v3729 = vsub.f32 %v2326, %v3345
        %v3730 = vsub.f32 %v2495, %v3346
        %v3731 = vsub.f32 %v2664, %v3347
        %v3732 = vsub.f32 %v2160, %v3344
        %v3733 = vsub.f32 %v2329, %v3345
        %v3734 = vsub.f32 %v2498, %v3346
        %v3735 = vsub.f32 %v2667, %v3347
        %v3736 = vsub.f32 %v2162, %v3344
        %v3737 = vsub.f32 %v2331, %v3345
        %v3738 = vsub.f32 %v2500, %v3346
        %v3739 = vsub.f32 %v2669, %v3347
        %v3740 = vsub.f32 %v2165, %v3344
        %v3741 = vsub.f32 %v2334, %v3345
        %v3742 = vsub.f32 %v2503, %v3346
        %v3743 = vsub.f32 %v2672, %v3347
        %v3744 = vsub.f32 %v2167, %v3344
        %v3745 = vsub.f32 %v2336, %v3345
        %v3746 = vsub.f32 %v2505, %v3346
        %v3747 = vsub.f32 %v2674, %v3347
        %v3748 = vsub.f32 %v2170, %v3344
        %v3749 = vsub.f32 %v2339, %v3345
        %v3750 = vsub.f32 %v2508, %v3346
        %v3751 = vsub.f32 %v2677, %v3347
        %v3752 = vsub.f32 %v2172, %v3344
        %v3753 = vsub.f32 %v2341, %v3345
        %v3754 = vsub.f32 %v2510, %v3346
        %v3755 = vsub.f32 %v2679, %v3347
        %v3756 = vsub.f32 %v2175, %v3344
        %v3757 = vsub.f32 %v2344, %v3345
        %v3758 = vsub.f32 %v2513, %v3346
        %v3759 = vsub.f32 %v2682, %v3347
        %v3760 = vsub.f32 %v2177, %v3344
        %v3761 = vsub.f32 %v2346, %v3345
        %v3762 = vsub.f32 %v2515, %v3346
        %v3763 = vsub.f32 %v2684, %v3347
        %v3764 = vsub.f32 %v2180, %v3344
        %v3765 = vsub.f32 %v2349, %v3345
        %v3766 = vsub.f32 %v2518, %v3346
        %v3767 = vsub.f32 %v2687, %v3347
        %v3768 = vsub.f32 %v2182, %v3344
        %v3769 = vsub.f32 %v2351, %v3345
        %v3770 = vsub.f32 %v2520, %v3346
        %v3771 = vsub.f32 %v2689, %v3347
        %v3772 = vsub.f32 %v2185, %v3344
        %v3773 = vsub.f32 %v2354, %v3345
        %v3774 = vsub.f32 %v2523, %v3346
        %v3775 = vsub.f32 %v2692, %v3347
        %v3776 = vsub.f32 %v2187, %v3344
        %v3777 = vsub.f32 %v2356, %v3345
        %v3778 = vsub.f32 %v2525, %v3346
        %v3779 = vsub.f32 %v2694, %v3347
        %v3780 = vsub.f32 %v2190, %v3344
        %v3781 = vsub.f32 %v2359, %v3345
        %v3782 = vsub.f32 %v2528, %v3346
        %v3783 = vsub.f32 %v2697, %v3347
        %v3784 = vsub.f32 %v2192, %v3344
        %v3785 = vsub.f32 %v2361, %v3345
        %v3786 = vsub.f32 %v2530, %v3346
        %v3787 = vsub.f32 %v2699, %v3347
        %v3788 = vsub.f32 %v2195, %v3344
        %v3789 = vsub.f32 %v2364, %v3345
        %v3790 = vsub.f32 %v2533, %v3346
        %v3791 = vsub.f32 %v2702, %v3347
        %v3792 = vsub.f32 %v2197, %v3344
        %v3793 = vsub.f32 %v2366, %v3345
        %v3794 = vsub.f32 %v2535, %v3346
        %v3795 = vsub.f32 %v2704, %v3347
        %v3796 = vsub.f32 %v2200, %v3344
        %v3797 = vsub.f32 %v2369, %v3345
        %v3798 = vsub.f32 %v2538, %v3346
        %v3799 = vsub.f32 %v2707, %v3347
        %v3800 = vsub.f32 %v2202, %v3344
        %v3801 = vsub.f32 %v2371, %v3345
        %v3802 = vsub.f32 %v2540, %v3346
        %v3803 = vsub.f32 %v2709, %v3347
        %v3804 = vsub.f32 %v2205, %v3344
        %v3805 = vsub.f32 %v2374, %v3345
        %v3806 = vsub.f32 %v2543, %v3346
        %v3807 = vsub.f32 %v2712, %v3347
        %v3808 = vsub.f32 %v2207, %v3344
        %v3809 = vsub.f32 %v2376, %v3345
        %v3810 = vsub.f32 %v2545, %v3346
        %v3811 = vsub.f32 %v2714, %v3347
        %v3812 = vsub.f32 %v2210, %v3344
        %v3813 = vsub.f32 %v2379, %v3345
        %v3814 = vsub.f32 %v2548, %v3346
        %v3815 = vsub.f32 %v2717, %v3347
        %v3816 = vsub.f32 %v2212, %v3344
        %v3817 = vsub.f32 %v2381, %v3345
        %v3818 = vsub.f32 %v2550, %v3346
        %v3819 = vsub.f32 %v2719, %v3347
        %v3820 = vsub.f32 %v2215, %v3344
        %v3821 = vsub.f32 %v2384, %v3345
        %v3822 = vsub.f32 %v2553, %v3346
        %v3823 = vsub.f32 %v2722, %v3347
        %v3824 = vsub.f32 %v2217, %v3344
        %v3825 = vsub.f32 %v2386, %v3345
        %v3826 = vsub.f32 %v2555, %v3346
        %v3827 = vsub.f32 %v2724, %v3347
        %v3828 = vsub.f32 %v2220, %v3344
        %v3829 = vsub.f32 %v2389, %v3345
        %v3830 = vsub.f32 %v2558, %v3346
        %v3831 = vsub.f32 %v2727, %v3347
        %v3832 = vsub.f32 %v2222, %v3344
        %v3833 = vsub.f32 %v2391, %v3345
        %v3834 = vsub.f32 %v2560, %v3346
        %v3835 = vsub.f32 %v2729, %v3347
        %v3836 = vsub.f32 %v2225, %v3344
        %v3837 = vsub.f32 %v2394, %v3345
        %v3838 = vsub.f32 %v2563, %v3346
        %v3839 = vsub.f32 %v2732, %v3347
        %v3840 = vsub.f32 %v2227, %v3344
        %v3841 = vsub.f32 %v2396, %v3345
        %v3842 = vsub.f32 %v2565, %v3346
        %v3843 = vsub.f32 %v2734, %v3347
        %v3844 = vsub.f32 %v2230, %v3344
        %v3845 = vsub.f32 %v2399, %v3345
        %v3846 = vsub.f32 %v2568, %v3346
        %v3847 = vsub.f32 %v2737, %v3347
        %v3848 = vsub.f32 %v2232, %v3344
        %v3849 = vsub.f32 %v2401, %v3345
        %v3850 = vsub.f32 %v2570, %v3346
        %v3851 = vsub.f32 %v2739, %v3347
        %v3852 = vsub.f32 %v2235, %v3344
        %v3853 = vsub.f32 %v2404, %v3345
        %v3854 = vsub.f32 %v2573, %v3346
        %v3855 = vsub.f32 %v2742, %v3347
        %v3856 = vsub.f32 %v2237, %v3344
        %v3857 = vsub.f32 %v2406, %v3345
        %v3858 = vsub.f32 %v2575, %v3346
        %v3859 = vsub.f32 %v2744, %v3347
        %v3860 = vsub.f32 %v2240, %v3344
        %v3861 = vsub.f32 %v2409, %v3345
        %v3862 = vsub.f32 %v2578, %v3346
        %v3863 = vsub.f32 %v2747, %v3347
        %v3864 = vsub.f32 %v2242, %v3344
        %v3865 = vsub.f32 %v2411, %v3345
        %v3866 = vsub.f32 %v2580, %v3346
        %v3867 = vsub.f32 %v2749, %v3347
        %v3868 = vmul.f32 %v3356, 1.442695
        %v3869 = vpow.pop %v3868
        %v3870 = vmul.f32 %v3357, 1.442695
        %v3871 = vpow.pop %v3870
        %v3872 = vmul.f32 %v3358, 1.442695
        %v3873 = vpow.pop %v3872
        %v3874 = vmul.f32 %v3359, 1.442695
        %v3875 = vpow.pop %v3874
        %v3876 = vmul.f32 %v3360, 1.442695
        %v3877 = vpow.pop %v3876
        %v3878 = vmul.f32 %v3361, 1.442695
        %v3879 = vpow.pop %v3878
        %v3880 = vmul.f32 %v3362, 1.442695
        %v3881 = vpow.pop %v3880
        %v3882 = vmul.f32 %v3363, 1.442695
        %v3883 = vpow.pop %v3882
        %v3884 = vmul.f32 %v3364, 1.442695
        %v3885 = vpow.pop %v3884
        %v3886 = vmul.f32 %v3365, 1.442695
        %v3887 = vpow.pop %v3886
        %v3888 = vmul.f32 %v3366, 1.442695
        %v3889 = vpow.pop %v3888
        %v3890 = vmul.f32 %v3367, 1.442695
        %v3891 = vpow.pop %v3890
        %v3892 = vmul.f32 %v3368, 1.442695
        %v3893 = vpow.pop %v3892
        %v3894 = vmul.f32 %v3369, 1.442695
        %v3895 = vpow.pop %v3894
        %v3896 = vmul.f32 %v3370, 1.442695
        %v3897 = vpow.pop %v3896
        %v3898 = vmul.f32 %v3371, 1.442695
        %v3899 = vpow.pop %v3898
        %v3900 = vmul.f32 %v3372, 1.442695
        %v3901 = vpow.pop %v3900
        %v3902 = vmul.f32 %v3373, 1.442695
        %v3903 = vpow.pop %v3902
        %v3904 = vmul.f32 %v3374, 1.442695
        %v3905 = vpow.pop %v3904
        %v3906 = vmul.f32 %v3375, 1.442695
        %v3907 = vpow.pop %v3906
        %v3908 = vmul.f32 %v3376, 1.442695
        %v3909 = vpow.pop %v3908
        %v3910 = vmul.f32 %v3377, 1.442695
        %v3911 = vpow.pop %v3910
        %v3912 = vmul.f32 %v3378, 1.442695
        %v3913 = vpow.pop %v3912
        %v3914 = vmul.f32 %v3379, 1.442695
        %v3915 = vpow.pop %v3914
        %v3916 = vmul.f32 %v3380, 1.442695
        %v3917 = vpow.pop %v3916
        %v3918 = vmul.f32 %v3381, 1.442695
        %v3919 = vpow.pop %v3918
        %v3920 = vmul.f32 %v3382, 1.442695
        %v3921 = vpow.pop %v3920
        %v3922 = vmul.f32 %v3383, 1.442695
        %v3923 = vpow.pop %v3922
        %v3924 = vmul.f32 %v3384, 1.442695
        %v3925 = vpow.pop %v3924
        %v3926 = vmul.f32 %v3385, 1.442695
        %v3927 = vpow.pop %v3926
        %v3928 = vmul.f32 %v3386, 1.442695
        %v3929 = vpow.pop %v3928
        %v3930 = vmul.f32 %v3387, 1.442695
        %v3931 = vpow.pop %v3930
        %v3932 = vmul.f32 %v3388, 1.442695
        %v3933 = vpow.pop %v3932
        %v3934 = vmul.f32 %v3389, 1.442695
        %v3935 = vpow.pop %v3934
        %v3936 = vmul.f32 %v3390, 1.442695
        %v3937 = vpow.pop %v3936
        %v3938 = vmul.f32 %v3391, 1.442695
        %v3939 = vpow.pop %v3938
        %v3940 = vmul.f32 %v3392, 1.442695
        %v3941 = vpow.pop %v3940
        %v3942 = vmul.f32 %v3393, 1.442695
        %v3943 = vpow.pop %v3942
        %v3944 = vmul.f32 %v3394, 1.442695
        %v3945 = vpow.pop %v3944
        %v3946 = vmul.f32 %v3395, 1.442695
        %v3947 = vpow.pop %v3946
        %v3948 = vmul.f32 %v3396, 1.442695
        %v3949 = vpow.pop %v3948
        %v3950 = vmul.f32 %v3397, 1.442695
        %v3951 = vpow.pop %v3950
        %v3952 = vmul.f32 %v3398, 1.442695
        %v3953 = vpow.pop %v3952
        %v3954 = vmul.f32 %v3399, 1.442695
        %v3955 = vpow.pop %v3954
        %v3956 = vmul.f32 %v3400, 1.442695
        %v3957 = vpow.pop %v3956
        %v3958 = vmul.f32 %v3401, 1.442695
        %v3959 = vpow.pop %v3958
        %v3960 = vmul.f32 %v3402, 1.442695
        %v3961 = vpow.pop %v3960
        %v3962 = vmul.f32 %v3403, 1.442695
        %v3963 = vpow.pop %v3962
        %v3964 = vmul.f32 %v3404, 1.442695
        %v3965 = vpow.pop %v3964
        %v3966 = vmul.f32 %v3405, 1.442695
        %v3967 = vpow.pop %v3966
        %v3968 = vmul.f32 %v3406, 1.442695
        %v3969 = vpow.pop %v3968
        %v3970 = vmul.f32 %v3407, 1.442695
        %v3971 = vpow.pop %v3970
        %v3972 = vmul.f32 %v3408, 1.442695
        %v3973 = vpow.pop %v3972
        %v3974 = vmul.f32 %v3409, 1.442695
        %v3975 = vpow.pop %v3974
        %v3976 = vmul.f32 %v3410, 1.442695
        %v3977 = vpow.pop %v3976
        %v3978 = vmul.f32 %v3411, 1.442695
        %v3979 = vpow.pop %v3978
        %v3980 = vmul.f32 %v3412, 1.442695
        %v3981 = vpow.pop %v3980
        %v3982 = vmul.f32 %v3413, 1.442695
        %v3983 = vpow.pop %v3982
        %v3984 = vmul.f32 %v3414, 1.442695
        %v3985 = vpow.pop %v3984
        %v3986 = vmul.f32 %v3415, 1.442695
        %v3987 = vpow.pop %v3986
        %v3988 = vmul.f32 %v3416, 1.442695
        %v3989 = vpow.pop %v3988
        %v3990 = vmul.f32 %v3417, 1.442695
        %v3991 = vpow.pop %v3990
        %v3992 = vmul.f32 %v3418, 1.442695
        %v3993 = vpow.pop %v3992
        %v3994 = vmul.f32 %v3419, 1.442695
        %v3995 = vpow.pop %v3994
        %v3996 = vmul.f32 %v3420, 1.442695
        %v3997 = vpow.pop %v3996
        %v3998 = vmul.f32 %v3421, 1.442695
        %v3999 = vpow.pop %v3998
        %v4000 = vmul.f32 %v3422, 1.442695
        %v4001 = vpow.pop %v4000
        %v4002 = vmul.f32 %v3423, 1.442695
        %v4003 = vpow.pop %v4002
        %v4004 = vmul.f32 %v3424, 1.442695
        %v4005 = vpow.pop %v4004
        %v4006 = vmul.f32 %v3425, 1.442695
        %v4007 = vpow.pop %v4006
        %v4008 = vmul.f32 %v3426, 1.442695
        %v4009 = vpow.pop %v4008
        %v4010 = vmul.f32 %v3427, 1.442695
        %v4011 = vpow.pop %v4010
        %v4012 = vmul.f32 %v3428, 1.442695
        %v4013 = vpow.pop %v4012
        %v4014 = vmul.f32 %v3429, 1.442695
        %v4015 = vpow.pop %v4014
        %v4016 = vmul.f32 %v3430, 1.442695
        %v4017 = vpow.pop %v4016
        %v4018 = vmul.f32 %v3431, 1.442695
        %v4019 = vpow.pop %v4018
        %v4020 = vmul.f32 %v3432, 1.442695
        %v4021 = vpow.pop %v4020
        %v4022 = vmul.f32 %v3433, 1.442695
        %v4023 = vpow.pop %v4022
        %v4024 = vmul.f32 %v3434, 1.442695
        %v4025 = vpow.pop %v4024
        %v4026 = vmul.f32 %v3435, 1.442695
        %v4027 = vpow.pop %v4026
        %v4028 = vmul.f32 %v3436, 1.442695
        %v4029 = vpow.pop %v4028
        %v4030 = vmul.f32 %v3437, 1.442695
        %v4031 = vpow.pop %v4030
        %v4032 = vmul.f32 %v3438, 1.442695
        %v4033 = vpow.pop %v4032
        %v4034 = vmul.f32 %v3439, 1.442695
        %v4035 = vpow.pop %v4034
        %v4036 = vmul.f32 %v3440, 1.442695
        %v4037 = vpow.pop %v4036
        %v4038 = vmul.f32 %v3441, 1.442695
        %v4039 = vpow.pop %v4038
        %v4040 = vmul.f32 %v3442, 1.442695
        %v4041 = vpow.pop %v4040
        %v4042 = vmul.f32 %v3443, 1.442695
        %v4043 = vpow.pop %v4042
        %v4044 = vmul.f32 %v3444, 1.442695
        %v4045 = vpow.pop %v4044
        %v4046 = vmul.f32 %v3445, 1.442695
        %v4047 = vpow.pop %v4046
        %v4048 = vmul.f32 %v3446, 1.442695
        %v4049 = vpow.pop %v4048
        %v4050 = vmul.f32 %v3447, 1.442695
        %v4051 = vpow.pop %v4050
        %v4052 = vmul.f32 %v3448, 1.442695
        %v4053 = vpow.pop %v4052
        %v4054 = vmul.f32 %v3449, 1.442695
        %v4055 = vpow.pop %v4054
        %v4056 = vmul.f32 %v3450, 1.442695
        %v4057 = vpow.pop %v4056
        %v4058 = vmul.f32 %v3451, 1.442695
        %v4059 = vpow.pop %v4058
        %v4060 = vmul.f32 %v3452, 1.442695
        %v4061 = vpow.pop %v4060
        %v4062 = vmul.f32 %v3453, 1.442695
        %v4063 = vpow.pop %v4062
        %v4064 = vmul.f32 %v3454, 1.442695
        %v4065 = vpow.pop %v4064
        %v4066 = vmul.f32 %v3455, 1.442695
        %v4067 = vpow.pop %v4066
        %v4068 = vmul.f32 %v3456, 1.442695
        %v4069 = vpow.pop %v4068
        %v4070 = vmul.f32 %v3457, 1.442695
        %v4071 = vpow.pop %v4070
        %v4072 = vmul.f32 %v3458, 1.442695
        %v4073 = vpow.pop %v4072
        %v4074 = vmul.f32 %v3459, 1.442695
        %v4075 = vpow.pop %v4074
        %v4076 = vmul.f32 %v3460, 1.442695
        %v4077 = vpow.pop %v4076
        %v4078 = vmul.f32 %v3461, 1.442695
        %v4079 = vpow.pop %v4078
        %v4080 = vmul.f32 %v3462, 1.442695
        %v4081 = vpow.pop %v4080
        %v4082 = vmul.f32 %v3463, 1.442695
        %v4083 = vpow.pop %v4082
        %v4084 = vmul.f32 %v3464, 1.442695
        %v4085 = vpow.pop %v4084
        %v4086 = vmul.f32 %v3465, 1.442695
        %v4087 = vpow.pop %v4086
        %v4088 = vmul.f32 %v3466, 1.442695
        %v4089 = vpow.pop %v4088
        %v4090 = vmul.f32 %v3467, 1.442695
        %v4091 = vpow.pop %v4090
        %v4092 = vmul.f32 %v3468, 1.442695
        %v4093 = vpow.pop %v4092
        %v4094 = vmul.f32 %v3469, 1.442695
        %v4095 = vpow.pop %v4094
        %v4096 = vmul.f32 %v3470, 1.442695
        %v4097 = vpow.pop %v4096
        %v4098 = vmul.f32 %v3471, 1.442695
        %v4099 = vpow.pop %v4098
        %v4100 = vmul.f32 %v3472, 1.442695
        %v4101 = vpow.pop %v4100
        %v4102 = vmul.f32 %v3473, 1.442695
        %v4103 = vpow.pop %v4102
        %v4104 = vmul.f32 %v3474, 1.442695
        %v4105 = vpow.pop %v4104
        %v4106 = vmul.f32 %v3475, 1.442695
        %v4107 = vpow.pop %v4106
        %v4108 = vmul.f32 %v3476, 1.442695
        %v4109 = vpow.pop %v4108
        %v4110 = vmul.f32 %v3477, 1.442695
        %v4111 = vpow.pop %v4110
        %v4112 = vmul.f32 %v3478, 1.442695
        %v4113 = vpow.pop %v4112
        %v4114 = vmul.f32 %v3479, 1.442695
        %v4115 = vpow.pop %v4114
        %v4116 = vmul.f32 %v3480, 1.442695
        %v4117 = vpow.pop %v4116
        %v4118 = vmul.f32 %v3481, 1.442695
        %v4119 = vpow.pop %v4118
        %v4120 = vmul.f32 %v3482, 1.442695
        %v4121 = vpow.pop %v4120
        %v4122 = vmul.f32 %v3483, 1.442695
        %v4123 = vpow.pop %v4122
        %v4124 = vmul.f32 %v3484, 1.442695
        %v4125 = vpow.pop %v4124
        %v4126 = vmul.f32 %v3485, 1.442695
        %v4127 = vpow.pop %v4126
        %v4128 = vmul.f32 %v3486, 1.442695
        %v4129 = vpow.pop %v4128
        %v4130 = vmul.f32 %v3487, 1.442695
        %v4131 = vpow.pop %v4130
        %v4132 = vmul.f32 %v3488, 1.442695
        %v4133 = vpow.pop %v4132
        %v4134 = vmul.f32 %v3489, 1.442695
        %v4135 = vpow.pop %v4134
        %v4136 = vmul.f32 %v3490, 1.442695
        %v4137 = vpow.pop %v4136
        %v4138 = vmul.f32 %v3491, 1.442695
        %v4139 = vpow.pop %v4138
        %v4140 = vmul.f32 %v3492, 1.442695
        %v4141 = vpow.pop %v4140
        %v4142 = vmul.f32 %v3493, 1.442695
        %v4143 = vpow.pop %v4142
        %v4144 = vmul.f32 %v3494, 1.442695
        %v4145 = vpow.pop %v4144
        %v4146 = vmul.f32 %v3495, 1.442695
        %v4147 = vpow.pop %v4146
        %v4148 = vmul.f32 %v3496, 1.442695
        %v4149 = vpow.pop %v4148
        %v4150 = vmul.f32 %v3497, 1.442695
        %v4151 = vpow.pop %v4150
        %v4152 = vmul.f32 %v3498, 1.442695
        %v4153 = vpow.pop %v4152
        %v4154 = vmul.f32 %v3499, 1.442695
        %v4155 = vpow.pop %v4154
        %v4156 = vmul.f32 %v3500, 1.442695
        %v4157 = vpow.pop %v4156
        %v4158 = vmul.f32 %v3501, 1.442695
        %v4159 = vpow.pop %v4158
        %v4160 = vmul.f32 %v3502, 1.442695
        %v4161 = vpow.pop %v4160
        %v4162 = vmul.f32 %v3503, 1.442695
        %v4163 = vpow.pop %v4162
        %v4164 = vmul.f32 %v3504, 1.442695
        %v4165 = vpow.pop %v4164
        %v4166 = vmul.f32 %v3505, 1.442695
        %v4167 = vpow.pop %v4166
        %v4168 = vmul.f32 %v3506, 1.442695
        %v4169 = vpow.pop %v4168
        %v4170 = vmul.f32 %v3507, 1.442695
        %v4171 = vpow.pop %v4170
        %v4172 = vmul.f32 %v3508, 1.442695
        %v4173 = vpow.pop %v4172
        %v4174 = vmul.f32 %v3509, 1.442695
        %v4175 = vpow.pop %v4174
        %v4176 = vmul.f32 %v3510, 1.442695
        %v4177 = vpow.pop %v4176
        %v4178 = vmul.f32 %v3511, 1.442695
        %v4179 = vpow.pop %v4178
        %v4180 = vmul.f32 %v3512, 1.442695
        %v4181 = vpow.pop %v4180
        %v4182 = vmul.f32 %v3513, 1.442695
        %v4183 = vpow.pop %v4182
        %v4184 = vmul.f32 %v3514, 1.442695
        %v4185 = vpow.pop %v4184
        %v4186 = vmul.f32 %v3515, 1.442695
        %v4187 = vpow.pop %v4186
        %v4188 = vmul.f32 %v3516, 1.442695
        %v4189 = vpow.pop %v4188
        %v4190 = vmul.f32 %v3517, 1.442695
        %v4191 = vpow.pop %v4190
        %v4192 = vmul.f32 %v3518, 1.442695
        %v4193 = vpow.pop %v4192
        %v4194 = vmul.f32 %v3519, 1.442695
        %v4195 = vpow.pop %v4194
        %v4196 = vmul.f32 %v3520, 1.442695
        %v4197 = vpow.pop %v4196
        %v4198 = vmul.f32 %v3521, 1.442695
        %v4199 = vpow.pop %v4198
        %v4200 = vmul.f32 %v3522, 1.442695
        %v4201 = vpow.pop %v4200
        %v4202 = vmul.f32 %v3523, 1.442695
        %v4203 = vpow.pop %v4202
        %v4204 = vmul.f32 %v3524, 1.442695
        %v4205 = vpow.pop %v4204
        %v4206 = vmul.f32 %v3525, 1.442695
        %v4207 = vpow.pop %v4206
        %v4208 = vmul.f32 %v3526, 1.442695
        %v4209 = vpow.pop %v4208
        %v4210 = vmul.f32 %v3527, 1.442695
        %v4211 = vpow.pop %v4210
        %v4212 = vmul.f32 %v3528, 1.442695
        %v4213 = vpow.pop %v4212
        %v4214 = vmul.f32 %v3529, 1.442695
        %v4215 = vpow.pop %v4214
        %v4216 = vmul.f32 %v3530, 1.442695
        %v4217 = vpow.pop %v4216
        %v4218 = vmul.f32 %v3531, 1.442695
        %v4219 = vpow.pop %v4218
        %v4220 = vmul.f32 %v3532, 1.442695
        %v4221 = vpow.pop %v4220
        %v4222 = vmul.f32 %v3533, 1.442695
        %v4223 = vpow.pop %v4222
        %v4224 = vmul.f32 %v3534, 1.442695
        %v4225 = vpow.pop %v4224
        %v4226 = vmul.f32 %v3535, 1.442695
        %v4227 = vpow.pop %v4226
        %v4228 = vmul.f32 %v3536, 1.442695
        %v4229 = vpow.pop %v4228
        %v4230 = vmul.f32 %v3537, 1.442695
        %v4231 = vpow.pop %v4230
        %v4232 = vmul.f32 %v3538, 1.442695
        %v4233 = vpow.pop %v4232
        %v4234 = vmul.f32 %v3539, 1.442695
        %v4235 = vpow.pop %v4234
        %v4236 = vmul.f32 %v3540, 1.442695
        %v4237 = vpow.pop %v4236
        %v4238 = vmul.f32 %v3541, 1.442695
        %v4239 = vpow.pop %v4238
        %v4240 = vmul.f32 %v3542, 1.442695
        %v4241 = vpow.pop %v4240
        %v4242 = vmul.f32 %v3543, 1.442695
        %v4243 = vpow.pop %v4242
        %v4244 = vmul.f32 %v3544, 1.442695
        %v4245 = vpow.pop %v4244
        %v4246 = vmul.f32 %v3545, 1.442695
        %v4247 = vpow.pop %v4246
        %v4248 = vmul.f32 %v3546, 1.442695
        %v4249 = vpow.pop %v4248
        %v4250 = vmul.f32 %v3547, 1.442695
        %v4251 = vpow.pop %v4250
        %v4252 = vmul.f32 %v3548, 1.442695
        %v4253 = vpow.pop %v4252
        %v4254 = vmul.f32 %v3549, 1.442695
        %v4255 = vpow.pop %v4254
        %v4256 = vmul.f32 %v3550, 1.442695
        %v4257 = vpow.pop %v4256
        %v4258 = vmul.f32 %v3551, 1.442695
        %v4259 = vpow.pop %v4258
        %v4260 = vmul.f32 %v3552, 1.442695
        %v4261 = vpow.pop %v4260
        %v4262 = vmul.f32 %v3553, 1.442695
        %v4263 = vpow.pop %v4262
        %v4264 = vmul.f32 %v3554, 1.442695
        %v4265 = vpow.pop %v4264
        %v4266 = vmul.f32 %v3555, 1.442695
        %v4267 = vpow.pop %v4266
        %v4268 = vmul.f32 %v3556, 1.442695
        %v4269 = vpow.pop %v4268
        %v4270 = vmul.f32 %v3557, 1.442695
        %v4271 = vpow.pop %v4270
        %v4272 = vmul.f32 %v3558, 1.442695
        %v4273 = vpow.pop %v4272
        %v4274 = vmul.f32 %v3559, 1.442695
        %v4275 = vpow.pop %v4274
        %v4276 = vmul.f32 %v3560, 1.442695
        %v4277 = vpow.pop %v4276
        %v4278 = vmul.f32 %v3561, 1.442695
        %v4279 = vpow.pop %v4278
        %v4280 = vmul.f32 %v3562, 1.442695
        %v4281 = vpow.pop %v4280
        %v4282 = vmul.f32 %v3563, 1.442695
        %v4283 = vpow.pop %v4282
        %v4284 = vmul.f32 %v3564, 1.442695
        %v4285 = vpow.pop %v4284
        %v4286 = vmul.f32 %v3565, 1.442695
        %v4287 = vpow.pop %v4286
        %v4288 = vmul.f32 %v3566, 1.442695
        %v4289 = vpow.pop %v4288
        %v4290 = vmul.f32 %v3567, 1.442695
        %v4291 = vpow.pop %v4290
        %v4292 = vmul.f32 %v3568, 1.442695
        %v4293 = vpow.pop %v4292
        %v4294 = vmul.f32 %v3569, 1.442695
        %v4295 = vpow.pop %v4294
        %v4296 = vmul.f32 %v3570, 1.442695
        %v4297 = vpow.pop %v4296
        %v4298 = vmul.f32 %v3571, 1.442695
        %v4299 = vpow.pop %v4298
        %v4300 = vmul.f32 %v3572, 1.442695
        %v4301 = vpow.pop %v4300
        %v4302 = vmul.f32 %v3573, 1.442695
        %v4303 = vpow.pop %v4302
        %v4304 = vmul.f32 %v3574, 1.442695
        %v4305 = vpow.pop %v4304
        %v4306 = vmul.f32 %v3575, 1.442695
        %v4307 = vpow.pop %v4306
        %v4308 = vmul.f32 %v3576, 1.442695
        %v4309 = vpow.pop %v4308
        %v4310 = vmul.f32 %v3577, 1.442695
        %v4311 = vpow.pop %v4310
        %v4312 = vmul.f32 %v3578, 1.442695
        %v4313 = vpow.pop %v4312
        %v4314 = vmul.f32 %v3579, 1.442695
        %v4315 = vpow.pop %v4314
        %v4316 = vmul.f32 %v3580, 1.442695
        %v4317 = vpow.pop %v4316
        %v4318 = vmul.f32 %v3581, 1.442695
        %v4319 = vpow.pop %v4318
        %v4320 = vmul.f32 %v3582, 1.442695
        %v4321 = vpow.pop %v4320
        %v4322 = vmul.f32 %v3583, 1.442695
        %v4323 = vpow.pop %v4322
        %v4324 = vmul.f32 %v3584, 1.442695
        %v4325 = vpow.pop %v4324
        %v4326 = vmul.f32 %v3585, 1.442695
        %v4327 = vpow.pop %v4326
        %v4328 = vmul.f32 %v3586, 1.442695
        %v4329 = vpow.pop %v4328
        %v4330 = vmul.f32 %v3587, 1.442695
        %v4331 = vpow.pop %v4330
        %v4332 = vmul.f32 %v3588, 1.442695
        %v4333 = vpow.pop %v4332
        %v4334 = vmul.f32 %v3589, 1.442695
        %v4335 = vpow.pop %v4334
        %v4336 = vmul.f32 %v3590, 1.442695
        %v4337 = vpow.pop %v4336
        %v4338 = vmul.f32 %v3591, 1.442695
        %v4339 = vpow.pop %v4338
        %v4340 = vmul.f32 %v3592, 1.442695
        %v4341 = vpow.pop %v4340
        %v4342 = vmul.f32 %v3593, 1.442695
        %v4343 = vpow.pop %v4342
        %v4344 = vmul.f32 %v3594, 1.442695
        %v4345 = vpow.pop %v4344
        %v4346 = vmul.f32 %v3595, 1.442695
        %v4347 = vpow.pop %v4346
        %v4348 = vmul.f32 %v3596, 1.442695
        %v4349 = vpow.pop %v4348
        %v4350 = vmul.f32 %v3597, 1.442695
        %v4351 = vpow.pop %v4350
        %v4352 = vmul.f32 %v3598, 1.442695
        %v4353 = vpow.pop %v4352
        %v4354 = vmul.f32 %v3599, 1.442695
        %v4355 = vpow.pop %v4354
        %v4356 = vmul.f32 %v3600, 1.442695
        %v4357 = vpow.pop %v4356
        %v4358 = vmul.f32 %v3601, 1.442695
        %v4359 = vpow.pop %v4358
        %v4360 = vmul.f32 %v3602, 1.442695
        %v4361 = vpow.pop %v4360
        %v4362 = vmul.f32 %v3603, 1.442695
        %v4363 = vpow.pop %v4362
        %v4364 = vmul.f32 %v3604, 1.442695
        %v4365 = vpow.pop %v4364
        %v4366 = vmul.f32 %v3605, 1.442695
        %v4367 = vpow.pop %v4366
        %v4368 = vmul.f32 %v3606, 1.442695
        %v4369 = vpow.pop %v4368
        %v4370 = vmul.f32 %v3607, 1.442695
        %v4371 = vpow.pop %v4370
        %v4372 = vmul.f32 %v3608, 1.442695
        %v4373 = vpow.pop %v4372
        %v4374 = vmul.f32 %v3609, 1.442695
        %v4375 = vpow.pop %v4374
        %v4376 = vmul.f32 %v3610, 1.442695
        %v4377 = vpow.pop %v4376
        %v4378 = vmul.f32 %v3611, 1.442695
        %v4379 = vpow.pop %v4378
        %v4380 = vmul.f32 %v3612, 1.442695
        %v4381 = vpow.pop %v4380
        %v4382 = vmul.f32 %v3613, 1.442695
        %v4383 = vpow.pop %v4382
        %v4384 = vmul.f32 %v3614, 1.442695
        %v4385 = vpow.pop %v4384
        %v4386 = vmul.f32 %v3615, 1.442695
        %v4387 = vpow.pop %v4386
        %v4388 = vmul.f32 %v3616, 1.442695
        %v4389 = vpow.pop %v4388
        %v4390 = vmul.f32 %v3617, 1.442695
        %v4391 = vpow.pop %v4390
        %v4392 = vmul.f32 %v3618, 1.442695
        %v4393 = vpow.pop %v4392
        %v4394 = vmul.f32 %v3619, 1.442695
        %v4395 = vpow.pop %v4394
        %v4396 = vmul.f32 %v3620, 1.442695
        %v4397 = vpow.pop %v4396
        %v4398 = vmul.f32 %v3621, 1.442695
        %v4399 = vpow.pop %v4398
        %v4400 = vmul.f32 %v3622, 1.442695
        %v4401 = vpow.pop %v4400
        %v4402 = vmul.f32 %v3623, 1.442695
        %v4403 = vpow.pop %v4402
        %v4404 = vmul.f32 %v3624, 1.442695
        %v4405 = vpow.pop %v4404
        %v4406 = vmul.f32 %v3625, 1.442695
        %v4407 = vpow.pop %v4406
        %v4408 = vmul.f32 %v3626, 1.442695
        %v4409 = vpow.pop %v4408
        %v4410 = vmul.f32 %v3627, 1.442695
        %v4411 = vpow.pop %v4410
        %v4412 = vmul.f32 %v3628, 1.442695
        %v4413 = vpow.pop %v4412
        %v4414 = vmul.f32 %v3629, 1.442695
        %v4415 = vpow.pop %v4414
        %v4416 = vmul.f32 %v3630, 1.442695
        %v4417 = vpow.pop %v4416
        %v4418 = vmul.f32 %v3631, 1.442695
        %v4419 = vpow.pop %v4418
        %v4420 = vmul.f32 %v3632, 1.442695
        %v4421 = vpow.pop %v4420
        %v4422 = vmul.f32 %v3633, 1.442695
        %v4423 = vpow.pop %v4422
        %v4424 = vmul.f32 %v3634, 1.442695
        %v4425 = vpow.pop %v4424
        %v4426 = vmul.f32 %v3635, 1.442695
        %v4427 = vpow.pop %v4426
        %v4428 = vmul.f32 %v3636, 1.442695
        %v4429 = vpow.pop %v4428
        %v4430 = vmul.f32 %v3637, 1.442695
        %v4431 = vpow.pop %v4430
        %v4432 = vmul.f32 %v3638, 1.442695
        %v4433 = vpow.pop %v4432
        %v4434 = vmul.f32 %v3639, 1.442695
        %v4435 = vpow.pop %v4434
        %v4436 = vmul.f32 %v3640, 1.442695
        %v4437 = vpow.pop %v4436
        %v4438 = vmul.f32 %v3641, 1.442695
        %v4439 = vpow.pop %v4438
        %v4440 = vmul.f32 %v3642, 1.442695
        %v4441 = vpow.pop %v4440
        %v4442 = vmul.f32 %v3643, 1.442695
        %v4443 = vpow.pop %v4442
        %v4444 = vmul.f32 %v3644, 1.442695
        %v4445 = vpow.pop %v4444
        %v4446 = vmul.f32 %v3645, 1.442695
        %v4447 = vpow.pop %v4446
        %v4448 = vmul.f32 %v3646, 1.442695
        %v4449 = vpow.pop %v4448
        %v4450 = vmul.f32 %v3647, 1.442695
        %v4451 = vpow.pop %v4450
        %v4452 = vmul.f32 %v3648, 1.442695
        %v4453 = vpow.pop %v4452
        %v4454 = vmul.f32 %v3649, 1.442695
        %v4455 = vpow.pop %v4454
        %v4456 = vmul.f32 %v3650, 1.442695
        %v4457 = vpow.pop %v4456
        %v4458 = vmul.f32 %v3651, 1.442695
        %v4459 = vpow.pop %v4458
        %v4460 = vmul.f32 %v3652, 1.442695
        %v4461 = vpow.pop %v4460
        %v4462 = vmul.f32 %v3653, 1.442695
        %v4463 = vpow.pop %v4462
        %v4464 = vmul.f32 %v3654, 1.442695
        %v4465 = vpow.pop %v4464
        %v4466 = vmul.f32 %v3655, 1.442695
        %v4467 = vpow.pop %v4466
        %v4468 = vmul.f32 %v3656, 1.442695
        %v4469 = vpow.pop %v4468
        %v4470 = vmul.f32 %v3657, 1.442695
        %v4471 = vpow.pop %v4470
        %v4472 = vmul.f32 %v3658, 1.442695
        %v4473 = vpow.pop %v4472
        %v4474 = vmul.f32 %v3659, 1.442695
        %v4475 = vpow.pop %v4474
        %v4476 = vmul.f32 %v3660, 1.442695
        %v4477 = vpow.pop %v4476
        %v4478 = vmul.f32 %v3661, 1.442695
        %v4479 = vpow.pop %v4478
        %v4480 = vmul.f32 %v3662, 1.442695
        %v4481 = vpow.pop %v4480
        %v4482 = vmul.f32 %v3663, 1.442695
        %v4483 = vpow.pop %v4482
        %v4484 = vmul.f32 %v3664, 1.442695
        %v4485 = vpow.pop %v4484
        %v4486 = vmul.f32 %v3665, 1.442695
        %v4487 = vpow.pop %v4486
        %v4488 = vmul.f32 %v3666, 1.442695
        %v4489 = vpow.pop %v4488
        %v4490 = vmul.f32 %v3667, 1.442695
        %v4491 = vpow.pop %v4490
        %v4492 = vmul.f32 %v3668, 1.442695
        %v4493 = vpow.pop %v4492
        %v4494 = vmul.f32 %v3669, 1.442695
        %v4495 = vpow.pop %v4494
        %v4496 = vmul.f32 %v3670, 1.442695
        %v4497 = vpow.pop %v4496
        %v4498 = vmul.f32 %v3671, 1.442695
        %v4499 = vpow.pop %v4498
        %v4500 = vmul.f32 %v3672, 1.442695
        %v4501 = vpow.pop %v4500
        %v4502 = vmul.f32 %v3673, 1.442695
        %v4503 = vpow.pop %v4502
        %v4504 = vmul.f32 %v3674, 1.442695
        %v4505 = vpow.pop %v4504
        %v4506 = vmul.f32 %v3675, 1.442695
        %v4507 = vpow.pop %v4506
        %v4508 = vmul.f32 %v3676, 1.442695
        %v4509 = vpow.pop %v4508
        %v4510 = vmul.f32 %v3677, 1.442695
        %v4511 = vpow.pop %v4510
        %v4512 = vmul.f32 %v3678, 1.442695
        %v4513 = vpow.pop %v4512
        %v4514 = vmul.f32 %v3679, 1.442695
        %v4515 = vpow.pop %v4514
        %v4516 = vmul.f32 %v3680, 1.442695
        %v4517 = vpow.pop %v4516
        %v4518 = vmul.f32 %v3681, 1.442695
        %v4519 = vpow.pop %v4518
        %v4520 = vmul.f32 %v3682, 1.442695
        %v4521 = vpow.pop %v4520
        %v4522 = vmul.f32 %v3683, 1.442695
        %v4523 = vpow.pop %v4522
        %v4524 = vmul.f32 %v3684, 1.442695
        %v4525 = vpow.pop %v4524
        %v4526 = vmul.f32 %v3685, 1.442695
        %v4527 = vpow.pop %v4526
        %v4528 = vmul.f32 %v3686, 1.442695
        %v4529 = vpow.pop %v4528
        %v4530 = vmul.f32 %v3687, 1.442695
        %v4531 = vpow.pop %v4530
        %v4532 = vmul.f32 %v3688, 1.442695
        %v4533 = vpow.pop %v4532
        %v4534 = vmul.f32 %v3689, 1.442695
        %v4535 = vpow.pop %v4534
        %v4536 = vmul.f32 %v3690, 1.442695
        %v4537 = vpow.pop %v4536
        %v4538 = vmul.f32 %v3691, 1.442695
        %v4539 = vpow.pop %v4538
        %v4540 = vmul.f32 %v3692, 1.442695
        %v4541 = vpow.pop %v4540
        %v4542 = vmul.f32 %v3693, 1.442695
        %v4543 = vpow.pop %v4542
        %v4544 = vmul.f32 %v3694, 1.442695
        %v4545 = vpow.pop %v4544
        %v4546 = vmul.f32 %v3695, 1.442695
        %v4547 = vpow.pop %v4546
        %v4548 = vmul.f32 %v3696, 1.442695
        %v4549 = vpow.pop %v4548
        %v4550 = vmul.f32 %v3697, 1.442695
        %v4551 = vpow.pop %v4550
        %v4552 = vmul.f32 %v3698, 1.442695
        %v4553 = vpow.pop %v4552
        %v4554 = vmul.f32 %v3699, 1.442695
        %v4555 = vpow.pop %v4554
        %v4556 = vmul.f32 %v3700, 1.442695
        %v4557 = vpow.pop %v4556
        %v4558 = vmul.f32 %v3701, 1.442695
        %v4559 = vpow.pop %v4558
        %v4560 = vmul.f32 %v3702, 1.442695
        %v4561 = vpow.pop %v4560
        %v4562 = vmul.f32 %v3703, 1.442695
        %v4563 = vpow.pop %v4562
        %v4564 = vmul.f32 %v3704, 1.442695
        %v4565 = vpow.pop %v4564
        %v4566 = vmul.f32 %v3705, 1.442695
        %v4567 = vpow.pop %v4566
        %v4568 = vmul.f32 %v3706, 1.442695
        %v4569 = vpow.pop %v4568
        %v4570 = vmul.f32 %v3707, 1.442695
        %v4571 = vpow.pop %v4570
        %v4572 = vmul.f32 %v3708, 1.442695
        %v4573 = vpow.pop %v4572
        %v4574 = vmul.f32 %v3709, 1.442695
        %v4575 = vpow.pop %v4574
        %v4576 = vmul.f32 %v3710, 1.442695
        %v4577 = vpow.pop %v4576
        %v4578 = vmul.f32 %v3711, 1.442695
        %v4579 = vpow.pop %v4578
        %v4580 = vmul.f32 %v3712, 1.442695
        %v4581 = vpow.pop %v4580
        %v4582 = vmul.f32 %v3713, 1.442695
        %v4583 = vpow.pop %v4582
        %v4584 = vmul.f32 %v3714, 1.442695
        %v4585 = vpow.pop %v4584
        %v4586 = vmul.f32 %v3715, 1.442695
        %v4587 = vpow.pop %v4586
        %v4588 = vmul.f32 %v3716, 1.442695
        %v4589 = vpow.pop %v4588
        %v4590 = vmul.f32 %v3717, 1.442695
        %v4591 = vpow.pop %v4590
        %v4592 = vmul.f32 %v3718, 1.442695
        %v4593 = vpow.pop %v4592
        %v4594 = vmul.f32 %v3719, 1.442695
        %v4595 = vpow.pop %v4594
        %v4596 = vmul.f32 %v3720, 1.442695
        %v4597 = vpow.pop %v4596
        %v4598 = vmul.f32 %v3721, 1.442695
        %v4599 = vpow.pop %v4598
        %v4600 = vmul.f32 %v3722, 1.442695
        %v4601 = vpow.pop %v4600
        %v4602 = vmul.f32 %v3723, 1.442695
        %v4603 = vpow.pop %v4602
        %v4604 = vmul.f32 %v3724, 1.442695
        %v4605 = vpow.pop %v4604
        %v4606 = vmul.f32 %v3725, 1.442695
        %v4607 = vpow.pop %v4606
        %v4608 = vmul.f32 %v3726, 1.442695
        %v4609 = vpow.pop %v4608
        %v4610 = vmul.f32 %v3727, 1.442695
        %v4611 = vpow.pop %v4610
        %v4612 = vmul.f32 %v3728, 1.442695
        %v4613 = vpow.pop %v4612
        %v4614 = vmul.f32 %v3729, 1.442695
        %v4615 = vpow.pop %v4614
        %v4616 = vmul.f32 %v3730, 1.442695
        %v4617 = vpow.pop %v4616
        %v4618 = vmul.f32 %v3731, 1.442695
        %v4619 = vpow.pop %v4618
        %v4620 = vmul.f32 %v3732, 1.442695
        %v4621 = vpow.pop %v4620
        %v4622 = vmul.f32 %v3733, 1.442695
        %v4623 = vpow.pop %v4622
        %v4624 = vmul.f32 %v3734, 1.442695
        %v4625 = vpow.pop %v4624
        %v4626 = vmul.f32 %v3735, 1.442695
        %v4627 = vpow.pop %v4626
        %v4628 = vmul.f32 %v3736, 1.442695
        %v4629 = vpow.pop %v4628
        %v4630 = vmul.f32 %v3737, 1.442695
        %v4631 = vpow.pop %v4630
        %v4632 = vmul.f32 %v3738, 1.442695
        %v4633 = vpow.pop %v4632
        %v4634 = vmul.f32 %v3739, 1.442695
        %v4635 = vpow.pop %v4634
        %v4636 = vmul.f32 %v3740, 1.442695
        %v4637 = vpow.pop %v4636
        %v4638 = vmul.f32 %v3741, 1.442695
        %v4639 = vpow.pop %v4638
        %v4640 = vmul.f32 %v3742, 1.442695
        %v4641 = vpow.pop %v4640
        %v4642 = vmul.f32 %v3743, 1.442695
        %v4643 = vpow.pop %v4642
        %v4644 = vmul.f32 %v3744, 1.442695
        %v4645 = vpow.pop %v4644
        %v4646 = vmul.f32 %v3745, 1.442695
        %v4647 = vpow.pop %v4646
        %v4648 = vmul.f32 %v3746, 1.442695
        %v4649 = vpow.pop %v4648
        %v4650 = vmul.f32 %v3747, 1.442695
        %v4651 = vpow.pop %v4650
        %v4652 = vmul.f32 %v3748, 1.442695
        %v4653 = vpow.pop %v4652
        %v4654 = vmul.f32 %v3749, 1.442695
        %v4655 = vpow.pop %v4654
        %v4656 = vmul.f32 %v3750, 1.442695
        %v4657 = vpow.pop %v4656
        %v4658 = vmul.f32 %v3751, 1.442695
        %v4659 = vpow.pop %v4658
        %v4660 = vmul.f32 %v3752, 1.442695
        %v4661 = vpow.pop %v4660
        %v4662 = vmul.f32 %v3753, 1.442695
        %v4663 = vpow.pop %v4662
        %v4664 = vmul.f32 %v3754, 1.442695
        %v4665 = vpow.pop %v4664
        %v4666 = vmul.f32 %v3755, 1.442695
        %v4667 = vpow.pop %v4666
        %v4668 = vmul.f32 %v3756, 1.442695
        %v4669 = vpow.pop %v4668
        %v4670 = vmul.f32 %v3757, 1.442695
        %v4671 = vpow.pop %v4670
        %v4672 = vmul.f32 %v3758, 1.442695
        %v4673 = vpow.pop %v4672
        %v4674 = vmul.f32 %v3759, 1.442695
        %v4675 = vpow.pop %v4674
        %v4676 = vmul.f32 %v3760, 1.442695
        %v4677 = vpow.pop %v4676
        %v4678 = vmul.f32 %v3761, 1.442695
        %v4679 = vpow.pop %v4678
        %v4680 = vmul.f32 %v3762, 1.442695
        %v4681 = vpow.pop %v4680
        %v4682 = vmul.f32 %v3763, 1.442695
        %v4683 = vpow.pop %v4682
        %v4684 = vmul.f32 %v3764, 1.442695
        %v4685 = vpow.pop %v4684
        %v4686 = vmul.f32 %v3765, 1.442695
        %v4687 = vpow.pop %v4686
        %v4688 = vmul.f32 %v3766, 1.442695
        %v4689 = vpow.pop %v4688
        %v4690 = vmul.f32 %v3767, 1.442695
        %v4691 = vpow.pop %v4690
        %v4692 = vmul.f32 %v3768, 1.442695
        %v4693 = vpow.pop %v4692
        %v4694 = vmul.f32 %v3769, 1.442695
        %v4695 = vpow.pop %v4694
        %v4696 = vmul.f32 %v3770, 1.442695
        %v4697 = vpow.pop %v4696
        %v4698 = vmul.f32 %v3771, 1.442695
        %v4699 = vpow.pop %v4698
        %v4700 = vmul.f32 %v3772, 1.442695
        %v4701 = vpow.pop %v4700
        %v4702 = vmul.f32 %v3773, 1.442695
        %v4703 = vpow.pop %v4702
        %v4704 = vmul.f32 %v3774, 1.442695
        %v4705 = vpow.pop %v4704
        %v4706 = vmul.f32 %v3775, 1.442695
        %v4707 = vpow.pop %v4706
        %v4708 = vmul.f32 %v3776, 1.442695
        %v4709 = vpow.pop %v4708
        %v4710 = vmul.f32 %v3777, 1.442695
        %v4711 = vpow.pop %v4710
        %v4712 = vmul.f32 %v3778, 1.442695
        %v4713 = vpow.pop %v4712
        %v4714 = vmul.f32 %v3779, 1.442695
        %v4715 = vpow.pop %v4714
        %v4716 = vmul.f32 %v3780, 1.442695
        %v4717 = vpow.pop %v4716
        %v4718 = vmul.f32 %v3781, 1.442695
        %v4719 = vpow.pop %v4718
        %v4720 = vmul.f32 %v3782, 1.442695
        %v4721 = vpow.pop %v4720
        %v4722 = vmul.f32 %v3783, 1.442695
        %v4723 = vpow.pop %v4722
        %v4724 = vmul.f32 %v3784, 1.442695
        %v4725 = vpow.pop %v4724
        %v4726 = vmul.f32 %v3785, 1.442695
        %v4727 = vpow.pop %v4726
        %v4728 = vmul.f32 %v3786, 1.442695
        %v4729 = vpow.pop %v4728
        %v4730 = vmul.f32 %v3787, 1.442695
        %v4731 = vpow.pop %v4730
        %v4732 = vmul.f32 %v3788, 1.442695
        %v4733 = vpow.pop %v4732
        %v4734 = vmul.f32 %v3789, 1.442695
        %v4735 = vpow.pop %v4734
        %v4736 = vmul.f32 %v3790, 1.442695
        %v4737 = vpow.pop %v4736
        %v4738 = vmul.f32 %v3791, 1.442695
        %v4739 = vpow.pop %v4738
        %v4740 = vmul.f32 %v3792, 1.442695
        %v4741 = vpow.pop %v4740
        %v4742 = vmul.f32 %v3793, 1.442695
        %v4743 = vpow.pop %v4742
        %v4744 = vmul.f32 %v3794, 1.442695
        %v4745 = vpow.pop %v4744
        %v4746 = vmul.f32 %v3795, 1.442695
        %v4747 = vpow.pop %v4746
        %v4748 = vmul.f32 %v3796, 1.442695
        %v4749 = vpow.pop %v4748
        %v4750 = vmul.f32 %v3797, 1.442695
        %v4751 = vpow.pop %v4750
        %v4752 = vmul.f32 %v3798, 1.442695
        %v4753 = vpow.pop %v4752
        %v4754 = vmul.f32 %v3799, 1.442695
        %v4755 = vpow.pop %v4754
        %v4756 = vmul.f32 %v3800, 1.442695
        %v4757 = vpow.pop %v4756
        %v4758 = vmul.f32 %v3801, 1.442695
        %v4759 = vpow.pop %v4758
        %v4760 = vmul.f32 %v3802, 1.442695
        %v4761 = vpow.pop %v4760
        %v4762 = vmul.f32 %v3803, 1.442695
        %v4763 = vpow.pop %v4762
        %v4764 = vmul.f32 %v3804, 1.442695
        %v4765 = vpow.pop %v4764
        %v4766 = vmul.f32 %v3805, 1.442695
        %v4767 = vpow.pop %v4766
        %v4768 = vmul.f32 %v3806, 1.442695
        %v4769 = vpow.pop %v4768
        %v4770 = vmul.f32 %v3807, 1.442695
        %v4771 = vpow.pop %v4770
        %v4772 = vmul.f32 %v3808, 1.442695
        %v4773 = vpow.pop %v4772
        %v4774 = vmul.f32 %v3809, 1.442695
        %v4775 = vpow.pop %v4774
        %v4776 = vmul.f32 %v3810, 1.442695
        %v4777 = vpow.pop %v4776
        %v4778 = vmul.f32 %v3811, 1.442695
        %v4779 = vpow.pop %v4778
        %v4780 = vmul.f32 %v3812, 1.442695
        %v4781 = vpow.pop %v4780
        %v4782 = vmul.f32 %v3813, 1.442695
        %v4783 = vpow.pop %v4782
        %v4784 = vmul.f32 %v3814, 1.442695
        %v4785 = vpow.pop %v4784
        %v4786 = vmul.f32 %v3815, 1.442695
        %v4787 = vpow.pop %v4786
        %v4788 = vmul.f32 %v3816, 1.442695
        %v4789 = vpow.pop %v4788
        %v4790 = vmul.f32 %v3817, 1.442695
        %v4791 = vpow.pop %v4790
        %v4792 = vmul.f32 %v3818, 1.442695
        %v4793 = vpow.pop %v4792
        %v4794 = vmul.f32 %v3819, 1.442695
        %v4795 = vpow.pop %v4794
        %v4796 = vmul.f32 %v3820, 1.442695
        %v4797 = vpow.pop %v4796
        %v4798 = vmul.f32 %v3821, 1.442695
        %v4799 = vpow.pop %v4798
        %v4800 = vmul.f32 %v3822, 1.442695
        %v4801 = vpow.pop %v4800
        %v4802 = vmul.f32 %v3823, 1.442695
        %v4803 = vpow.pop %v4802
        %v4804 = vmul.f32 %v3824, 1.442695
        %v4805 = vpow.pop %v4804
        %v4806 = vmul.f32 %v3825, 1.442695
        %v4807 = vpow.pop %v4806
        %v4808 = vmul.f32 %v3826, 1.442695
        %v4809 = vpow.pop %v4808
        %v4810 = vmul.f32 %v3827, 1.442695
        %v4811 = vpow.pop %v4810
        %v4812 = vmul.f32 %v3828, 1.442695
        %v4813 = vpow.pop %v4812
        %v4814 = vmul.f32 %v3829, 1.442695
        %v4815 = vpow.pop %v4814
        %v4816 = vmul.f32 %v3830, 1.442695
        %v4817 = vpow.pop %v4816
        %v4818 = vmul.f32 %v3831, 1.442695
        %v4819 = vpow.pop %v4818
        %v4820 = vmul.f32 %v3832, 1.442695
        %v4821 = vpow.pop %v4820
        %v4822 = vmul.f32 %v3833, 1.442695
        %v4823 = vpow.pop %v4822
        %v4824 = vmul.f32 %v3834, 1.442695
        %v4825 = vpow.pop %v4824
        %v4826 = vmul.f32 %v3835, 1.442695
        %v4827 = vpow.pop %v4826
        %v4828 = vmul.f32 %v3836, 1.442695
        %v4829 = vpow.pop %v4828
        %v4830 = vmul.f32 %v3837, 1.442695
        %v4831 = vpow.pop %v4830
        %v4832 = vmul.f32 %v3838, 1.442695
        %v4833 = vpow.pop %v4832
        %v4834 = vmul.f32 %v3839, 1.442695
        %v4835 = vpow.pop %v4834
        %v4836 = vmul.f32 %v3840, 1.442695
        %v4837 = vpow.pop %v4836
        %v4838 = vmul.f32 %v3841, 1.442695
        %v4839 = vpow.pop %v4838
        %v4840 = vmul.f32 %v3842, 1.442695
        %v4841 = vpow.pop %v4840
        %v4842 = vmul.f32 %v3843, 1.442695
        %v4843 = vpow.pop %v4842
        %v4844 = vmul.f32 %v3844, 1.442695
        %v4845 = vpow.pop %v4844
        %v4846 = vmul.f32 %v3845, 1.442695
        %v4847 = vpow.pop %v4846
        %v4848 = vmul.f32 %v3846, 1.442695
        %v4849 = vpow.pop %v4848
        %v4850 = vmul.f32 %v3847, 1.442695
        %v4851 = vpow.pop %v4850
        %v4852 = vmul.f32 %v3848, 1.442695
        %v4853 = vpow.pop %v4852
        %v4854 = vmul.f32 %v3849, 1.442695
        %v4855 = vpow.pop %v4854
        %v4856 = vmul.f32 %v3850, 1.442695
        %v4857 = vpow.pop %v4856
        %v4858 = vmul.f32 %v3851, 1.442695
        %v4859 = vpow.pop %v4858
        %v4860 = vmul.f32 %v3852, 1.442695
        %v4861 = vpow.pop %v4860
        %v4862 = vmul.f32 %v3853, 1.442695
        %v4863 = vpow.pop %v4862
        %v4864 = vmul.f32 %v3854, 1.442695
        %v4865 = vpow.pop %v4864
        %v4866 = vmul.f32 %v3855, 1.442695
        %v4867 = vpow.pop %v4866
        %v4868 = vmul.f32 %v3856, 1.442695
        %v4869 = vpow.pop %v4868
        %v4870 = vmul.f32 %v3857, 1.442695
        %v4871 = vpow.pop %v4870
        %v4872 = vmul.f32 %v3858, 1.442695
        %v4873 = vpow.pop %v4872
        %v4874 = vmul.f32 %v3859, 1.442695
        %v4875 = vpow.pop %v4874
        %v4876 = vmul.f32 %v3860, 1.442695
        %v4877 = vpow.pop %v4876
        %v4878 = vmul.f32 %v3861, 1.442695
        %v4879 = vpow.pop %v4878
        %v4880 = vmul.f32 %v3862, 1.442695
        %v4881 = vpow.pop %v4880
        %v4882 = vmul.f32 %v3863, 1.442695
        %v4883 = vpow.pop %v4882
        %v4884 = vmul.f32 %v3864, 1.442695
        %v4885 = vpow.pop %v4884
        %v4886 = vmul.f32 %v3865, 1.442695
        %v4887 = vpow.pop %v4886
        %v4888 = vmul.f32 %v3866, 1.442695
        %v4889 = vpow.pop %v4888
        %v4890 = vmul.f32 %v3867, 1.442695
        %v4891 = vpow.pop %v4890
        %v4892 = vld [vmem:[#allocation4] sm:$0xf]
        %v4893 = vld [vmem:[#allocation4 + $0x4] sm:$0xf]
        %v4894 = vmul.f32 %v3335, %v4892
        %v4895 = vmul.f32 %v3337, %v4893
        %v4896 = vadd.f32 %v3869, %v3877
        %v4897 = vadd.f32 %v4896, %v3885
        %v4898 = vadd.f32 %v4897, %v3893
        %v4899 = vadd.f32 %v4898, %v3901
        %v4900 = vadd.f32 %v4899, %v3909
        %v4901 = vadd.f32 %v4900, %v3917
        %v4902 = vadd.f32 %v4901, %v3925
        %v4903 = vadd.f32 %v4902, %v3933
        %v4904 = vadd.f32 %v4903, %v3941
        %v4905 = vadd.f32 %v4904, %v3949
        %v4906 = vadd.f32 %v4905, %v3957
        %v4907 = vadd.f32 %v4906, %v3965
        %v4908 = vadd.f32 %v4907, %v3973
        %v4909 = vadd.f32 %v4908, %v3981
        %v4910 = vadd.f32 %v4909, %v3989
        %v4911 = vadd.f32 %v4910, %v3997
        %v4912 = vadd.f32 %v4911, %v4005
        %v4913 = vadd.f32 %v4912, %v4013
        %v4914 = vadd.f32 %v4913, %v4021
        %v4915 = vadd.f32 %v4914, %v4029
        %v4916 = vadd.f32 %v4915, %v4037
        %v4917 = vadd.f32 %v4916, %v4045
        %v4918 = vadd.f32 %v4917, %v4053
        %v4919 = vadd.f32 %v4918, %v4061
        %v4920 = vadd.f32 %v4919, %v4069
        %v4921 = vadd.f32 %v4920, %v4077
        %v4922 = vadd.f32 %v4921, %v4085
        %v4923 = vadd.f32 %v4922, %v4093
        %v4924 = vadd.f32 %v4923, %v4101
        %v4925 = vadd.f32 %v4924, %v4109
        %v4926 = vadd.f32 %v4925, %v4117
        %v4927 = vadd.f32 %v4926, %v4125
        %v4928 = vadd.f32 %v4927, %v4133
        %v4929 = vadd.f32 %v4928, %v4141
        %v4930 = vadd.f32 %v4929, %v4149
        %v4931 = vadd.f32 %v4930, %v4157
        %v4932 = vadd.f32 %v4931, %v4165
        %v4933 = vadd.f32 %v4932, %v4173
        %v4934 = vadd.f32 %v4933, %v4181
        %v4935 = vadd.f32 %v4934, %v4189
        %v4936 = vadd.f32 %v4935, %v4197
        %v4937 = vadd.f32 %v4936, %v4205
        %v4938 = vadd.f32 %v4937, %v4213
        %v4939 = vadd.f32 %v4938, %v4221
        %v4940 = vadd.f32 %v4939, %v4229
        %v4941 = vadd.f32 %v4940, %v4237
        %v4942 = vadd.f32 %v4941, %v4245
        %v4943 = vadd.f32 %v4942, %v4253
        %v4944 = vadd.f32 %v4943, %v4261
        %v4945 = vadd.f32 %v4944, %v4269
        %v4946 = vadd.f32 %v4945, %v4277
        %v4947 = vadd.f32 %v4946, %v4285
        %v4948 = vadd.f32 %v4947, %v4293
        %v4949 = vadd.f32 %v4948, %v4301
        %v4950 = vadd.f32 %v4949, %v4309
        %v4951 = vadd.f32 %v4950, %v4317
        %v4952 = vadd.f32 %v4951, %v4325
        %v4953 = vadd.f32 %v4952, %v4333
        %v4954 = vadd.f32 %v4953, %v4341
        %v4955 = vadd.f32 %v4954, %v4349
        %v4956 = vadd.f32 %v4955, %v4357
        %v4957 = vadd.f32 %v4956, %v4365
        %v4958 = vadd.f32 %v4957, %v4373
        %v4959 = vrot.slane %v4958, 4
        %v4960 = vadd.f32 %v4958, %v4959
        %v4961 = vrot.slane %v4960, 2
        %v4962 = vadd.f32 %v4960, %v4961
        %v4963 = vrot.slane %v4962, 1
        %v4964 = vadd.f32 %v4962, %v4963
        %v4965 = vadd.f32 %v3871, %v3879
        %v4966 = vadd.f32 %v4965, %v3887
        %v4967 = vadd.f32 %v4966, %v3895
        %v4968 = vadd.f32 %v4967, %v3903
        %v4969 = vadd.f32 %v4968, %v3911
        %v4970 = vadd.f32 %v4969, %v3919
        %v4971 = vadd.f32 %v4970, %v3927
        %v4972 = vadd.f32 %v4971, %v3935
        %v4973 = vadd.f32 %v4972, %v3943
        %v4974 = vadd.f32 %v4973, %v3951
        %v4975 = vadd.f32 %v4974, %v3959
        %v4976 = vadd.f32 %v4975, %v3967
        %v4977 = vadd.f32 %v4976, %v3975
        %v4978 = vadd.f32 %v4977, %v3983
        %v4979 = vadd.f32 %v4978, %v3991
        %v4980 = vadd.f32 %v4979, %v3999
        %v4981 = vadd.f32 %v4980, %v4007
        %v4982 = vadd.f32 %v4981, %v4015
        %v4983 = vadd.f32 %v4982, %v4023
        %v4984 = vadd.f32 %v4983, %v4031
        %v4985 = vadd.f32 %v4984, %v4039
        %v4986 = vadd.f32 %v4985, %v4047
        %v4987 = vadd.f32 %v4986, %v4055
        %v4988 = vadd.f32 %v4987, %v4063
        %v4989 = vadd.f32 %v4988, %v4071
        %v4990 = vadd.f32 %v4989, %v4079
        %v4991 = vadd.f32 %v4990, %v4087
        %v4992 = vadd.f32 %v4991, %v4095
        %v4993 = vadd.f32 %v4992, %v4103
        %v4994 = vadd.f32 %v4993, %v4111
        %v4995 = vadd.f32 %v4994, %v4119
        %v4996 = vadd.f32 %v4995, %v4127
        %v4997 = vadd.f32 %v4996, %v4135
        %v4998 = vadd.f32 %v4997, %v4143
        %v4999 = vadd.f32 %v4998, %v4151
        %v5000 = vadd.f32 %v4999, %v4159
        %v5001 = vadd.f32 %v5000, %v4167
        %v5002 = vadd.f32 %v5001, %v4175
        %v5003 = vadd.f32 %v5002, %v4183
        %v5004 = vadd.f32 %v5003, %v4191
        %v5005 = vadd.f32 %v5004, %v4199
        %v5006 = vadd.f32 %v5005, %v4207
        %v5007 = vadd.f32 %v5006, %v4215
        %v5008 = vadd.f32 %v5007, %v4223
        %v5009 = vadd.f32 %v5008, %v4231
        %v5010 = vadd.f32 %v5009, %v4239
        %v5011 = vadd.f32 %v5010, %v4247
        %v5012 = vadd.f32 %v5011, %v4255
        %v5013 = vadd.f32 %v5012, %v4263
        %v5014 = vadd.f32 %v5013, %v4271
        %v5015 = vadd.f32 %v5014, %v4279
        %v5016 = vadd.f32 %v5015, %v4287
        %v5017 = vadd.f32 %v5016, %v4295
        %v5018 = vadd.f32 %v5017, %v4303
        %v5019 = vadd.f32 %v5018, %v4311
        %v5020 = vadd.f32 %v5019, %v4319
        %v5021 = vadd.f32 %v5020, %v4327
        %v5022 = vadd.f32 %v5021, %v4335
        %v5023 = vadd.f32 %v5022, %v4343
        %v5024 = vadd.f32 %v5023, %v4351
        %v5025 = vadd.f32 %v5024, %v4359
        %v5026 = vadd.f32 %v5025, %v4367
        %v5027 = vadd.f32 %v5026, %v4375
        %v5028 = vrot.slane %v5027, 4
        %v5029 = vadd.f32 %v5027, %v5028
        %v5030 = vrot.slane %v5029, 2
        %v5031 = vadd.f32 %v5029, %v5030
        %v5032 = vrot.slane %v5031, 1
        %v5033 = vadd.f32 %v5031, %v5032
        %v5034 = vadd.f32 %v3873, %v3881
        %v5035 = vadd.f32 %v5034, %v3889
        %v5036 = vadd.f32 %v5035, %v3897
        %v5037 = vadd.f32 %v5036, %v3905
        %v5038 = vadd.f32 %v5037, %v3913
        %v5039 = vadd.f32 %v5038, %v3921
        %v5040 = vadd.f32 %v5039, %v3929
        %v5041 = vadd.f32 %v5040, %v3937
        %v5042 = vadd.f32 %v5041, %v3945
        %v5043 = vadd.f32 %v5042, %v3953
        %v5044 = vadd.f32 %v5043, %v3961
        %v5045 = vadd.f32 %v5044, %v3969
        %v5046 = vadd.f32 %v5045, %v3977
        %v5047 = vadd.f32 %v5046, %v3985
        %v5048 = vadd.f32 %v5047, %v3993
        %v5049 = vadd.f32 %v5048, %v4001
        %v5050 = vadd.f32 %v5049, %v4009
        %v5051 = vadd.f32 %v5050, %v4017
        %v5052 = vadd.f32 %v5051, %v4025
        %v5053 = vadd.f32 %v5052, %v4033
        %v5054 = vadd.f32 %v5053, %v4041
        %v5055 = vadd.f32 %v5054, %v4049
        %v5056 = vadd.f32 %v5055, %v4057
        %v5057 = vadd.f32 %v5056, %v4065
        %v5058 = vadd.f32 %v5057, %v4073
        %v5059 = vadd.f32 %v5058, %v4081
        %v5060 = vadd.f32 %v5059, %v4089
        %v5061 = vadd.f32 %v5060, %v4097
        %v5062 = vadd.f32 %v5061, %v4105
        %v5063 = vadd.f32 %v5062, %v4113
        %v5064 = vadd.f32 %v5063, %v4121
        %v5065 = vadd.f32 %v5064, %v4129
        %v5066 = vadd.f32 %v5065, %v4137
        %v5067 = vadd.f32 %v5066, %v4145
        %v5068 = vadd.f32 %v5067, %v4153
        %v5069 = vadd.f32 %v5068, %v4161
        %v5070 = vadd.f32 %v5069, %v4169
        %v5071 = vadd.f32 %v5070, %v4177
        %v5072 = vadd.f32 %v5071, %v4185
        %v5073 = vadd.f32 %v5072, %v4193
        %v5074 = vadd.f32 %v5073, %v4201
        %v5075 = vadd.f32 %v5074, %v4209
        %v5076 = vadd.f32 %v5075, %v4217
        %v5077 = vadd.f32 %v5076, %v4225
        %v5078 = vadd.f32 %v5077, %v4233
        %v5079 = vadd.f32 %v5078, %v4241
        %v5080 = vadd.f32 %v5079, %v4249
        %v5081 = vadd.f32 %v5080, %v4257
        %v5082 = vadd.f32 %v5081, %v4265
        %v5083 = vadd.f32 %v5082, %v4273
        %v5084 = vadd.f32 %v5083, %v4281
        %v5085 = vadd.f32 %v5084, %v4289
        %v5086 = vadd.f32 %v5085, %v4297
        %v5087 = vadd.f32 %v5086, %v4305
        %v5088 = vadd.f32 %v5087, %v4313
        %v5089 = vadd.f32 %v5088, %v4321
        %v5090 = vadd.f32 %v5089, %v4329
        %v5091 = vadd.f32 %v5090, %v4337
        %v5092 = vadd.f32 %v5091, %v4345
        %v5093 = vadd.f32 %v5092, %v4353
        %v5094 = vadd.f32 %v5093, %v4361
        %v5095 = vadd.f32 %v5094, %v4369
        %v5096 = vadd.f32 %v5095, %v4377
        %v5097 = vrot.slane %v5096, 4
        %v5098 = vadd.f32 %v5096, %v5097
        %v5099 = vrot.slane %v5098, 2
        %v5100 = vadd.f32 %v5098, %v5099
        %v5101 = vrot.slane %v5100, 1
        %v5102 = vadd.f32 %v5100, %v5101
        %v5103 = vadd.f32 %v3875, %v3883
        %v5104 = vadd.f32 %v5103, %v3891
        %v5105 = vadd.f32 %v5104, %v3899
        %v5106 = vadd.f32 %v5105, %v3907
        %v5107 = vadd.f32 %v5106, %v3915
        %v5108 = vadd.f32 %v5107, %v3923
        %v5109 = vadd.f32 %v5108, %v3931
        %v5110 = vadd.f32 %v5109, %v3939
        %v5111 = vadd.f32 %v5110, %v3947
        %v5112 = vadd.f32 %v5111, %v3955
        %v5113 = vadd.f32 %v5112, %v3963
        %v5114 = vadd.f32 %v5113, %v3971
        %v5115 = vadd.f32 %v5114, %v3979
        %v5116 = vadd.f32 %v5115, %v3987
        %v5117 = vadd.f32 %v5116, %v3995
        %v5118 = vadd.f32 %v5117, %v4003
        %v5119 = vadd.f32 %v5118, %v4011
        %v5120 = vadd.f32 %v5119, %v4019
        %v5121 = vadd.f32 %v5120, %v4027
        %v5122 = vadd.f32 %v5121, %v4035
        %v5123 = vadd.f32 %v5122, %v4043
        %v5124 = vadd.f32 %v5123, %v4051
        %v5125 = vadd.f32 %v5124, %v4059
        %v5126 = vadd.f32 %v5125, %v4067
        %v5127 = vadd.f32 %v5126, %v4075
        %v5128 = vadd.f32 %v5127, %v4083
        %v5129 = vadd.f32 %v5128, %v4091
        %v5130 = vadd.f32 %v5129, %v4099
        %v5131 = vadd.f32 %v5130, %v4107
        %v5132 = vadd.f32 %v5131, %v4115
        %v5133 = vadd.f32 %v5132, %v4123
        %v5134 = vadd.f32 %v5133, %v4131
        %v5135 = vadd.f32 %v5134, %v4139
        %v5136 = vadd.f32 %v5135, %v4147
        %v5137 = vadd.f32 %v5136, %v4155
        %v5138 = vadd.f32 %v5137, %v4163
        %v5139 = vadd.f32 %v5138, %v4171
        %v5140 = vadd.f32 %v5139, %v4179
        %v5141 = vadd.f32 %v5140, %v4187
        %v5142 = vadd.f32 %v5141, %v4195
        %v5143 = vadd.f32 %v5142, %v4203
        %v5144 = vadd.f32 %v5143, %v4211
        %v5145 = vadd.f32 %v5144, %v4219
        %v5146 = vadd.f32 %v5145, %v4227
        %v5147 = vadd.f32 %v5146, %v4235
        %v5148 = vadd.f32 %v5147, %v4243
        %v5149 = vadd.f32 %v5148, %v4251
        %v5150 = vadd.f32 %v5149, %v4259
        %v5151 = vadd.f32 %v5150, %v4267
        %v5152 = vadd.f32 %v5151, %v4275
        %v5153 = vadd.f32 %v5152, %v4283
        %v5154 = vadd.f32 %v5153, %v4291
        %v5155 = vadd.f32 %v5154, %v4299
        %v5156 = vadd.f32 %v5155, %v4307
        %v5157 = vadd.f32 %v5156, %v4315
        %v5158 = vadd.f32 %v5157, %v4323
        %v5159 = vadd.f32 %v5158, %v4331
        %v5160 = vadd.f32 %v5159, %v4339
        %v5161 = vadd.f32 %v5160, %v4347
        %v5162 = vadd.f32 %v5161, %v4355
        %v5163 = vadd.f32 %v5162, %v4363
        %v5164 = vadd.f32 %v5163, %v4371
        %v5165 = vadd.f32 %v5164, %v4379
        %v5166 = vrot.slane %v5165, 4
        %v5167 = vadd.f32 %v5165, %v5166
        %v5168 = vrot.slane %v5167, 2
        %v5169 = vadd.f32 %v5167, %v5168
        %v5170 = vrot.slane %v5169, 1
        %v5171 = vadd.f32 %v5169, %v5170
        %v5172 = vadd.f32 %v4381, %v4389
        %v5173 = vadd.f32 %v5172, %v4397
        %v5174 = vadd.f32 %v5173, %v4405
        %v5175 = vadd.f32 %v5174, %v4413
        %v5176 = vadd.f32 %v5175, %v4421
        %v5177 = vadd.f32 %v5176, %v4429
        %v5178 = vadd.f32 %v5177, %v4437
        %v5179 = vadd.f32 %v5178, %v4445
        %v5180 = vadd.f32 %v5179, %v4453
        %v5181 = vadd.f32 %v5180, %v4461
        %v5182 = vadd.f32 %v5181, %v4469
        %v5183 = vadd.f32 %v5182, %v4477
        %v5184 = vadd.f32 %v5183, %v4485
        %v5185 = vadd.f32 %v5184, %v4493
        %v5186 = vadd.f32 %v5185, %v4501
        %v5187 = vadd.f32 %v5186, %v4509
        %v5188 = vadd.f32 %v5187, %v4517
        %v5189 = vadd.f32 %v5188, %v4525
        %v5190 = vadd.f32 %v5189, %v4533
        %v5191 = vadd.f32 %v5190, %v4541
        %v5192 = vadd.f32 %v5191, %v4549
        %v5193 = vadd.f32 %v5192, %v4557
        %v5194 = vadd.f32 %v5193, %v4565
        %v5195 = vadd.f32 %v5194, %v4573
        %v5196 = vadd.f32 %v5195, %v4581
        %v5197 = vadd.f32 %v5196, %v4589
        %v5198 = vadd.f32 %v5197, %v4597
        %v5199 = vadd.f32 %v5198, %v4605
        %v5200 = vadd.f32 %v5199, %v4613
        %v5201 = vadd.f32 %v5200, %v4621
        %v5202 = vadd.f32 %v5201, %v4629
        %v5203 = vadd.f32 %v5202, %v4637
        %v5204 = vadd.f32 %v5203, %v4645
        %v5205 = vadd.f32 %v5204, %v4653
        %v5206 = vadd.f32 %v5205, %v4661
        %v5207 = vadd.f32 %v5206, %v4669
        %v5208 = vadd.f32 %v5207, %v4677
        %v5209 = vadd.f32 %v5208, %v4685
        %v5210 = vadd.f32 %v5209, %v4693
        %v5211 = vadd.f32 %v5210, %v4701
        %v5212 = vadd.f32 %v5211, %v4709
        %v5213 = vadd.f32 %v5212, %v4717
        %v5214 = vadd.f32 %v5213, %v4725
        %v5215 = vadd.f32 %v5214, %v4733
        %v5216 = vadd.f32 %v5215, %v4741
        %v5217 = vadd.f32 %v5216, %v4749
        %v5218 = vadd.f32 %v5217, %v4757
        %v5219 = vadd.f32 %v5218, %v4765
        %v5220 = vadd.f32 %v5219, %v4773
        %v5221 = vadd.f32 %v5220, %v4781
        %v5222 = vadd.f32 %v5221, %v4789
        %v5223 = vadd.f32 %v5222, %v4797
        %v5224 = vadd.f32 %v5223, %v4805
        %v5225 = vadd.f32 %v5224, %v4813
        %v5226 = vadd.f32 %v5225, %v4821
        %v5227 = vadd.f32 %v5226, %v4829
        %v5228 = vadd.f32 %v5227, %v4837
        %v5229 = vadd.f32 %v5228, %v4845
        %v5230 = vadd.f32 %v5229, %v4853
        %v5231 = vadd.f32 %v5230, %v4861
        %v5232 = vadd.f32 %v5231, %v4869
        %v5233 = vadd.f32 %v5232, %v4877
        %v5234 = vadd.f32 %v5233, %v4885
        %v5235 = vrot.slane %v5234, 4
        %v5236 = vadd.f32 %v5234, %v5235
        %v5237 = vrot.slane %v5236, 2
        %v5238 = vadd.f32 %v5236, %v5237
        %v5239 = vrot.slane %v5238, 1
        %v5240 = vadd.f32 %v5238, %v5239
        %v5241 = vadd.f32 %v4383, %v4391
        %v5242 = vadd.f32 %v5241, %v4399
        %v5243 = vadd.f32 %v5242, %v4407
        %v5244 = vadd.f32 %v5243, %v4415
        %v5245 = vadd.f32 %v5244, %v4423
        %v5246 = vadd.f32 %v5245, %v4431
        %v5247 = vadd.f32 %v5246, %v4439
        %v5248 = vadd.f32 %v5247, %v4447
        %v5249 = vadd.f32 %v5248, %v4455
        %v5250 = vadd.f32 %v5249, %v4463
        %v5251 = vadd.f32 %v5250, %v4471
        %v5252 = vadd.f32 %v5251, %v4479
        %v5253 = vadd.f32 %v5252, %v4487
        %v5254 = vadd.f32 %v5253, %v4495
        %v5255 = vadd.f32 %v5254, %v4503
        %v5256 = vadd.f32 %v5255, %v4511
        %v5257 = vadd.f32 %v5256, %v4519
        %v5258 = vadd.f32 %v5257, %v4527
        %v5259 = vadd.f32 %v5258, %v4535
        %v5260 = vadd.f32 %v5259, %v4543
        %v5261 = vadd.f32 %v5260, %v4551
        %v5262 = vadd.f32 %v5261, %v4559
        %v5263 = vadd.f32 %v5262, %v4567
        %v5264 = vadd.f32 %v5263, %v4575
        %v5265 = vadd.f32 %v5264, %v4583
        %v5266 = vadd.f32 %v5265, %v4591
        %v5267 = vadd.f32 %v5266, %v4599
        %v5268 = vadd.f32 %v5267, %v4607
        %v5269 = vadd.f32 %v5268, %v4615
        %v5270 = vadd.f32 %v5269, %v4623
        %v5271 = vadd.f32 %v5270, %v4631
        %v5272 = vadd.f32 %v5271, %v4639
        %v5273 = vadd.f32 %v5272, %v4647
        %v5274 = vadd.f32 %v5273, %v4655
        %v5275 = vadd.f32 %v5274, %v4663
        %v5276 = vadd.f32 %v5275, %v4671
        %v5277 = vadd.f32 %v5276, %v4679
        %v5278 = vadd.f32 %v5277, %v4687
        %v5279 = vadd.f32 %v5278, %v4695
        %v5280 = vadd.f32 %v5279, %v4703
        %v5281 = vadd.f32 %v5280, %v4711
        %v5282 = vadd.f32 %v5281, %v4719
        %v5283 = vadd.f32 %v5282, %v4727
        %v5284 = vadd.f32 %v5283, %v4735
        %v5285 = vadd.f32 %v5284, %v4743
        %v5286 = vadd.f32 %v5285, %v4751
        %v5287 = vadd.f32 %v5286, %v4759
        %v5288 = vadd.f32 %v5287, %v4767
        %v5289 = vadd.f32 %v5288, %v4775
        %v5290 = vadd.f32 %v5289, %v4783
        %v5291 = vadd.f32 %v5290, %v4791
        %v5292 = vadd.f32 %v5291, %v4799
        %v5293 = vadd.f32 %v5292, %v4807
        %v5294 = vadd.f32 %v5293, %v4815
        %v5295 = vadd.f32 %v5294, %v4823
        %v5296 = vadd.f32 %v5295, %v4831
        %v5297 = vadd.f32 %v5296, %v4839
        %v5298 = vadd.f32 %v5297, %v4847
        %v5299 = vadd.f32 %v5298, %v4855
        %v5300 = vadd.f32 %v5299, %v4863
        %v5301 = vadd.f32 %v5300, %v4871
        %v5302 = vadd.f32 %v5301, %v4879
        %v5303 = vadd.f32 %v5302, %v4887
        %v5304 = vrot.slane %v5303, 4
        %v5305 = vadd.f32 %v5303, %v5304
        %v5306 = vrot.slane %v5305, 2
        %v5307 = vadd.f32 %v5305, %v5306
        %v5308 = vrot.slane %v5307, 1
        %v5309 = vadd.f32 %v5307, %v5308
        %v5310 = vadd.f32 %v4385, %v4393
        %v5311 = vadd.f32 %v5310, %v4401
        %v5312 = vadd.f32 %v5311, %v4409
        %v5313 = vadd.f32 %v5312, %v4417
        %v5314 = vadd.f32 %v5313, %v4425
        %v5315 = vadd.f32 %v5314, %v4433
        %v5316 = vadd.f32 %v5315, %v4441
        %v5317 = vadd.f32 %v5316, %v4449
        %v5318 = vadd.f32 %v5317, %v4457
        %v5319 = vadd.f32 %v5318, %v4465
        %v5320 = vadd.f32 %v5319, %v4473
        %v5321 = vadd.f32 %v5320, %v4481
        %v5322 = vadd.f32 %v5321, %v4489
        %v5323 = vadd.f32 %v5322, %v4497
        %v5324 = vadd.f32 %v5323, %v4505
        %v5325 = vadd.f32 %v5324, %v4513
        %v5326 = vadd.f32 %v5325, %v4521
        %v5327 = vadd.f32 %v5326, %v4529
        %v5328 = vadd.f32 %v5327, %v4537
        %v5329 = vadd.f32 %v5328, %v4545
        %v5330 = vadd.f32 %v5329, %v4553
        %v5331 = vadd.f32 %v5330, %v4561
        %v5332 = vadd.f32 %v5331, %v4569
        %v5333 = vadd.f32 %v5332, %v4577
        %v5334 = vadd.f32 %v5333, %v4585
        %v5335 = vadd.f32 %v5334, %v4593
        %v5336 = vadd.f32 %v5335, %v4601
        %v5337 = vadd.f32 %v5336, %v4609
        %v5338 = vadd.f32 %v5337, %v4617
        %v5339 = vadd.f32 %v5338, %v4625
        %v5340 = vadd.f32 %v5339, %v4633
        %v5341 = vadd.f32 %v5340, %v4641
        %v5342 = vadd.f32 %v5341, %v4649
        %v5343 = vadd.f32 %v5342, %v4657
        %v5344 = vadd.f32 %v5343, %v4665
        %v5345 = vadd.f32 %v5344, %v4673
        %v5346 = vadd.f32 %v5345, %v4681
        %v5347 = vadd.f32 %v5346, %v4689
        %v5348 = vadd.f32 %v5347, %v4697
        %v5349 = vadd.f32 %v5348, %v4705
        %v5350 = vadd.f32 %v5349, %v4713
        %v5351 = vadd.f32 %v5350, %v4721
        %v5352 = vadd.f32 %v5351, %v4729
        %v5353 = vadd.f32 %v5352, %v4737
        %v5354 = vadd.f32 %v5353, %v4745
        %v5355 = vadd.f32 %v5354, %v4753
        %v5356 = vadd.f32 %v5355, %v4761
        %v5357 = vadd.f32 %v5356, %v4769
        %v5358 = vadd.f32 %v5357, %v4777
        %v5359 = vadd.f32 %v5358, %v4785
        %v5360 = vadd.f32 %v5359, %v4793
        %v5361 = vadd.f32 %v5360, %v4801
        %v5362 = vadd.f32 %v5361, %v4809
        %v5363 = vadd.f32 %v5362, %v4817
        %v5364 = vadd.f32 %v5363, %v4825
        %v5365 = vadd.f32 %v5364, %v4833
        %v5366 = vadd.f32 %v5365, %v4841
        %v5367 = vadd.f32 %v5366, %v4849
        %v5368 = vadd.f32 %v5367, %v4857
        %v5369 = vadd.f32 %v5368, %v4865
        %v5370 = vadd.f32 %v5369, %v4873
        %v5371 = vadd.f32 %v5370, %v4881
        %v5372 = vadd.f32 %v5371, %v4889
        %v5373 = vrot.slane %v5372, 4
        %v5374 = vadd.f32 %v5372, %v5373
        %v5375 = vrot.slane %v5374, 2
        %v5376 = vadd.f32 %v5374, %v5375
        %v5377 = vrot.slane %v5376, 1
        %v5378 = vadd.f32 %v5376, %v5377
        %v5379 = vadd.f32 %v4387, %v4395
        %v5380 = vadd.f32 %v5379, %v4403
        %v5381 = vadd.f32 %v5380, %v4411
        %v5382 = vadd.f32 %v5381, %v4419
        %v5383 = vadd.f32 %v5382, %v4427
        %v5384 = vadd.f32 %v5383, %v4435
        %v5385 = vadd.f32 %v5384, %v4443
        %v5386 = vadd.f32 %v5385, %v4451
        %v5387 = vadd.f32 %v5386, %v4459
        %v5388 = vadd.f32 %v5387, %v4467
        %v5389 = vadd.f32 %v5388, %v4475
        %v5390 = vadd.f32 %v5389, %v4483
        %v5391 = vadd.f32 %v5390, %v4491
        %v5392 = vadd.f32 %v5391, %v4499
        %v5393 = vadd.f32 %v5392, %v4507
        %v5394 = vadd.f32 %v5393, %v4515
        %v5395 = vadd.f32 %v5394, %v4523
        %v5396 = vadd.f32 %v5395, %v4531
        %v5397 = vadd.f32 %v5396, %v4539
        %v5398 = vadd.f32 %v5397, %v4547
        %v5399 = vadd.f32 %v5398, %v4555
        %v5400 = vadd.f32 %v5399, %v4563
        %v5401 = vadd.f32 %v5400, %v4571
        %v5402 = vadd.f32 %v5401, %v4579
        %v5403 = vadd.f32 %v5402, %v4587
        %v5404 = vadd.f32 %v5403, %v4595
        %v5405 = vadd.f32 %v5404, %v4603
        %v5406 = vadd.f32 %v5405, %v4611
        %v5407 = vadd.f32 %v5406, %v4619
        %v5408 = vadd.f32 %v5407, %v4627
        %v5409 = vadd.f32 %v5408, %v4635
        %v5410 = vadd.f32 %v5409, %v4643
        %v5411 = vadd.f32 %v5410, %v4651
        %v5412 = vadd.f32 %v5411, %v4659
        %v5413 = vadd.f32 %v5412, %v4667
        %v5414 = vadd.f32 %v5413, %v4675
        %v5415 = vadd.f32 %v5414, %v4683
        %v5416 = vadd.f32 %v5415, %v4691
        %v5417 = vadd.f32 %v5416, %v4699
        %v5418 = vadd.f32 %v5417, %v4707
        %v5419 = vadd.f32 %v5418, %v4715
        %v5420 = vadd.f32 %v5419, %v4723
        %v5421 = vadd.f32 %v5420, %v4731
        %v5422 = vadd.f32 %v5421, %v4739
        %v5423 = vadd.f32 %v5422, %v4747
        %v5424 = vadd.f32 %v5423, %v4755
        %v5425 = vadd.f32 %v5424, %v4763
        %v5426 = vadd.f32 %v5425, %v4771
        %v5427 = vadd.f32 %v5426, %v4779
        %v5428 = vadd.f32 %v5427, %v4787
        %v5429 = vadd.f32 %v5428, %v4795
        %v5430 = vadd.f32 %v5429, %v4803
        %v5431 = vadd.f32 %v5430, %v4811
        %v5432 = vadd.f32 %v5431, %v4819
        %v5433 = vadd.f32 %v5432, %v4827
        %v5434 = vadd.f32 %v5433, %v4835
        %v5435 = vadd.f32 %v5434, %v4843
        %v5436 = vadd.f32 %v5435, %v4851
        %v5437 = vadd.f32 %v5436, %v4859
        %v5438 = vadd.f32 %v5437, %v4867
        %v5439 = vadd.f32 %v5438, %v4875
        %v5440 = vadd.f32 %v5439, %v4883
        %v5441 = vadd.f32 %v5440, %v4891
        %v5442 = vrot.slane %v5441, 4
        %v5443 = vadd.f32 %v5441, %v5442
        %v5444 = vrot.slane %v5443, 2
        %v5445 = vadd.f32 %v5443, %v5444
        %v5446 = vrot.slane %v5445, 1
        %v5447 = vadd.f32 %v5445, %v5446
        %v5456 = vrot.slane %v5033, 7
        %v5457 = vrot.slane %v5102, 6
        %v5458 = vrot.slane %v5171, 5
        %v5459 = vrot.slane %v5309, 7
        %v5460 = vrot.slane %v5378, 6
        %v5461 = vrot.slane %v5447, 5
        %v5462 = vsel %vm3319, %v4964, %v5456
        %v5463 = vsel %vm3321, %v5457, %v5458
        %v5464 = vsel %vm3323, %v5462, %v5463
        %v5465 = vsel %vm3319, %v5240, %v5459
        %v5466 = vsel %vm3321, %v5460, %v5461
        %v5467 = vsel %vm3323, %v5465, %v5466
        %v5470 = vadd.f32 %v4894, %v5464
        %v5471 = vadd.f32 %v4895, %v5467
        %v5472 = vlaneseq
        %vm5473 = vcmp.ge.s32.totalorder %v5472, 0
        %vm5474 = vcmp.lt.s32.totalorder %v5472, 512
        %vm5475 = vmand %vm5473, %vm5474
        %5476 = vst.msk [vmem:[#allocation4] sm:$0xf] %vm5475, %v5470
        %5477 = vst.msk [vmem:[#allocation4 + $0x4] sm:$0xf] %vm5475, %v5471
        %v5478 = vld [vmem:[#allocation5] sm:$0xff]
        %v5479 = vld [vmem:[#allocation5 + $0x8] sm:$0xff]
        %v5480 = vld [vmem:[#allocation5 + $0x10] sm:$0xff]
        %v5481 = vld [vmem:[#allocation5 + $0x18] sm:$0xff]
        %v5482 = vld [vmem:[#allocation5 + $0x20] sm:$0xff]
        %v5483 = vld [vmem:[#allocation5 + $0x28] sm:$0xff]
        %v5484 = vld [vmem:[#allocation5 + $0x30] sm:$0xff]
        %v5485 = vld [vmem:[#allocation5 + $0x38] sm:$0xff]
        %v5486 = vld [vmem:[#allocation5 + $0x40] sm:$0xff]
        %v5487 = vld [vmem:[#allocation5 + $0x48] sm:$0xff]
        %v5488 = vld [vmem:[#allocation5 + $0x50] sm:$0xff]
        %v5489 = vld [vmem:[#allocation5 + $0x58] sm:$0xff]
        %v5490 = vld [vmem:[#allocation5 + $0x60] sm:$0xff]
        %v5491 = vld [vmem:[#allocation5 + $0x68] sm:$0xff]
        %v5492 = vld [vmem:[#allocation5 + $0x70] sm:$0xff]
        %v5493 = vld [vmem:[#allocation5 + $0x78] sm:$0xff]
        %v5494 = vld [vmem:[#allocation5 + $0x80] sm:$0xff]
        %v5495 = vld [vmem:[#allocation5 + $0x88] sm:$0xff]
        %v5496 = vld [vmem:[#allocation5 + $0x90] sm:$0xff]
        %v5497 = vld [vmem:[#allocation5 + $0x98] sm:$0xff]
        %v5498 = vld [vmem:[#allocation5 + $0xa0] sm:$0xff]
        %v5499 = vld [vmem:[#allocation5 + $0xa8] sm:$0xff]
        %v5500 = vld [vmem:[#allocation5 + $0xb0] sm:$0xff]
        %v5501 = vld [vmem:[#allocation5 + $0xb8] sm:$0xff]
        %v5502 = vld [vmem:[#allocation5 + $0xc0] sm:$0xff]
        %v5503 = vld [vmem:[#allocation5 + $0xc8] sm:$0xff]
        %v5504 = vld [vmem:[#allocation5 + $0xd0] sm:$0xff]
        %v5505 = vld [vmem:[#allocation5 + $0xd8] sm:$0xff]
        %v5506 = vld [vmem:[#allocation5 + $0xe0] sm:$0xff]
        %v5507 = vld [vmem:[#allocation5 + $0xe8] sm:$0xff]
        %v5508 = vld [vmem:[#allocation5 + $0xf0] sm:$0xff]
        %v5509 = vld [vmem:[#allocation5 + $0xf8] sm:$0xff]
        %v5510 = vld [vmem:[#allocation5 + $0x100] sm:$0xff]
        %v5511 = vld [vmem:[#allocation5 + $0x108] sm:$0xff]
        %v5512 = vld [vmem:[#allocation5 + $0x110] sm:$0xff]
        %v5513 = vld [vmem:[#allocation5 + $0x118] sm:$0xff]
        %v5514 = vld [vmem:[#allocation5 + $0x120] sm:$0xff]
        %v5515 = vld [vmem:[#allocation5 + $0x128] sm:$0xff]
        %v5516 = vld [vmem:[#allocation5 + $0x130] sm:$0xff]
        %v5517 = vld [vmem:[#allocation5 + $0x138] sm:$0xff]
        %v5518 = vld [vmem:[#allocation5 + $0x140] sm:$0xff]
        %v5519 = vld [vmem:[#allocation5 + $0x148] sm:$0xff]
        %v5520 = vld [vmem:[#allocation5 + $0x150] sm:$0xff]
        %v5521 = vld [vmem:[#allocation5 + $0x158] sm:$0xff]
        %v5522 = vld [vmem:[#allocation5 + $0x160] sm:$0xff]
        %v5523 = vld [vmem:[#allocation5 + $0x168] sm:$0xff]
        %v5524 = vld [vmem:[#allocation5 + $0x170] sm:$0xff]
        %v5525 = vld [vmem:[#allocation5 + $0x178] sm:$0xff]
        %v5526 = vld [vmem:[#allocation5 + $0x180] sm:$0xff]
        %v5527 = vld [vmem:[#allocation5 + $0x188] sm:$0xff]
        %v5528 = vld [vmem:[#allocation5 + $0x190] sm:$0xff]
        %v5529 = vld [vmem:[#allocation5 + $0x198] sm:$0xff]
        %v5530 = vld [vmem:[#allocation5 + $0x1a0] sm:$0xff]
        %v5531 = vld [vmem:[#allocation5 + $0x1a8] sm:$0xff]
        %v5532 = vld [vmem:[#allocation5 + $0x1b0] sm:$0xff]
        %v5533 = vld [vmem:[#allocation5 + $0x1b8] sm:$0xff]
        %v5534 = vld [vmem:[#allocation5 + $0x1c0] sm:$0xff]
        %v5535 = vld [vmem:[#allocation5 + $0x1c8] sm:$0xff]
        %v5536 = vld [vmem:[#allocation5 + $0x1d0] sm:$0xff]
        %v5537 = vld [vmem:[#allocation5 + $0x1d8] sm:$0xff]
        %v5538 = vld [vmem:[#allocation5 + $0x1e0] sm:$0xff]
        %v5539 = vld [vmem:[#allocation5 + $0x1e8] sm:$0xff]
        %v5540 = vld [vmem:[#allocation5 + $0x1f0] sm:$0xff]
        %v5541 = vld [vmem:[#allocation5 + $0x1f8] sm:$0xff]
        %v5544 = vperm.slane %v3335, 0
        %v5545 = vperm.slane %v3335, 1
        %v5546 = vperm.slane %v3335, 2
        %v5547 = vperm.slane %v3335, 3
        %v5548 = vperm.slane %v3337, 0
        %v5549 = vperm.slane %v3337, 1
        %v5550 = vperm.slane %v3337, 2
        %v5551 = vperm.slane %v3337, 3
        %v5560 = vmul.f32 %v5544, %v5478
        %v5561 = vmul.f32 %v5545, %v5479
        %v5562 = vmul.f32 %v5546, %v5480
        %v5563 = vmul.f32 %v5547, %v5481
        %v5564 = vmul.f32 %v5544, %v5482
        %v5565 = vmul.f32 %v5545, %v5483
        %v5566 = vmul.f32 %v5546, %v5484
        %v5567 = vmul.f32 %v5547, %v5485
        %v5568 = vmul.f32 %v5544, %v5486
        %v5569 = vmul.f32 %v5545, %v5487
        %v5570 = vmul.f32 %v5546, %v5488
        %v5571 = vmul.f32 %v5547, %v5489
        %v5572 = vmul.f32 %v5544, %v5490
        %v5573 = vmul.f32 %v5545, %v5491
        %v5574 = vmul.f32 %v5546, %v5492
        %v5575 = vmul.f32 %v5547, %v5493
        %v5576 = vmul.f32 %v5544, %v5494
        %v5577 = vmul.f32 %v5545, %v5495
        %v5578 = vmul.f32 %v5546, %v5496
        %v5579 = vmul.f32 %v5547, %v5497
        %v5580 = vmul.f32 %v5544, %v5498
        %v5581 = vmul.f32 %v5545, %v5499
        %v5582 = vmul.f32 %v5546, %v5500
        %v5583 = vmul.f32 %v5547, %v5501
        %v5584 = vmul.f32 %v5544, %v5502
        %v5585 = vmul.f32 %v5545, %v5503
        %v5586 = vmul.f32 %v5546, %v5504
        %v5587 = vmul.f32 %v5547, %v5505
        %v5588 = vmul.f32 %v5544, %v5506
        %v5589 = vmul.f32 %v5545, %v5507
        %v5590 = vmul.f32 %v5546, %v5508
        %v5591 = vmul.f32 %v5547, %v5509
        %v5592 = vmul.f32 %v5548, %v5510
        %v5593 = vmul.f32 %v5549, %v5511
        %v5594 = vmul.f32 %v5550, %v5512
        %v5595 = vmul.f32 %v5551, %v5513
        %v5596 = vmul.f32 %v5548, %v5514
        %v5597 = vmul.f32 %v5549, %v5515
        %v5598 = vmul.f32 %v5550, %v5516
        %v5599 = vmul.f32 %v5551, %v5517
        %v5600 = vmul.f32 %v5548, %v5518
        %v5601 = vmul.f32 %v5549, %v5519
        %v5602 = vmul.f32 %v5550, %v5520
        %v5603 = vmul.f32 %v5551, %v5521
        %v5604 = vmul.f32 %v5548, %v5522
        %v5605 = vmul.f32 %v5549, %v5523
        %v5606 = vmul.f32 %v5550, %v5524
        %v5607 = vmul.f32 %v5551, %v5525
        %v5608 = vmul.f32 %v5548, %v5526
        %v5609 = vmul.f32 %v5549, %v5527
        %v5610 = vmul.f32 %v5550, %v5528
        %v5611 = vmul.f32 %v5551, %v5529
        %v5612 = vmul.f32 %v5548, %v5530
        %v5613 = vmul.f32 %v5549, %v5531
        %v5614 = vmul.f32 %v5550, %v5532
        %v5615 = vmul.f32 %v5551, %v5533
        %v5616 = vmul.f32 %v5548, %v5534
        %v5617 = vmul.f32 %v5549, %v5535
        %v5618 = vmul.f32 %v5550, %v5536
        %v5619 = vmul.f32 %v5551, %v5537
        %v5620 = vmul.f32 %v5548, %v5538
        %v5621 = vmul.f32 %v5549, %v5539
        %v5622 = vmul.f32 %v5550, %v5540
        %v5623 = vmul.f32 %v5551, %v5541
        %v5624 = vld [vmem:[%s351] sm:$0xff]
        %v5625 = vld [vmem:[%s351 + $0x8] sm:$0xff]
        %v5626 = vld [vmem:[%s351 + $0x10] sm:$0xff]
        %v5627 = vld [vmem:[%s351 + $0x18] sm:$0xff]
        %v5628 = vld [vmem:[%s351 + $0x20] sm:$0xff]
        %v5629 = vld [vmem:[%s351 + $0x28] sm:$0xff]
        %v5630 = vld [vmem:[%s351 + $0x30] sm:$0xff]
        %v5631 = vld [vmem:[%s351 + $0x38] sm:$0xff]
        %v5632 = vld [vmem:[%s351 + $0x40] sm:$0xff]
        %v5633 = vld [vmem:[%s351 + $0x48] sm:$0xff]
        %v5634 = vld [vmem:[%s351 + $0x50] sm:$0xff]
        %v5635 = vld [vmem:[%s351 + $0x58] sm:$0xff]
        %v5636 = vld [vmem:[%s351 + $0x60] sm:$0xff]
        %v5637 = vld [vmem:[%s351 + $0x68] sm:$0xff]
        %v5638 = vld [vmem:[%s351 + $0x70] sm:$0xff]
        %v5639 = vld [vmem:[%s351 + $0x78] sm:$0xff]
        %v5640 = vld [vmem:[%s351 + $0x80] sm:$0xff]
        %v5641 = vld [vmem:[%s351 + $0x88] sm:$0xff]
        %v5642 = vld [vmem:[%s351 + $0x90] sm:$0xff]
        %v5643 = vld [vmem:[%s351 + $0x98] sm:$0xff]
        %v5644 = vld [vmem:[%s351 + $0xa0] sm:$0xff]
        %v5645 = vld [vmem:[%s351 + $0xa8] sm:$0xff]
        %v5646 = vld [vmem:[%s351 + $0xb0] sm:$0xff]
        %v5647 = vld [vmem:[%s351 + $0xb8] sm:$0xff]
        %v5648 = vld [vmem:[%s351 + $0xc0] sm:$0xff]
        %v5649 = vld [vmem:[%s351 + $0xc8] sm:$0xff]
        %v5650 = vld [vmem:[%s351 + $0xd0] sm:$0xff]
        %v5651 = vld [vmem:[%s351 + $0xd8] sm:$0xff]
        %v5652 = vld [vmem:[%s351 + $0xe0] sm:$0xff]
        %v5653 = vld [vmem:[%s351 + $0xe8] sm:$0xff]
        %v5654 = vld [vmem:[%s351 + $0xf0] sm:$0xff]
        %v5655 = vld [vmem:[%s351 + $0xf8] sm:$0xff]
        %v5656 = vld [vmem:[%s351 + $0x100] sm:$0xff]
        %v5657 = vld [vmem:[%s351 + $0x108] sm:$0xff]
        %v5658 = vld [vmem:[%s351 + $0x110] sm:$0xff]
        %v5659 = vld [vmem:[%s351 + $0x118] sm:$0xff]
        %v5660 = vld [vmem:[%s351 + $0x120] sm:$0xff]
        %v5661 = vld [vmem:[%s351 + $0x128] sm:$0xff]
        %v5662 = vld [vmem:[%s351 + $0x130] sm:$0xff]
        %v5663 = vld [vmem:[%s351 + $0x138] sm:$0xff]
        %v5664 = vld [vmem:[%s351 + $0x140] sm:$0xff]
        %v5665 = vld [vmem:[%s351 + $0x148] sm:$0xff]
        %v5666 = vld [vmem:[%s351 + $0x150] sm:$0xff]
        %v5667 = vld [vmem:[%s351 + $0x158] sm:$0xff]
        %v5668 = vld [vmem:[%s351 + $0x160] sm:$0xff]
        %v5669 = vld [vmem:[%s351 + $0x168] sm:$0xff]
        %v5670 = vld [vmem:[%s351 + $0x170] sm:$0xff]
        %v5671 = vld [vmem:[%s351 + $0x178] sm:$0xff]
        %v5672 = vld [vmem:[%s351 + $0x180] sm:$0xff]
        %v5673 = vld [vmem:[%s351 + $0x188] sm:$0xff]
        %v5674 = vld [vmem:[%s351 + $0x190] sm:$0xff]
        %v5675 = vld [vmem:[%s351 + $0x198] sm:$0xff]
        %v5676 = vld [vmem:[%s351 + $0x1a0] sm:$0xff]
        %v5677 = vld [vmem:[%s351 + $0x1a8] sm:$0xff]
        %v5678 = vld [vmem:[%s351 + $0x1b0] sm:$0xff]
        %v5679 = vld [vmem:[%s351 + $0x1b8] sm:$0xff]
        %v5680 = vld [vmem:[%s351 + $0x1c0] sm:$0xff]
        %v5681 = vld [vmem:[%s351 + $0x1c8] sm:$0xff]
        %v5682 = vld [vmem:[%s351 + $0x1d0] sm:$0xff]
        %v5683 = vld [vmem:[%s351 + $0x1d8] sm:$0xff]
        %v5684 = vld [vmem:[%s351 + $0x1e0] sm:$0xff]
        %v5685 = vld [vmem:[%s351 + $0x1e8] sm:$0xff]
        %v5686 = vld [vmem:[%s351 + $0x1f0] sm:$0xff]
        %v5687 = vld [vmem:[%s351 + $0x1f8] sm:$0xff]
        %v5688 = vpack.c.bf16 %v5625, %v5624
        %v5689 = vpack.c.bf16 %v5627, %v5626
        %v5690 = vpack.c.bf16 %v5629, %v5628
        %v5691 = vpack.c.bf16 %v5631, %v5630
        %v5692 = vpack.c.bf16 %v5633, %v5632
        %v5693 = vpack.c.bf16 %v5635, %v5634
        %v5694 = vpack.c.bf16 %v5637, %v5636
        %v5695 = vpack.c.bf16 %v5639, %v5638
        %v5696 = vpack.c.bf16 %v5641, %v5640
        %v5697 = vpack.c.bf16 %v5643, %v5642
        %v5698 = vpack.c.bf16 %v5645, %v5644
        %v5699 = vpack.c.bf16 %v5647, %v5646
        %v5700 = vpack.c.bf16 %v5649, %v5648
        %v5701 = vpack.c.bf16 %v5651, %v5650
        %v5702 = vpack.c.bf16 %v5653, %v5652
        %v5703 = vpack.c.bf16 %v5655, %v5654
        %v5704 = vpack.c.bf16 %v5657, %v5656
        %v5705 = vpack.c.bf16 %v5659, %v5658
        %v5706 = vpack.c.bf16 %v5661, %v5660
        %v5707 = vpack.c.bf16 %v5663, %v5662
        %v5708 = vpack.c.bf16 %v5665, %v5664
        %v5709 = vpack.c.bf16 %v5667, %v5666
        %v5710 = vpack.c.bf16 %v5669, %v5668
        %v5711 = vpack.c.bf16 %v5671, %v5670
        %v5712 = vpack.c.bf16 %v5673, %v5672
        %v5713 = vpack.c.bf16 %v5675, %v5674
        %v5714 = vpack.c.bf16 %v5677, %v5676
        %v5715 = vpack.c.bf16 %v5679, %v5678
        %v5716 = vpack.c.bf16 %v5681, %v5680
        %v5717 = vpack.c.bf16 %v5683, %v5682
        %v5718 = vpack.c.bf16 %v5685, %v5684
        %v5719 = vpack.c.bf16 %v5687, %v5686
        %v5720 = vpack.c.bf16 %v3871, %v3869
        %v5721 = vpack.c.bf16 %v3875, %v3873
        %v5722 = vpack.c.bf16 %v3879, %v3877
        %v5723 = vpack.c.bf16 %v3883, %v3881
        %v5724 = vpack.c.bf16 %v3887, %v3885
        %v5725 = vpack.c.bf16 %v3891, %v3889
        %v5726 = vpack.c.bf16 %v3895, %v3893
        %v5727 = vpack.c.bf16 %v3899, %v3897
        %v5728 = vpack.c.bf16 %v3903, %v3901
        %v5729 = vpack.c.bf16 %v3907, %v3905
        %v5730 = vpack.c.bf16 %v3911, %v3909
        %v5731 = vpack.c.bf16 %v3915, %v3913
        %v5732 = vpack.c.bf16 %v3919, %v3917
        %v5733 = vpack.c.bf16 %v3923, %v3921
        %v5734 = vpack.c.bf16 %v3927, %v3925
        %v5735 = vpack.c.bf16 %v3931, %v3929
        %v5736 = vpack.c.bf16 %v3935, %v3933
        %v5737 = vpack.c.bf16 %v3939, %v3937
        %v5738 = vpack.c.bf16 %v3943, %v3941
        %v5739 = vpack.c.bf16 %v3947, %v3945
        %v5740 = vpack.c.bf16 %v3951, %v3949
        %v5741 = vpack.c.bf16 %v3955, %v3953
        %v5742 = vpack.c.bf16 %v3959, %v3957
        %v5743 = vpack.c.bf16 %v3963, %v3961
        %v5744 = vpack.c.bf16 %v3967, %v3965
        %v5745 = vpack.c.bf16 %v3971, %v3969
        %v5746 = vpack.c.bf16 %v3975, %v3973
        %v5747 = vpack.c.bf16 %v3979, %v3977
        %v5748 = vpack.c.bf16 %v3983, %v3981
        %v5749 = vpack.c.bf16 %v3987, %v3985
        %v5750 = vpack.c.bf16 %v3991, %v3989
        %v5751 = vpack.c.bf16 %v3995, %v3993
        %v5752 = vpack.c.bf16 %v3999, %v3997
        %v5753 = vpack.c.bf16 %v4003, %v4001
        %v5754 = vpack.c.bf16 %v4007, %v4005
        %v5755 = vpack.c.bf16 %v4011, %v4009
        %v5756 = vpack.c.bf16 %v4015, %v4013
        %v5757 = vpack.c.bf16 %v4019, %v4017
        %v5758 = vpack.c.bf16 %v4023, %v4021
        %v5759 = vpack.c.bf16 %v4027, %v4025
        %v5760 = vpack.c.bf16 %v4031, %v4029
        %v5761 = vpack.c.bf16 %v4035, %v4033
        %v5762 = vpack.c.bf16 %v4039, %v4037
        %v5763 = vpack.c.bf16 %v4043, %v4041
        %v5764 = vpack.c.bf16 %v4047, %v4045
        %v5765 = vpack.c.bf16 %v4051, %v4049
        %v5766 = vpack.c.bf16 %v4055, %v4053
        %v5767 = vpack.c.bf16 %v4059, %v4057
        %v5768 = vpack.c.bf16 %v4063, %v4061
        %v5769 = vpack.c.bf16 %v4067, %v4065
        %v5770 = vpack.c.bf16 %v4071, %v4069
        %v5771 = vpack.c.bf16 %v4075, %v4073
        %v5772 = vpack.c.bf16 %v4079, %v4077
        %v5773 = vpack.c.bf16 %v4083, %v4081
        %v5774 = vpack.c.bf16 %v4087, %v4085
        %v5775 = vpack.c.bf16 %v4091, %v4089
        %v5776 = vpack.c.bf16 %v4095, %v4093
        %v5777 = vpack.c.bf16 %v4099, %v4097
        %v5778 = vpack.c.bf16 %v4103, %v4101
        %v5779 = vpack.c.bf16 %v4107, %v4105
        %v5780 = vpack.c.bf16 %v4111, %v4109
        %v5781 = vpack.c.bf16 %v4115, %v4113
        %v5782 = vpack.c.bf16 %v4119, %v4117
        %v5783 = vpack.c.bf16 %v4123, %v4121
        %v5784 = vpack.c.bf16 %v4127, %v4125
        %v5785 = vpack.c.bf16 %v4131, %v4129
        %v5786 = vpack.c.bf16 %v4135, %v4133
        %v5787 = vpack.c.bf16 %v4139, %v4137
        %v5788 = vpack.c.bf16 %v4143, %v4141
        %v5789 = vpack.c.bf16 %v4147, %v4145
        %v5790 = vpack.c.bf16 %v4151, %v4149
        %v5791 = vpack.c.bf16 %v4155, %v4153
        %v5792 = vpack.c.bf16 %v4159, %v4157
        %v5793 = vpack.c.bf16 %v4163, %v4161
        %v5794 = vpack.c.bf16 %v4167, %v4165
        %v5795 = vpack.c.bf16 %v4171, %v4169
        %v5796 = vpack.c.bf16 %v4175, %v4173
        %v5797 = vpack.c.bf16 %v4179, %v4177
        %v5798 = vpack.c.bf16 %v4183, %v4181
        %v5799 = vpack.c.bf16 %v4187, %v4185
        %v5800 = vpack.c.bf16 %v4191, %v4189
        %v5801 = vpack.c.bf16 %v4195, %v4193
        %v5802 = vpack.c.bf16 %v4199, %v4197
        %v5803 = vpack.c.bf16 %v4203, %v4201
        %v5804 = vpack.c.bf16 %v4207, %v4205
        %v5805 = vpack.c.bf16 %v4211, %v4209
        %v5806 = vpack.c.bf16 %v4215, %v4213
        %v5807 = vpack.c.bf16 %v4219, %v4217
        %v5808 = vpack.c.bf16 %v4223, %v4221
        %v5809 = vpack.c.bf16 %v4227, %v4225
        %v5810 = vpack.c.bf16 %v4231, %v4229
        %v5811 = vpack.c.bf16 %v4235, %v4233
        %v5812 = vpack.c.bf16 %v4239, %v4237
        %v5813 = vpack.c.bf16 %v4243, %v4241
        %v5814 = vpack.c.bf16 %v4247, %v4245
        %v5815 = vpack.c.bf16 %v4251, %v4249
        %v5816 = vpack.c.bf16 %v4255, %v4253
        %v5817 = vpack.c.bf16 %v4259, %v4257
        %v5818 = vpack.c.bf16 %v4263, %v4261
        %v5819 = vpack.c.bf16 %v4267, %v4265
        %v5820 = vpack.c.bf16 %v4271, %v4269
        %v5821 = vpack.c.bf16 %v4275, %v4273
        %v5822 = vpack.c.bf16 %v4279, %v4277
        %v5823 = vpack.c.bf16 %v4283, %v4281
        %v5824 = vpack.c.bf16 %v4287, %v4285
        %v5825 = vpack.c.bf16 %v4291, %v4289
        %v5826 = vpack.c.bf16 %v4295, %v4293
        %v5827 = vpack.c.bf16 %v4299, %v4297
        %v5828 = vpack.c.bf16 %v4303, %v4301
        %v5829 = vpack.c.bf16 %v4307, %v4305
        %v5830 = vpack.c.bf16 %v4311, %v4309
        %v5831 = vpack.c.bf16 %v4315, %v4313
        %v5832 = vpack.c.bf16 %v4319, %v4317
        %v5833 = vpack.c.bf16 %v4323, %v4321
        %v5834 = vpack.c.bf16 %v4327, %v4325
        %v5835 = vpack.c.bf16 %v4331, %v4329
        %v5836 = vpack.c.bf16 %v4335, %v4333
        %v5837 = vpack.c.bf16 %v4339, %v4337
        %v5838 = vpack.c.bf16 %v4343, %v4341
        %v5839 = vpack.c.bf16 %v4347, %v4345
        %v5840 = vpack.c.bf16 %v4351, %v4349
        %v5841 = vpack.c.bf16 %v4355, %v4353
        %v5842 = vpack.c.bf16 %v4359, %v4357
        %v5843 = vpack.c.bf16 %v4363, %v4361
        %v5844 = vpack.c.bf16 %v4367, %v4365
        %v5845 = vpack.c.bf16 %v4371, %v4369
        %v5846 = vpack.c.bf16 %v4375, %v4373
        %v5847 = vpack.c.bf16 %v4379, %v4377
        %v5848 = vpack.c.bf16 %v4383, %v4381
        %v5849 = vpack.c.bf16 %v4387, %v4385
        %v5850 = vpack.c.bf16 %v4391, %v4389
        %v5851 = vpack.c.bf16 %v4395, %v4393
        %v5852 = vpack.c.bf16 %v4399, %v4397
        %v5853 = vpack.c.bf16 %v4403, %v4401
        %v5854 = vpack.c.bf16 %v4407, %v4405
        %v5855 = vpack.c.bf16 %v4411, %v4409
        %v5856 = vpack.c.bf16 %v4415, %v4413
        %v5857 = vpack.c.bf16 %v4419, %v4417
        %v5858 = vpack.c.bf16 %v4423, %v4421
        %v5859 = vpack.c.bf16 %v4427, %v4425
        %v5860 = vpack.c.bf16 %v4431, %v4429
        %v5861 = vpack.c.bf16 %v4435, %v4433
        %v5862 = vpack.c.bf16 %v4439, %v4437
        %v5863 = vpack.c.bf16 %v4443, %v4441
        %v5864 = vpack.c.bf16 %v4447, %v4445
        %v5865 = vpack.c.bf16 %v4451, %v4449
        %v5866 = vpack.c.bf16 %v4455, %v4453
        %v5867 = vpack.c.bf16 %v4459, %v4457
        %v5868 = vpack.c.bf16 %v4463, %v4461
        %v5869 = vpack.c.bf16 %v4467, %v4465
        %v5870 = vpack.c.bf16 %v4471, %v4469
        %v5871 = vpack.c.bf16 %v4475, %v4473
        %v5872 = vpack.c.bf16 %v4479, %v4477
        %v5873 = vpack.c.bf16 %v4483, %v4481
        %v5874 = vpack.c.bf16 %v4487, %v4485
        %v5875 = vpack.c.bf16 %v4491, %v4489
        %v5876 = vpack.c.bf16 %v4495, %v4493
        %v5877 = vpack.c.bf16 %v4499, %v4497
        %v5878 = vpack.c.bf16 %v4503, %v4501
        %v5879 = vpack.c.bf16 %v4507, %v4505
        %v5880 = vpack.c.bf16 %v4511, %v4509
        %v5881 = vpack.c.bf16 %v4515, %v4513
        %v5882 = vpack.c.bf16 %v4519, %v4517
        %v5883 = vpack.c.bf16 %v4523, %v4521
        %v5884 = vpack.c.bf16 %v4527, %v4525
        %v5885 = vpack.c.bf16 %v4531, %v4529
        %v5886 = vpack.c.bf16 %v4535, %v4533
        %v5887 = vpack.c.bf16 %v4539, %v4537
        %v5888 = vpack.c.bf16 %v4543, %v4541
        %v5889 = vpack.c.bf16 %v4547, %v4545
        %v5890 = vpack.c.bf16 %v4551, %v4549
        %v5891 = vpack.c.bf16 %v4555, %v4553
        %v5892 = vpack.c.bf16 %v4559, %v4557
        %v5893 = vpack.c.bf16 %v4563, %v4561
        %v5894 = vpack.c.bf16 %v4567, %v4565
        %v5895 = vpack.c.bf16 %v4571, %v4569
        %v5896 = vpack.c.bf16 %v4575, %v4573
        %v5897 = vpack.c.bf16 %v4579, %v4577
        %v5898 = vpack.c.bf16 %v4583, %v4581
        %v5899 = vpack.c.bf16 %v4587, %v4585
        %v5900 = vpack.c.bf16 %v4591, %v4589
        %v5901 = vpack.c.bf16 %v4595, %v4593
        %v5902 = vpack.c.bf16 %v4599, %v4597
        %v5903 = vpack.c.bf16 %v4603, %v4601
        %v5904 = vpack.c.bf16 %v4607, %v4605
        %v5905 = vpack.c.bf16 %v4611, %v4609
        %v5906 = vpack.c.bf16 %v4615, %v4613
        %v5907 = vpack.c.bf16 %v4619, %v4617
        %v5908 = vpack.c.bf16 %v4623, %v4621
        %v5909 = vpack.c.bf16 %v4627, %v4625
        %v5910 = vpack.c.bf16 %v4631, %v4629
        %v5911 = vpack.c.bf16 %v4635, %v4633
        %v5912 = vpack.c.bf16 %v4639, %v4637
        %v5913 = vpack.c.bf16 %v4643, %v4641
        %v5914 = vpack.c.bf16 %v4647, %v4645
        %v5915 = vpack.c.bf16 %v4651, %v4649
        %v5916 = vpack.c.bf16 %v4655, %v4653
        %v5917 = vpack.c.bf16 %v4659, %v4657
        %v5918 = vpack.c.bf16 %v4663, %v4661
        %v5919 = vpack.c.bf16 %v4667, %v4665
        %v5920 = vpack.c.bf16 %v4671, %v4669
        %v5921 = vpack.c.bf16 %v4675, %v4673
        %v5922 = vpack.c.bf16 %v4679, %v4677
        %v5923 = vpack.c.bf16 %v4683, %v4681
        %v5924 = vpack.c.bf16 %v4687, %v4685
        %v5925 = vpack.c.bf16 %v4691, %v4689
        %v5926 = vpack.c.bf16 %v4695, %v4693
        %v5927 = vpack.c.bf16 %v4699, %v4697
        %v5928 = vpack.c.bf16 %v4703, %v4701
        %v5929 = vpack.c.bf16 %v4707, %v4705
        %v5930 = vpack.c.bf16 %v4711, %v4709
        %v5931 = vpack.c.bf16 %v4715, %v4713
        %v5932 = vpack.c.bf16 %v4719, %v4717
        %v5933 = vpack.c.bf16 %v4723, %v4721
        %v5934 = vpack.c.bf16 %v4727, %v4725
        %v5935 = vpack.c.bf16 %v4731, %v4729
        %v5936 = vpack.c.bf16 %v4735, %v4733
        %v5937 = vpack.c.bf16 %v4739, %v4737
        %v5938 = vpack.c.bf16 %v4743, %v4741
        %v5939 = vpack.c.bf16 %v4747, %v4745
        %v5940 = vpack.c.bf16 %v4751, %v4749
        %v5941 = vpack.c.bf16 %v4755, %v4753
        %v5942 = vpack.c.bf16 %v4759, %v4757
        %v5943 = vpack.c.bf16 %v4763, %v4761
        %v5944 = vpack.c.bf16 %v4767, %v4765
        %v5945 = vpack.c.bf16 %v4771, %v4769
        %v5946 = vpack.c.bf16 %v4775, %v4773
        %v5947 = vpack.c.bf16 %v4779, %v4777
        %v5948 = vpack.c.bf16 %v4783, %v4781
        %v5949 = vpack.c.bf16 %v4787, %v4785
        %v5950 = vpack.c.bf16 %v4791, %v4789
        %v5951 = vpack.c.bf16 %v4795, %v4793
        %v5952 = vpack.c.bf16 %v4799, %v4797
        %v5953 = vpack.c.bf16 %v4803, %v4801
        %v5954 = vpack.c.bf16 %v4807, %v4805
        %v5955 = vpack.c.bf16 %v4811, %v4809
        %v5956 = vpack.c.bf16 %v4815, %v4813
        %v5957 = vpack.c.bf16 %v4819, %v4817
        %v5958 = vpack.c.bf16 %v4823, %v4821
        %v5959 = vpack.c.bf16 %v4827, %v4825
        %v5960 = vpack.c.bf16 %v4831, %v4829
        %v5961 = vpack.c.bf16 %v4835, %v4833
        %v5962 = vpack.c.bf16 %v4839, %v4837
        %v5963 = vpack.c.bf16 %v4843, %v4841
        %v5964 = vpack.c.bf16 %v4847, %v4845
        %v5965 = vpack.c.bf16 %v4851, %v4849
        %v5966 = vpack.c.bf16 %v4855, %v4853
        %v5967 = vpack.c.bf16 %v4859, %v4857
        %v5968 = vpack.c.bf16 %v4863, %v4861
        %v5969 = vpack.c.bf16 %v4867, %v4865
        %v5970 = vpack.c.bf16 %v4871, %v4869
        %v5971 = vpack.c.bf16 %v4875, %v4873
        %v5972 = vpack.c.bf16 %v4879, %v4877
        %v5973 = vpack.c.bf16 %v4883, %v4881
        %v5974 = vpack.c.bf16 %v4887, %v4885
        %v5975 = vpack.c.bf16 %v4891, %v4889
        %v5992 = vunpack.c.l.b16 %v5688
        %v5993 = vunpack.c.h.b16 %v5688
        %v5994 = vunpack.c.l.b16 %v5689
        %v5995 = vunpack.c.h.b16 %v5689
        %v5996 = vunpack.c.l.b16 %v5690
        %v5997 = vunpack.c.h.b16 %v5690
        %v5998 = vunpack.c.l.b16 %v5691
        %v5999 = vunpack.c.h.b16 %v5691
        %v6000 = vunpack.c.l.b16 %v5692
        %v6001 = vunpack.c.h.b16 %v5692
        %v6002 = vunpack.c.l.b16 %v5693
        %v6003 = vunpack.c.h.b16 %v5693
        %v6004 = vunpack.c.l.b16 %v5694
        %v6005 = vunpack.c.h.b16 %v5694
        %v6006 = vunpack.c.l.b16 %v5695
        %v6007 = vunpack.c.h.b16 %v5695
        %v6008 = vunpack.c.l.b16 %v5696
        %v6009 = vunpack.c.h.b16 %v5696
        %v6010 = vunpack.c.l.b16 %v5697
        %v6011 = vunpack.c.h.b16 %v5697
        %v6012 = vunpack.c.l.b16 %v5698
        %v6013 = vunpack.c.h.b16 %v5698
        %v6014 = vunpack.c.l.b16 %v5699
        %v6015 = vunpack.c.h.b16 %v5699
        %v6016 = vunpack.c.l.b16 %v5700
        %v6017 = vunpack.c.h.b16 %v5700
        %v6018 = vunpack.c.l.b16 %v5701
        %v6019 = vunpack.c.h.b16 %v5701
        %v6020 = vunpack.c.l.b16 %v5702
        %v6021 = vunpack.c.h.b16 %v5702
        %v6022 = vunpack.c.l.b16 %v5703
        %v6023 = vunpack.c.h.b16 %v5703
        %v6024 = vpack.c.b16 %v5996, %v5992
        %v6025 = vpack.c.b16 %v5997, %v5993
        %v6026 = vpack.c.b16 %v5998, %v5994
        %v6027 = vpack.c.b16 %v5999, %v5995
        %v6028 = vpack.c.b16 %v6004, %v6000
        %v6029 = vpack.c.b16 %v6005, %v6001
        %v6030 = vpack.c.b16 %v6006, %v6002
        %v6031 = vpack.c.b16 %v6007, %v6003
        %v6032 = vpack.c.b16 %v6012, %v6008
        %v6033 = vpack.c.b16 %v6013, %v6009
        %v6034 = vpack.c.b16 %v6014, %v6010
        %v6035 = vpack.c.b16 %v6015, %v6011
        %v6036 = vpack.c.b16 %v6020, %v6016
        %v6037 = vpack.c.b16 %v6021, %v6017
        %v6038 = vpack.c.b16 %v6022, %v6018
        %v6039 = vpack.c.b16 %v6023, %v6019
        %v6184 = vunpack.c.l.b16 %v5720
        %v6185 = vunpack.c.h.b16 %v5720
        %v6186 = vunpack.c.l.b16 %v5721
        %v6187 = vunpack.c.h.b16 %v5721
        %v6188 = vunpack.c.l.b16 %v5722
        %v6189 = vunpack.c.h.b16 %v5722
        %v6190 = vunpack.c.l.b16 %v5723
        %v6191 = vunpack.c.h.b16 %v5723
        %v6192 = vunpack.c.l.b16 %v5724
        %v6193 = vunpack.c.h.b16 %v5724
        %v6194 = vunpack.c.l.b16 %v5725
        %v6195 = vunpack.c.h.b16 %v5725
        %v6196 = vunpack.c.l.b16 %v5726
        %v6197 = vunpack.c.h.b16 %v5726
        %v6198 = vunpack.c.l.b16 %v5727
        %v6199 = vunpack.c.h.b16 %v5727
        %v6200 = vunpack.c.l.b16 %v5728
        %v6201 = vunpack.c.h.b16 %v5728
        %v6202 = vunpack.c.l.b16 %v5729
        %v6203 = vunpack.c.h.b16 %v5729
        %v6204 = vunpack.c.l.b16 %v5730
        %v6205 = vunpack.c.h.b16 %v5730
        %v6206 = vunpack.c.l.b16 %v5731
        %v6207 = vunpack.c.h.b16 %v5731
        %v6208 = vunpack.c.l.b16 %v5732
        %v6209 = vunpack.c.h.b16 %v5732
        %v6210 = vunpack.c.l.b16 %v5733
        %v6211 = vunpack.c.h.b16 %v5733
        %v6212 = vunpack.c.l.b16 %v5734
        %v6213 = vunpack.c.h.b16 %v5734
        %v6214 = vunpack.c.l.b16 %v5735
        %v6215 = vunpack.c.h.b16 %v5735
        %v6216 = vunpack.c.l.b16 %v5736
        %v6217 = vunpack.c.h.b16 %v5736
        %v6218 = vunpack.c.l.b16 %v5737
        %v6219 = vunpack.c.h.b16 %v5737
        %v6220 = vunpack.c.l.b16 %v5738
        %v6221 = vunpack.c.h.b16 %v5738
        %v6222 = vunpack.c.l.b16 %v5739
        %v6223 = vunpack.c.h.b16 %v5739
        %v6224 = vunpack.c.l.b16 %v5740
        %v6225 = vunpack.c.h.b16 %v5740
        %v6226 = vunpack.c.l.b16 %v5741
        %v6227 = vunpack.c.h.b16 %v5741
        %v6228 = vunpack.c.l.b16 %v5742
        %v6229 = vunpack.c.h.b16 %v5742
        %v6230 = vunpack.c.l.b16 %v5743
        %v6231 = vunpack.c.h.b16 %v5743
        %v6232 = vunpack.c.l.b16 %v5744
        %v6233 = vunpack.c.h.b16 %v5744
        %v6234 = vunpack.c.l.b16 %v5745
        %v6235 = vunpack.c.h.b16 %v5745
        %v6236 = vunpack.c.l.b16 %v5746
        %v6237 = vunpack.c.h.b16 %v5746
        %v6238 = vunpack.c.l.b16 %v5747
        %v6239 = vunpack.c.h.b16 %v5747
        %v6240 = vunpack.c.l.b16 %v5748
        %v6241 = vunpack.c.h.b16 %v5748
        %v6242 = vunpack.c.l.b16 %v5749
        %v6243 = vunpack.c.h.b16 %v5749
        %v6244 = vunpack.c.l.b16 %v5750
        %v6245 = vunpack.c.h.b16 %v5750
        %v6246 = vunpack.c.l.b16 %v5751
        %v6247 = vunpack.c.h.b16 %v5751
        %v6248 = vunpack.c.l.b16 %v5752
        %v6249 = vunpack.c.h.b16 %v5752
        %v6250 = vunpack.c.l.b16 %v5753
        %v6251 = vunpack.c.h.b16 %v5753
        %v6252 = vunpack.c.l.b16 %v5754
        %v6253 = vunpack.c.h.b16 %v5754
        %v6254 = vunpack.c.l.b16 %v5755
        %v6255 = vunpack.c.h.b16 %v5755
        %v6256 = vunpack.c.l.b16 %v5756
        %v6257 = vunpack.c.h.b16 %v5756
        %v6258 = vunpack.c.l.b16 %v5757
        %v6259 = vunpack.c.h.b16 %v5757
        %v6260 = vunpack.c.l.b16 %v5758
        %v6261 = vunpack.c.h.b16 %v5758
        %v6262 = vunpack.c.l.b16 %v5759
        %v6263 = vunpack.c.h.b16 %v5759
        %v6264 = vunpack.c.l.b16 %v5760
        %v6265 = vunpack.c.h.b16 %v5760
        %v6266 = vunpack.c.l.b16 %v5761
        %v6267 = vunpack.c.h.b16 %v5761
        %v6268 = vunpack.c.l.b16 %v5762
        %v6269 = vunpack.c.h.b16 %v5762
        %v6270 = vunpack.c.l.b16 %v5763
        %v6271 = vunpack.c.h.b16 %v5763
        %v6272 = vunpack.c.l.b16 %v5764
        %v6273 = vunpack.c.h.b16 %v5764
        %v6274 = vunpack.c.l.b16 %v5765
        %v6275 = vunpack.c.h.b16 %v5765
        %v6276 = vunpack.c.l.b16 %v5766
        %v6277 = vunpack.c.h.b16 %v5766
        %v6278 = vunpack.c.l.b16 %v5767
        %v6279 = vunpack.c.h.b16 %v5767
        %v6280 = vunpack.c.l.b16 %v5768
        %v6281 = vunpack.c.h.b16 %v5768
        %v6282 = vunpack.c.l.b16 %v5769
        %v6283 = vunpack.c.h.b16 %v5769
        %v6284 = vunpack.c.l.b16 %v5770
        %v6285 = vunpack.c.h.b16 %v5770
        %v6286 = vunpack.c.l.b16 %v5771
        %v6287 = vunpack.c.h.b16 %v5771
        %v6288 = vunpack.c.l.b16 %v5772
        %v6289 = vunpack.c.h.b16 %v5772
        %v6290 = vunpack.c.l.b16 %v5773
        %v6291 = vunpack.c.h.b16 %v5773
        %v6292 = vunpack.c.l.b16 %v5774
        %v6293 = vunpack.c.h.b16 %v5774
        %v6294 = vunpack.c.l.b16 %v5775
        %v6295 = vunpack.c.h.b16 %v5775
        %v6296 = vunpack.c.l.b16 %v5776
        %v6297 = vunpack.c.h.b16 %v5776
        %v6298 = vunpack.c.l.b16 %v5777
        %v6299 = vunpack.c.h.b16 %v5777
        %v6300 = vunpack.c.l.b16 %v5778
        %v6301 = vunpack.c.h.b16 %v5778
        %v6302 = vunpack.c.l.b16 %v5779
        %v6303 = vunpack.c.h.b16 %v5779
        %v6304 = vunpack.c.l.b16 %v5780
        %v6305 = vunpack.c.h.b16 %v5780
        %v6306 = vunpack.c.l.b16 %v5781
        %v6307 = vunpack.c.h.b16 %v5781
        %v6308 = vunpack.c.l.b16 %v5782
        %v6309 = vunpack.c.h.b16 %v5782
        %v6310 = vunpack.c.l.b16 %v5783
        %v6311 = vunpack.c.h.b16 %v5783
        %v6312 = vunpack.c.l.b16 %v5784
        %v6313 = vunpack.c.h.b16 %v5784
        %v6314 = vunpack.c.l.b16 %v5785
        %v6315 = vunpack.c.h.b16 %v5785
        %v6316 = vunpack.c.l.b16 %v5786
        %v6317 = vunpack.c.h.b16 %v5786
        %v6318 = vunpack.c.l.b16 %v5787
        %v6319 = vunpack.c.h.b16 %v5787
        %v6320 = vunpack.c.l.b16 %v5788
        %v6321 = vunpack.c.h.b16 %v5788
        %v6322 = vunpack.c.l.b16 %v5789
        %v6323 = vunpack.c.h.b16 %v5789
        %v6324 = vunpack.c.l.b16 %v5790
        %v6325 = vunpack.c.h.b16 %v5790
        %v6326 = vunpack.c.l.b16 %v5791
        %v6327 = vunpack.c.h.b16 %v5791
        %v6328 = vunpack.c.l.b16 %v5792
        %v6329 = vunpack.c.h.b16 %v5792
        %v6330 = vunpack.c.l.b16 %v5793
        %v6331 = vunpack.c.h.b16 %v5793
        %v6332 = vunpack.c.l.b16 %v5794
        %v6333 = vunpack.c.h.b16 %v5794
        %v6334 = vunpack.c.l.b16 %v5795
        %v6335 = vunpack.c.h.b16 %v5795
        %v6336 = vunpack.c.l.b16 %v5796
        %v6337 = vunpack.c.h.b16 %v5796
        %v6338 = vunpack.c.l.b16 %v5797
        %v6339 = vunpack.c.h.b16 %v5797
        %v6340 = vunpack.c.l.b16 %v5798
        %v6341 = vunpack.c.h.b16 %v5798
        %v6342 = vunpack.c.l.b16 %v5799
        %v6343 = vunpack.c.h.b16 %v5799
        %v6344 = vunpack.c.l.b16 %v5800
        %v6345 = vunpack.c.h.b16 %v5800
        %v6346 = vunpack.c.l.b16 %v5801
        %v6347 = vunpack.c.h.b16 %v5801
        %v6348 = vunpack.c.l.b16 %v5802
        %v6349 = vunpack.c.h.b16 %v5802
        %v6350 = vunpack.c.l.b16 %v5803
        %v6351 = vunpack.c.h.b16 %v5803
        %v6352 = vunpack.c.l.b16 %v5804
        %v6353 = vunpack.c.h.b16 %v5804
        %v6354 = vunpack.c.l.b16 %v5805
        %v6355 = vunpack.c.h.b16 %v5805
        %v6356 = vunpack.c.l.b16 %v5806
        %v6357 = vunpack.c.h.b16 %v5806
        %v6358 = vunpack.c.l.b16 %v5807
        %v6359 = vunpack.c.h.b16 %v5807
        %v6360 = vunpack.c.l.b16 %v5808
        %v6361 = vunpack.c.h.b16 %v5808
        %v6362 = vunpack.c.l.b16 %v5809
        %v6363 = vunpack.c.h.b16 %v5809
        %v6364 = vunpack.c.l.b16 %v5810
        %v6365 = vunpack.c.h.b16 %v5810
        %v6366 = vunpack.c.l.b16 %v5811
        %v6367 = vunpack.c.h.b16 %v5811
        %v6368 = vunpack.c.l.b16 %v5812
        %v6369 = vunpack.c.h.b16 %v5812
        %v6370 = vunpack.c.l.b16 %v5813
        %v6371 = vunpack.c.h.b16 %v5813
        %v6372 = vunpack.c.l.b16 %v5814
        %v6373 = vunpack.c.h.b16 %v5814
        %v6374 = vunpack.c.l.b16 %v5815
        %v6375 = vunpack.c.h.b16 %v5815
        %v6376 = vunpack.c.l.b16 %v5816
        %v6377 = vunpack.c.h.b16 %v5816
        %v6378 = vunpack.c.l.b16 %v5817
        %v6379 = vunpack.c.h.b16 %v5817
        %v6380 = vunpack.c.l.b16 %v5818
        %v6381 = vunpack.c.h.b16 %v5818
        %v6382 = vunpack.c.l.b16 %v5819
        %v6383 = vunpack.c.h.b16 %v5819
        %v6384 = vunpack.c.l.b16 %v5820
        %v6385 = vunpack.c.h.b16 %v5820
        %v6386 = vunpack.c.l.b16 %v5821
        %v6387 = vunpack.c.h.b16 %v5821
        %v6388 = vunpack.c.l.b16 %v5822
        %v6389 = vunpack.c.h.b16 %v5822
        %v6390 = vunpack.c.l.b16 %v5823
        %v6391 = vunpack.c.h.b16 %v5823
        %v6392 = vunpack.c.l.b16 %v5824
        %v6393 = vunpack.c.h.b16 %v5824
        %v6394 = vunpack.c.l.b16 %v5825
        %v6395 = vunpack.c.h.b16 %v5825
        %v6396 = vunpack.c.l.b16 %v5826
        %v6397 = vunpack.c.h.b16 %v5826
        %v6398 = vunpack.c.l.b16 %v5827
        %v6399 = vunpack.c.h.b16 %v5827
        %v6400 = vunpack.c.l.b16 %v5828
        %v6401 = vunpack.c.h.b16 %v5828
        %v6402 = vunpack.c.l.b16 %v5829
        %v6403 = vunpack.c.h.b16 %v5829
        %v6404 = vunpack.c.l.b16 %v5830
        %v6405 = vunpack.c.h.b16 %v5830
        %v6406 = vunpack.c.l.b16 %v5831
        %v6407 = vunpack.c.h.b16 %v5831
        %v6408 = vunpack.c.l.b16 %v5832
        %v6409 = vunpack.c.h.b16 %v5832
        %v6410 = vunpack.c.l.b16 %v5833
        %v6411 = vunpack.c.h.b16 %v5833
        %v6412 = vunpack.c.l.b16 %v5834
        %v6413 = vunpack.c.h.b16 %v5834
        %v6414 = vunpack.c.l.b16 %v5835
        %v6415 = vunpack.c.h.b16 %v5835
        %v6416 = vunpack.c.l.b16 %v5836
        %v6417 = vunpack.c.h.b16 %v5836
        %v6418 = vunpack.c.l.b16 %v5837
        %v6419 = vunpack.c.h.b16 %v5837
        %v6420 = vunpack.c.l.b16 %v5838
        %v6421 = vunpack.c.h.b16 %v5838
        %v6422 = vunpack.c.l.b16 %v5839
        %v6423 = vunpack.c.h.b16 %v5839
        %v6424 = vunpack.c.l.b16 %v5840
        %v6425 = vunpack.c.h.b16 %v5840
        %v6426 = vunpack.c.l.b16 %v5841
        %v6427 = vunpack.c.h.b16 %v5841
        %v6428 = vunpack.c.l.b16 %v5842
        %v6429 = vunpack.c.h.b16 %v5842
        %v6430 = vunpack.c.l.b16 %v5843
        %v6431 = vunpack.c.h.b16 %v5843
        %v6432 = vunpack.c.l.b16 %v5844
        %v6433 = vunpack.c.h.b16 %v5844
        %v6434 = vunpack.c.l.b16 %v5845
        %v6435 = vunpack.c.h.b16 %v5845
        %v6436 = vunpack.c.l.b16 %v5846
        %v6437 = vunpack.c.h.b16 %v5846
        %v6438 = vunpack.c.l.b16 %v5847
        %v6439 = vunpack.c.h.b16 %v5847
        %v6440 = vpack.c.b16 %v6188, %v6184
        %v6441 = vpack.c.b16 %v6189, %v6185
        %v6442 = vpack.c.b16 %v6190, %v6186
        %v6443 = vpack.c.b16 %v6191, %v6187
        %v6444 = vpack.c.b16 %v6196, %v6192
        %v6445 = vpack.c.b16 %v6197, %v6193
        %v6446 = vpack.c.b16 %v6198, %v6194
        %v6447 = vpack.c.b16 %v6199, %v6195
        %v6448 = vpack.c.b16 %v6204, %v6200
        %v6449 = vpack.c.b16 %v6205, %v6201
        %v6450 = vpack.c.b16 %v6206, %v6202
        %v6451 = vpack.c.b16 %v6207, %v6203
        %v6452 = vpack.c.b16 %v6212, %v6208
        %v6453 = vpack.c.b16 %v6213, %v6209
        %v6454 = vpack.c.b16 %v6214, %v6210
        %v6455 = vpack.c.b16 %v6215, %v6211
        %v6456 = vpack.c.b16 %v6220, %v6216
        %v6457 = vpack.c.b16 %v6221, %v6217
        %v6458 = vpack.c.b16 %v6222, %v6218
        %v6459 = vpack.c.b16 %v6223, %v6219
        %v6460 = vpack.c.b16 %v6228, %v6224
        %v6461 = vpack.c.b16 %v6229, %v6225
        %v6462 = vpack.c.b16 %v6230, %v6226
        %v6463 = vpack.c.b16 %v6231, %v6227
        %v6464 = vpack.c.b16 %v6236, %v6232
        %v6465 = vpack.c.b16 %v6237, %v6233
        %v6466 = vpack.c.b16 %v6238, %v6234
        %v6467 = vpack.c.b16 %v6239, %v6235
        %v6468 = vpack.c.b16 %v6244, %v6240
        %v6469 = vpack.c.b16 %v6245, %v6241
        %v6470 = vpack.c.b16 %v6246, %v6242
        %v6471 = vpack.c.b16 %v6247, %v6243
        %v6472 = vpack.c.b16 %v6252, %v6248
        %v6473 = vpack.c.b16 %v6253, %v6249
        %v6474 = vpack.c.b16 %v6254, %v6250
        %v6475 = vpack.c.b16 %v6255, %v6251
        %v6476 = vpack.c.b16 %v6260, %v6256
        %v6477 = vpack.c.b16 %v6261, %v6257
        %v6478 = vpack.c.b16 %v6262, %v6258
        %v6479 = vpack.c.b16 %v6263, %v6259
        %v6480 = vpack.c.b16 %v6268, %v6264
        %v6481 = vpack.c.b16 %v6269, %v6265
        %v6482 = vpack.c.b16 %v6270, %v6266
        %v6483 = vpack.c.b16 %v6271, %v6267
        %v6484 = vpack.c.b16 %v6276, %v6272
        %v6485 = vpack.c.b16 %v6277, %v6273
        %v6486 = vpack.c.b16 %v6278, %v6274
        %v6487 = vpack.c.b16 %v6279, %v6275
        %v6488 = vpack.c.b16 %v6284, %v6280
        %v6489 = vpack.c.b16 %v6285, %v6281
        %v6490 = vpack.c.b16 %v6286, %v6282
        %v6491 = vpack.c.b16 %v6287, %v6283
        %v6492 = vpack.c.b16 %v6292, %v6288
        %v6493 = vpack.c.b16 %v6293, %v6289
        %v6494 = vpack.c.b16 %v6294, %v6290
        %v6495 = vpack.c.b16 %v6295, %v6291
        %v6496 = vpack.c.b16 %v6300, %v6296
        %v6497 = vpack.c.b16 %v6301, %v6297
        %v6498 = vpack.c.b16 %v6302, %v6298
        %v6499 = vpack.c.b16 %v6303, %v6299
        %v6500 = vpack.c.b16 %v6308, %v6304
        %v6501 = vpack.c.b16 %v6309, %v6305
        %v6502 = vpack.c.b16 %v6310, %v6306
        %v6503 = vpack.c.b16 %v6311, %v6307
        %v6504 = vpack.c.b16 %v6316, %v6312
        %v6505 = vpack.c.b16 %v6317, %v6313
        %v6506 = vpack.c.b16 %v6318, %v6314
        %v6507 = vpack.c.b16 %v6319, %v6315
        %v6508 = vpack.c.b16 %v6324, %v6320
        %v6509 = vpack.c.b16 %v6325, %v6321
        %v6510 = vpack.c.b16 %v6326, %v6322
        %v6511 = vpack.c.b16 %v6327, %v6323
        %v6512 = vpack.c.b16 %v6332, %v6328
        %v6513 = vpack.c.b16 %v6333, %v6329
        %v6514 = vpack.c.b16 %v6334, %v6330
        %v6515 = vpack.c.b16 %v6335, %v6331
        %v6516 = vpack.c.b16 %v6340, %v6336
        %v6517 = vpack.c.b16 %v6341, %v6337
        %v6518 = vpack.c.b16 %v6342, %v6338
        %v6519 = vpack.c.b16 %v6343, %v6339
        %v6520 = vpack.c.b16 %v6348, %v6344
        %v6521 = vpack.c.b16 %v6349, %v6345
        %v6522 = vpack.c.b16 %v6350, %v6346
        %v6523 = vpack.c.b16 %v6351, %v6347
        %v6524 = vpack.c.b16 %v6356, %v6352
        %v6525 = vpack.c.b16 %v6357, %v6353
        %v6526 = vpack.c.b16 %v6358, %v6354
        %v6527 = vpack.c.b16 %v6359, %v6355
        %v6528 = vpack.c.b16 %v6364, %v6360
        %v6529 = vpack.c.b16 %v6365, %v6361
        %v6530 = vpack.c.b16 %v6366, %v6362
        %v6531 = vpack.c.b16 %v6367, %v6363
        %v6532 = vpack.c.b16 %v6372, %v6368
        %v6533 = vpack.c.b16 %v6373, %v6369
        %v6534 = vpack.c.b16 %v6374, %v6370
        %v6535 = vpack.c.b16 %v6375, %v6371
        %v6536 = vpack.c.b16 %v6380, %v6376
        %v6537 = vpack.c.b16 %v6381, %v6377
        %v6538 = vpack.c.b16 %v6382, %v6378
        %v6539 = vpack.c.b16 %v6383, %v6379
        %v6540 = vpack.c.b16 %v6388, %v6384
        %v6541 = vpack.c.b16 %v6389, %v6385
        %v6542 = vpack.c.b16 %v6390, %v6386
        %v6543 = vpack.c.b16 %v6391, %v6387
        %v6544 = vpack.c.b16 %v6396, %v6392
        %v6545 = vpack.c.b16 %v6397, %v6393
        %v6546 = vpack.c.b16 %v6398, %v6394
        %v6547 = vpack.c.b16 %v6399, %v6395
        %v6548 = vpack.c.b16 %v6404, %v6400
        %v6549 = vpack.c.b16 %v6405, %v6401
        %v6550 = vpack.c.b16 %v6406, %v6402
        %v6551 = vpack.c.b16 %v6407, %v6403
        %v6552 = vpack.c.b16 %v6412, %v6408
        %v6553 = vpack.c.b16 %v6413, %v6409
        %v6554 = vpack.c.b16 %v6414, %v6410
        %v6555 = vpack.c.b16 %v6415, %v6411
        %v6556 = vpack.c.b16 %v6420, %v6416
        %v6557 = vpack.c.b16 %v6421, %v6417
        %v6558 = vpack.c.b16 %v6422, %v6418
        %v6559 = vpack.c.b16 %v6423, %v6419
        %v6560 = vpack.c.b16 %v6428, %v6424
        %v6561 = vpack.c.b16 %v6429, %v6425
        %v6562 = vpack.c.b16 %v6430, %v6426
        %v6563 = vpack.c.b16 %v6431, %v6427
        %v6564 = vpack.c.b16 %v6436, %v6432
        %v6565 = vpack.c.b16 %v6437, %v6433
        %v6566 = vpack.c.b16 %v6438, %v6434
        %v6567 = vpack.c.b16 %v6439, %v6435
        %6696 = vmatpush.bf16.msra.mxu0 %v6468
        %6697 = vmatpush.bf16.msra.mxu0 %v6464
        %6698 = vmatpush.bf16.msra.mxu0 %v6460
        %6699 = vmatpush.bf16.msra.mxu0 %v6456
        %6700 = vmatpush.bf16.msra.mxu0 %v6452
        %6701 = vmatpush.bf16.msra.mxu0 %v6448
        %6702 = vmatpush.bf16.msra.mxu0 %v6444
        %6703 = vmatpush.bf16.msra.mxu0 %v6440
        %6704 = vmatmul.bf16.gmra.mxu0 %v6024
        %v6705 = vpop.f32.mrf.mxu0
        %v6706 = vadd.f32 0.0, %v6705
        %v6707 = vpop.f32.mrf.mxu0
        %v6708 = vadd.f32 0.0, %v6707
        %6709 = vmatmul.bf16.gmra.mxu0 %v6028
        %v6710 = vpop.f32.mrf.mxu0
        %v6711 = vadd.f32 0.0, %v6710
        %v6712 = vpop.f32.mrf.mxu0
        %v6713 = vadd.f32 0.0, %v6712
        %6714 = vmatmul.bf16.gmra.mxu0 %v6032
        %v6715 = vpop.f32.mrf.mxu0
        %v6716 = vadd.f32 0.0, %v6715
        %v6717 = vpop.f32.mrf.mxu0
        %v6718 = vadd.f32 0.0, %v6717
        %6719 = vmatmul.bf16.gmra.mxu0 %v6036
        %v6720 = vpop.f32.mrf.mxu0
        %v6721 = vadd.f32 0.0, %v6720
        %v6722 = vpop.f32.mrf.mxu0
        %v6723 = vadd.f32 0.0, %v6722
        %6724 = vdwg.mxu0
        %6725 = vmatpush.bf16.msra.mxu0 %v6500
        %6726 = vmatpush.bf16.msra.mxu0 %v6496
        %6727 = vmatpush.bf16.msra.mxu0 %v6492
        %6728 = vmatpush.bf16.msra.mxu0 %v6488
        %6729 = vmatpush.bf16.msra.mxu0 %v6484
        %6730 = vmatpush.bf16.msra.mxu0 %v6480
        %6731 = vmatpush.bf16.msra.mxu0 %v6476
        %6732 = vmatpush.bf16.msra.mxu0 %v6472
        %6733 = vmatmul.bf16.gmra.mxu0 %v6025
        %v6734 = vpop.f32.mrf.mxu0
        %v6735 = vadd.f32 %v6706, %v6734
        %v6736 = vpop.f32.mrf.mxu0
        %v6737 = vadd.f32 %v6708, %v6736
        %6738 = vmatmul.bf16.gmra.mxu0 %v6029
        %v6739 = vpop.f32.mrf.mxu0
        %v6740 = vadd.f32 %v6711, %v6739
        %v6741 = vpop.f32.mrf.mxu0
        %v6742 = vadd.f32 %v6713, %v6741
        %6743 = vmatmul.bf16.gmra.mxu0 %v6033
        %v6744 = vpop.f32.mrf.mxu0
        %v6745 = vadd.f32 %v6716, %v6744
        %v6746 = vpop.f32.mrf.mxu0
        %v6747 = vadd.f32 %v6718, %v6746
        %6748 = vmatmul.bf16.gmra.mxu0 %v6037
        %v6749 = vpop.f32.mrf.mxu0
        %v6750 = vadd.f32 %v6721, %v6749
        %v6751 = vpop.f32.mrf.mxu0
        %v6752 = vadd.f32 %v6723, %v6751
        %6753 = vdwg.mxu0
        %6754 = vmatpush.bf16.msra.mxu0 %v6532
        %6755 = vmatpush.bf16.msra.mxu0 %v6528
        %6756 = vmatpush.bf16.msra.mxu0 %v6524
        %6757 = vmatpush.bf16.msra.mxu0 %v6520
        %6758 = vmatpush.bf16.msra.mxu0 %v6516
        %6759 = vmatpush.bf16.msra.mxu0 %v6512
        %6760 = vmatpush.bf16.msra.mxu0 %v6508
        %6761 = vmatpush.bf16.msra.mxu0 %v6504
        %6762 = vmatmul.bf16.gmra.mxu0 %v6026
        %v6763 = vpop.f32.mrf.mxu0
        %v6764 = vadd.f32 %v6735, %v6763
        %v6765 = vpop.f32.mrf.mxu0
        %v6766 = vadd.f32 %v6737, %v6765
        %6767 = vmatmul.bf16.gmra.mxu0 %v6030
        %v6768 = vpop.f32.mrf.mxu0
        %v6769 = vadd.f32 %v6740, %v6768
        %v6770 = vpop.f32.mrf.mxu0
        %v6771 = vadd.f32 %v6742, %v6770
        %6772 = vmatmul.bf16.gmra.mxu0 %v6034
        %v6773 = vpop.f32.mrf.mxu0
        %v6774 = vadd.f32 %v6745, %v6773
        %v6775 = vpop.f32.mrf.mxu0
        %v6776 = vadd.f32 %v6747, %v6775
        %6777 = vmatmul.bf16.gmra.mxu0 %v6038
        %v6778 = vpop.f32.mrf.mxu0
        %v6779 = vadd.f32 %v6750, %v6778
        %v6780 = vpop.f32.mrf.mxu0
        %v6781 = vadd.f32 %v6752, %v6780
        %6782 = vdwg.mxu0
        %6783 = vmatpush.bf16.msra.mxu0 %v6564
        %6784 = vmatpush.bf16.msra.mxu0 %v6560
        %6785 = vmatpush.bf16.msra.mxu0 %v6556
        %6786 = vmatpush.bf16.msra.mxu0 %v6552
        %6787 = vmatpush.bf16.msra.mxu0 %v6548
        %6788 = vmatpush.bf16.msra.mxu0 %v6544
        %6789 = vmatpush.bf16.msra.mxu0 %v6540
        %6790 = vmatpush.bf16.msra.mxu0 %v6536
        %6791 = vmatmul.bf16.gmra.mxu0 %v6027
        %v6792 = vpop.f32.mrf.mxu0
        %v6793 = vadd.f32 %v6764, %v6792
        %v6794 = vpop.f32.mrf.mxu0
        %v6795 = vadd.f32 %v6766, %v6794
        %6796 = vmatmul.bf16.gmra.mxu0 %v6031
        %v6797 = vpop.f32.mrf.mxu0
        %v6798 = vadd.f32 %v6769, %v6797
        %v6799 = vpop.f32.mrf.mxu0
        %v6800 = vadd.f32 %v6771, %v6799
        %6801 = vmatmul.bf16.gmra.mxu0 %v6035
        %v6802 = vpop.f32.mrf.mxu0
        %v6803 = vadd.f32 %v6774, %v6802
        %v6804 = vpop.f32.mrf.mxu0
        %v6805 = vadd.f32 %v6776, %v6804
        %6806 = vmatmul.bf16.gmra.mxu0 %v6039
        %v6807 = vpop.f32.mrf.mxu0
        %v6808 = vadd.f32 %v6779, %v6807
        %v6809 = vpop.f32.mrf.mxu0
        %v6810 = vadd.f32 %v6781, %v6809
        %6811 = vdwg.mxu0
        %6812 = vmatpush.bf16.msra.mxu0 %v6469
        %6813 = vmatpush.bf16.msra.mxu0 %v6465
        %6814 = vmatpush.bf16.msra.mxu0 %v6461
        %6815 = vmatpush.bf16.msra.mxu0 %v6457
        %6816 = vmatpush.bf16.msra.mxu0 %v6453
        %6817 = vmatpush.bf16.msra.mxu0 %v6449
        %6818 = vmatpush.bf16.msra.mxu0 %v6445
        %6819 = vmatpush.bf16.msra.mxu0 %v6441
        %6820 = vmatmul.bf16.gmra.mxu0 %v6024
        %v6821 = vpop.f32.mrf.mxu0
        %v6822 = vadd.f32 0.0, %v6821
        %v6823 = vpop.f32.mrf.mxu0
        %v6824 = vadd.f32 0.0, %v6823
        %6825 = vmatmul.bf16.gmra.mxu0 %v6028
        %v6826 = vpop.f32.mrf.mxu0
        %v6827 = vadd.f32 0.0, %v6826
        %v6828 = vpop.f32.mrf.mxu0
        %v6829 = vadd.f32 0.0, %v6828
        %6830 = vmatmul.bf16.gmra.mxu0 %v6032
        %v6831 = vpop.f32.mrf.mxu0
        %v6832 = vadd.f32 0.0, %v6831
        %v6833 = vpop.f32.mrf.mxu0
        %v6834 = vadd.f32 0.0, %v6833
        %6835 = vmatmul.bf16.gmra.mxu0 %v6036
        %v6836 = vpop.f32.mrf.mxu0
        %v6837 = vadd.f32 0.0, %v6836
        %v6838 = vpop.f32.mrf.mxu0
        %v6839 = vadd.f32 0.0, %v6838
        %6840 = vdwg.mxu0
        %6841 = vmatpush.bf16.msra.mxu0 %v6501
        %6842 = vmatpush.bf16.msra.mxu0 %v6497
        %6843 = vmatpush.bf16.msra.mxu0 %v6493
        %6844 = vmatpush.bf16.msra.mxu0 %v6489
        %6845 = vmatpush.bf16.msra.mxu0 %v6485
        %6846 = vmatpush.bf16.msra.mxu0 %v6481
        %6847 = vmatpush.bf16.msra.mxu0 %v6477
        %6848 = vmatpush.bf16.msra.mxu0 %v6473
        %6849 = vmatmul.bf16.gmra.mxu0 %v6025
        %v6850 = vpop.f32.mrf.mxu0
        %v6851 = vadd.f32 %v6822, %v6850
        %v6852 = vpop.f32.mrf.mxu0
        %v6853 = vadd.f32 %v6824, %v6852
        %6854 = vmatmul.bf16.gmra.mxu0 %v6029
        %v6855 = vpop.f32.mrf.mxu0
        %v6856 = vadd.f32 %v6827, %v6855
        %v6857 = vpop.f32.mrf.mxu0
        %v6858 = vadd.f32 %v6829, %v6857
        %6859 = vmatmul.bf16.gmra.mxu0 %v6033
        %v6860 = vpop.f32.mrf.mxu0
        %v6861 = vadd.f32 %v6832, %v6860
        %v6862 = vpop.f32.mrf.mxu0
        %v6863 = vadd.f32 %v6834, %v6862
        %6864 = vmatmul.bf16.gmra.mxu0 %v6037
        %v6865 = vpop.f32.mrf.mxu0
        %v6866 = vadd.f32 %v6837, %v6865
        %v6867 = vpop.f32.mrf.mxu0
        %v6868 = vadd.f32 %v6839, %v6867
        %6869 = vdwg.mxu0
        %6870 = vmatpush.bf16.msra.mxu0 %v6533
        %6871 = vmatpush.bf16.msra.mxu0 %v6529
        %6872 = vmatpush.bf16.msra.mxu0 %v6525
        %6873 = vmatpush.bf16.msra.mxu0 %v6521
        %6874 = vmatpush.bf16.msra.mxu0 %v6517
        %6875 = vmatpush.bf16.msra.mxu0 %v6513
        %6876 = vmatpush.bf16.msra.mxu0 %v6509
        %6877 = vmatpush.bf16.msra.mxu0 %v6505
        %6878 = vmatmul.bf16.gmra.mxu0 %v6026
        %v6879 = vpop.f32.mrf.mxu0
        %v6880 = vadd.f32 %v6851, %v6879
        %v6881 = vpop.f32.mrf.mxu0
        %v6882 = vadd.f32 %v6853, %v6881
        %6883 = vmatmul.bf16.gmra.mxu0 %v6030
        %v6884 = vpop.f32.mrf.mxu0
        %v6885 = vadd.f32 %v6856, %v6884
        %v6886 = vpop.f32.mrf.mxu0
        %v6887 = vadd.f32 %v6858, %v6886
        %6888 = vmatmul.bf16.gmra.mxu0 %v6034
        %v6889 = vpop.f32.mrf.mxu0
        %v6890 = vadd.f32 %v6861, %v6889
        %v6891 = vpop.f32.mrf.mxu0
        %v6892 = vadd.f32 %v6863, %v6891
        %6893 = vmatmul.bf16.gmra.mxu0 %v6038
        %v6894 = vpop.f32.mrf.mxu0
        %v6895 = vadd.f32 %v6866, %v6894
        %v6896 = vpop.f32.mrf.mxu0
        %v6897 = vadd.f32 %v6868, %v6896
        %6898 = vdwg.mxu0
        %6899 = vmatpush.bf16.msra.mxu0 %v6565
        %6900 = vmatpush.bf16.msra.mxu0 %v6561
        %6901 = vmatpush.bf16.msra.mxu0 %v6557
        %6902 = vmatpush.bf16.msra.mxu0 %v6553
        %6903 = vmatpush.bf16.msra.mxu0 %v6549
        %6904 = vmatpush.bf16.msra.mxu0 %v6545
        %6905 = vmatpush.bf16.msra.mxu0 %v6541
        %6906 = vmatpush.bf16.msra.mxu0 %v6537
        %6907 = vmatmul.bf16.gmra.mxu0 %v6027
        %v6908 = vpop.f32.mrf.mxu0
        %v6909 = vadd.f32 %v6880, %v6908
        %v6910 = vpop.f32.mrf.mxu0
        %v6911 = vadd.f32 %v6882, %v6910
        %6912 = vmatmul.bf16.gmra.mxu0 %v6031
        %v6913 = vpop.f32.mrf.mxu0
        %v6914 = vadd.f32 %v6885, %v6913
        %v6915 = vpop.f32.mrf.mxu0
        %v6916 = vadd.f32 %v6887, %v6915
        %6917 = vmatmul.bf16.gmra.mxu0 %v6035
        %v6918 = vpop.f32.mrf.mxu0
        %v6919 = vadd.f32 %v6890, %v6918
        %v6920 = vpop.f32.mrf.mxu0
        %v6921 = vadd.f32 %v6892, %v6920
        %6922 = vmatmul.bf16.gmra.mxu0 %v6039
        %v6923 = vpop.f32.mrf.mxu0
        %v6924 = vadd.f32 %v6895, %v6923
        %v6925 = vpop.f32.mrf.mxu0
        %v6926 = vadd.f32 %v6897, %v6925
        %6927 = vdwg.mxu0
        %6928 = vmatpush.bf16.msra.mxu0 %v6470
        %6929 = vmatpush.bf16.msra.mxu0 %v6466
        %6930 = vmatpush.bf16.msra.mxu0 %v6462
        %6931 = vmatpush.bf16.msra.mxu0 %v6458
        %6932 = vmatpush.bf16.msra.mxu0 %v6454
        %6933 = vmatpush.bf16.msra.mxu0 %v6450
        %6934 = vmatpush.bf16.msra.mxu0 %v6446
        %6935 = vmatpush.bf16.msra.mxu0 %v6442
        %6936 = vmatmul.bf16.gmra.mxu0 %v6024
        %v6937 = vpop.f32.mrf.mxu0
        %v6938 = vadd.f32 0.0, %v6937
        %v6939 = vpop.f32.mrf.mxu0
        %v6940 = vadd.f32 0.0, %v6939
        %6941 = vmatmul.bf16.gmra.mxu0 %v6028
        %v6942 = vpop.f32.mrf.mxu0
        %v6943 = vadd.f32 0.0, %v6942
        %v6944 = vpop.f32.mrf.mxu0
        %v6945 = vadd.f32 0.0, %v6944
        %6946 = vmatmul.bf16.gmra.mxu0 %v6032
        %v6947 = vpop.f32.mrf.mxu0
        %v6948 = vadd.f32 0.0, %v6947
        %v6949 = vpop.f32.mrf.mxu0
        %v6950 = vadd.f32 0.0, %v6949
        %6951 = vmatmul.bf16.gmra.mxu0 %v6036
        %v6952 = vpop.f32.mrf.mxu0
        %v6953 = vadd.f32 0.0, %v6952
        %v6954 = vpop.f32.mrf.mxu0
        %v6955 = vadd.f32 0.0, %v6954
        %6956 = vdwg.mxu0
        %6957 = vmatpush.bf16.msra.mxu0 %v6502
        %6958 = vmatpush.bf16.msra.mxu0 %v6498
        %6959 = vmatpush.bf16.msra.mxu0 %v6494
        %6960 = vmatpush.bf16.msra.mxu0 %v6490
        %6961 = vmatpush.bf16.msra.mxu0 %v6486
        %6962 = vmatpush.bf16.msra.mxu0 %v6482
        %6963 = vmatpush.bf16.msra.mxu0 %v6478
        %6964 = vmatpush.bf16.msra.mxu0 %v6474
        %6965 = vmatmul.bf16.gmra.mxu0 %v6025
        %v6966 = vpop.f32.mrf.mxu0
        %v6967 = vadd.f32 %v6938, %v6966
        %v6968 = vpop.f32.mrf.mxu0
        %v6969 = vadd.f32 %v6940, %v6968
        %6970 = vmatmul.bf16.gmra.mxu0 %v6029
        %v6971 = vpop.f32.mrf.mxu0
        %v6972 = vadd.f32 %v6943, %v6971
        %v6973 = vpop.f32.mrf.mxu0
        %v6974 = vadd.f32 %v6945, %v6973
        %6975 = vmatmul.bf16.gmra.mxu0 %v6033
        %v6976 = vpop.f32.mrf.mxu0
        %v6977 = vadd.f32 %v6948, %v6976
        %v6978 = vpop.f32.mrf.mxu0
        %v6979 = vadd.f32 %v6950, %v6978
        %6980 = vmatmul.bf16.gmra.mxu0 %v6037
        %v6981 = vpop.f32.mrf.mxu0
        %v6982 = vadd.f32 %v6953, %v6981
        %v6983 = vpop.f32.mrf.mxu0
        %v6984 = vadd.f32 %v6955, %v6983
        %6985 = vdwg.mxu0
        %6986 = vmatpush.bf16.msra.mxu0 %v6534
        %6987 = vmatpush.bf16.msra.mxu0 %v6530
        %6988 = vmatpush.bf16.msra.mxu0 %v6526
        %6989 = vmatpush.bf16.msra.mxu0 %v6522
        %6990 = vmatpush.bf16.msra.mxu0 %v6518
        %6991 = vmatpush.bf16.msra.mxu0 %v6514
        %6992 = vmatpush.bf16.msra.mxu0 %v6510
        %6993 = vmatpush.bf16.msra.mxu0 %v6506
        %6994 = vmatmul.bf16.gmra.mxu0 %v6026
        %v6995 = vpop.f32.mrf.mxu0
        %v6996 = vadd.f32 %v6967, %v6995
        %v6997 = vpop.f32.mrf.mxu0
        %v6998 = vadd.f32 %v6969, %v6997
        %6999 = vmatmul.bf16.gmra.mxu0 %v6030
        %v7000 = vpop.f32.mrf.mxu0
        %v7001 = vadd.f32 %v6972, %v7000
        %v7002 = vpop.f32.mrf.mxu0
        %v7003 = vadd.f32 %v6974, %v7002
        %7004 = vmatmul.bf16.gmra.mxu0 %v6034
        %v7005 = vpop.f32.mrf.mxu0
        %v7006 = vadd.f32 %v6977, %v7005
        %v7007 = vpop.f32.mrf.mxu0
        %v7008 = vadd.f32 %v6979, %v7007
        %7009 = vmatmul.bf16.gmra.mxu0 %v6038
        %v7010 = vpop.f32.mrf.mxu0
        %v7011 = vadd.f32 %v6982, %v7010
        %v7012 = vpop.f32.mrf.mxu0
        %v7013 = vadd.f32 %v6984, %v7012
        %7014 = vdwg.mxu0
        %7015 = vmatpush.bf16.msra.mxu0 %v6566
        %7016 = vmatpush.bf16.msra.mxu0 %v6562
        %7017 = vmatpush.bf16.msra.mxu0 %v6558
        %7018 = vmatpush.bf16.msra.mxu0 %v6554
        %7019 = vmatpush.bf16.msra.mxu0 %v6550
        %7020 = vmatpush.bf16.msra.mxu0 %v6546
        %7021 = vmatpush.bf16.msra.mxu0 %v6542
        %7022 = vmatpush.bf16.msra.mxu0 %v6538
        %7023 = vmatmul.bf16.gmra.mxu0 %v6027
        %v7024 = vpop.f32.mrf.mxu0
        %v7025 = vadd.f32 %v6996, %v7024
        %v7026 = vpop.f32.mrf.mxu0
        %v7027 = vadd.f32 %v6998, %v7026
        %7028 = vmatmul.bf16.gmra.mxu0 %v6031
        %v7029 = vpop.f32.mrf.mxu0
        %v7030 = vadd.f32 %v7001, %v7029
        %v7031 = vpop.f32.mrf.mxu0
        %v7032 = vadd.f32 %v7003, %v7031
        %7033 = vmatmul.bf16.gmra.mxu0 %v6035
        %v7034 = vpop.f32.mrf.mxu0
        %v7035 = vadd.f32 %v7006, %v7034
        %v7036 = vpop.f32.mrf.mxu0
        %v7037 = vadd.f32 %v7008, %v7036
        %7038 = vmatmul.bf16.gmra.mxu0 %v6039
        %v7039 = vpop.f32.mrf.mxu0
        %v7040 = vadd.f32 %v7011, %v7039
        %v7041 = vpop.f32.mrf.mxu0
        %v7042 = vadd.f32 %v7013, %v7041
        %7043 = vdwg.mxu0
        %7044 = vmatpush.bf16.msra.mxu0 %v6471
        %7045 = vmatpush.bf16.msra.mxu0 %v6467
        %7046 = vmatpush.bf16.msra.mxu0 %v6463
        %7047 = vmatpush.bf16.msra.mxu0 %v6459
        %7048 = vmatpush.bf16.msra.mxu0 %v6455
        %7049 = vmatpush.bf16.msra.mxu0 %v6451
        %7050 = vmatpush.bf16.msra.mxu0 %v6447
        %7051 = vmatpush.bf16.msra.mxu0 %v6443
        %7052 = vmatmul.bf16.gmra.mxu0 %v6024
        %v7053 = vpop.f32.mrf.mxu0
        %v7054 = vadd.f32 0.0, %v7053
        %v7055 = vpop.f32.mrf.mxu0
        %v7056 = vadd.f32 0.0, %v7055
        %7057 = vmatmul.bf16.gmra.mxu0 %v6028
        %v7058 = vpop.f32.mrf.mxu0
        %v7059 = vadd.f32 0.0, %v7058
        %v7060 = vpop.f32.mrf.mxu0
        %v7061 = vadd.f32 0.0, %v7060
        %7062 = vmatmul.bf16.gmra.mxu0 %v6032
        %v7063 = vpop.f32.mrf.mxu0
        %v7064 = vadd.f32 0.0, %v7063
        %v7065 = vpop.f32.mrf.mxu0
        %v7066 = vadd.f32 0.0, %v7065
        %7067 = vmatmul.bf16.gmra.mxu0 %v6036
        %v7068 = vpop.f32.mrf.mxu0
        %v7069 = vadd.f32 0.0, %v7068
        %v7070 = vpop.f32.mrf.mxu0
        %v7071 = vadd.f32 0.0, %v7070
        %7072 = vdwg.mxu0
        %7073 = vmatpush.bf16.msra.mxu0 %v6503
        %7074 = vmatpush.bf16.msra.mxu0 %v6499
        %7075 = vmatpush.bf16.msra.mxu0 %v6495
        %7076 = vmatpush.bf16.msra.mxu0 %v6491
        %7077 = vmatpush.bf16.msra.mxu0 %v6487
        %7078 = vmatpush.bf16.msra.mxu0 %v6483
        %7079 = vmatpush.bf16.msra.mxu0 %v6479
        %7080 = vmatpush.bf16.msra.mxu0 %v6475
        %7081 = vmatmul.bf16.gmra.mxu0 %v6025
        %v7082 = vpop.f32.mrf.mxu0
        %v7083 = vadd.f32 %v7054, %v7082
        %v7084 = vpop.f32.mrf.mxu0
        %v7085 = vadd.f32 %v7056, %v7084
        %7086 = vmatmul.bf16.gmra.mxu0 %v6029
        %v7087 = vpop.f32.mrf.mxu0
        %v7088 = vadd.f32 %v7059, %v7087
        %v7089 = vpop.f32.mrf.mxu0
        %v7090 = vadd.f32 %v7061, %v7089
        %7091 = vmatmul.bf16.gmra.mxu0 %v6033
        %v7092 = vpop.f32.mrf.mxu0
        %v7093 = vadd.f32 %v7064, %v7092
        %v7094 = vpop.f32.mrf.mxu0
        %v7095 = vadd.f32 %v7066, %v7094
        %7096 = vmatmul.bf16.gmra.mxu0 %v6037
        %v7097 = vpop.f32.mrf.mxu0
        %v7098 = vadd.f32 %v7069, %v7097
        %v7099 = vpop.f32.mrf.mxu0
        %v7100 = vadd.f32 %v7071, %v7099
        %7101 = vdwg.mxu0
        %7102 = vmatpush.bf16.msra.mxu0 %v6535
        %7103 = vmatpush.bf16.msra.mxu0 %v6531
        %7104 = vmatpush.bf16.msra.mxu0 %v6527
        %7105 = vmatpush.bf16.msra.mxu0 %v6523
        %7106 = vmatpush.bf16.msra.mxu0 %v6519
        %7107 = vmatpush.bf16.msra.mxu0 %v6515
        %7108 = vmatpush.bf16.msra.mxu0 %v6511
        %7109 = vmatpush.bf16.msra.mxu0 %v6507
        %7110 = vmatmul.bf16.gmra.mxu0 %v6026
        %v7111 = vpop.f32.mrf.mxu0
        %v7112 = vadd.f32 %v7083, %v7111
        %v7113 = vpop.f32.mrf.mxu0
        %v7114 = vadd.f32 %v7085, %v7113
        %7115 = vmatmul.bf16.gmra.mxu0 %v6030
        %v7116 = vpop.f32.mrf.mxu0
        %v7117 = vadd.f32 %v7088, %v7116
        %v7118 = vpop.f32.mrf.mxu0
        %v7119 = vadd.f32 %v7090, %v7118
        %7120 = vmatmul.bf16.gmra.mxu0 %v6034
        %v7121 = vpop.f32.mrf.mxu0
        %v7122 = vadd.f32 %v7093, %v7121
        %v7123 = vpop.f32.mrf.mxu0
        %v7124 = vadd.f32 %v7095, %v7123
        %7125 = vmatmul.bf16.gmra.mxu0 %v6038
        %v7126 = vpop.f32.mrf.mxu0
        %v7127 = vadd.f32 %v7098, %v7126
        %v7128 = vpop.f32.mrf.mxu0
        %v7129 = vadd.f32 %v7100, %v7128
        %7130 = vdwg.mxu0
        %7131 = vmatpush.bf16.msra.mxu0 %v6567
        %7132 = vmatpush.bf16.msra.mxu0 %v6563
        %7133 = vmatpush.bf16.msra.mxu0 %v6559
        %7134 = vmatpush.bf16.msra.mxu0 %v6555
        %7135 = vmatpush.bf16.msra.mxu0 %v6551
        %7136 = vmatpush.bf16.msra.mxu0 %v6547
        %7137 = vmatpush.bf16.msra.mxu0 %v6543
        %7138 = vmatpush.bf16.msra.mxu0 %v6539
        %7139 = vmatmul.bf16.gmra.mxu0 %v6027
        %v7140 = vpop.f32.mrf.mxu0
        %v7141 = vadd.f32 %v7112, %v7140
        %v7142 = vpop.f32.mrf.mxu0
        %v7143 = vadd.f32 %v7114, %v7142
        %7144 = vmatmul.bf16.gmra.mxu0 %v6031
        %v7145 = vpop.f32.mrf.mxu0
        %v7146 = vadd.f32 %v7117, %v7145
        %v7147 = vpop.f32.mrf.mxu0
        %v7148 = vadd.f32 %v7119, %v7147
        %7149 = vmatmul.bf16.gmra.mxu0 %v6035
        %v7150 = vpop.f32.mrf.mxu0
        %v7151 = vadd.f32 %v7122, %v7150
        %v7152 = vpop.f32.mrf.mxu0
        %v7153 = vadd.f32 %v7124, %v7152
        %7154 = vmatmul.bf16.gmra.mxu0 %v6039
        %v7155 = vpop.f32.mrf.mxu0
        %v7156 = vadd.f32 %v7127, %v7155
        %v7157 = vpop.f32.mrf.mxu0
        %v7158 = vadd.f32 %v7129, %v7157
        %7159 = vdwg.mxu0
        %v7176 = vunpack.c.l.b16 %v5704
        %v7177 = vunpack.c.h.b16 %v5704
        %v7178 = vunpack.c.l.b16 %v5705
        %v7179 = vunpack.c.h.b16 %v5705
        %v7180 = vunpack.c.l.b16 %v5706
        %v7181 = vunpack.c.h.b16 %v5706
        %v7182 = vunpack.c.l.b16 %v5707
        %v7183 = vunpack.c.h.b16 %v5707
        %v7184 = vunpack.c.l.b16 %v5708
        %v7185 = vunpack.c.h.b16 %v5708
        %v7186 = vunpack.c.l.b16 %v5709
        %v7187 = vunpack.c.h.b16 %v5709
        %v7188 = vunpack.c.l.b16 %v5710
        %v7189 = vunpack.c.h.b16 %v5710
        %v7190 = vunpack.c.l.b16 %v5711
        %v7191 = vunpack.c.h.b16 %v5711
        %v7192 = vunpack.c.l.b16 %v5712
        %v7193 = vunpack.c.h.b16 %v5712
        %v7194 = vunpack.c.l.b16 %v5713
        %v7195 = vunpack.c.h.b16 %v5713
        %v7196 = vunpack.c.l.b16 %v5714
        %v7197 = vunpack.c.h.b16 %v5714
        %v7198 = vunpack.c.l.b16 %v5715
        %v7199 = vunpack.c.h.b16 %v5715
        %v7200 = vunpack.c.l.b16 %v5716
        %v7201 = vunpack.c.h.b16 %v5716
        %v7202 = vunpack.c.l.b16 %v5717
        %v7203 = vunpack.c.h.b16 %v5717
        %v7204 = vunpack.c.l.b16 %v5718
        %v7205 = vunpack.c.h.b16 %v5718
        %v7206 = vunpack.c.l.b16 %v5719
        %v7207 = vunpack.c.h.b16 %v5719
        %v7208 = vpack.c.b16 %v7180, %v7176
        %v7209 = vpack.c.b16 %v7181, %v7177
        %v7210 = vpack.c.b16 %v7182, %v7178
        %v7211 = vpack.c.b16 %v7183, %v7179
        %v7212 = vpack.c.b16 %v7188, %v7184
        %v7213 = vpack.c.b16 %v7189, %v7185
        %v7214 = vpack.c.b16 %v7190, %v7186
        %v7215 = vpack.c.b16 %v7191, %v7187
        %v7216 = vpack.c.b16 %v7196, %v7192
        %v7217 = vpack.c.b16 %v7197, %v7193
        %v7218 = vpack.c.b16 %v7198, %v7194
        %v7219 = vpack.c.b16 %v7199, %v7195
        %v7220 = vpack.c.b16 %v7204, %v7200
        %v7221 = vpack.c.b16 %v7205, %v7201
        %v7222 = vpack.c.b16 %v7206, %v7202
        %v7223 = vpack.c.b16 %v7207, %v7203
        %v7368 = vunpack.c.l.b16 %v5848
        %v7369 = vunpack.c.h.b16 %v5848
        %v7370 = vunpack.c.l.b16 %v5849
        %v7371 = vunpack.c.h.b16 %v5849
        %v7372 = vunpack.c.l.b16 %v5850
        %v7373 = vunpack.c.h.b16 %v5850
        %v7374 = vunpack.c.l.b16 %v5851
        %v7375 = vunpack.c.h.b16 %v5851
        %v7376 = vunpack.c.l.b16 %v5852
        %v7377 = vunpack.c.h.b16 %v5852
        %v7378 = vunpack.c.l.b16 %v5853
        %v7379 = vunpack.c.h.b16 %v5853
        %v7380 = vunpack.c.l.b16 %v5854
        %v7381 = vunpack.c.h.b16 %v5854
        %v7382 = vunpack.c.l.b16 %v5855
        %v7383 = vunpack.c.h.b16 %v5855
        %v7384 = vunpack.c.l.b16 %v5856
        %v7385 = vunpack.c.h.b16 %v5856
        %v7386 = vunpack.c.l.b16 %v5857
        %v7387 = vunpack.c.h.b16 %v5857
        %v7388 = vunpack.c.l.b16 %v5858
        %v7389 = vunpack.c.h.b16 %v5858
        %v7390 = vunpack.c.l.b16 %v5859
        %v7391 = vunpack.c.h.b16 %v5859
        %v7392 = vunpack.c.l.b16 %v5860
        %v7393 = vunpack.c.h.b16 %v5860
        %v7394 = vunpack.c.l.b16 %v5861
        %v7395 = vunpack.c.h.b16 %v5861
        %v7396 = vunpack.c.l.b16 %v5862
        %v7397 = vunpack.c.h.b16 %v5862
        %v7398 = vunpack.c.l.b16 %v5863
        %v7399 = vunpack.c.h.b16 %v5863
        %v7400 = vunpack.c.l.b16 %v5864
        %v7401 = vunpack.c.h.b16 %v5864
        %v7402 = vunpack.c.l.b16 %v5865
        %v7403 = vunpack.c.h.b16 %v5865
        %v7404 = vunpack.c.l.b16 %v5866
        %v7405 = vunpack.c.h.b16 %v5866
        %v7406 = vunpack.c.l.b16 %v5867
        %v7407 = vunpack.c.h.b16 %v5867
        %v7408 = vunpack.c.l.b16 %v5868
        %v7409 = vunpack.c.h.b16 %v5868
        %v7410 = vunpack.c.l.b16 %v5869
        %v7411 = vunpack.c.h.b16 %v5869
        %v7412 = vunpack.c.l.b16 %v5870
        %v7413 = vunpack.c.h.b16 %v5870
        %v7414 = vunpack.c.l.b16 %v5871
        %v7415 = vunpack.c.h.b16 %v5871
        %v7416 = vunpack.c.l.b16 %v5872
        %v7417 = vunpack.c.h.b16 %v5872
        %v7418 = vunpack.c.l.b16 %v5873
        %v7419 = vunpack.c.h.b16 %v5873
        %v7420 = vunpack.c.l.b16 %v5874
        %v7421 = vunpack.c.h.b16 %v5874
        %v7422 = vunpack.c.l.b16 %v5875
        %v7423 = vunpack.c.h.b16 %v5875
        %v7424 = vunpack.c.l.b16 %v5876
        %v7425 = vunpack.c.h.b16 %v5876
        %v7426 = vunpack.c.l.b16 %v5877
        %v7427 = vunpack.c.h.b16 %v5877
        %v7428 = vunpack.c.l.b16 %v5878
        %v7429 = vunpack.c.h.b16 %v5878
        %v7430 = vunpack.c.l.b16 %v5879
        %v7431 = vunpack.c.h.b16 %v5879
        %v7432 = vunpack.c.l.b16 %v5880
        %v7433 = vunpack.c.h.b16 %v5880
        %v7434 = vunpack.c.l.b16 %v5881
        %v7435 = vunpack.c.h.b16 %v5881
        %v7436 = vunpack.c.l.b16 %v5882
        %v7437 = vunpack.c.h.b16 %v5882
        %v7438 = vunpack.c.l.b16 %v5883
        %v7439 = vunpack.c.h.b16 %v5883
        %v7440 = vunpack.c.l.b16 %v5884
        %v7441 = vunpack.c.h.b16 %v5884
        %v7442 = vunpack.c.l.b16 %v5885
        %v7443 = vunpack.c.h.b16 %v5885
        %v7444 = vunpack.c.l.b16 %v5886
        %v7445 = vunpack.c.h.b16 %v5886
        %v7446 = vunpack.c.l.b16 %v5887
        %v7447 = vunpack.c.h.b16 %v5887
        %v7448 = vunpack.c.l.b16 %v5888
        %v7449 = vunpack.c.h.b16 %v5888
        %v7450 = vunpack.c.l.b16 %v5889
        %v7451 = vunpack.c.h.b16 %v5889
        %v7452 = vunpack.c.l.b16 %v5890
        %v7453 = vunpack.c.h.b16 %v5890
        %v7454 = vunpack.c.l.b16 %v5891
        %v7455 = vunpack.c.h.b16 %v5891
        %v7456 = vunpack.c.l.b16 %v5892
        %v7457 = vunpack.c.h.b16 %v5892
        %v7458 = vunpack.c.l.b16 %v5893
        %v7459 = vunpack.c.h.b16 %v5893
        %v7460 = vunpack.c.l.b16 %v5894
        %v7461 = vunpack.c.h.b16 %v5894
        %v7462 = vunpack.c.l.b16 %v5895
        %v7463 = vunpack.c.h.b16 %v5895
        %v7464 = vunpack.c.l.b16 %v5896
        %v7465 = vunpack.c.h.b16 %v5896
        %v7466 = vunpack.c.l.b16 %v5897
        %v7467 = vunpack.c.h.b16 %v5897
        %v7468 = vunpack.c.l.b16 %v5898
        %v7469 = vunpack.c.h.b16 %v5898
        %v7470 = vunpack.c.l.b16 %v5899
        %v7471 = vunpack.c.h.b16 %v5899
        %v7472 = vunpack.c.l.b16 %v5900
        %v7473 = vunpack.c.h.b16 %v5900
        %v7474 = vunpack.c.l.b16 %v5901
        %v7475 = vunpack.c.h.b16 %v5901
        %v7476 = vunpack.c.l.b16 %v5902
        %v7477 = vunpack.c.h.b16 %v5902
        %v7478 = vunpack.c.l.b16 %v5903
        %v7479 = vunpack.c.h.b16 %v5903
        %v7480 = vunpack.c.l.b16 %v5904
        %v7481 = vunpack.c.h.b16 %v5904
        %v7482 = vunpack.c.l.b16 %v5905
        %v7483 = vunpack.c.h.b16 %v5905
        %v7484 = vunpack.c.l.b16 %v5906
        %v7485 = vunpack.c.h.b16 %v5906
        %v7486 = vunpack.c.l.b16 %v5907
        %v7487 = vunpack.c.h.b16 %v5907
        %v7488 = vunpack.c.l.b16 %v5908
        %v7489 = vunpack.c.h.b16 %v5908
        %v7490 = vunpack.c.l.b16 %v5909
        %v7491 = vunpack.c.h.b16 %v5909
        %v7492 = vunpack.c.l.b16 %v5910
        %v7493 = vunpack.c.h.b16 %v5910
        %v7494 = vunpack.c.l.b16 %v5911
        %v7495 = vunpack.c.h.b16 %v5911
        %v7496 = vunpack.c.l.b16 %v5912
        %v7497 = vunpack.c.h.b16 %v5912
        %v7498 = vunpack.c.l.b16 %v5913
        %v7499 = vunpack.c.h.b16 %v5913
        %v7500 = vunpack.c.l.b16 %v5914
        %v7501 = vunpack.c.h.b16 %v5914
        %v7502 = vunpack.c.l.b16 %v5915
        %v7503 = vunpack.c.h.b16 %v5915
        %v7504 = vunpack.c.l.b16 %v5916
        %v7505 = vunpack.c.h.b16 %v5916
        %v7506 = vunpack.c.l.b16 %v5917
        %v7507 = vunpack.c.h.b16 %v5917
        %v7508 = vunpack.c.l.b16 %v5918
        %v7509 = vunpack.c.h.b16 %v5918
        %v7510 = vunpack.c.l.b16 %v5919
        %v7511 = vunpack.c.h.b16 %v5919
        %v7512 = vunpack.c.l.b16 %v5920
        %v7513 = vunpack.c.h.b16 %v5920
        %v7514 = vunpack.c.l.b16 %v5921
        %v7515 = vunpack.c.h.b16 %v5921
        %v7516 = vunpack.c.l.b16 %v5922
        %v7517 = vunpack.c.h.b16 %v5922
        %v7518 = vunpack.c.l.b16 %v5923
        %v7519 = vunpack.c.h.b16 %v5923
        %v7520 = vunpack.c.l.b16 %v5924
        %v7521 = vunpack.c.h.b16 %v5924
        %v7522 = vunpack.c.l.b16 %v5925
        %v7523 = vunpack.c.h.b16 %v5925
        %v7524 = vunpack.c.l.b16 %v5926
        %v7525 = vunpack.c.h.b16 %v5926
        %v7526 = vunpack.c.l.b16 %v5927
        %v7527 = vunpack.c.h.b16 %v5927
        %v7528 = vunpack.c.l.b16 %v5928
        %v7529 = vunpack.c.h.b16 %v5928
        %v7530 = vunpack.c.l.b16 %v5929
        %v7531 = vunpack.c.h.b16 %v5929
        %v7532 = vunpack.c.l.b16 %v5930
        %v7533 = vunpack.c.h.b16 %v5930
        %v7534 = vunpack.c.l.b16 %v5931
        %v7535 = vunpack.c.h.b16 %v5931
        %v7536 = vunpack.c.l.b16 %v5932
        %v7537 = vunpack.c.h.b16 %v5932
        %v7538 = vunpack.c.l.b16 %v5933
        %v7539 = vunpack.c.h.b16 %v5933
        %v7540 = vunpack.c.l.b16 %v5934
        %v7541 = vunpack.c.h.b16 %v5934
        %v7542 = vunpack.c.l.b16 %v5935
        %v7543 = vunpack.c.h.b16 %v5935
        %v7544 = vunpack.c.l.b16 %v5936
        %v7545 = vunpack.c.h.b16 %v5936
        %v7546 = vunpack.c.l.b16 %v5937
        %v7547 = vunpack.c.h.b16 %v5937
        %v7548 = vunpack.c.l.b16 %v5938
        %v7549 = vunpack.c.h.b16 %v5938
        %v7550 = vunpack.c.l.b16 %v5939
        %v7551 = vunpack.c.h.b16 %v5939
        %v7552 = vunpack.c.l.b16 %v5940
        %v7553 = vunpack.c.h.b16 %v5940
        %v7554 = vunpack.c.l.b16 %v5941
        %v7555 = vunpack.c.h.b16 %v5941
        %v7556 = vunpack.c.l.b16 %v5942
        %v7557 = vunpack.c.h.b16 %v5942
        %v7558 = vunpack.c.l.b16 %v5943
        %v7559 = vunpack.c.h.b16 %v5943
        %v7560 = vunpack.c.l.b16 %v5944
        %v7561 = vunpack.c.h.b16 %v5944
        %v7562 = vunpack.c.l.b16 %v5945
        %v7563 = vunpack.c.h.b16 %v5945
        %v7564 = vunpack.c.l.b16 %v5946
        %v7565 = vunpack.c.h.b16 %v5946
        %v7566 = vunpack.c.l.b16 %v5947
        %v7567 = vunpack.c.h.b16 %v5947
        %v7568 = vunpack.c.l.b16 %v5948
        %v7569 = vunpack.c.h.b16 %v5948
        %v7570 = vunpack.c.l.b16 %v5949
        %v7571 = vunpack.c.h.b16 %v5949
        %v7572 = vunpack.c.l.b16 %v5950
        %v7573 = vunpack.c.h.b16 %v5950
        %v7574 = vunpack.c.l.b16 %v5951
        %v7575 = vunpack.c.h.b16 %v5951
        %v7576 = vunpack.c.l.b16 %v5952
        %v7577 = vunpack.c.h.b16 %v5952
        %v7578 = vunpack.c.l.b16 %v5953
        %v7579 = vunpack.c.h.b16 %v5953
        %v7580 = vunpack.c.l.b16 %v5954
        %v7581 = vunpack.c.h.b16 %v5954
        %v7582 = vunpack.c.l.b16 %v5955
        %v7583 = vunpack.c.h.b16 %v5955
        %v7584 = vunpack.c.l.b16 %v5956
        %v7585 = vunpack.c.h.b16 %v5956
        %v7586 = vunpack.c.l.b16 %v5957
        %v7587 = vunpack.c.h.b16 %v5957
        %v7588 = vunpack.c.l.b16 %v5958
        %v7589 = vunpack.c.h.b16 %v5958
        %v7590 = vunpack.c.l.b16 %v5959
        %v7591 = vunpack.c.h.b16 %v5959
        %v7592 = vunpack.c.l.b16 %v5960
        %v7593 = vunpack.c.h.b16 %v5960
        %v7594 = vunpack.c.l.b16 %v5961
        %v7595 = vunpack.c.h.b16 %v5961
        %v7596 = vunpack.c.l.b16 %v5962
        %v7597 = vunpack.c.h.b16 %v5962
        %v7598 = vunpack.c.l.b16 %v5963
        %v7599 = vunpack.c.h.b16 %v5963
        %v7600 = vunpack.c.l.b16 %v5964
        %v7601 = vunpack.c.h.b16 %v5964
        %v7602 = vunpack.c.l.b16 %v5965
        %v7603 = vunpack.c.h.b16 %v5965
        %v7604 = vunpack.c.l.b16 %v5966
        %v7605 = vunpack.c.h.b16 %v5966
        %v7606 = vunpack.c.l.b16 %v5967
        %v7607 = vunpack.c.h.b16 %v5967
        %v7608 = vunpack.c.l.b16 %v5968
        %v7609 = vunpack.c.h.b16 %v5968
        %v7610 = vunpack.c.l.b16 %v5969
        %v7611 = vunpack.c.h.b16 %v5969
        %v7612 = vunpack.c.l.b16 %v5970
        %v7613 = vunpack.c.h.b16 %v5970
        %v7614 = vunpack.c.l.b16 %v5971
        %v7615 = vunpack.c.h.b16 %v5971
        %v7616 = vunpack.c.l.b16 %v5972
        %v7617 = vunpack.c.h.b16 %v5972
        %v7618 = vunpack.c.l.b16 %v5973
        %v7619 = vunpack.c.h.b16 %v5973
        %v7620 = vunpack.c.l.b16 %v5974
        %v7621 = vunpack.c.h.b16 %v5974
        %v7622 = vunpack.c.l.b16 %v5975
        %v7623 = vunpack.c.h.b16 %v5975
        %v7624 = vpack.c.b16 %v7372, %v7368
        %v7625 = vpack.c.b16 %v7373, %v7369
        %v7626 = vpack.c.b16 %v7374, %v7370
        %v7627 = vpack.c.b16 %v7375, %v7371
        %v7628 = vpack.c.b16 %v7380, %v7376
        %v7629 = vpack.c.b16 %v7381, %v7377
        %v7630 = vpack.c.b16 %v7382, %v7378
        %v7631 = vpack.c.b16 %v7383, %v7379
        %v7632 = vpack.c.b16 %v7388, %v7384
        %v7633 = vpack.c.b16 %v7389, %v7385
        %v7634 = vpack.c.b16 %v7390, %v7386
        %v7635 = vpack.c.b16 %v7391, %v7387
        %v7636 = vpack.c.b16 %v7396, %v7392
        %v7637 = vpack.c.b16 %v7397, %v7393
        %v7638 = vpack.c.b16 %v7398, %v7394
        %v7639 = vpack.c.b16 %v7399, %v7395
        %v7640 = vpack.c.b16 %v7404, %v7400
        %v7641 = vpack.c.b16 %v7405, %v7401
        %v7642 = vpack.c.b16 %v7406, %v7402
        %v7643 = vpack.c.b16 %v7407, %v7403
        %v7644 = vpack.c.b16 %v7412, %v7408
        %v7645 = vpack.c.b16 %v7413, %v7409
        %v7646 = vpack.c.b16 %v7414, %v7410
        %v7647 = vpack.c.b16 %v7415, %v7411
        %v7648 = vpack.c.b16 %v7420, %v7416
        %v7649 = vpack.c.b16 %v7421, %v7417
        %v7650 = vpack.c.b16 %v7422, %v7418
        %v7651 = vpack.c.b16 %v7423, %v7419
        %v7652 = vpack.c.b16 %v7428, %v7424
        %v7653 = vpack.c.b16 %v7429, %v7425
        %v7654 = vpack.c.b16 %v7430, %v7426
        %v7655 = vpack.c.b16 %v7431, %v7427
        %v7656 = vpack.c.b16 %v7436, %v7432
        %v7657 = vpack.c.b16 %v7437, %v7433
        %v7658 = vpack.c.b16 %v7438, %v7434
        %v7659 = vpack.c.b16 %v7439, %v7435
        %v7660 = vpack.c.b16 %v7444, %v7440
        %v7661 = vpack.c.b16 %v7445, %v7441
        %v7662 = vpack.c.b16 %v7446, %v7442
        %v7663 = vpack.c.b16 %v7447, %v7443
        %v7664 = vpack.c.b16 %v7452, %v7448
        %v7665 = vpack.c.b16 %v7453, %v7449
        %v7666 = vpack.c.b16 %v7454, %v7450
        %v7667 = vpack.c.b16 %v7455, %v7451
        %v7668 = vpack.c.b16 %v7460, %v7456
        %v7669 = vpack.c.b16 %v7461, %v7457
        %v7670 = vpack.c.b16 %v7462, %v7458
        %v7671 = vpack.c.b16 %v7463, %v7459
        %v7672 = vpack.c.b16 %v7468, %v7464
        %v7673 = vpack.c.b16 %v7469, %v7465
        %v7674 = vpack.c.b16 %v7470, %v7466
        %v7675 = vpack.c.b16 %v7471, %v7467
        %v7676 = vpack.c.b16 %v7476, %v7472
        %v7677 = vpack.c.b16 %v7477, %v7473
        %v7678 = vpack.c.b16 %v7478, %v7474
        %v7679 = vpack.c.b16 %v7479, %v7475
        %v7680 = vpack.c.b16 %v7484, %v7480
        %v7681 = vpack.c.b16 %v7485, %v7481
        %v7682 = vpack.c.b16 %v7486, %v7482
        %v7683 = vpack.c.b16 %v7487, %v7483
        %v7684 = vpack.c.b16 %v7492, %v7488
        %v7685 = vpack.c.b16 %v7493, %v7489
        %v7686 = vpack.c.b16 %v7494, %v7490
        %v7687 = vpack.c.b16 %v7495, %v7491
        %v7688 = vpack.c.b16 %v7500, %v7496
        %v7689 = vpack.c.b16 %v7501, %v7497
        %v7690 = vpack.c.b16 %v7502, %v7498
        %v7691 = vpack.c.b16 %v7503, %v7499
        %v7692 = vpack.c.b16 %v7508, %v7504
        %v7693 = vpack.c.b16 %v7509, %v7505
        %v7694 = vpack.c.b16 %v7510, %v7506
        %v7695 = vpack.c.b16 %v7511, %v7507
        %v7696 = vpack.c.b16 %v7516, %v7512
        %v7697 = vpack.c.b16 %v7517, %v7513
        %v7698 = vpack.c.b16 %v7518, %v7514
        %v7699 = vpack.c.b16 %v7519, %v7515
        %v7700 = vpack.c.b16 %v7524, %v7520
        %v7701 = vpack.c.b16 %v7525, %v7521
        %v7702 = vpack.c.b16 %v7526, %v7522
        %v7703 = vpack.c.b16 %v7527, %v7523
        %v7704 = vpack.c.b16 %v7532, %v7528
        %v7705 = vpack.c.b16 %v7533, %v7529
        %v7706 = vpack.c.b16 %v7534, %v7530
        %v7707 = vpack.c.b16 %v7535, %v7531
        %v7708 = vpack.c.b16 %v7540, %v7536
        %v7709 = vpack.c.b16 %v7541, %v7537
        %v7710 = vpack.c.b16 %v7542, %v7538
        %v7711 = vpack.c.b16 %v7543, %v7539
        %v7712 = vpack.c.b16 %v7548, %v7544
        %v7713 = vpack.c.b16 %v7549, %v7545
        %v7714 = vpack.c.b16 %v7550, %v7546
        %v7715 = vpack.c.b16 %v7551, %v7547
        %v7716 = vpack.c.b16 %v7556, %v7552
        %v7717 = vpack.c.b16 %v7557, %v7553
        %v7718 = vpack.c.b16 %v7558, %v7554
        %v7719 = vpack.c.b16 %v7559, %v7555
        %v7720 = vpack.c.b16 %v7564, %v7560
        %v7721 = vpack.c.b16 %v7565, %v7561
        %v7722 = vpack.c.b16 %v7566, %v7562
        %v7723 = vpack.c.b16 %v7567, %v7563
        %v7724 = vpack.c.b16 %v7572, %v7568
        %v7725 = vpack.c.b16 %v7573, %v7569
        %v7726 = vpack.c.b16 %v7574, %v7570
        %v7727 = vpack.c.b16 %v7575, %v7571
        %v7728 = vpack.c.b16 %v7580, %v7576
        %v7729 = vpack.c.b16 %v7581, %v7577
        %v7730 = vpack.c.b16 %v7582, %v7578
        %v7731 = vpack.c.b16 %v7583, %v7579
        %v7732 = vpack.c.b16 %v7588, %v7584
        %v7733 = vpack.c.b16 %v7589, %v7585
        %v7734 = vpack.c.b16 %v7590, %v7586
        %v7735 = vpack.c.b16 %v7591, %v7587
        %v7736 = vpack.c.b16 %v7596, %v7592
        %v7737 = vpack.c.b16 %v7597, %v7593
        %v7738 = vpack.c.b16 %v7598, %v7594
        %v7739 = vpack.c.b16 %v7599, %v7595
        %v7740 = vpack.c.b16 %v7604, %v7600
        %v7741 = vpack.c.b16 %v7605, %v7601
        %v7742 = vpack.c.b16 %v7606, %v7602
        %v7743 = vpack.c.b16 %v7607, %v7603
        %v7744 = vpack.c.b16 %v7612, %v7608
        %v7745 = vpack.c.b16 %v7613, %v7609
        %v7746 = vpack.c.b16 %v7614, %v7610
        %v7747 = vpack.c.b16 %v7615, %v7611
        %v7748 = vpack.c.b16 %v7620, %v7616
        %v7749 = vpack.c.b16 %v7621, %v7617
        %v7750 = vpack.c.b16 %v7622, %v7618
        %v7751 = vpack.c.b16 %v7623, %v7619
        %7880 = vmatpush.bf16.msra.mxu0 %v7652
        %7881 = vmatpush.bf16.msra.mxu0 %v7648
        %7882 = vmatpush.bf16.msra.mxu0 %v7644
        %7883 = vmatpush.bf16.msra.mxu0 %v7640
        %7884 = vmatpush.bf16.msra.mxu0 %v7636
        %7885 = vmatpush.bf16.msra.mxu0 %v7632
        %7886 = vmatpush.bf16.msra.mxu0 %v7628
        %7887 = vmatpush.bf16.msra.mxu0 %v7624
        %7888 = vmatmul.bf16.gmra.mxu0 %v7208
        %v7889 = vpop.f32.mrf.mxu0
        %v7890 = vadd.f32 0.0, %v7889
        %v7891 = vpop.f32.mrf.mxu0
        %v7892 = vadd.f32 0.0, %v7891
        %7893 = vmatmul.bf16.gmra.mxu0 %v7212
        %v7894 = vpop.f32.mrf.mxu0
        %v7895 = vadd.f32 0.0, %v7894
        %v7896 = vpop.f32.mrf.mxu0
        %v7897 = vadd.f32 0.0, %v7896
        %7898 = vmatmul.bf16.gmra.mxu0 %v7216
        %v7899 = vpop.f32.mrf.mxu0
        %v7900 = vadd.f32 0.0, %v7899
        %v7901 = vpop.f32.mrf.mxu0
        %v7902 = vadd.f32 0.0, %v7901
        %7903 = vmatmul.bf16.gmra.mxu0 %v7220
        %v7904 = vpop.f32.mrf.mxu0
        %v7905 = vadd.f32 0.0, %v7904
        %v7906 = vpop.f32.mrf.mxu0
        %v7907 = vadd.f32 0.0, %v7906
        %7908 = vdwg.mxu0
        %7909 = vmatpush.bf16.msra.mxu0 %v7684
        %7910 = vmatpush.bf16.msra.mxu0 %v7680
        %7911 = vmatpush.bf16.msra.mxu0 %v7676
        %7912 = vmatpush.bf16.msra.mxu0 %v7672
        %7913 = vmatpush.bf16.msra.mxu0 %v7668
        %7914 = vmatpush.bf16.msra.mxu0 %v7664
        %7915 = vmatpush.bf16.msra.mxu0 %v7660
        %7916 = vmatpush.bf16.msra.mxu0 %v7656
        %7917 = vmatmul.bf16.gmra.mxu0 %v7209
        %v7918 = vpop.f32.mrf.mxu0
        %v7919 = vadd.f32 %v7890, %v7918
        %v7920 = vpop.f32.mrf.mxu0
        %v7921 = vadd.f32 %v7892, %v7920
        %7922 = vmatmul.bf16.gmra.mxu0 %v7213
        %v7923 = vpop.f32.mrf.mxu0
        %v7924 = vadd.f32 %v7895, %v7923
        %v7925 = vpop.f32.mrf.mxu0
        %v7926 = vadd.f32 %v7897, %v7925
        %7927 = vmatmul.bf16.gmra.mxu0 %v7217
        %v7928 = vpop.f32.mrf.mxu0
        %v7929 = vadd.f32 %v7900, %v7928
        %v7930 = vpop.f32.mrf.mxu0
        %v7931 = vadd.f32 %v7902, %v7930
        %7932 = vmatmul.bf16.gmra.mxu0 %v7221
        %v7933 = vpop.f32.mrf.mxu0
        %v7934 = vadd.f32 %v7905, %v7933
        %v7935 = vpop.f32.mrf.mxu0
        %v7936 = vadd.f32 %v7907, %v7935
        %7937 = vdwg.mxu0
        %7938 = vmatpush.bf16.msra.mxu0 %v7716
        %7939 = vmatpush.bf16.msra.mxu0 %v7712
        %7940 = vmatpush.bf16.msra.mxu0 %v7708
        %7941 = vmatpush.bf16.msra.mxu0 %v7704
        %7942 = vmatpush.bf16.msra.mxu0 %v7700
        %7943 = vmatpush.bf16.msra.mxu0 %v7696
        %7944 = vmatpush.bf16.msra.mxu0 %v7692
        %7945 = vmatpush.bf16.msra.mxu0 %v7688
        %7946 = vmatmul.bf16.gmra.mxu0 %v7210
        %v7947 = vpop.f32.mrf.mxu0
        %v7948 = vadd.f32 %v7919, %v7947
        %v7949 = vpop.f32.mrf.mxu0
        %v7950 = vadd.f32 %v7921, %v7949
        %7951 = vmatmul.bf16.gmra.mxu0 %v7214
        %v7952 = vpop.f32.mrf.mxu0
        %v7953 = vadd.f32 %v7924, %v7952
        %v7954 = vpop.f32.mrf.mxu0
        %v7955 = vadd.f32 %v7926, %v7954
        %7956 = vmatmul.bf16.gmra.mxu0 %v7218
        %v7957 = vpop.f32.mrf.mxu0
        %v7958 = vadd.f32 %v7929, %v7957
        %v7959 = vpop.f32.mrf.mxu0
        %v7960 = vadd.f32 %v7931, %v7959
        %7961 = vmatmul.bf16.gmra.mxu0 %v7222
        %v7962 = vpop.f32.mrf.mxu0
        %v7963 = vadd.f32 %v7934, %v7962
        %v7964 = vpop.f32.mrf.mxu0
        %v7965 = vadd.f32 %v7936, %v7964
        %7966 = vdwg.mxu0
        %7967 = vmatpush.bf16.msra.mxu0 %v7748
        %7968 = vmatpush.bf16.msra.mxu0 %v7744
        %7969 = vmatpush.bf16.msra.mxu0 %v7740
        %7970 = vmatpush.bf16.msra.mxu0 %v7736
        %7971 = vmatpush.bf16.msra.mxu0 %v7732
        %7972 = vmatpush.bf16.msra.mxu0 %v7728
        %7973 = vmatpush.bf16.msra.mxu0 %v7724
        %7974 = vmatpush.bf16.msra.mxu0 %v7720
        %7975 = vmatmul.bf16.gmra.mxu0 %v7211
        %v7976 = vpop.f32.mrf.mxu0
        %v7977 = vadd.f32 %v7948, %v7976
        %v7978 = vpop.f32.mrf.mxu0
        %v7979 = vadd.f32 %v7950, %v7978
        %7980 = vmatmul.bf16.gmra.mxu0 %v7215
        %v7981 = vpop.f32.mrf.mxu0
        %v7982 = vadd.f32 %v7953, %v7981
        %v7983 = vpop.f32.mrf.mxu0
        %v7984 = vadd.f32 %v7955, %v7983
        %7985 = vmatmul.bf16.gmra.mxu0 %v7219
        %v7986 = vpop.f32.mrf.mxu0
        %v7987 = vadd.f32 %v7958, %v7986
        %v7988 = vpop.f32.mrf.mxu0
        %v7989 = vadd.f32 %v7960, %v7988
        %7990 = vmatmul.bf16.gmra.mxu0 %v7223
        %v7991 = vpop.f32.mrf.mxu0
        %v7992 = vadd.f32 %v7963, %v7991
        %v7993 = vpop.f32.mrf.mxu0
        %v7994 = vadd.f32 %v7965, %v7993
        %7995 = vdwg.mxu0
        %7996 = vmatpush.bf16.msra.mxu0 %v7653
        %7997 = vmatpush.bf16.msra.mxu0 %v7649
        %7998 = vmatpush.bf16.msra.mxu0 %v7645
        %7999 = vmatpush.bf16.msra.mxu0 %v7641
        %8000 = vmatpush.bf16.msra.mxu0 %v7637
        %8001 = vmatpush.bf16.msra.mxu0 %v7633
        %8002 = vmatpush.bf16.msra.mxu0 %v7629
        %8003 = vmatpush.bf16.msra.mxu0 %v7625
        %8004 = vmatmul.bf16.gmra.mxu0 %v7208
        %v8005 = vpop.f32.mrf.mxu0
        %v8006 = vadd.f32 0.0, %v8005
        %v8007 = vpop.f32.mrf.mxu0
        %v8008 = vadd.f32 0.0, %v8007
        %8009 = vmatmul.bf16.gmra.mxu0 %v7212
        %v8010 = vpop.f32.mrf.mxu0
        %v8011 = vadd.f32 0.0, %v8010
        %v8012 = vpop.f32.mrf.mxu0
        %v8013 = vadd.f32 0.0, %v8012
        %8014 = vmatmul.bf16.gmra.mxu0 %v7216
        %v8015 = vpop.f32.mrf.mxu0
        %v8016 = vadd.f32 0.0, %v8015
        %v8017 = vpop.f32.mrf.mxu0
        %v8018 = vadd.f32 0.0, %v8017
        %8019 = vmatmul.bf16.gmra.mxu0 %v7220
        %v8020 = vpop.f32.mrf.mxu0
        %v8021 = vadd.f32 0.0, %v8020
        %v8022 = vpop.f32.mrf.mxu0
        %v8023 = vadd.f32 0.0, %v8022
        %8024 = vdwg.mxu0
        %8025 = vmatpush.bf16.msra.mxu0 %v7685
        %8026 = vmatpush.bf16.msra.mxu0 %v7681
        %8027 = vmatpush.bf16.msra.mxu0 %v7677
        %8028 = vmatpush.bf16.msra.mxu0 %v7673
        %8029 = vmatpush.bf16.msra.mxu0 %v7669
        %8030 = vmatpush.bf16.msra.mxu0 %v7665
        %8031 = vmatpush.bf16.msra.mxu0 %v7661
        %8032 = vmatpush.bf16.msra.mxu0 %v7657
        %8033 = vmatmul.bf16.gmra.mxu0 %v7209
        %v8034 = vpop.f32.mrf.mxu0
        %v8035 = vadd.f32 %v8006, %v8034
        %v8036 = vpop.f32.mrf.mxu0
        %v8037 = vadd.f32 %v8008, %v8036
        %8038 = vmatmul.bf16.gmra.mxu0 %v7213
        %v8039 = vpop.f32.mrf.mxu0
        %v8040 = vadd.f32 %v8011, %v8039
        %v8041 = vpop.f32.mrf.mxu0
        %v8042 = vadd.f32 %v8013, %v8041
        %8043 = vmatmul.bf16.gmra.mxu0 %v7217
        %v8044 = vpop.f32.mrf.mxu0
        %v8045 = vadd.f32 %v8016, %v8044
        %v8046 = vpop.f32.mrf.mxu0
        %v8047 = vadd.f32 %v8018, %v8046
        %8048 = vmatmul.bf16.gmra.mxu0 %v7221
        %v8049 = vpop.f32.mrf.mxu0
        %v8050 = vadd.f32 %v8021, %v8049
        %v8051 = vpop.f32.mrf.mxu0
        %v8052 = vadd.f32 %v8023, %v8051
        %8053 = vdwg.mxu0
        %8054 = vmatpush.bf16.msra.mxu0 %v7717
        %8055 = vmatpush.bf16.msra.mxu0 %v7713
        %8056 = vmatpush.bf16.msra.mxu0 %v7709
        %8057 = vmatpush.bf16.msra.mxu0 %v7705
        %8058 = vmatpush.bf16.msra.mxu0 %v7701
        %8059 = vmatpush.bf16.msra.mxu0 %v7697
        %8060 = vmatpush.bf16.msra.mxu0 %v7693
        %8061 = vmatpush.bf16.msra.mxu0 %v7689
        %8062 = vmatmul.bf16.gmra.mxu0 %v7210
        %v8063 = vpop.f32.mrf.mxu0
        %v8064 = vadd.f32 %v8035, %v8063
        %v8065 = vpop.f32.mrf.mxu0
        %v8066 = vadd.f32 %v8037, %v8065
        %8067 = vmatmul.bf16.gmra.mxu0 %v7214
        %v8068 = vpop.f32.mrf.mxu0
        %v8069 = vadd.f32 %v8040, %v8068
        %v8070 = vpop.f32.mrf.mxu0
        %v8071 = vadd.f32 %v8042, %v8070
        %8072 = vmatmul.bf16.gmra.mxu0 %v7218
        %v8073 = vpop.f32.mrf.mxu0
        %v8074 = vadd.f32 %v8045, %v8073
        %v8075 = vpop.f32.mrf.mxu0
        %v8076 = vadd.f32 %v8047, %v8075
        %8077 = vmatmul.bf16.gmra.mxu0 %v7222
        %v8078 = vpop.f32.mrf.mxu0
        %v8079 = vadd.f32 %v8050, %v8078
        %v8080 = vpop.f32.mrf.mxu0
        %v8081 = vadd.f32 %v8052, %v8080
        %8082 = vdwg.mxu0
        %8083 = vmatpush.bf16.msra.mxu0 %v7749
        %8084 = vmatpush.bf16.msra.mxu0 %v7745
        %8085 = vmatpush.bf16.msra.mxu0 %v7741
        %8086 = vmatpush.bf16.msra.mxu0 %v7737
        %8087 = vmatpush.bf16.msra.mxu0 %v7733
        %8088 = vmatpush.bf16.msra.mxu0 %v7729
        %8089 = vmatpush.bf16.msra.mxu0 %v7725
        %8090 = vmatpush.bf16.msra.mxu0 %v7721
        %8091 = vmatmul.bf16.gmra.mxu0 %v7211
        %v8092 = vpop.f32.mrf.mxu0
        %v8093 = vadd.f32 %v8064, %v8092
        %v8094 = vpop.f32.mrf.mxu0
        %v8095 = vadd.f32 %v8066, %v8094
        %8096 = vmatmul.bf16.gmra.mxu0 %v7215
        %v8097 = vpop.f32.mrf.mxu0
        %v8098 = vadd.f32 %v8069, %v8097
        %v8099 = vpop.f32.mrf.mxu0
        %v8100 = vadd.f32 %v8071, %v8099
        %8101 = vmatmul.bf16.gmra.mxu0 %v7219
        %v8102 = vpop.f32.mrf.mxu0
        %v8103 = vadd.f32 %v8074, %v8102
        %v8104 = vpop.f32.mrf.mxu0
        %v8105 = vadd.f32 %v8076, %v8104
        %8106 = vmatmul.bf16.gmra.mxu0 %v7223
        %v8107 = vpop.f32.mrf.mxu0
        %v8108 = vadd.f32 %v8079, %v8107
        %v8109 = vpop.f32.mrf.mxu0
        %v8110 = vadd.f32 %v8081, %v8109
        %8111 = vdwg.mxu0
        %8112 = vmatpush.bf16.msra.mxu0 %v7654
        %8113 = vmatpush.bf16.msra.mxu0 %v7650
        %8114 = vmatpush.bf16.msra.mxu0 %v7646
        %8115 = vmatpush.bf16.msra.mxu0 %v7642
        %8116 = vmatpush.bf16.msra.mxu0 %v7638
        %8117 = vmatpush.bf16.msra.mxu0 %v7634
        %8118 = vmatpush.bf16.msra.mxu0 %v7630
        %8119 = vmatpush.bf16.msra.mxu0 %v7626
        %8120 = vmatmul.bf16.gmra.mxu0 %v7208
        %v8121 = vpop.f32.mrf.mxu0
        %v8122 = vadd.f32 0.0, %v8121
        %v8123 = vpop.f32.mrf.mxu0
        %v8124 = vadd.f32 0.0, %v8123
        %8125 = vmatmul.bf16.gmra.mxu0 %v7212
        %v8126 = vpop.f32.mrf.mxu0
        %v8127 = vadd.f32 0.0, %v8126
        %v8128 = vpop.f32.mrf.mxu0
        %v8129 = vadd.f32 0.0, %v8128
        %8130 = vmatmul.bf16.gmra.mxu0 %v7216
        %v8131 = vpop.f32.mrf.mxu0
        %v8132 = vadd.f32 0.0, %v8131
        %v8133 = vpop.f32.mrf.mxu0
        %v8134 = vadd.f32 0.0, %v8133
        %8135 = vmatmul.bf16.gmra.mxu0 %v7220
        %v8136 = vpop.f32.mrf.mxu0
        %v8137 = vadd.f32 0.0, %v8136
        %v8138 = vpop.f32.mrf.mxu0
        %v8139 = vadd.f32 0.0, %v8138
        %8140 = vdwg.mxu0
        %8141 = vmatpush.bf16.msra.mxu0 %v7686
        %8142 = vmatpush.bf16.msra.mxu0 %v7682
        %8143 = vmatpush.bf16.msra.mxu0 %v7678
        %8144 = vmatpush.bf16.msra.mxu0 %v7674
        %8145 = vmatpush.bf16.msra.mxu0 %v7670
        %8146 = vmatpush.bf16.msra.mxu0 %v7666
        %8147 = vmatpush.bf16.msra.mxu0 %v7662
        %8148 = vmatpush.bf16.msra.mxu0 %v7658
        %8149 = vmatmul.bf16.gmra.mxu0 %v7209
        %v8150 = vpop.f32.mrf.mxu0
        %v8151 = vadd.f32 %v8122, %v8150
        %v8152 = vpop.f32.mrf.mxu0
        %v8153 = vadd.f32 %v8124, %v8152
        %8154 = vmatmul.bf16.gmra.mxu0 %v7213
        %v8155 = vpop.f32.mrf.mxu0
        %v8156 = vadd.f32 %v8127, %v8155
        %v8157 = vpop.f32.mrf.mxu0
        %v8158 = vadd.f32 %v8129, %v8157
        %8159 = vmatmul.bf16.gmra.mxu0 %v7217
        %v8160 = vpop.f32.mrf.mxu0
        %v8161 = vadd.f32 %v8132, %v8160
        %v8162 = vpop.f32.mrf.mxu0
        %v8163 = vadd.f32 %v8134, %v8162
        %8164 = vmatmul.bf16.gmra.mxu0 %v7221
        %v8165 = vpop.f32.mrf.mxu0
        %v8166 = vadd.f32 %v8137, %v8165
        %v8167 = vpop.f32.mrf.mxu0
        %v8168 = vadd.f32 %v8139, %v8167
        %8169 = vdwg.mxu0
        %8170 = vmatpush.bf16.msra.mxu0 %v7718
        %8171 = vmatpush.bf16.msra.mxu0 %v7714
        %8172 = vmatpush.bf16.msra.mxu0 %v7710
        %8173 = vmatpush.bf16.msra.mxu0 %v7706
        %8174 = vmatpush.bf16.msra.mxu0 %v7702
        %8175 = vmatpush.bf16.msra.mxu0 %v7698
        %8176 = vmatpush.bf16.msra.mxu0 %v7694
        %8177 = vmatpush.bf16.msra.mxu0 %v7690
        %8178 = vmatmul.bf16.gmra.mxu0 %v7210
        %v8179 = vpop.f32.mrf.mxu0
        %v8180 = vadd.f32 %v8151, %v8179
        %v8181 = vpop.f32.mrf.mxu0
        %v8182 = vadd.f32 %v8153, %v8181
        %8183 = vmatmul.bf16.gmra.mxu0 %v7214
        %v8184 = vpop.f32.mrf.mxu0
        %v8185 = vadd.f32 %v8156, %v8184
        %v8186 = vpop.f32.mrf.mxu0
        %v8187 = vadd.f32 %v8158, %v8186
        %8188 = vmatmul.bf16.gmra.mxu0 %v7218
        %v8189 = vpop.f32.mrf.mxu0
        %v8190 = vadd.f32 %v8161, %v8189
        %v8191 = vpop.f32.mrf.mxu0
        %v8192 = vadd.f32 %v8163, %v8191
        %8193 = vmatmul.bf16.gmra.mxu0 %v7222
        %v8194 = vpop.f32.mrf.mxu0
        %v8195 = vadd.f32 %v8166, %v8194
        %v8196 = vpop.f32.mrf.mxu0
        %v8197 = vadd.f32 %v8168, %v8196
        %8198 = vdwg.mxu0
        %8199 = vmatpush.bf16.msra.mxu0 %v7750
        %8200 = vmatpush.bf16.msra.mxu0 %v7746
        %8201 = vmatpush.bf16.msra.mxu0 %v7742
        %8202 = vmatpush.bf16.msra.mxu0 %v7738
        %8203 = vmatpush.bf16.msra.mxu0 %v7734
        %8204 = vmatpush.bf16.msra.mxu0 %v7730
        %8205 = vmatpush.bf16.msra.mxu0 %v7726
        %8206 = vmatpush.bf16.msra.mxu0 %v7722
        %8207 = vmatmul.bf16.gmra.mxu0 %v7211
        %v8208 = vpop.f32.mrf.mxu0
        %v8209 = vadd.f32 %v8180, %v8208
        %v8210 = vpop.f32.mrf.mxu0
        %v8211 = vadd.f32 %v8182, %v8210
        %8212 = vmatmul.bf16.gmra.mxu0 %v7215
        %v8213 = vpop.f32.mrf.mxu0
        %v8214 = vadd.f32 %v8185, %v8213
        %v8215 = vpop.f32.mrf.mxu0
        %v8216 = vadd.f32 %v8187, %v8215
        %8217 = vmatmul.bf16.gmra.mxu0 %v7219
        %v8218 = vpop.f32.mrf.mxu0
        %v8219 = vadd.f32 %v8190, %v8218
        %v8220 = vpop.f32.mrf.mxu0
        %v8221 = vadd.f32 %v8192, %v8220
        %8222 = vmatmul.bf16.gmra.mxu0 %v7223
        %v8223 = vpop.f32.mrf.mxu0
        %v8224 = vadd.f32 %v8195, %v8223
        %v8225 = vpop.f32.mrf.mxu0
        %v8226 = vadd.f32 %v8197, %v8225
        %8227 = vdwg.mxu0
        %8228 = vmatpush.bf16.msra.mxu0 %v7655
        %8229 = vmatpush.bf16.msra.mxu0 %v7651
        %8230 = vmatpush.bf16.msra.mxu0 %v7647
        %8231 = vmatpush.bf16.msra.mxu0 %v7643
        %8232 = vmatpush.bf16.msra.mxu0 %v7639
        %8233 = vmatpush.bf16.msra.mxu0 %v7635
        %8234 = vmatpush.bf16.msra.mxu0 %v7631
        %8235 = vmatpush.bf16.msra.mxu0 %v7627
        %8236 = vmatmul.bf16.gmra.mxu0 %v7208
        %v8237 = vpop.f32.mrf.mxu0
        %v8238 = vadd.f32 0.0, %v8237
        %v8239 = vpop.f32.mrf.mxu0
        %v8240 = vadd.f32 0.0, %v8239
        %8241 = vmatmul.bf16.gmra.mxu0 %v7212
        %v8242 = vpop.f32.mrf.mxu0
        %v8243 = vadd.f32 0.0, %v8242
        %v8244 = vpop.f32.mrf.mxu0
        %v8245 = vadd.f32 0.0, %v8244
        %8246 = vmatmul.bf16.gmra.mxu0 %v7216
        %v8247 = vpop.f32.mrf.mxu0
        %v8248 = vadd.f32 0.0, %v8247
        %v8249 = vpop.f32.mrf.mxu0
        %v8250 = vadd.f32 0.0, %v8249
        %8251 = vmatmul.bf16.gmra.mxu0 %v7220
        %v8252 = vpop.f32.mrf.mxu0
        %v8253 = vadd.f32 0.0, %v8252
        %v8254 = vpop.f32.mrf.mxu0
        %v8255 = vadd.f32 0.0, %v8254
        %8256 = vdwg.mxu0
        %8257 = vmatpush.bf16.msra.mxu0 %v7687
        %8258 = vmatpush.bf16.msra.mxu0 %v7683
        %8259 = vmatpush.bf16.msra.mxu0 %v7679
        %8260 = vmatpush.bf16.msra.mxu0 %v7675
        %8261 = vmatpush.bf16.msra.mxu0 %v7671
        %8262 = vmatpush.bf16.msra.mxu0 %v7667
        %8263 = vmatpush.bf16.msra.mxu0 %v7663
        %8264 = vmatpush.bf16.msra.mxu0 %v7659
        %8265 = vmatmul.bf16.gmra.mxu0 %v7209
        %v8266 = vpop.f32.mrf.mxu0
        %v8267 = vadd.f32 %v8238, %v8266
        %v8268 = vpop.f32.mrf.mxu0
        %v8269 = vadd.f32 %v8240, %v8268
        %8270 = vmatmul.bf16.gmra.mxu0 %v7213
        %v8271 = vpop.f32.mrf.mxu0
        %v8272 = vadd.f32 %v8243, %v8271
        %v8273 = vpop.f32.mrf.mxu0
        %v8274 = vadd.f32 %v8245, %v8273
        %8275 = vmatmul.bf16.gmra.mxu0 %v7217
        %v8276 = vpop.f32.mrf.mxu0
        %v8277 = vadd.f32 %v8248, %v8276
        %v8278 = vpop.f32.mrf.mxu0
        %v8279 = vadd.f32 %v8250, %v8278
        %8280 = vmatmul.bf16.gmra.mxu0 %v7221
        %v8281 = vpop.f32.mrf.mxu0
        %v8282 = vadd.f32 %v8253, %v8281
        %v8283 = vpop.f32.mrf.mxu0
        %v8284 = vadd.f32 %v8255, %v8283
        %8285 = vdwg.mxu0
        %8286 = vmatpush.bf16.msra.mxu0 %v7719
        %8287 = vmatpush.bf16.msra.mxu0 %v7715
        %8288 = vmatpush.bf16.msra.mxu0 %v7711
        %8289 = vmatpush.bf16.msra.mxu0 %v7707
        %8290 = vmatpush.bf16.msra.mxu0 %v7703
        %8291 = vmatpush.bf16.msra.mxu0 %v7699
        %8292 = vmatpush.bf16.msra.mxu0 %v7695
        %8293 = vmatpush.bf16.msra.mxu0 %v7691
        %8294 = vmatmul.bf16.gmra.mxu0 %v7210
        %v8295 = vpop.f32.mrf.mxu0
        %v8296 = vadd.f32 %v8267, %v8295
        %v8297 = vpop.f32.mrf.mxu0
        %v8298 = vadd.f32 %v8269, %v8297
        %8299 = vmatmul.bf16.gmra.mxu0 %v7214
        %v8300 = vpop.f32.mrf.mxu0
        %v8301 = vadd.f32 %v8272, %v8300
        %v8302 = vpop.f32.mrf.mxu0
        %v8303 = vadd.f32 %v8274, %v8302
        %8304 = vmatmul.bf16.gmra.mxu0 %v7218
        %v8305 = vpop.f32.mrf.mxu0
        %v8306 = vadd.f32 %v8277, %v8305
        %v8307 = vpop.f32.mrf.mxu0
        %v8308 = vadd.f32 %v8279, %v8307
        %8309 = vmatmul.bf16.gmra.mxu0 %v7222
        %v8310 = vpop.f32.mrf.mxu0
        %v8311 = vadd.f32 %v8282, %v8310
        %v8312 = vpop.f32.mrf.mxu0
        %v8313 = vadd.f32 %v8284, %v8312
        %8314 = vdwg.mxu0
        %8315 = vmatpush.bf16.msra.mxu0 %v7751
        %8316 = vmatpush.bf16.msra.mxu0 %v7747
        %8317 = vmatpush.bf16.msra.mxu0 %v7743
        %8318 = vmatpush.bf16.msra.mxu0 %v7739
        %8319 = vmatpush.bf16.msra.mxu0 %v7735
        %8320 = vmatpush.bf16.msra.mxu0 %v7731
        %8321 = vmatpush.bf16.msra.mxu0 %v7727
        %8322 = vmatpush.bf16.msra.mxu0 %v7723
        %8323 = vmatmul.bf16.gmra.mxu0 %v7211
        %v8324 = vpop.f32.mrf.mxu0
        %v8325 = vadd.f32 %v8296, %v8324
        %v8326 = vpop.f32.mrf.mxu0
        %v8327 = vadd.f32 %v8298, %v8326
        %8328 = vmatmul.bf16.gmra.mxu0 %v7215
        %v8329 = vpop.f32.mrf.mxu0
        %v8330 = vadd.f32 %v8301, %v8329
        %v8331 = vpop.f32.mrf.mxu0
        %v8332 = vadd.f32 %v8303, %v8331
        %8333 = vmatmul.bf16.gmra.mxu0 %v7219
        %v8334 = vpop.f32.mrf.mxu0
        %v8335 = vadd.f32 %v8306, %v8334
        %v8336 = vpop.f32.mrf.mxu0
        %v8337 = vadd.f32 %v8308, %v8336
        %8338 = vmatmul.bf16.gmra.mxu0 %v7223
        %v8339 = vpop.f32.mrf.mxu0
        %v8340 = vadd.f32 %v8311, %v8339
        %v8341 = vpop.f32.mrf.mxu0
        %v8342 = vadd.f32 %v8313, %v8341
        %8343 = vdwg.mxu0
        %v8344 = vadd.f32 %v5560, %v6793
        %v8345 = vadd.f32 %v5561, %v6909
        %v8346 = vadd.f32 %v5562, %v7025
        %v8347 = vadd.f32 %v5563, %v7141
        %v8348 = vadd.f32 %v5564, %v6795
        %v8349 = vadd.f32 %v5565, %v6911
        %v8350 = vadd.f32 %v5566, %v7027
        %v8351 = vadd.f32 %v5567, %v7143
        %v8352 = vadd.f32 %v5568, %v6798
        %v8353 = vadd.f32 %v5569, %v6914
        %v8354 = vadd.f32 %v5570, %v7030
        %v8355 = vadd.f32 %v5571, %v7146
        %v8356 = vadd.f32 %v5572, %v6800
        %v8357 = vadd.f32 %v5573, %v6916
        %v8358 = vadd.f32 %v5574, %v7032
        %v8359 = vadd.f32 %v5575, %v7148
        %v8360 = vadd.f32 %v5576, %v6803
        %v8361 = vadd.f32 %v5577, %v6919
        %v8362 = vadd.f32 %v5578, %v7035
        %v8363 = vadd.f32 %v5579, %v7151
        %v8364 = vadd.f32 %v5580, %v6805
        %v8365 = vadd.f32 %v5581, %v6921
        %v8366 = vadd.f32 %v5582, %v7037
        %v8367 = vadd.f32 %v5583, %v7153
        %v8368 = vadd.f32 %v5584, %v6808
        %v8369 = vadd.f32 %v5585, %v6924
        %v8370 = vadd.f32 %v5586, %v7040
        %v8371 = vadd.f32 %v5587, %v7156
        %v8372 = vadd.f32 %v5588, %v6810
        %v8373 = vadd.f32 %v5589, %v6926
        %v8374 = vadd.f32 %v5590, %v7042
        %v8375 = vadd.f32 %v5591, %v7158
        %v8376 = vadd.f32 %v5592, %v7977
        %v8377 = vadd.f32 %v5593, %v8093
        %v8378 = vadd.f32 %v5594, %v8209
        %v8379 = vadd.f32 %v5595, %v8325
        %v8380 = vadd.f32 %v5596, %v7979
        %v8381 = vadd.f32 %v5597, %v8095
        %v8382 = vadd.f32 %v5598, %v8211
        %v8383 = vadd.f32 %v5599, %v8327
        %v8384 = vadd.f32 %v5600, %v7982
        %v8385 = vadd.f32 %v5601, %v8098
        %v8386 = vadd.f32 %v5602, %v8214
        %v8387 = vadd.f32 %v5603, %v8330
        %v8388 = vadd.f32 %v5604, %v7984
        %v8389 = vadd.f32 %v5605, %v8100
        %v8390 = vadd.f32 %v5606, %v8216
        %v8391 = vadd.f32 %v5607, %v8332
        %v8392 = vadd.f32 %v5608, %v7987
        %v8393 = vadd.f32 %v5609, %v8103
        %v8394 = vadd.f32 %v5610, %v8219
        %v8395 = vadd.f32 %v5611, %v8335
        %v8396 = vadd.f32 %v5612, %v7989
        %v8397 = vadd.f32 %v5613, %v8105
        %v8398 = vadd.f32 %v5614, %v8221
        %v8399 = vadd.f32 %v5615, %v8337
        %v8400 = vadd.f32 %v5616, %v7992
        %v8401 = vadd.f32 %v5617, %v8108
        %v8402 = vadd.f32 %v5618, %v8224
        %v8403 = vadd.f32 %v5619, %v8340
        %v8404 = vadd.f32 %v5620, %v7994
        %v8405 = vadd.f32 %v5621, %v8110
        %v8406 = vadd.f32 %v5622, %v8226
        %v8407 = vadd.f32 %v5623, %v8342
        %8408 = vst [vmem:[#allocation5] sm:$0xff] %v8344
        %8409 = vst [vmem:[#allocation5 + $0x8] sm:$0xff] %v8345
        %8410 = vst [vmem:[#allocation5 + $0x10] sm:$0xff] %v8346
        %8411 = vst [vmem:[#allocation5 + $0x18] sm:$0xff] %v8347
        %8412 = vst [vmem:[#allocation5 + $0x20] sm:$0xff] %v8348
        %8413 = vst [vmem:[#allocation5 + $0x28] sm:$0xff] %v8349
        %8414 = vst [vmem:[#allocation5 + $0x30] sm:$0xff] %v8350
        %8415 = vst [vmem:[#allocation5 + $0x38] sm:$0xff] %v8351
        %8416 = vst [vmem:[#allocation5 + $0x40] sm:$0xff] %v8352
        %8417 = vst [vmem:[#allocation5 + $0x48] sm:$0xff] %v8353
        %8418 = vst [vmem:[#allocation5 + $0x50] sm:$0xff] %v8354
        %8419 = vst [vmem:[#allocation5 + $0x58] sm:$0xff] %v8355
        %8420 = vst [vmem:[#allocation5 + $0x60] sm:$0xff] %v8356
        %8421 = vst [vmem:[#allocation5 + $0x68] sm:$0xff] %v8357
        %8422 = vst [vmem:[#allocation5 + $0x70] sm:$0xff] %v8358
        %8423 = vst [vmem:[#allocation5 + $0x78] sm:$0xff] %v8359
        %8424 = vst [vmem:[#allocation5 + $0x80] sm:$0xff] %v8360
        %8425 = vst [vmem:[#allocation5 + $0x88] sm:$0xff] %v8361
        %8426 = vst [vmem:[#allocation5 + $0x90] sm:$0xff] %v8362
        %8427 = vst [vmem:[#allocation5 + $0x98] sm:$0xff] %v8363
        %8428 = vst [vmem:[#allocation5 + $0xa0] sm:$0xff] %v8364
        %8429 = vst [vmem:[#allocation5 + $0xa8] sm:$0xff] %v8365
        %8430 = vst [vmem:[#allocation5 + $0xb0] sm:$0xff] %v8366
        %8431 = vst [vmem:[#allocation5 + $0xb8] sm:$0xff] %v8367
        %8432 = vst [vmem:[#allocation5 + $0xc0] sm:$0xff] %v8368
        %8433 = vst [vmem:[#allocation5 + $0xc8] sm:$0xff] %v8369
        %8434 = vst [vmem:[#allocation5 + $0xd0] sm:$0xff] %v8370
        %8435 = vst [vmem:[#allocation5 + $0xd8] sm:$0xff] %v8371
        %8436 = vst [vmem:[#allocation5 + $0xe0] sm:$0xff] %v8372
        %8437 = vst [vmem:[#allocation5 + $0xe8] sm:$0xff] %v8373
        %8438 = vst [vmem:[#allocation5 + $0xf0] sm:$0xff] %v8374
        %8439 = vst [vmem:[#allocation5 + $0xf8] sm:$0xff] %v8375
        %8440 = vst [vmem:[#allocation5 + $0x100] sm:$0xff] %v8376
        %8441 = vst [vmem:[#allocation5 + $0x108] sm:$0xff] %v8377
        %8442 = vst [vmem:[#allocation5 + $0x110] sm:$0xff] %v8378
        %8443 = vst [vmem:[#allocation5 + $0x118] sm:$0xff] %v8379
        %8444 = vst [vmem:[#allocation5 + $0x120] sm:$0xff] %v8380
        %8445 = vst [vmem:[#allocation5 + $0x128] sm:$0xff] %v8381
        %8446 = vst [vmem:[#allocation5 + $0x130] sm:$0xff] %v8382
        %8447 = vst [vmem:[#allocation5 + $0x138] sm:$0xff] %v8383
        %8448 = vst [vmem:[#allocation5 + $0x140] sm:$0xff] %v8384
        %8449 = vst [vmem:[#allocation5 + $0x148] sm:$0xff] %v8385
        %8450 = vst [vmem:[#allocation5 + $0x150] sm:$0xff] %v8386
        %8451 = vst [vmem:[#allocation5 + $0x158] sm:$0xff] %v8387
        %8452 = vst [vmem:[#allocation5 + $0x160] sm:$0xff] %v8388
        %8453 = vst [vmem:[#allocation5 + $0x168] sm:$0xff] %v8389
        %8454 = vst [vmem:[#allocation5 + $0x170] sm:$0xff] %v8390
        %8455 = vst [vmem:[#allocation5 + $0x178] sm:$0xff] %v8391
        %8456 = vst [vmem:[#allocation5 + $0x180] sm:$0xff] %v8392
        %8457 = vst [vmem:[#allocation5 + $0x188] sm:$0xff] %v8393
        %8458 = vst [vmem:[#allocation5 + $0x190] sm:$0xff] %v8394
        %8459 = vst [vmem:[#allocation5 + $0x198] sm:$0xff] %v8395
        %8460 = vst [vmem:[#allocation5 + $0x1a0] sm:$0xff] %v8396
        %8461 = vst [vmem:[#allocation5 + $0x1a8] sm:$0xff] %v8397
        %8462 = vst [vmem:[#allocation5 + $0x1b0] sm:$0xff] %v8398
        %8463 = vst [vmem:[#allocation5 + $0x1b8] sm:$0xff] %v8399
        %8464 = vst [vmem:[#allocation5 + $0x1c0] sm:$0xff] %v8400
        %8465 = vst [vmem:[#allocation5 + $0x1c8] sm:$0xff] %v8401
        %8466 = vst [vmem:[#allocation5 + $0x1d0] sm:$0xff] %v8402
        %8467 = vst [vmem:[#allocation5 + $0x1d8] sm:$0xff] %v8403
        %8468 = vst [vmem:[#allocation5 + $0x1e0] sm:$0xff] %v8404
        %8469 = vst [vmem:[#allocation5 + $0x1e8] sm:$0xff] %v8405
        %8470 = vst [vmem:[#allocation5 + $0x1f0] sm:$0xff] %v8406
        %8471 = vst [vmem:[#allocation5 + $0x1f8] sm:$0xff] %v8407
        %8472 = vst.msk [vmem:[#allocation3] sm:$0xf] %vm5475, %v3330
        %8473 = vst.msk [vmem:[#allocation3 + $0x4] sm:$0xf] %vm5475, %v3331
        // Predicated region
        $region49: #{tpu_custom_call.1} parent=31 // pred_check
          %p8474 = pneg %p394
        $region50: #{tpu_custom_call.1} parent=31 // pred_check_branch
          %8476 = sbr.rel (%p8474) target = $region52
        $region51: #{tpu_custom_call.1} parent=31 // pred_region
          %v8477 = vld [vmem:[#allocation4] sm:$0xf]
          %v8478 = vld [vmem:[#allocation4 + $0x4] sm:$0xf]
          %v8479 = vrcp.pop %v8477
          %v8480 = vrcp.pop %v8478
          %v8481 = vmul.f32 %v8477, %v8479
          %v8482 = vmul.f32 %v8478, %v8480
          %v8483 = vsub.f32 2.0, %v8481
          %v8484 = vsub.f32 2.0, %v8482
          %v8485 = vmul.f32 %v8479, %v8483
          %v8486 = vmul.f32 %v8480, %v8484
          %v8487 = vld [vmem:[#allocation5] sm:$0xff]
          %v8488 = vld [vmem:[#allocation5 + $0x8] sm:$0xff]
          %v8489 = vld [vmem:[#allocation5 + $0x10] sm:$0xff]
          %v8490 = vld [vmem:[#allocation5 + $0x18] sm:$0xff]
          %v8491 = vld [vmem:[#allocation5 + $0x20] sm:$0xff]
          %v8492 = vld [vmem:[#allocation5 + $0x28] sm:$0xff]
          %v8493 = vld [vmem:[#allocation5 + $0x30] sm:$0xff]
          %v8494 = vld [vmem:[#allocation5 + $0x38] sm:$0xff]
          %v8495 = vld [vmem:[#allocation5 + $0x40] sm:$0xff]
          %v8496 = vld [vmem:[#allocation5 + $0x48] sm:$0xff]
          %v8497 = vld [vmem:[#allocation5 + $0x50] sm:$0xff]
          %v8498 = vld [vmem:[#allocation5 + $0x58] sm:$0xff]
          %v8499 = vld [vmem:[#allocation5 + $0x60] sm:$0xff]
          %v8500 = vld [vmem:[#allocation5 + $0x68] sm:$0xff]
          %v8501 = vld [vmem:[#allocation5 + $0x70] sm:$0xff]
          %v8502 = vld [vmem:[#allocation5 + $0x78] sm:$0xff]
          %v8503 = vld [vmem:[#allocation5 + $0x80] sm:$0xff]
          %v8504 = vld [vmem:[#allocation5 + $0x88] sm:$0xff]
          %v8505 = vld [vmem:[#allocation5 + $0x90] sm:$0xff]
          %v8506 = vld [vmem:[#allocation5 + $0x98] sm:$0xff]
          %v8507 = vld [vmem:[#allocation5 + $0xa0] sm:$0xff]
          %v8508 = vld [vmem:[#allocation5 + $0xa8] sm:$0xff]
          %v8509 = vld [vmem:[#allocation5 + $0xb0] sm:$0xff]
          %v8510 = vld [vmem:[#allocation5 + $0xb8] sm:$0xff]
          %v8511 = vld [vmem:[#allocation5 + $0xc0] sm:$0xff]
          %v8512 = vld [vmem:[#allocation5 + $0xc8] sm:$0xff]
          %v8513 = vld [vmem:[#allocation5 + $0xd0] sm:$0xff]
          %v8514 = vld [vmem:[#allocation5 + $0xd8] sm:$0xff]
          %v8515 = vld [vmem:[#allocation5 + $0xe0] sm:$0xff]
          %v8516 = vld [vmem:[#allocation5 + $0xe8] sm:$0xff]
          %v8517 = vld [vmem:[#allocation5 + $0xf0] sm:$0xff]
          %v8518 = vld [vmem:[#allocation5 + $0xf8] sm:$0xff]
          %v8519 = vld [vmem:[#allocation5 + $0x100] sm:$0xff]
          %v8520 = vld [vmem:[#allocation5 + $0x108] sm:$0xff]
          %v8521 = vld [vmem:[#allocation5 + $0x110] sm:$0xff]
          %v8522 = vld [vmem:[#allocation5 + $0x118] sm:$0xff]
          %v8523 = vld [vmem:[#allocation5 + $0x120] sm:$0xff]
          %v8524 = vld [vmem:[#allocation5 + $0x128] sm:$0xff]
          %v8525 = vld [vmem:[#allocation5 + $0x130] sm:$0xff]
          %v8526 = vld [vmem:[#allocation5 + $0x138] sm:$0xff]
          %v8527 = vld [vmem:[#allocation5 + $0x140] sm:$0xff]
          %v8528 = vld [vmem:[#allocation5 + $0x148] sm:$0xff]
          %v8529 = vld [vmem:[#allocation5 + $0x150] sm:$0xff]
          %v8530 = vld [vmem:[#allocation5 + $0x158] sm:$0xff]
          %v8531 = vld [vmem:[#allocation5 + $0x160] sm:$0xff]
          %v8532 = vld [vmem:[#allocation5 + $0x168] sm:$0xff]
          %v8533 = vld [vmem:[#allocation5 + $0x170] sm:$0xff]
          %v8534 = vld [vmem:[#allocation5 + $0x178] sm:$0xff]
          %v8535 = vld [vmem:[#allocation5 + $0x180] sm:$0xff]
          %v8536 = vld [vmem:[#allocation5 + $0x188] sm:$0xff]
          %v8537 = vld [vmem:[#allocation5 + $0x190] sm:$0xff]
          %v8538 = vld [vmem:[#allocation5 + $0x198] sm:$0xff]
          %v8539 = vld [vmem:[#allocation5 + $0x1a0] sm:$0xff]
          %v8540 = vld [vmem:[#allocation5 + $0x1a8] sm:$0xff]
          %v8541 = vld [vmem:[#allocation5 + $0x1b0] sm:$0xff]
          %v8542 = vld [vmem:[#allocation5 + $0x1b8] sm:$0xff]
          %v8543 = vld [vmem:[#allocation5 + $0x1c0] sm:$0xff]
          %v8544 = vld [vmem:[#allocation5 + $0x1c8] sm:$0xff]
          %v8545 = vld [vmem:[#allocation5 + $0x1d0] sm:$0xff]
          %v8546 = vld [vmem:[#allocation5 + $0x1d8] sm:$0xff]
          %v8547 = vld [vmem:[#allocation5 + $0x1e0] sm:$0xff]
          %v8548 = vld [vmem:[#allocation5 + $0x1e8] sm:$0xff]
          %v8549 = vld [vmem:[#allocation5 + $0x1f0] sm:$0xff]
          %v8550 = vld [vmem:[#allocation5 + $0x1f8] sm:$0xff]
          %v8553 = vperm.slane %v8485, 0
          %v8554 = vperm.slane %v8485, 1
          %v8555 = vperm.slane %v8485, 2
          %v8556 = vperm.slane %v8485, 3
          %v8557 = vperm.slane %v8486, 0
          %v8558 = vperm.slane %v8486, 1
          %v8559 = vperm.slane %v8486, 2
          %v8560 = vperm.slane %v8486, 3
          %v8569 = vmul.f32 %v8487, %v8553
          %v8570 = vmul.f32 %v8488, %v8554
          %v8571 = vmul.f32 %v8489, %v8555
          %v8572 = vmul.f32 %v8490, %v8556
          %v8573 = vmul.f32 %v8491, %v8553
          %v8574 = vmul.f32 %v8492, %v8554
          %v8575 = vmul.f32 %v8493, %v8555
          %v8576 = vmul.f32 %v8494, %v8556
          %v8577 = vmul.f32 %v8495, %v8553
          %v8578 = vmul.f32 %v8496, %v8554
          %v8579 = vmul.f32 %v8497, %v8555
          %v8580 = vmul.f32 %v8498, %v8556
          %v8581 = vmul.f32 %v8499, %v8553
          %v8582 = vmul.f32 %v8500, %v8554
          %v8583 = vmul.f32 %v8501, %v8555
          %v8584 = vmul.f32 %v8502, %v8556
          %v8585 = vmul.f32 %v8503, %v8553
          %v8586 = vmul.f32 %v8504, %v8554
          %v8587 = vmul.f32 %v8505, %v8555
          %v8588 = vmul.f32 %v8506, %v8556
          %v8589 = vmul.f32 %v8507, %v8553
          %v8590 = vmul.f32 %v8508, %v8554
          %v8591 = vmul.f32 %v8509, %v8555
          %v8592 = vmul.f32 %v8510, %v8556
          %v8593 = vmul.f32 %v8511, %v8553
          %v8594 = vmul.f32 %v8512, %v8554
          %v8595 = vmul.f32 %v8513, %v8555
          %v8596 = vmul.f32 %v8514, %v8556
          %v8597 = vmul.f32 %v8515, %v8553
          %v8598 = vmul.f32 %v8516, %v8554
          %v8599 = vmul.f32 %v8517, %v8555
          %v8600 = vmul.f32 %v8518, %v8556
          %v8601 = vmul.f32 %v8519, %v8557
          %v8602 = vmul.f32 %v8520, %v8558
          %v8603 = vmul.f32 %v8521, %v8559
          %v8604 = vmul.f32 %v8522, %v8560
          %v8605 = vmul.f32 %v8523, %v8557
          %v8606 = vmul.f32 %v8524, %v8558
          %v8607 = vmul.f32 %v8525, %v8559
          %v8608 = vmul.f32 %v8526, %v8560
          %v8609 = vmul.f32 %v8527, %v8557
          %v8610 = vmul.f32 %v8528, %v8558
          %v8611 = vmul.f32 %v8529, %v8559
          %v8612 = vmul.f32 %v8530, %v8560
          %v8613 = vmul.f32 %v8531, %v8557
          %v8614 = vmul.f32 %v8532, %v8558
          %v8615 = vmul.f32 %v8533, %v8559
          %v8616 = vmul.f32 %v8534, %v8560
          %v8617 = vmul.f32 %v8535, %v8557
          %v8618 = vmul.f32 %v8536, %v8558
          %v8619 = vmul.f32 %v8537, %v8559
          %v8620 = vmul.f32 %v8538, %v8560
          %v8621 = vmul.f32 %v8539, %v8557
          %v8622 = vmul.f32 %v8540, %v8558
          %v8623 = vmul.f32 %v8541, %v8559
          %v8624 = vmul.f32 %v8542, %v8560
          %v8625 = vmul.f32 %v8543, %v8557
          %v8626 = vmul.f32 %v8544, %v8558
          %v8627 = vmul.f32 %v8545, %v8559
          %v8628 = vmul.f32 %v8546, %v8560
          %v8629 = vmul.f32 %v8547, %v8557
          %v8630 = vmul.f32 %v8548, %v8558
          %v8631 = vmul.f32 %v8549, %v8559
          %v8632 = vmul.f32 %v8550, %v8560
          %8633 = vst [vmem:[%s384] sm:$0xff] %v8569
          %8634 = vst [vmem:[%s384 + $0x8] sm:$0xff] %v8570
          %8635 = vst [vmem:[%s384 + $0x10] sm:$0xff] %v8571
          %8636 = vst [vmem:[%s384 + $0x18] sm:$0xff] %v8572
          %8637 = vst [vmem:[%s384 + $0x20] sm:$0xff] %v8573
          %8638 = vst [vmem:[%s384 + $0x28] sm:$0xff] %v8574
          %8639 = vst [vmem:[%s384 + $0x30] sm:$0xff] %v8575
          %8640 = vst [vmem:[%s384 + $0x38] sm:$0xff] %v8576
          %8641 = vst [vmem:[%s384 + $0x40] sm:$0xff] %v8577
          %8642 = vst [vmem:[%s384 + $0x48] sm:$0xff] %v8578
          %8643 = vst [vmem:[%s384 + $0x50] sm:$0xff] %v8579
          %8644 = vst [vmem:[%s384 + $0x58] sm:$0xff] %v8580
          %8645 = vst [vmem:[%s384 + $0x60] sm:$0xff] %v8581
          %8646 = vst [vmem:[%s384 + $0x68] sm:$0xff] %v8582
          %8647 = vst [vmem:[%s384 + $0x70] sm:$0xff] %v8583
          %8648 = vst [vmem:[%s384 + $0x78] sm:$0xff] %v8584
          %8649 = vst [vmem:[%s384 + $0x80] sm:$0xff] %v8585
          %8650 = vst [vmem:[%s384 + $0x88] sm:$0xff] %v8586
          %8651 = vst [vmem:[%s384 + $0x90] sm:$0xff] %v8587
          %8652 = vst [vmem:[%s384 + $0x98] sm:$0xff] %v8588
          %8653 = vst [vmem:[%s384 + $0xa0] sm:$0xff] %v8589
          %8654 = vst [vmem:[%s384 + $0xa8] sm:$0xff] %v8590
          %8655 = vst [vmem:[%s384 + $0xb0] sm:$0xff] %v8591
          %8656 = vst [vmem:[%s384 + $0xb8] sm:$0xff] %v8592
          %8657 = vst [vmem:[%s384 + $0xc0] sm:$0xff] %v8593
          %8658 = vst [vmem:[%s384 + $0xc8] sm:$0xff] %v8594
          %8659 = vst [vmem:[%s384 + $0xd0] sm:$0xff] %v8595
          %8660 = vst [vmem:[%s384 + $0xd8] sm:$0xff] %v8596
          %8661 = vst [vmem:[%s384 + $0xe0] sm:$0xff] %v8597
          %8662 = vst [vmem:[%s384 + $0xe8] sm:$0xff] %v8598
          %8663 = vst [vmem:[%s384 + $0xf0] sm:$0xff] %v8599
          %8664 = vst [vmem:[%s384 + $0xf8] sm:$0xff] %v8600
          %8665 = vst [vmem:[%s384 + $0x100] sm:$0xff] %v8601
          %8666 = vst [vmem:[%s384 + $0x108] sm:$0xff] %v8602
          %8667 = vst [vmem:[%s384 + $0x110] sm:$0xff] %v8603
          %8668 = vst [vmem:[%s384 + $0x118] sm:$0xff] %v8604
          %8669 = vst [vmem:[%s384 + $0x120] sm:$0xff] %v8605
          %8670 = vst [vmem:[%s384 + $0x128] sm:$0xff] %v8606
          %8671 = vst [vmem:[%s384 + $0x130] sm:$0xff] %v8607
          %8672 = vst [vmem:[%s384 + $0x138] sm:$0xff] %v8608
          %8673 = vst [vmem:[%s384 + $0x140] sm:$0xff] %v8609
          %8674 = vst [vmem:[%s384 + $0x148] sm:$0xff] %v8610
          %8675 = vst [vmem:[%s384 + $0x150] sm:$0xff] %v8611
          %8676 = vst [vmem:[%s384 + $0x158] sm:$0xff] %v8612
          %8677 = vst [vmem:[%s384 + $0x160] sm:$0xff] %v8613
          %8678 = vst [vmem:[%s384 + $0x168] sm:$0xff] %v8614
          %8679 = vst [vmem:[%s384 + $0x170] sm:$0xff] %v8615
          %8680 = vst [vmem:[%s384 + $0x178] sm:$0xff] %v8616
          %8681 = vst [vmem:[%s384 + $0x180] sm:$0xff] %v8617
          %8682 = vst [vmem:[%s384 + $0x188] sm:$0xff] %v8618
          %8683 = vst [vmem:[%s384 + $0x190] sm:$0xff] %v8619
          %8684 = vst [vmem:[%s384 + $0x198] sm:$0xff] %v8620
          %8685 = vst [vmem:[%s384 + $0x1a0] sm:$0xff] %v8621
          %8686 = vst [vmem:[%s384 + $0x1a8] sm:$0xff] %v8622
          %8687 = vst [vmem:[%s384 + $0x1b0] sm:$0xff] %v8623
          %8688 = vst [vmem:[%s384 + $0x1b8] sm:$0xff] %v8624
          %8689 = vst [vmem:[%s384 + $0x1c0] sm:$0xff] %v8625
          %8690 = vst [vmem:[%s384 + $0x1c8] sm:$0xff] %v8626
          %8691 = vst [vmem:[%s384 + $0x1d0] sm:$0xff] %v8627
          %8692 = vst [vmem:[%s384 + $0x1d8] sm:$0xff] %v8628
          %8693 = vst [vmem:[%s384 + $0x1e0] sm:$0xff] %v8629
          %8694 = vst [vmem:[%s384 + $0x1e8] sm:$0xff] %v8630
          %8695 = vst [vmem:[%s384 + $0x1f0] sm:$0xff] %v8631
          %8696 = vst [vmem:[%s384 + $0x1f8] sm:$0xff] %v8632
        $region52: #{tpu_custom_call.1} parent=31 // pred_fallthru
          _
        %s8697 = sand.u32 %s136, 1
        %s8698 = scalar_lea.sflag [#allocation8], %s8697
        %s8699 = sand.u32 %s136, 1
        %s8700 = smul.addr %s8699, 512
        %s8701 = scalar_lea.vmem [#allocation12], %s8700
        // Predicated region
        $region53: #{tpu_custom_call.1} parent=31 // pred_check
          %p8702 = pneg %p146
        $region54: #{tpu_custom_call.1} parent=31 // pred_check_branch
          %8704 = sbr.rel (%p8702) target = $region56
        $region55: #{tpu_custom_call.1} parent=31 // pred_region
          %s8705 = smul.u32 2, %s28
          %s8706 = smul.u32 4, %s29
          %8708 = vsyncadd %s8698, 0
          %s8709 = smul.addr %s8705, 32
          %s8710 = sadd.s32 %s8706, %s8709
          %s8711 = smul.addr %s8710, 8
          %s8712 = scalar_lea.hbm %s3, %s8711
          %s8713 = sshll.u32 %s8701, 4
          %s8714 = int_to_ptr.vmem [resolvable:$true] %s8713
          %s8715 = sshll.u32 %s8712, 4
          %s8716 = int_to_ptr.hbm [resolvable:$true] %s8715
          %8721 = dma.vmem_to_hbm [thread:$0]  %s8714, 8192, %s8716, %s8698, 512, 512, 32
        $region56: #{tpu_custom_call.1} parent=31 // pred_fallthru
          _
      $region32: #{tpu_custom_call.1} parent=5 // pred_fallthru
        _
      %p8722 = scmp.le.s32.totalorder 2, %s18
      // Predicated region
      $region57: #{tpu_custom_call.1} parent=5 // pred_check
        %p8723 = pneg %p8722
      $region58: #{tpu_custom_call.1} parent=5 // pred_check_branch
        %8725 = sbr.rel (%p8723) target = $region60
      $region59: #{tpu_custom_call.1} parent=5 // pred_region
        %s8726 = ssub.s32 %s18, 2
        // Predicated region
        $region61: #{tpu_custom_call.1} parent=59 // pred_check
          %p8727 = pneg %p152
        $region62: #{tpu_custom_call.1} parent=59 // pred_check_branch
          %8729 = sbr.rel (%p8727) target = $region64
        $region63: #{tpu_custom_call.1} parent=59 // pred_region
          %s8730 = sand.u32 %s137, 1
          %s8731 = scalar_lea.sflag [#allocation8], %s8730
          %s8732 = sand.u32 %s137, 1
          %s8733 = smul.addr %s8732, 512
          %s8734 = scalar_lea.vmem [#allocation12], %s8733
          %8736 = dma.done %s8731, 8192
        $region64: #{tpu_custom_call.1} parent=59 // pred_fallthru
          _
      $region60: #{tpu_custom_call.1} parent=5 // pred_fallthru
        _
    $region6: #{tpu_custom_call.1} parent=1 // loop_footer
      %s22 = sadd.s32 1, %s18
    $region7: #{tpu_custom_call.1} parent=1 // loop_footer_branch
      %17 = sbr.rel target = $region3
    $region8: #{tpu_custom_call.1} parent=1 // loop_exit
      _
    %8737 = vsyncpa [#allocation7], 1
    %s8738 = scalar_lea.sflag [#allocation7], 1
    %8739 = vsyncpa %s8738, 1
    %8740 = vsyncpa [#allocation10], 1
    %s8741 = scalar_lea.sflag [#allocation10], 1
    %8742 = vsyncpa %s8741, 1
    %8743 = vsyncpa [#allocation8], 1
    %s8744 = scalar_lea.sflag [#allocation8], 1
    %8745 = vsyncpa %s8744, 1

</llo_original>
